<compile_context>
chip_gen: v5e
topology: v5e:2x2
jax: 0.10.0
libtpu: 0.0.40
codegen_flags: <defaults>
</compile_context>

<pallas_src>
import functools

import numpy as np

import jax
import jax.numpy as jnp
from jax import lax
from jax.experimental import pallas as pl
from jax.experimental.pallas import tpu as pltpu


# The nine (sy, sx) input shifts a k=4 / stride=2 / pad=1 transposed conv needs.
SHIFTS = tuple((sy, sx) for sy in (-1, 0, 1) for sx in (-1, 0, 1))


def _apply_act(x, activation):
    if activation == "relu":
        return jnp.maximum(x, 0.0)
    if activation == "tanh":
        return jnp.tanh(x)
    return x


# ----------------------------------------------------------------------------
# Pallas kernel: in-kernel tap gather + 9 accumulated MXU dots + bias + act
# ----------------------------------------------------------------------------
def _stride2_kernel(*refs, w_cols, m, guard, activation, has_bias):
    """One stride-2 ConvTranspose2d layer, all 4 output phases at once.

    refs: wpack (9, 4*Cout, Cin) bf16, x_pad (Cin, M + 2*guard) bf16,
          mask (9, M) bf16, [bias (4*Cout, 1) f32], out (4*Cout, M).
    Output row ph*Cout + o is phase ph = 2*ry + rx of channel o.
    """
    if has_bias:
        w_ref, x_ref, mask_ref, b_ref, o_ref = refs
    else:
        w_ref, x_ref, mask_ref, o_ref = refs
        b_ref = None
    x = x_ref[...]             # guard-padded flat activation (Cin, M + 2*guard)
    masks = mask_ref[...]      # (9, M) {0,1} row/col boundary masks
    rows = o_ref.shape[0]
    acc = jnp.zeros((rows, m), jnp.float32)
    for s_idx, (sy, sx) in enumerate(SHIFTS):
        # In-kernel tap gather: static lane-offset slice of the VMEM-resident
        # activation; out-of-row / out-of-image positions are masked to zero.
        off = guard + sy * w_cols + sx
        tap = x[:, off:off + m] * masks[s_idx:s_idx + 1, :]
        acc = acc + jnp.dot(w_ref[s_idx], tap,
                            preferred_element_type=jnp.float32)
    if has_bias:
        acc = acc + b_ref[...]
    acc = _apply_act(acc, activation)
    o_ref[...] = acc.astype(o_ref.dtype)


def _convt_s2_pallas(flat_pad, wpack, mask, bias, *, w_cols, m, guard,
                     activation, out_dtype):
    n_shift, rows, cin = wpack.shape
    has_bias = bias is not None
    kernel = functools.partial(_stride2_kernel, w_cols=w_cols, m=m,
                               guard=guard, activation=activation,
                               has_bias=has_bias)
    in_specs = [
        pl.BlockSpec((n_shift, rows, cin), lambda i: (0, 0, 0)),   # weights
        pl.BlockSpec((cin, m + 2 * guard), lambda i: (0, 0)),      # activation
        pl.BlockSpec((n_shift, m), lambda i: (0, 0)),              # masks
    ]
    args = [wpack, flat_pad, mask]
    if has_bias:
        in_specs.append(pl.BlockSpec((rows, 1), lambda i: (0, 0)))
        args.append(bias)
    return pl.pallas_call(
        kernel,
        out_shape=jax.ShapeDtypeStruct((rows, m), out_dtype),
        grid=(1,),
        in_specs=in_specs,
        out_specs=pl.BlockSpec((rows, m), lambda i: (0, 0)),
        compiler_params=pltpu.CompilerParams(
            dimension_semantics=("arbitrary",)),
    )(*args)


# ----------------------------------------------------------------------------
# Small XLA helpers (tiny layers + glue), per performance review
# ----------------------------------------------------------------------------
def _shift_masks_np(n, h, w):
    """(9, N*H*W) {0,1} mask: 1 where the shifted read stays inside the image."""
    y = np.arange(h)[:, None]
    x = np.arange(w)[None, :]
    rows = []
    for sy, sx in SHIFTS:
        ok = (y + sy >= 0) & (y + sy < h) & (x + sx >= 0) & (x + sx < w)
        rows.append(np.broadcast_to(ok, (h, w)))
    mk = np.stack(rows, axis=0).astype(np.float32)            # (9, H, W)
    return np.tile(mk[:, None], (1, n, 1, 1)).reshape(9, n * h * w)


def _interleave_phases(rows, cout, n, h, w):
    # rows: (4*Cout, N*H*W), phase-major (ph = 2*ry + rx) -> (Cout, N, 2H, 2W).
    # TODO(synk): move this interleave in-kernel (strided roll / bitcast pack)
    # to delete the one small XLA transpose per stride-2 layer that remains.
    ph = rows.reshape(2, 2, cout, n, h, w)
    return jnp.transpose(ph, (2, 3, 4, 0, 5, 1)).reshape(cout, n, 2 * h, 2 * w)


def _convt_s1_xla(h, w_taps, k):
    """ConvTranspose2d(k, stride=1, pad=0) ("full" conv). Tiny first layer
    (1x1 noise input) -> plain XLA einsum, no Pallas call."""
    cin, n, hh, ww = h.shape
    ho, wo = hh + k - 1, ww + k - 1
    hp = jnp.pad(h, ((0, 0), (0, 0), (k - 1, k - 1), (k - 1, k - 1)))
    taps = jnp.stack([hp[:, :, k - 1 - ky:k - 1 - ky + ho,
                         k - 1 - kx:k - 1 - kx + wo]
                      for ky in range(k) for kx in range(k)], axis=0)
    return jnp.einsum('tcnyx,tco->onyx', taps, w_taps,
                      preferred_element_type=jnp.float32)


def _convt_s2_xla(h, wpack, bias, activation):
    """Same math as the Pallas kernel, in XLA, for layers too small to benefit
    from a custom call (M = N*H*W < 128 -> sub-lane-width output)."""
    cin, n, hh, ww = h.shape
    m = n * hh * ww
    hp = jnp.pad(h, ((0, 0), (0, 0), (1, 1), (1, 1)))
    shifted = jnp.stack(
        [hp[:, :, 1 + sy:1 + sy + hh, 1 + sx:1 + sx + ww].reshape(cin, m)
         for sy, sx in SHIFTS], axis=0)                       # (9, Cin, M)
    rows = jnp.einsum('soc,scm->om', wpack, shifted,
                      preferred_element_type=jnp.float32)
    if bias is not None:
        rows = rows + bias
    return _apply_act(rows, activation)


# ----------------------------------------------------------------------------
# Parameters: raw PyTorch-layout init + one-time packing into kernel form
# ----------------------------------------------------------------------------
def init_generator_params(key, noise_channels, img_channels, features):
    f = features
    layer_cfg = [
        # (Cin, Cout, k, stride, pad, has_bias)
        (noise_channels, f * 16, 4, 1, 0, False),
        (f * 16, f * 8, 4, 2, 1, False),
        (f * 8, f * 4, 4, 2, 1, False),
        (f * 4, f * 2, 4, 2, 1, False),
        (f * 2, img_channels, 4, 2, 1, True),   # final ConvTranspose2d has bias
    ]
    params = []
    for cin, cout, k, s, p, has_bias in layer_cfg:
        key, wk, bk = jax.random.split(key, 3)
        w = 0.02 * jax.random.normal(wk, (cin, cout, k, k), jnp.float32)
        b = (0.02 * jax.random.normal(bk, (cout,), jnp.float32)
             if has_bias else jnp.zeros((cout,), jnp.float32))
        params.append({"w": w, "b": b, "stride": s, "pad": p,
                       "has_bias": has_bias})
    return params


def _pack_stride2_weight(w):
    """(Cin, Cout, 4, 4) PyTorch ConvTranspose2d weight -> (9, 4*Cout, Cin)
    bf16 matmul weights: one (4*Cout, Cin) slab per input shift (sy, sx); the
    (phase, shift) pairs that do not contribute are exact zeros."""
    w = np.asarray(w, np.float32)
    cin, cout = w.shape[:2]
    wpack = np.zeros((len(SHIFTS), 4 * cout, cin), np.float32)
    for s_idx, (sy, sx) in enumerate(SHIFTS):
        for ry in range(2):
            for rx in range(2):
                if sy not in (ry - 1, ry) or sx not in (rx - 1, rx):
                    continue
                ky, kx = 1 + ry - 2 * sy, 1 + rx - 2 * sx
                ph = 2 * ry + rx
                wpack[s_idx, ph * cout:(ph + 1) * cout, :] = w[:, :, ky, kx].T
    return jnp.asarray(wpack, jnp.bfloat16)


def prepare_generator_params(raw_params):
    """One-time packing of ConvTranspose2d weights into kernel matmul form."""
    prepped = []
    for lp in raw_params:
        cin, cout, k, _ = lp["w"].shape
        if lp["stride"] == 1:
            w_taps = jnp.asarray(
                np.asarray(lp["w"], np.float32).transpose(2, 3, 0, 1)
                .reshape(k * k, cin, cout), jnp.bfloat16)
            prepped.append({"kind": "s1", "w_taps": w_taps, "k": k,
                            "cout": cout})
        else:
            bias = None
            if lp["has_bias"]:
                bias = jnp.asarray(
                    np.tile(np.asarray(lp["b"], np.float32), 4)
                    .reshape(4 * cout, 1))
            prepped.append({"kind": "s2",
                            "wpack": _pack_stride2_weight(lp["w"]),
                            "bias": bias, "cout": cout})
    return prepped


# ----------------------------------------------------------------------------
# Generator forward (Pallas) and pure-JAX reference
# ----------------------------------------------------------------------------
def generator_forward(params, x):
    """params: prepare_generator_params output; x: (N, Cin, H, W) NCHW f32."""
    # One layout conversion in: NCHW -> channel-major (C, N, H, W), bf16.
    h = jnp.transpose(x, (1, 0, 2, 3)).astype(jnp.bfloat16)
    n_layers = len(params)
    for idx, lp in enumerate(params):
        is_last = idx == n_layers - 1
        act = "tanh" if is_last else "relu"
        out_dtype = jnp.float32 if is_last else jnp.bfloat16
        if lp["kind"] == "s1":
            out = _convt_s1_xla(h, lp["w_taps"], lp["k"])
            h = _apply_act(out, act).astype(out_dtype)
            continue
        cin, n, hh, ww = h.shape
        m = n * hh * ww
        cout = lp["cout"]
        if m >= 128:
            # Pallas path: guard-padded flat activation, taps gathered in-kernel.
            guard = ww + 1
            flat_pad = jnp.pad(h.reshape(cin, m), ((0, 0), (guard, guard)))
            mask = jnp.asarray(_shift_masks_np(n, hh, ww), jnp.bfloat16)
            rows = _convt_s2_pallas(flat_pad, lp["wpack"], mask, lp["bias"],
                                    w_cols=ww, m=m, guard=guard,
                                    activation=act, out_dtype=out_dtype)
        else:
            # Tiny layer (lane width < 128): plain XLA per the perf review.
            rows = _convt_s2_xla(h, lp["wpack"], lp["bias"], act)
            rows = rows.astype(out_dtype)
        h = _interleave_phases(rows, cout, n, hh, ww)
    # One layout conversion out: channel-major -> NCHW, f32.
    return jnp.transpose(h, (1, 0, 2, 3)).astype(jnp.float32)


def generator_forward_ref(raw_params, x):
    """Pure-JAX f32 reference using lax.conv_general_dilated."""
    h = x
    n_layers = len(raw_params)
    for i, lp in enumerate(raw_params):
        w, b, s, p = lp["w"], lp["b"], lp["stride"], lp["pad"]
        k = w.shape[2]
        w_conv = w[:, :, ::-1, ::-1].transpose(1, 0, 2, 3)   # OIHW, flipped
        pad = k - 1 - p
        out = lax.conv_general_dilated(
            h, w_conv, window_strides=(1, 1),
            padding=[(pad, pad), (pad, pad)], lhs_dilation=(s, s),
            dimension_numbers=("NCHW", "OIHW", "NCHW"))
        out = out + b.reshape(1, -1, 1, 1)
        h = jnp.tanh(out) if i == n_layers - 1 else jnp.maximum(out, 0.0)
    return h


if __name__ == "__main__":
    key = jax.random.PRNGKey(0)
    noise_channels, img_channels, features, batch = 8, 3, 4, 2

    pkey, xkey = jax.random.split(key)
    raw_params = init_generator_params(pkey, noise_channels, img_channels,
                                       features)
    params = prepare_generator_params(raw_params)
    x = jax.random.normal(xkey, (batch, noise_channels, 1, 1), jnp.float32)

    fwd = jax.jit(lambda xx: generator_forward(params, xx))
    out = jax.block_until_ready(fwd(x))
    assert out.shape == (batch, img_channels, 64, 64), out.shape

    ref = jax.block_until_ready(generator_forward_ref(raw_params, x))
    err = float(jnp.max(jnp.abs(out.astype(jnp.float32) - ref)))
    scale = float(jnp.max(jnp.abs(ref)))
    # bf16 MXU inputs (f32 accumulation) -> bf16-level tolerance vs f32 reference.
    assert err <= 5e-2 * scale + 1e-6, (err, scale)

    print("KERNEL_OK")
</pallas_src>

<mosaic_0001>
module attributes {stable_mosaic.version = 11 : i64} {
  func.func @_stride2_kernel(%arg0: i32, %arg1: memref<9x64x32xbf16, #tpu.memory_space<vmem>>, %arg2: memref<32x146xbf16, #tpu.memory_space<vmem>>, %arg3: memref<9x128xbf16, #tpu.memory_space<vmem>>, %arg4: memref<64x128xbf16, #tpu.memory_space<vmem>>) attributes {dimension_semantics = [#tpu.dimension_semantics<arbitrary>], iteration_bounds = array<i64: 1>, scalar_prefetch = 0 : i64, scratch_operands = 0 : i64, tpu.core_type = #tpu.core_type<tc>, window_params = [{pipeline_mode = #tpu.pipeline_mode<synchronous>, transform_indices = @transform_0, window_bounds = array<i64: 9, 64, 32>}, {pipeline_mode = #tpu.pipeline_mode<synchronous>, transform_indices = @transform_1, window_bounds = array<i64: 32, 146>}, {pipeline_mode = #tpu.pipeline_mode<synchronous>, transform_indices = @transform_2, window_bounds = array<i64: 9, 128>}, {pipeline_mode = #tpu.pipeline_mode<synchronous>, transform_indices = @transform_3, window_bounds = array<i64: 64, 128>}]} {
    %c0 = arith.constant 0 : index
    %c0_0 = arith.constant 0 : index
    %0 = vector.load %arg2[%c0, %c0_0] : memref<32x146xbf16, #tpu.memory_space<vmem>>, vector<32x146xbf16>
    %c0_1 = arith.constant 0 : index
    %c0_2 = arith.constant 0 : index
    %1 = vector.load %arg3[%c0_1, %c0_2] : memref<9x128xbf16, #tpu.memory_space<vmem>>, vector<9x128xbf16>
    %cst = arith.constant 0.000000e+00 : f32
    %2 = vector.broadcast %cst : f32 to vector<64x128xf32>
    %3 = vector.extract_strided_slice %0 {offsets = [0, 0], sizes = [32, 128], strides = [1, 1]} : vector<32x146xbf16> to vector<32x128xbf16>
    %4 = vector.extract_strided_slice %1 {offsets = [0, 0], sizes = [1, 128], strides = [1, 1]} : vector<9x128xbf16> to vector<1x128xbf16>
    %5 = vector.broadcast %4 : vector<1x128xbf16> to vector<32x128xbf16>
    %6 = arith.mulf %3, %5 : vector<32x128xbf16>
    %c0_3 = arith.constant 0 : index
    %c0_4 = arith.constant 0 : index
    %c0_5 = arith.constant 0 : index
    %7 = vector.load %arg1[%c0_3, %c0_4, %c0_5] : memref<9x64x32xbf16, #tpu.memory_space<vmem>>, vector<1x64x32xbf16>
    %8 = vector.shape_cast %7 : vector<1x64x32xbf16> to vector<64x32xbf16>
    %cst_6 = arith.constant dense<0.000000e+00> : vector<64x128xf32>
    %9 = tpu.matmul %8, %6, %cst_6 {dimension_numbers = #tpu.dot_dimension_numbers<[1], [0], [0], [1], [0, 0, 1, 1], [], []>} : vector<64x32xbf16>, vector<32x128xbf16>, vector<64x128xf32> -> vector<64x128xf32>
    %10 = arith.addf %2, %9 : vector<64x128xf32>
    %11 = vector.extract_strided_slice %0 {offsets = [0, 1], sizes = [32, 128], strides = [1, 1]} : vector<32x146xbf16> to vector<32x128xbf16>
    %12 = vector.extract_strided_slice %1 {offsets = [1, 0], sizes = [1, 128], strides = [1, 1]} : vector<9x128xbf16> to vector<1x128xbf16>
    %13 = vector.broadcast %12 : vector<1x128xbf16> to vector<32x128xbf16>
    %14 = arith.mulf %11, %13 : vector<32x128xbf16>
    %c1 = arith.constant 1 : index
    %c0_7 = arith.constant 0 : index
    %c0_8 = arith.constant 0 : index
    %15 = vector.load %arg1[%c1, %c0_7, %c0_8] : memref<9x64x32xbf16, #tpu.memory_space<vmem>>, vector<1x64x32xbf16>
    %16 = vector.shape_cast %15 : vector<1x64x32xbf16> to vector<64x32xbf16>
    %cst_9 = arith.constant dense<0.000000e+00> : vector<64x128xf32>
    %17 = tpu.matmul %16, %14, %cst_9 {dimension_numbers = #tpu.dot_dimension_numbers<[1], [0], [0], [1], [0, 0, 1, 1], [], []>} : vector<64x32xbf16>, vector<32x128xbf16>, vector<64x128xf32> -> vector<64x128xf32>
    %18 = arith.addf %10, %17 : vector<64x128xf32>
    %19 = vector.extract_strided_slice %0 {offsets = [0, 2], sizes = [32, 128], strides = [1, 1]} : vector<32x146xbf16> to vector<32x128xbf16>
    %20 = vector.extract_strided_slice %1 {offsets = [2, 0], sizes = [1, 128], strides = [1, 1]} : vector<9x128xbf16> to vector<1x128xbf16>
    %21 = vector.broadcast %20 : vector<1x128xbf16> to vector<32x128xbf16>
    %22 = arith.mulf %19, %21 : vector<32x128xbf16>
    %c2 = arith.constant 2 : index
    %c0_10 = arith.constant 0 : index
    %c0_11 = arith.constant 0 : index
    %23 = vector.load %arg1[%c2, %c0_10, %c0_11] : memref<9x64x32xbf16, #tpu.memory_space<vmem>>, vector<1x64x32xbf16>
    %24 = vector.shape_cast %23 : vector<1x64x32xbf16> to vector<64x32xbf16>
    %cst_12 = arith.constant dense<0.000000e+00> : vector<64x128xf32>
    %25 = tpu.matmul %24, %22, %cst_12 {dimension_numbers = #tpu.dot_dimension_numbers<[1], [0], [0], [1], [0, 0, 1, 1], [], []>} : vector<64x32xbf16>, vector<32x128xbf16>, vector<64x128xf32> -> vector<64x128xf32>
    %26 = arith.addf %18, %25 : vector<64x128xf32>
    %27 = vector.extract_strided_slice %0 {offsets = [0, 8], sizes = [32, 128], strides = [1, 1]} : vector<32x146xbf16> to vector<32x128xbf16>
    %28 = vector.extract_strided_slice %1 {offsets = [3, 0], sizes = [1, 128], strides = [1, 1]} : vector<9x128xbf16> to vector<1x128xbf16>
    %29 = vector.broadcast %28 : vector<1x128xbf16> to vector<32x128xbf16>
    %30 = arith.mulf %27, %29 : vector<32x128xbf16>
    %c3 = arith.constant 3 : index
    %c0_13 = arith.constant 0 : index
    %c0_14 = arith.constant 0 : index
    %31 = vector.load %arg1[%c3, %c0_13, %c0_14] : memref<9x64x32xbf16, #tpu.memory_space<vmem>>, vector<1x64x32xbf16>
    %32 = vector.shape_cast %31 : vector<1x64x32xbf16> to vector<64x32xbf16>
    %cst_15 = arith.constant dense<0.000000e+00> : vector<64x128xf32>
    %33 = tpu.matmul %32, %30, %cst_15 {dimension_numbers = #tpu.dot_dimension_numbers<[1], [0], [0], [1], [0, 0, 1, 1], [], []>} : vector<64x32xbf16>, vector<32x128xbf16>, vector<64x128xf32> -> vector<64x128xf32>
    %34 = arith.addf %26, %33 : vector<64x128xf32>
    %35 = vector.extract_strided_slice %0 {offsets = [0, 9], sizes = [32, 128], strides = [1, 1]} : vector<32x146xbf16> to vector<32x128xbf16>
    %36 = vector.extract_strided_slice %1 {offsets = [4, 0], sizes = [1, 128], strides = [1, 1]} : vector<9x128xbf16> to vector<1x128xbf16>
    %37 = vector.broadcast %36 : vector<1x128xbf16> to vector<32x128xbf16>
    %38 = arith.mulf %35, %37 : vector<32x128xbf16>
    %c4 = arith.constant 4 : index
    %c0_16 = arith.constant 0 : index
    %c0_17 = arith.constant 0 : index
    %39 = vector.load %arg1[%c4, %c0_16, %c0_17] : memref<9x64x32xbf16, #tpu.memory_space<vmem>>, vector<1x64x32xbf16>
    %40 = vector.shape_cast %39 : vector<1x64x32xbf16> to vector<64x32xbf16>
    %cst_18 = arith.constant dense<0.000000e+00> : vector<64x128xf32>
    %41 = tpu.matmul %40, %38, %cst_18 {dimension_numbers = #tpu.dot_dimension_numbers<[1], [0], [0], [1], [0, 0, 1, 1], [], []>} : vector<64x32xbf16>, vector<32x128xbf16>, vector<64x128xf32> -> vector<64x128xf32>
    %42 = arith.addf %34, %41 : vector<64x128xf32>
    %43 = vector.extract_strided_slice %0 {offsets = [0, 10], sizes = [32, 128], strides = [1, 1]} : vector<32x146xbf16> to vector<32x128xbf16>
    %44 = vector.extract_strided_slice %1 {offsets = [5, 0], sizes = [1, 128], strides = [1, 1]} : vector<9x128xbf16> to vector<1x128xbf16>
    %45 = vector.broadcast %44 : vector<1x128xbf16> to vector<32x128xbf16>
    %46 = arith.mulf %43, %45 : vector<32x128xbf16>
    %c5 = arith.constant 5 : index
    %c0_19 = arith.constant 0 : index
    %c0_20 = arith.constant 0 : index
    %47 = vector.load %arg1[%c5, %c0_19, %c0_20] : memref<9x64x32xbf16, #tpu.memory_space<vmem>>, vector<1x64x32xbf16>
    %48 = vector.shape_cast %47 : vector<1x64x32xbf16> to vector<64x32xbf16>
    %cst_21 = arith.constant dense<0.000000e+00> : vector<64x128xf32>
    %49 = tpu.matmul %48, %46, %cst_21 {dimension_numbers = #tpu.dot_dimension_numbers<[1], [0], [0], [1], [0, 0, 1, 1], [], []>} : vector<64x32xbf16>, vector<32x128xbf16>, vector<64x128xf32> -> vector<64x128xf32>
    %50 = arith.addf %42, %49 : vector<64x128xf32>
    %51 = vector.extract_strided_slice %0 {offsets = [0, 16], sizes = [32, 128], strides = [1, 1]} : vector<32x146xbf16> to vector<32x128xbf16>
    %52 = vector.extract_strided_slice %1 {offsets = [6, 0], sizes = [1, 128], strides = [1, 1]} : vector<9x128xbf16> to vector<1x128xbf16>
    %53 = vector.broadcast %52 : vector<1x128xbf16> to vector<32x128xbf16>
    %54 = arith.mulf %51, %53 : vector<32x128xbf16>
    %c6 = arith.constant 6 : index
    %c0_22 = arith.constant 0 : index
    %c0_23 = arith.constant 0 : index
    %55 = vector.load %arg1[%c6, %c0_22, %c0_23] : memref<9x64x32xbf16, #tpu.memory_space<vmem>>, vector<1x64x32xbf16>
    %56 = vector.shape_cast %55 : vector<1x64x32xbf16> to vector<64x32xbf16>
    %cst_24 = arith.constant dense<0.000000e+00> : vector<64x128xf32>
    %57 = tpu.matmul %56, %54, %cst_24 {dimension_numbers = #tpu.dot_dimension_numbers<[1], [0], [0], [1], [0, 0, 1, 1], [], []>} : vector<64x32xbf16>, vector<32x128xbf16>, vector<64x128xf32> -> vector<64x128xf32>
    %58 = arith.addf %50, %57 : vector<64x128xf32>
    %59 = vector.extract_strided_slice %0 {offsets = [0, 17], sizes = [32, 128], strides = [1, 1]} : vector<32x146xbf16> to vector<32x128xbf16>
    %60 = vector.extract_strided_slice %1 {offsets = [7, 0], sizes = [1, 128], strides = [1, 1]} : vector<9x128xbf16> to vector<1x128xbf16>
    %61 = vector.broadcast %60 : vector<1x128xbf16> to vector<32x128xbf16>
    %62 = arith.mulf %59, %61 : vector<32x128xbf16>
    %c7 = arith.constant 7 : index
    %c0_25 = arith.constant 0 : index
    %c0_26 = arith.constant 0 : index
    %63 = vector.load %arg1[%c7, %c0_25, %c0_26] : memref<9x64x32xbf16, #tpu.memory_space<vmem>>, vector<1x64x32xbf16>
    %64 = vector.shape_cast %63 : vector<1x64x32xbf16> to vector<64x32xbf16>
    %cst_27 = arith.constant dense<0.000000e+00> : vector<64x128xf32>
    %65 = tpu.matmul %64, %62, %cst_27 {dimension_numbers = #tpu.dot_dimension_numbers<[1], [0], [0], [1], [0, 0, 1, 1], [], []>} : vector<64x32xbf16>, vector<32x128xbf16>, vector<64x128xf32> -> vector<64x128xf32>
    %66 = arith.addf %58, %65 : vector<64x128xf32>
    %67 = vector.extract_strided_slice %0 {offsets = [0, 18], sizes = [32, 128], strides = [1, 1]} : vector<32x146xbf16> to vector<32x128xbf16>
    %68 = vector.extract_strided_slice %1 {offsets = [8, 0], sizes = [1, 128], strides = [1, 1]} : vector<9x128xbf16> to vector<1x128xbf16>
    %69 = vector.broadcast %68 : vector<1x128xbf16> to vector<32x128xbf16>
    %70 = arith.mulf %67, %69 : vector<32x128xbf16>
    %c8 = arith.constant 8 : index
    %c0_28 = arith.constant 0 : index
    %c0_29 = arith.constant 0 : index
    %71 = vector.load %arg1[%c8, %c0_28, %c0_29] : memref<9x64x32xbf16, #tpu.memory_space<vmem>>, vector<1x64x32xbf16>
    %72 = vector.shape_cast %71 : vector<1x64x32xbf16> to vector<64x32xbf16>
    %cst_30 = arith.constant dense<0.000000e+00> : vector<64x128xf32>
    %73 = tpu.matmul %72, %70, %cst_30 {dimension_numbers = #tpu.dot_dimension_numbers<[1], [0], [0], [1], [0, 0, 1, 1], [], []>} : vector<64x32xbf16>, vector<32x128xbf16>, vector<64x128xf32> -> vector<64x128xf32>
    %74 = arith.addf %66, %73 : vector<64x128xf32>
    %cst_31 = arith.constant 0.000000e+00 : f32
    %75 = vector.broadcast %cst_31 : f32 to vector<64x128xf32>
    %76 = arith.maximumf %74, %75 : vector<64x128xf32>
    %77 = arith.truncf %76 : vector<64x128xf32> to vector<64x128xbf16>
    %c0_32 = arith.constant 0 : index
    %c0_33 = arith.constant 0 : index
    %78 = vector.load %arg4[%c0_32, %c0_33] : memref<64x128xbf16, #tpu.memory_space<vmem>>, vector<64x128xbf16>
    tpu.vector_store %arg4[%c0_32, %c0_33], %77 {strides = array<i32>} : memref<64x128xbf16, #tpu.memory_space<vmem>>, vector<64x128xbf16>,
    return
  }
  func.func @transform_0(%arg0: i32) -> (i32, i32, i32) {
    %c0_i32 = arith.constant 0 : i32
    %c0_i32_0 = arith.constant 0 : i32
    %c0_i32_1 = arith.constant 0 : i32
    %c0_i32_2 = arith.constant 0 : i32
    return %c0_i32, %c0_i32_0, %c0_i32_1 : i32, i32, i32
  }
  func.func @transform_1(%arg0: i32) -> (i32, i32) {
    %c0_i32 = arith.constant 0 : i32
    %c0_i32_0 = arith.constant 0 : i32
    %c0_i32_1 = arith.constant 0 : i32
    return %c0_i32, %c0_i32_0 : i32, i32
  }
  func.func @transform_2(%arg0: i32) -> (i32, i32) {
    %c0_i32 = arith.constant 0 : i32
    %c0_i32_0 = arith.constant 0 : i32
    %c0_i32_1 = arith.constant 0 : i32
    return %c0_i32, %c0_i32_0 : i32, i32
  }
  func.func @transform_3(%arg0: i32) -> (i32, i32) {
    %c0_i32 = arith.constant 0 : i32
    %c0_i32_0 = arith.constant 0 : i32
    %c0_i32_1 = arith.constant 0 : i32
    return %c0_i32, %c0_i32_0 : i32, i32
  }
}

module attributes {stable_mosaic.version = 11 : i64} {
  func.func @_stride2_kernel(%arg0: i32, %arg1: memref<9x32x16xbf16, #tpu.memory_space<vmem>>, %arg2: memref<16x546xbf16, #tpu.memory_space<vmem>>, %arg3: memref<9x512xbf16, #tpu.memory_space<vmem>>, %arg4: memref<32x512xbf16, #tpu.memory_space<vmem>>) attributes {dimension_semantics = [#tpu.dimension_semantics<arbitrary>], iteration_bounds = array<i64: 1>, scalar_prefetch = 0 : i64, scratch_operands = 0 : i64, tpu.core_type = #tpu.core_type<tc>, window_params = [{pipeline_mode = #tpu.pipeline_mode<synchronous>, transform_indices = @transform_0, window_bounds = array<i64: 9, 32, 16>}, {pipeline_mode = #tpu.pipeline_mode<synchronous>, transform_indices = @transform_1, window_bounds = array<i64: 16, 546>}, {pipeline_mode = #tpu.pipeline_mode<synchronous>, transform_indices = @transform_2, window_bounds = array<i64: 9, 512>}, {pipeline_mode = #tpu.pipeline_mode<synchronous>, transform_indices = @transform_3, window_bounds = array<i64: 32, 512>}]} {
    %c0 = arith.constant 0 : index
    %c0_0 = arith.constant 0 : index
    %0 = vector.load %arg2[%c0, %c0_0] : memref<16x546xbf16, #tpu.memory_space<vmem>>, vector<16x546xbf16>
    %c0_1 = arith.constant 0 : index
    %c0_2 = arith.constant 0 : index
    %1 = vector.load %arg3[%c0_1, %c0_2] : memref<9x512xbf16, #tpu.memory_space<vmem>>, vector<9x512xbf16>
    %cst = arith.constant 0.000000e+00 : f32
    %2 = vector.broadcast %cst : f32 to vector<32x512xf32>
    %3 = vector.extract_strided_slice %0 {offsets = [0, 0], sizes = [16, 512], strides = [1, 1]} : vector<16x546xbf16> to vector<16x512xbf16>
    %4 = vector.extract_strided_slice %1 {offsets = [0, 0], sizes = [1, 512], strides = [1, 1]} : vector<9x512xbf16> to vector<1x512xbf16>
    %5 = vector.broadcast %4 : vector<1x512xbf16> to vector<16x512xbf16>
    %6 = arith.mulf %3, %5 : vector<16x512xbf16>
    %c0_3 = arith.constant 0 : index
    %c0_4 = arith.constant 0 : index
    %c0_5 = arith.constant 0 : index
    %7 = vector.load %arg1[%c0_3, %c0_4, %c0_5] : memref<9x32x16xbf16, #tpu.memory_space<vmem>>, vector<1x32x16xbf16>
    %8 = vector.shape_cast %7 : vector<1x32x16xbf16> to vector<32x16xbf16>
    %cst_6 = arith.constant dense<0.000000e+00> : vector<32x512xf32>
    %9 = tpu.matmul %8, %6, %cst_6 {dimension_numbers = #tpu.dot_dimension_numbers<[1], [0], [0], [1], [0, 0, 1, 1], [], []>} : vector<32x16xbf16>, vector<16x512xbf16>, vector<32x512xf32> -> vector<32x512xf32>
    %10 = arith.addf %2, %9 : vector<32x512xf32>
    %11 = vector.extract_strided_slice %0 {offsets = [0, 1], sizes = [16, 512], strides = [1, 1]} : vector<16x546xbf16> to vector<16x512xbf16>
    %12 = vector.extract_strided_slice %1 {offsets = [1, 0], sizes = [1, 512], strides = [1, 1]} : vector<9x512xbf16> to vector<1x512xbf16>
    %13 = vector.broadcast %12 : vector<1x512xbf16> to vector<16x512xbf16>
    %14 = arith.mulf %11, %13 : vector<16x512xbf16>
    %c1 = arith.constant 1 : index
    %c0_7 = arith.constant 0 : index
    %c0_8 = arith.constant 0 : index
    %15 = vector.load %arg1[%c1, %c0_7, %c0_8] : memref<9x32x16xbf16, #tpu.memory_space<vmem>>, vector<1x32x16xbf16>
    %16 = vector.shape_cast %15 : vector<1x32x16xbf16> to vector<32x16xbf16>
    %cst_9 = arith.constant dense<0.000000e+00> : vector<32x512xf32>
    %17 = tpu.matmul %16, %14, %cst_9 {dimension_numbers = #tpu.dot_dimension_numbers<[1], [0], [0], [1], [0, 0, 1, 1], [], []>} : vector<32x16xbf16>, vector<16x512xbf16>, vector<32x512xf32> -> vector<32x512xf32>
    %18 = arith.addf %10, %17 : vector<32x512xf32>
    %19 = vector.extract_strided_slice %0 {offsets = [0, 2], sizes = [16, 512], strides = [1, 1]} : vector<16x546xbf16> to vector<16x512xbf16>
    %20 = vector.extract_strided_slice %1 {offsets = [2, 0], sizes = [1, 512], strides = [1, 1]} : vector<9x512xbf16> to vector<1x512xbf16>
    %21 = vector.broadcast %20 : vector<1x512xbf16> to vector<16x512xbf16>
    %22 = arith.mulf %19, %21 : vector<16x512xbf16>
    %c2 = arith.constant 2 : index
    %c0_10 = arith.constant 0 : index
    %c0_11 = arith.constant 0 : index
    %23 = vector.load %arg1[%c2, %c0_10, %c0_11] : memref<9x32x16xbf16, #tpu.memory_space<vmem>>, vector<1x32x16xbf16>
    %24 = vector.shape_cast %23 : vector<1x32x16xbf16> to vector<32x16xbf16>
    %cst_12 = arith.constant dense<0.000000e+00> : vector<32x512xf32>
    %25 = tpu.matmul %24, %22, %cst_12 {dimension_numbers = #tpu.dot_dimension_numbers<[1], [0], [0], [1], [0, 0, 1, 1], [], []>} : vector<32x16xbf16>, vector<16x512xbf16>, vector<32x512xf32> -> vector<32x512xf32>
    %26 = arith.addf %18, %25 : vector<32x512xf32>
    %27 = vector.extract_strided_slice %0 {offsets = [0, 16], sizes = [16, 512], strides = [1, 1]} : vector<16x546xbf16> to vector<16x512xbf16>
    %28 = vector.extract_strided_slice %1 {offsets = [3, 0], sizes = [1, 512], strides = [1, 1]} : vector<9x512xbf16> to vector<1x512xbf16>
    %29 = vector.broadcast %28 : vector<1x512xbf16> to vector<16x512xbf16>
    %30 = arith.mulf %27, %29 : vector<16x512xbf16>
    %c3 = arith.constant 3 : index
    %c0_13 = arith.constant 0 : index
    %c0_14 = arith.constant 0 : index
    %31 = vector.load %arg1[%c3, %c0_13, %c0_14] : memref<9x32x16xbf16, #tpu.memory_space<vmem>>, vector<1x32x16xbf16>
    %32 = vector.shape_cast %31 : vector<1x32x16xbf16> to vector<32x16xbf16>
    %cst_15 = arith.constant dense<0.000000e+00> : vector<32x512xf32>
    %33 = tpu.matmul %32, %30, %cst_15 {dimension_numbers = #tpu.dot_dimension_numbers<[1], [0], [0], [1], [0, 0, 1, 1], [], []>} : vector<32x16xbf16>, vector<16x512xbf16>, vector<32x512xf32> -> vector<32x512xf32>
    %34 = arith.addf %26, %33 : vector<32x512xf32>
    %35 = vector.extract_strided_slice %0 {offsets = [0, 17], sizes = [16, 512], strides = [1, 1]} : vector<16x546xbf16> to vector<16x512xbf16>
    %36 = vector.extract_strided_slice %1 {offsets = [4, 0], sizes = [1, 512], strides = [1, 1]} : vector<9x512xbf16> to vector<1x512xbf16>
    %37 = vector.broadcast %36 : vector<1x512xbf16> to vector<16x512xbf16>
    %38 = arith.mulf %35, %37 : vector<16x512xbf16>
    %c4 = arith.constant 4 : index
    %c0_16 = arith.constant 0 : index
    %c0_17 = arith.constant 0 : index
    %39 = vector.load %arg1[%c4, %c0_16, %c0_17] : memref<9x32x16xbf16, #tpu.memory_space<vmem>>, vector<1x32x16xbf16>
    %40 = vector.shape_cast %39 : vector<1x32x16xbf16> to vector<32x16xbf16>
    %cst_18 = arith.constant dense<0.000000e+00> : vector<32x512xf32>
    %41 = tpu.matmul %40, %38, %cst_18 {dimension_numbers = #tpu.dot_dimension_numbers<[1], [0], [0], [1], [0, 0, 1, 1], [], []>} : vector<32x16xbf16>, vector<16x512xbf16>, vector<32x512xf32> -> vector<32x512xf32>
    %42 = arith.addf %34, %41 : vector<32x512xf32>
    %43 = vector.extract_strided_slice %0 {offsets = [0, 18], sizes = [16, 512], strides = [1, 1]} : vector<16x546xbf16> to vector<16x512xbf16>
    %44 = vector.extract_strided_slice %1 {offsets = [5, 0], sizes = [1, 512], strides = [1, 1]} : vector<9x512xbf16> to vector<1x512xbf16>
    %45 = vector.broadcast %44 : vector<1x512xbf16> to vector<16x512xbf16>
    %46 = arith.mulf %43, %45 : vector<16x512xbf16>
    %c5 = arith.constant 5 : index
    %c0_19 = arith.constant 0 : index
    %c0_20 = arith.constant 0 : index
    %47 = vector.load %arg1[%c5, %c0_19, %c0_20] : memref<9x32x16xbf16, #tpu.memory_space<vmem>>, vector<1x32x16xbf16>
    %48 = vector.shape_cast %47 : vector<1x32x16xbf16> to vector<32x16xbf16>
    %cst_21 = arith.constant dense<0.000000e+00> : vector<32x512xf32>
    %49 = tpu.matmul %48, %46, %cst_21 {dimension_numbers = #tpu.dot_dimension_numbers<[1], [0], [0], [1], [0, 0, 1, 1], [], []>} : vector<32x16xbf16>, vector<16x512xbf16>, vector<32x512xf32> -> vector<32x512xf32>
    %50 = arith.addf %42, %49 : vector<32x512xf32>
    %51 = vector.extract_strided_slice %0 {offsets = [0, 32], sizes = [16, 512], strides = [1, 1]} : vector<16x546xbf16> to vector<16x512xbf16>
    %52 = vector.extract_strided_slice %1 {offsets = [6, 0], sizes = [1, 512], strides = [1, 1]} : vector<9x512xbf16> to vector<1x512xbf16>
    %53 = vector.broadcast %52 : vector<1x512xbf16> to vector<16x512xbf16>
    %54 = arith.mulf %51, %53 : vector<16x512xbf16>
    %c6 = arith.constant 6 : index
    %c0_22 = arith.constant 0 : index
    %c0_23 = arith.constant 0 : index
    %55 = vector.load %arg1[%c6, %c0_22, %c0_23] : memref<9x32x16xbf16, #tpu.memory_space<vmem>>, vector<1x32x16xbf16>
    %56 = vector.shape_cast %55 : vector<1x32x16xbf16> to vector<32x16xbf16>
    %cst_24 = arith.constant dense<0.000000e+00> : vector<32x512xf32>
    %57 = tpu.matmul %56, %54, %cst_24 {dimension_numbers = #tpu.dot_dimension_numbers<[1], [0], [0], [1], [0, 0, 1, 1], [], []>} : vector<32x16xbf16>, vector<16x512xbf16>, vector<32x512xf32> -> vector<32x512xf32>
    %58 = arith.addf %50, %57 : vector<32x512xf32>
    %59 = vector.extract_strided_slice %0 {offsets = [0, 33], sizes = [16, 512], strides = [1, 1]} : vector<16x546xbf16> to vector<16x512xbf16>
    %60 = vector.extract_strided_slice %1 {offsets = [7, 0], sizes = [1, 512], strides = [1, 1]} : vector<9x512xbf16> to vector<1x512xbf16>
    %61 = vector.broadcast %60 : vector<1x512xbf16> to vector<16x512xbf16>
    %62 = arith.mulf %59, %61 : vector<16x512xbf16>
    %c7 = arith.constant 7 : index
    %c0_25 = arith.constant 0 : index
    %c0_26 = arith.constant 0 : index
    %63 = vector.load %arg1[%c7, %c0_25, %c0_26] : memref<9x32x16xbf16, #tpu.memory_space<vmem>>, vector<1x32x16xbf16>
    %64 = vector.shape_cast %63 : vector<1x32x16xbf16> to vector<32x16xbf16>
    %cst_27 = arith.constant dense<0.000000e+00> : vector<32x512xf32>
    %65 = tpu.matmul %64, %62, %cst_27 {dimension_numbers = #tpu.dot_dimension_numbers<[1], [0], [0], [1], [0, 0, 1, 1], [], []>} : vector<32x16xbf16>, vector<16x512xbf16>, vector<32x512xf32> -> vector<32x512xf32>
    %66 = arith.addf %58, %65 : vector<32x512xf32>
    %67 = vector.extract_strided_slice %0 {offsets = [0, 34], sizes = [16, 512], strides = [1, 1]} : vector<16x546xbf16> to vector<16x512xbf16>
    %68 = vector.extract_strided_slice %1 {offsets = [8, 0], sizes = [1, 512], strides = [1, 1]} : vector<9x512xbf16> to vector<1x512xbf16>
    %69 = vector.broadcast %68 : vector<1x512xbf16> to vector<16x512xbf16>
    %70 = arith.mulf %67, %69 : vector<16x512xbf16>
    %c8 = arith.constant 8 : index
    %c0_28 = arith.constant 0 : index
    %c0_29 = arith.constant 0 : index
    %71 = vector.load %arg1[%c8, %c0_28, %c0_29] : memref<9x32x16xbf16, #tpu.memory_space<vmem>>, vector<1x32x16xbf16>
    %72 = vector.shape_cast %71 : vector<1x32x16xbf16> to vector<32x16xbf16>
    %cst_30 = arith.constant dense<0.000000e+00> : vector<32x512xf32>
    %73 = tpu.matmul %72, %70, %cst_30 {dimension_numbers = #tpu.dot_dimension_numbers<[1], [0], [0], [1], [0, 0, 1, 1], [], []>} : vector<32x16xbf16>, vector<16x512xbf16>, vector<32x512xf32> -> vector<32x512xf32>
    %74 = arith.addf %66, %73 : vector<32x512xf32>
    %cst_31 = arith.constant 0.000000e+00 : f32
    %75 = vector.broadcast %cst_31 : f32 to vector<32x512xf32>
    %76 = arith.maximumf %74, %75 : vector<32x512xf32>
    %77 = arith.truncf %76 : vector<32x512xf32> to vector<32x512xbf16>
    %c0_32 = arith.constant 0 : index
    %c0_33 = arith.constant 0 : index
    %78 = vector.load %arg4[%c0_32, %c0_33] : memref<32x512xbf16, #tpu.memory_space<vmem>>, vector<32x512xbf16>
    tpu.vector_store %arg4[%c0_32, %c0_33], %77 {strides = array<i32>} : memref<32x512xbf16, #tpu.memory_space<vmem>>, vector<32x512xbf16>,
    return
  }
  func.func @transform_0(%arg0: i32) -> (i32, i32, i32) {
    %c0_i32 = arith.constant 0 : i32
    %c0_i32_0 = arith.constant 0 : i32
    %c0_i32_1 = arith.constant 0 : i32
    %c0_i32_2 = arith.constant 0 : i32
    return %c0_i32, %c0_i32_0, %c0_i32_1 : i32, i32, i32
  }
  func.func @transform_1(%arg0: i32) -> (i32, i32) {
    %c0_i32 = arith.constant 0 : i32
    %c0_i32_0 = arith.constant 0 : i32
    %c0_i32_1 = arith.constant 0 : i32
    return %c0_i32, %c0_i32_0 : i32, i32
  }
  func.func @transform_2(%arg0: i32) -> (i32, i32) {
    %c0_i32 = arith.constant 0 : i32
    %c0_i32_0 = arith.constant 0 : i32
    %c0_i32_1 = arith.constant 0 : i32
    return %c0_i32, %c0_i32_0 : i32, i32
  }
  func.func @transform_3(%arg0: i32) -> (i32, i32) {
    %c0_i32 = arith.constant 0 : i32
    %c0_i32_0 = arith.constant 0 : i32
    %c0_i32_1 = arith.constant 0 : i32
    return %c0_i32, %c0_i32_0 : i32, i32
  }
}

module attributes {stable_mosaic.version = 11 : i64} {
  func.func @_stride2_kernel(%arg0: i32, %arg1: memref<9x12x8xbf16, #tpu.memory_space<vmem>>, %arg2: memref<8x2114xbf16, #tpu.memory_space<vmem>>, %arg3: memref<9x2048xbf16, #tpu.memory_space<vmem>>, %arg4: memref<12x1xf32, #tpu.memory_space<vmem>>, %arg5: memref<12x2048xf32, #tpu.memory_space<vmem>>) attributes {dimension_semantics = [#tpu.dimension_semantics<arbitrary>], iteration_bounds = array<i64: 1>, scalar_prefetch = 0 : i64, scratch_operands = 0 : i64, tpu.core_type = #tpu.core_type<tc>, window_params = [{pipeline_mode = #tpu.pipeline_mode<synchronous>, transform_indices = @transform_0, window_bounds = array<i64: 9, 12, 8>}, {pipeline_mode = #tpu.pipeline_mode<synchronous>, transform_indices = @transform_1, window_bounds = array<i64: 8, 2114>}, {pipeline_mode = #tpu.pipeline_mode<synchronous>, transform_indices = @transform_2, window_bounds = array<i64: 9, 2048>}, {pipeline_mode = #tpu.pipeline_mode<synchronous>, transform_indices = @transform_3, window_bounds = array<i64: 12, 1>}, {pipeline_mode = #tpu.pipeline_mode<synchronous>, transform_indices = @transform_4, window_bounds = array<i64: 12, 2048>}]} {
    %c0 = arith.constant 0 : index
    %c0_0 = arith.constant 0 : index
    %0 = vector.load %arg2[%c0, %c0_0] : memref<8x2114xbf16, #tpu.memory_space<vmem>>, vector<8x2114xbf16>
    %c0_1 = arith.constant 0 : index
    %c0_2 = arith.constant 0 : index
    %1 = vector.load %arg3[%c0_1, %c0_2] : memref<9x2048xbf16, #tpu.memory_space<vmem>>, vector<9x2048xbf16>
    %cst = arith.constant 0.000000e+00 : f32
    %2 = vector.broadcast %cst : f32 to vector<12x2048xf32>
    %3 = vector.extract_strided_slice %0 {offsets = [0, 0], sizes = [8, 2048], strides = [1, 1]} : vector<8x2114xbf16> to vector<8x2048xbf16>
    %4 = vector.extract_strided_slice %1 {offsets = [0, 0], sizes = [1, 2048], strides = [1, 1]} : vector<9x2048xbf16> to vector<1x2048xbf16>
    %5 = vector.broadcast %4 : vector<1x2048xbf16> to vector<8x2048xbf16>
    %6 = arith.mulf %3, %5 : vector<8x2048xbf16>
    %c0_3 = arith.constant 0 : index
    %c0_4 = arith.constant 0 : index
    %c0_5 = arith.constant 0 : index
    %7 = vector.load %arg1[%c0_3, %c0_4, %c0_5] : memref<9x12x8xbf16, #tpu.memory_space<vmem>>, vector<1x12x8xbf16>
    %8 = vector.shape_cast %7 : vector<1x12x8xbf16> to vector<12x8xbf16>
    %cst_6 = arith.constant dense<0.000000e+00> : vector<12x2048xf32>
    %9 = tpu.matmul %8, %6, %cst_6 {dimension_numbers = #tpu.dot_dimension_numbers<[1], [0], [0], [1], [0, 0, 1, 1], [], []>} : vector<12x8xbf16>, vector<8x2048xbf16>, vector<12x2048xf32> -> vector<12x2048xf32>
    %10 = arith.addf %2, %9 : vector<12x2048xf32>
    %11 = vector.extract_strided_slice %0 {offsets = [0, 1], sizes = [8, 2048], strides = [1, 1]} : vector<8x2114xbf16> to vector<8x2048xbf16>
    %12 = vector.extract_strided_slice %1 {offsets = [1, 0], sizes = [1, 2048], strides = [1, 1]} : vector<9x2048xbf16> to vector<1x2048xbf16>
    %13 = vector.broadcast %12 : vector<1x2048xbf16> to vector<8x2048xbf16>
    %14 = arith.mulf %11, %13 : vector<8x2048xbf16>
    %c1 = arith.constant 1 : index
    %c0_7 = arith.constant 0 : index
    %c0_8 = arith.constant 0 : index
    %15 = vector.load %arg1[%c1, %c0_7, %c0_8] : memref<9x12x8xbf16, #tpu.memory_space<vmem>>, vector<1x12x8xbf16>
    %16 = vector.shape_cast %15 : vector<1x12x8xbf16> to vector<12x8xbf16>
    %cst_9 = arith.constant dense<0.000000e+00> : vector<12x2048xf32>
    %17 = tpu.matmul %16, %14, %cst_9 {dimension_numbers = #tpu.dot_dimension_numbers<[1], [0], [0], [1], [0, 0, 1, 1], [], []>} : vector<12x8xbf16>, vector<8x2048xbf16>, vector<12x2048xf32> -> vector<12x2048xf32>
    %18 = arith.addf %10, %17 : vector<12x2048xf32>
    %19 = vector.extract_strided_slice %0 {offsets = [0, 2], sizes = [8, 2048], strides = [1, 1]} : vector<8x2114xbf16> to vector<8x2048xbf16>
    %20 = vector.extract_strided_slice %1 {offsets = [2, 0], sizes = [1, 2048], strides = [1, 1]} : vector<9x2048xbf16> to vector<1x2048xbf16>
    %21 = vector.broadcast %20 : vector<1x2048xbf16> to vector<8x2048xbf16>
    %22 = arith.mulf %19, %21 : vector<8x2048xbf16>
    %c2 = arith.constant 2 : index
    %c0_10 = arith.constant 0 : index
    %c0_11 = arith.constant 0 : index
    %23 = vector.load %arg1[%c2, %c0_10, %c0_11] : memref<9x12x8xbf16, #tpu.memory_space<vmem>>, vector<1x12x8xbf16>
    %24 = vector.shape_cast %23 : vector<1x12x8xbf16> to vector<12x8xbf16>
    %cst_12 = arith.constant dense<0.000000e+00> : vector<12x2048xf32>
    %25 = tpu.matmul %24, %22, %cst_12 {dimension_numbers = #tpu.dot_dimension_numbers<[1], [0], [0], [1], [0, 0, 1, 1], [], []>} : vector<12x8xbf16>, vector<8x2048xbf16>, vector<12x2048xf32> -> vector<12x2048xf32>
    %26 = arith.addf %18, %25 : vector<12x2048xf32>
    %27 = vector.extract_strided_slice %0 {offsets = [0, 32], sizes = [8, 2048], strides = [1, 1]} : vector<8x2114xbf16> to vector<8x2048xbf16>
    %28 = vector.extract_strided_slice %1 {offsets = [3, 0], sizes = [1, 2048], strides = [1, 1]} : vector<9x2048xbf16> to vector<1x2048xbf16>
    %29 = vector.broadcast %28 : vector<1x2048xbf16> to vector<8x2048xbf16>
    %30 = arith.mulf %27, %29 : vector<8x2048xbf16>
    %c3 = arith.constant 3 : index
    %c0_13 = arith.constant 0 : index
    %c0_14 = arith.constant 0 : index
    %31 = vector.load %arg1[%c3, %c0_13, %c0_14] : memref<9x12x8xbf16, #tpu.memory_space<vmem>>, vector<1x12x8xbf16>
    %32 = vector.shape_cast %31 : vector<1x12x8xbf16> to vector<12x8xbf16>
    %cst_15 = arith.constant dense<0.000000e+00> : vector<12x2048xf32>
    %33 = tpu.matmul %32, %30, %cst_15 {dimension_numbers = #tpu.dot_dimension_numbers<[1], [0], [0], [1], [0, 0, 1, 1], [], []>} : vector<12x8xbf16>, vector<8x2048xbf16>, vector<12x2048xf32> -> vector<12x2048xf32>
    %34 = arith.addf %26, %33 : vector<12x2048xf32>
    %35 = vector.extract_strided_slice %0 {offsets = [0, 33], sizes = [8, 2048], strides = [1, 1]} : vector<8x2114xbf16> to vector<8x2048xbf16>
    %36 = vector.extract_strided_slice %1 {offsets = [4, 0], sizes = [1, 2048], strides = [1, 1]} : vector<9x2048xbf16> to vector<1x2048xbf16>
    %37 = vector.broadcast %36 : vector<1x2048xbf16> to vector<8x2048xbf16>
    %38 = arith.mulf %35, %37 : vector<8x2048xbf16>
    %c4 = arith.constant 4 : index
    %c0_16 = arith.constant 0 : index
    %c0_17 = arith.constant 0 : index
    %39 = vector.load %arg1[%c4, %c0_16, %c0_17] : memref<9x12x8xbf16, #tpu.memory_space<vmem>>, vector<1x12x8xbf16>
    %40 = vector.shape_cast %39 : vector<1x12x8xbf16> to vector<12x8xbf16>
    %cst_18 = arith.constant dense<0.000000e+00> : vector<12x2048xf32>
    %41 = tpu.matmul %40, %38, %cst_18 {dimension_numbers = #tpu.dot_dimension_numbers<[1], [0], [0], [1], [0, 0, 1, 1], [], []>} : vector<12x8xbf16>, vector<8x2048xbf16>, vector<12x2048xf32> -> vector<12x2048xf32>
    %42 = arith.addf %34, %41 : vector<12x2048xf32>
    %43 = vector.extract_strided_slice %0 {offsets = [0, 34], sizes = [8, 2048], strides = [1, 1]} : vector<8x2114xbf16> to vector<8x2048xbf16>
    %44 = vector.extract_strided_slice %1 {offsets = [5, 0], sizes = [1, 2048], strides = [1, 1]} : vector<9x2048xbf16> to vector<1x2048xbf16>
    %45 = vector.broadcast %44 : vector<1x2048xbf16> to vector<8x2048xbf16>
    %46 = arith.mulf %43, %45 : vector<8x2048xbf16>
    %c5 = arith.constant 5 : index
    %c0_19 = arith.constant 0 : index
    %c0_20 = arith.constant 0 : index
    %47 = vector.load %arg1[%c5, %c0_19, %c0_20] : memref<9x12x8xbf16, #tpu.memory_space<vmem>>, vector<1x12x8xbf16>
    %48 = vector.shape_cast %47 : vector<1x12x8xbf16> to vector<12x8xbf16>
    %cst_21 = arith.constant dense<0.000000e+00> : vector<12x2048xf32>
    %49 = tpu.matmul %48, %46, %cst_21 {dimension_numbers = #tpu.dot_dimension_numbers<[1], [0], [0], [1], [0, 0, 1, 1], [], []>} : vector<12x8xbf16>, vector<8x2048xbf16>, vector<12x2048xf32> -> vector<12x2048xf32>
    %50 = arith.addf %42, %49 : vector<12x2048xf32>
    %51 = vector.extract_strided_slice %0 {offsets = [0, 64], sizes = [8, 2048], strides = [1, 1]} : vector<8x2114xbf16> to vector<8x2048xbf16>
    %52 = vector.extract_strided_slice %1 {offsets = [6, 0], sizes = [1, 2048], strides = [1, 1]} : vector<9x2048xbf16> to vector<1x2048xbf16>
    %53 = vector.broadcast %52 : vector<1x2048xbf16> to vector<8x2048xbf16>
    %54 = arith.mulf %51, %53 : vector<8x2048xbf16>
    %c6 = arith.constant 6 : index
    %c0_22 = arith.constant 0 : index
    %c0_23 = arith.constant 0 : index
    %55 = vector.load %arg1[%c6, %c0_22, %c0_23] : memref<9x12x8xbf16, #tpu.memory_space<vmem>>, vector<1x12x8xbf16>
    %56 = vector.shape_cast %55 : vector<1x12x8xbf16> to vector<12x8xbf16>
    %cst_24 = arith.constant dense<0.000000e+00> : vector<12x2048xf32>
    %57 = tpu.matmul %56, %54, %cst_24 {dimension_numbers = #tpu.dot_dimension_numbers<[1], [0], [0], [1], [0, 0, 1, 1], [], []>} : vector<12x8xbf16>, vector<8x2048xbf16>, vector<12x2048xf32> -> vector<12x2048xf32>
    %58 = arith.addf %50, %57 : vector<12x2048xf32>
    %59 = vector.extract_strided_slice %0 {offsets = [0, 65], sizes = [8, 2048], strides = [1, 1]} : vector<8x2114xbf16> to vector<8x2048xbf16>
    %60 = vector.extract_strided_slice %1 {offsets = [7, 0], sizes = [1, 2048], strides = [1, 1]} : vector<9x2048xbf16> to vector<1x2048xbf16>
    %61 = vector.broadcast %60 : vector<1x2048xbf16> to vector<8x2048xbf16>
    %62 = arith.mulf %59, %61 : vector<8x2048xbf16>
    %c7 = arith.constant 7 : index
    %c0_25 = arith.constant 0 : index
    %c0_26 = arith.constant 0 : index
    %63 = vector.load %arg1[%c7, %c0_25, %c0_26] : memref<9x12x8xbf16, #tpu.memory_space<vmem>>, vector<1x12x8xbf16>
    %64 = vector.shape_cast %63 : vector<1x12x8xbf16> to vector<12x8xbf16>
    %cst_27 = arith.constant dense<0.000000e+00> : vector<12x2048xf32>
    %65 = tpu.matmul %64, %62, %cst_27 {dimension_numbers = #tpu.dot_dimension_numbers<[1], [0], [0], [1], [0, 0, 1, 1], [], []>} : vector<12x8xbf16>, vector<8x2048xbf16>, vector<12x2048xf32> -> vector<12x2048xf32>
    %66 = arith.addf %58, %65 : vector<12x2048xf32>
    %67 = vector.extract_strided_slice %0 {offsets = [0, 66], sizes = [8, 2048], strides = [1, 1]} : vector<8x2114xbf16> to vector<8x2048xbf16>
    %68 = vector.extract_strided_slice %1 {offsets = [8, 0], sizes = [1, 2048], strides = [1, 1]} : vector<9x2048xbf16> to vector<1x2048xbf16>
    %69 = vector.broadcast %68 : vector<1x2048xbf16> to vector<8x2048xbf16>
    %70 = arith.mulf %67, %69 : vector<8x2048xbf16>
    %c8 = arith.constant 8 : index
    %c0_28 = arith.constant 0 : index
    %c0_29 = arith.constant 0 : index
    %71 = vector.load %arg1[%c8, %c0_28, %c0_29] : memref<9x12x8xbf16, #tpu.memory_space<vmem>>, vector<1x12x8xbf16>
    %72 = vector.shape_cast %71 : vector<1x12x8xbf16> to vector<12x8xbf16>
    %cst_30 = arith.constant dense<0.000000e+00> : vector<12x2048xf32>
    %73 = tpu.matmul %72, %70, %cst_30 {dimension_numbers = #tpu.dot_dimension_numbers<[1], [0], [0], [1], [0, 0, 1, 1], [], []>} : vector<12x8xbf16>, vector<8x2048xbf16>, vector<12x2048xf32> -> vector<12x2048xf32>
    %74 = arith.addf %66, %73 : vector<12x2048xf32>
    %c0_31 = arith.constant 0 : index
    %c0_32 = arith.constant 0 : index
    %75 = vector.load %arg4[%c0_31, %c0_32] : memref<12x1xf32, #tpu.memory_space<vmem>>, vector<12x1xf32>
    %76 = vector.broadcast %75 : vector<12x1xf32> to vector<12x2048xf32>
    %77 = arith.addf %74, %76 : vector<12x2048xf32>
    %78 = math.tanh %77 : vector<12x2048xf32>
    %c0_33 = arith.constant 0 : index
    %c0_34 = arith.constant 0 : index
    %79 = vector.load %arg5[%c0_33, %c0_34] : memref<12x2048xf32, #tpu.memory_space<vmem>>, vector<12x2048xf32>
    tpu.vector_store %arg5[%c0_33, %c0_34], %78 {strides = array<i32>} : memref<12x2048xf32, #tpu.memory_space<vmem>>, vector<12x2048xf32>,
    return
  }
  func.func @transform_0(%arg0: i32) -> (i32, i32, i32) {
    %c0_i32 = arith.constant 0 : i32
    %c0_i32_0 = arith.constant 0 : i32
    %c0_i32_1 = arith.constant 0 : i32
    %c0_i32_2 = arith.constant 0 : i32
    return %c0_i32, %c0_i32_0, %c0_i32_1 : i32, i32, i32
  }
  func.func @transform_1(%arg0: i32) -> (i32, i32) {
    %c0_i32 = arith.constant 0 : i32
    %c0_i32_0 = arith.constant 0 : i32
    %c0_i32_1 = arith.constant 0 : i32
    return %c0_i32, %c0_i32_0 : i32, i32
  }
  func.func @transform_2(%arg0: i32) -> (i32, i32) {
    %c0_i32 = arith.constant 0 : i32
    %c0_i32_0 = arith.constant 0 : i32
    %c0_i32_1 = arith.constant 0 : i32
    return %c0_i32, %c0_i32_0 : i32, i32
  }
  func.func @transform_3(%arg0: i32) -> (i32, i32) {
    %c0_i32 = arith.constant 0 : i32
    %c0_i32_0 = arith.constant 0 : i32
    %c0_i32_1 = arith.constant 0 : i32
    return %c0_i32, %c0_i32_0 : i32, i32
  }
  func.func @transform_4(%arg0: i32) -> (i32, i32) {
    %c0_i32 = arith.constant 0 : i32
    %c0_i32_0 = arith.constant 0 : i32
    %c0_i32_1 = arith.constant 0 : i32
    return %c0_i32, %c0_i32_0 : i32, i32
  }
}

</mosaic_0001>

<llo_original>
// kernel: _lambda_.3
$region0: #{_lambda_.3}
  #allocation0 [shape = 'u32[]', space=smem, size = 0x4, offset = 0x4, fixed_abs, tag = 'smem constant byte address 0x4 - core index']
  #allocation1 [shape = 'u32[72,128]{1,0:T(1,128)}', space=vmem, size = 0x9000, scoped, tag = 'internal scratch']
  %s0 = inlined_call_operand.hbm [shape: bf16[9,64,32], index: 0, kind: input, shape index: {}]
  %s1 = inlined_call_operand.vmem [shape: bf16[32,146], index: 1, kind: input, shape index: {}]
  %s2 = inlined_call_operand.hbm [shape: bf16[9,128], index: 2, kind: input, shape index: {}]
  %s3 = inlined_call_operand.vmem [shape: bf16[64,128], index: 3, kind: output, shape index: {}]
  %s4 = sld [smem:[#allocation0]]
  $region30: #{_lambda_.3} parent=0
    _
  %s6 = ssub.s32 1, %s4
  %s7 = scalar_select 0, %s6, %s4
  $region1: #{_lambda_.3} parent=0
    #allocation2 [shape = 'u8[147456]{0}', space=vmem, size = 0x24000, scoped, tag = 'input window, operand 0, single buffered']
    #allocation3 [shape = 's32[1]{0}', space=sflag, size = 0x4, scoped, tag = 'scoped memory for _lambda_.3']
    #allocation4 [shape = 'u8[4096]{0}', space=vmem, size = 0x1000, scoped, tag = 'input window, operand 2, single buffered']
    #allocation5 [shape = 's32[1]{0}', space=sflag, size = 0x4, scoped, tag = 'scoped memory for _lambda_.3']
    %8 = vsyncpa [#allocation3], 0
    %9 = vsyncpa [#allocation5], 0
    // Predicated region
    $region2: #{_lambda_.3} parent=1 // pred_check
      _
    $region3: #{_lambda_.3} parent=1 // pred_check_branch
      %11 = sbr.rel (0) target = $region5
    $region4: #{_lambda_.3} parent=1 // pred_region
      %13 = vsyncadd [#allocation3], 0
      %s14 = sshll.u32 %s0, 4
      %s15 = int_to_ptr.hbm [resolvable:$true] %s14
      %s16 = sshll.u32 [#allocation2], 4
      %s17 = int_to_ptr.vmem [resolvable:$true] %s16
      %22 = dma.hbm_to_vmem [thread:$0]  %s15, 4608, %s17, [#allocation3], 64, 64, 4
    $region5: #{_lambda_.3} parent=1 // pred_fallthru
      _
    // Predicated region
    $region6: #{_lambda_.3} parent=1 // pred_check
      _
    $region7: #{_lambda_.3} parent=1 // pred_check_branch
      %24 = sbr.rel (0) target = $region9
    $region8: #{_lambda_.3} parent=1 // pred_region
      _
    $region9: #{_lambda_.3} parent=1 // pred_fallthru
      _
    // Predicated region
    $region10: #{_lambda_.3} parent=1 // pred_check
      _
    $region11: #{_lambda_.3} parent=1 // pred_check_branch
      %26 = sbr.rel (0) target = $region13
    $region12: #{_lambda_.3} parent=1 // pred_region
      %28 = vsyncadd [#allocation5], 0
      %s29 = sshll.u32 %s2, 4
      %s30 = int_to_ptr.hbm [resolvable:$true] %s29
      %s31 = sshll.u32 [#allocation4], 4
      %s32 = int_to_ptr.vmem [resolvable:$true] %s31
      %37 = dma.hbm_to_vmem [thread:$0]  %s30, 128, %s32, [#allocation5], 64, 64, 4
    $region13: #{_lambda_.3} parent=1 // pred_fallthru
      _
    // Predicated region
    $region14: #{_lambda_.3} parent=1 // pred_check
      _
    $region15: #{_lambda_.3} parent=1 // pred_check_branch
      %39 = sbr.rel (0) target = $region17
    $region16: #{_lambda_.3} parent=1 // pred_region
      %41 = dma.done [#allocation3], 4608
    $region17: #{_lambda_.3} parent=1 // pred_fallthru
      _
    // Predicated region
    $region18: #{_lambda_.3} parent=1 // pred_check
      _
    $region19: #{_lambda_.3} parent=1 // pred_check_branch
      %43 = sbr.rel (0) target = $region21
    $region20: #{_lambda_.3} parent=1 // pred_region
      %45 = dma.done [#allocation5], 128
    $region21: #{_lambda_.3} parent=1 // pred_fallthru
      _
    %v47 = vld [vmem:[%s1] sm:$0xff]
    %v48 = vld [vmem:[%s1 + $0x8] sm:$0xff]
    %v49 = vld [vmem:[%s1 + $0x10] sm:$0xff]
    %v50 = vld [vmem:[%s1 + $0x18] sm:$0xff]
    %v51 = vld [vmem:[#allocation4] sm:$0xf]
    %v52 = vld [vmem:[#allocation4 + $0x4] sm:$0x1]
    %v54 = vpack.i.b16 %v51, %v51
    %v56 = vperm.slane %v54, 0
    %v57 = vunpack.c.l.bf16 %v47
    %v58 = vunpack.c.l.bf16 %v48
    %v59 = vunpack.c.l.bf16 %v49
    %v60 = vunpack.c.l.bf16 %v50
    %v61 = vunpack.c.l.bf16 %v56
    %v62 = vmul.f32 %v57, %v61
    %v63 = vmul.f32 %v58, %v61
    %v64 = vmul.f32 %v59, %v61
    %v65 = vmul.f32 %v60, %v61
    %v66 = vpack.c.bf16 %v63, %v62
    %v67 = vpack.c.bf16 %v65, %v64
    %v68 = vld [vmem:[#allocation2] sm:$0xf]
    %v69 = vld [vmem:[#allocation2 + $0x4] sm:$0xf]
    %v70 = vld [vmem:[#allocation2 + $0x8] sm:$0xf]
    %v71 = vld [vmem:[#allocation2 + $0xc] sm:$0xf]
    %v72 = vld [vmem:[#allocation2 + $0x10] sm:$0xf]
    %v73 = vld [vmem:[#allocation2 + $0x14] sm:$0xf]
    %v74 = vld [vmem:[#allocation2 + $0x18] sm:$0xf]
    %v75 = vld [vmem:[#allocation2 + $0x1c] sm:$0xf]
    %v76 = vshrl.u32 %v51, 16
    %v77 = vpack.i.b16 %v76, %v76
    %v79 = vperm.slane %v77, 0
    %v80 = vunpack.c.h.bf16 %v47
    %v81 = vunpack.c.h.bf16 %v48
    %v82 = vunpack.c.h.bf16 %v49
    %v83 = vunpack.c.h.bf16 %v50
    %v84 = vunpack.c.l.bf16 %v79
    %86 = vrot.lane.b32.xlu0 %v84, 1
    %v87 = vpop.permute.xlu0 %86
    %v89 = vmul.f32 %v57, %v87
    %v90 = vmul.f32 %v80, %v87
    %v91 = vmul.f32 %v58, %v87
    %v92 = vmul.f32 %v81, %v87
    %v93 = vmul.f32 %v59, %v87
    %v94 = vmul.f32 %v82, %v87
    %v95 = vmul.f32 %v60, %v87
    %v96 = vmul.f32 %v83, %v87
    %v97 = vpack.c.bf16 %v91, %v89
    %v98 = vpack.c.bf16 %v92, %v90
    %v99 = vpack.c.bf16 %v95, %v93
    %v100 = vpack.c.bf16 %v96, %v94
    %s101 = scalar_lea.vmem [#allocation2], 32
    %v102 = vld [vmem:[%s101] sm:$0xf]
    %v103 = vld [vmem:[%s101 + $0x4] sm:$0xf]
    %v104 = vld [vmem:[%s101 + $0x8] sm:$0xf]
    %v105 = vld [vmem:[%s101 + $0xc] sm:$0xf]
    %v106 = vld [vmem:[%s101 + $0x10] sm:$0xf]
    %v107 = vld [vmem:[%s101 + $0x14] sm:$0xf]
    %v108 = vld [vmem:[%s101 + $0x18] sm:$0xf]
    %v109 = vld [vmem:[%s101 + $0x1c] sm:$0xf]
    %v118 = vunpack.c.l.b16 %v102
    %v119 = vunpack.c.l.b16 %v103
    %v120 = vunpack.c.l.b16 %v104
    %v121 = vunpack.c.l.b16 %v105
    %v122 = vunpack.c.l.b16 %v106
    %v123 = vunpack.c.l.b16 %v107
    %v124 = vunpack.c.l.b16 %v108
    %v125 = vunpack.c.l.b16 %v109
    %v126 = vpack.c.b16 %v119, %v118
    %v127 = vpack.c.b16 %v121, %v120
    %v128 = vpack.c.b16 %v123, %v122
    %v129 = vpack.c.b16 %v125, %v124
    %134 = vrot.lane.b32.xlu0 %v97, 127
    %v135 = vpop.permute.xlu0 %134
    %136 = vrot.lane.b32.xlu0 %v98, 127
    %v137 = vpop.permute.xlu0 %136
    %138 = vrot.lane.b32.xlu0 %v99, 127
    %v139 = vpop.permute.xlu0 %138
    %140 = vrot.lane.b32.xlu0 %v100, 127
    %v141 = vpop.permute.xlu0 %140
    %vm142 = vcmask 1039360
    %v143 = vsel %vm142, %v135, %v137
    %v144 = vsel %vm142, %v139, %v141
    %vm147 = vcmask 261120
    %v149 = vsel %vm147, %v126, 0
    %v152 = vsel %vm147, %v127, 0
    %v155 = vsel %vm147, %v128, 0
    %v158 = vsel %vm147, %v129, 0
    %160 = vmatpush.bf16.msra.mxu0 0
    %161 = vmatpush.bf16.msra.mxu0 0
    %162 = vmatpush.bf16.msra.mxu0 0
    %163 = vmatpush.bf16.msra.mxu0 0
    %164 = vmatpush.bf16.msra.mxu0 0
    %165 = vmatpush.bf16.msra.mxu0 0
    %166 = vmatpush.bf16.msra.mxu0 %v144
    %167 = vmatpush.bf16.msra.mxu0 %v143
    %168 = vmatmul.bf16.gmra.mxu0 %v149
    %v169 = vpop.f32.mrf.mxu0
    %v170 = vadd.f32 0.0, %v169
    %v171 = vpop.f32.mrf.mxu0
    %v172 = vadd.f32 0.0, %v171
    %173 = vmatmul.bf16.gmra.mxu0 %v152
    %v174 = vpop.f32.mrf.mxu0
    %v175 = vadd.f32 0.0, %v174
    %v176 = vpop.f32.mrf.mxu0
    %v177 = vadd.f32 0.0, %v176
    %178 = vmatmul.bf16.gmra.mxu0 %v155
    %v179 = vpop.f32.mrf.mxu0
    %v180 = vadd.f32 0.0, %v179
    %v181 = vpop.f32.mrf.mxu0
    %v182 = vadd.f32 0.0, %v181
    %183 = vmatmul.bf16.gmra.mxu0 %v158
    %v184 = vpop.f32.mrf.mxu0
    %v185 = vadd.f32 0.0, %v184
    %v186 = vpop.f32.mrf.mxu0
    %v187 = vadd.f32 0.0, %v186
    %188 = vdwg.mxu0
    %v197 = vunpack.c.l.b16 %v68
    %v198 = vunpack.c.l.b16 %v69
    %v199 = vunpack.c.l.b16 %v70
    %v200 = vunpack.c.l.b16 %v71
    %v201 = vunpack.c.l.b16 %v72
    %v202 = vunpack.c.l.b16 %v73
    %v203 = vunpack.c.l.b16 %v74
    %v204 = vunpack.c.l.b16 %v75
    %v205 = vpack.c.b16 %v198, %v197
    %v206 = vpack.c.b16 %v200, %v199
    %v207 = vpack.c.b16 %v202, %v201
    %v208 = vpack.c.b16 %v204, %v203
    %v210 = vsel %vm147, %v205, 0
    %v213 = vsel %vm147, %v206, 0
    %v216 = vsel %vm147, %v207, 0
    %v219 = vsel %vm147, %v208, 0
    %221 = vmatpush.bf16.msra.mxu0 0
    %222 = vmatpush.bf16.msra.mxu0 0
    %223 = vmatpush.bf16.msra.mxu0 0
    %224 = vmatpush.bf16.msra.mxu0 0
    %225 = vmatpush.bf16.msra.mxu0 0
    %226 = vmatpush.bf16.msra.mxu0 0
    %227 = vmatpush.bf16.msra.mxu0 %v67
    %228 = vmatpush.bf16.msra.mxu0 %v66
    %229 = vmatmul.bf16.gmra.mxu0 %v210
    %v230 = vpop.f32.mrf.mxu0
    %v231 = vadd.f32 %v170, %v230
    %v232 = vpop.f32.mrf.mxu0
    %v233 = vadd.f32 %v172, %v232
    %234 = vmatmul.bf16.gmra.mxu0 %v213
    %v235 = vpop.f32.mrf.mxu0
    %v236 = vadd.f32 %v175, %v235
    %v237 = vpop.f32.mrf.mxu0
    %v238 = vadd.f32 %v177, %v237
    %239 = vmatmul.bf16.gmra.mxu0 %v216
    %v240 = vpop.f32.mrf.mxu0
    %v241 = vadd.f32 %v180, %v240
    %v242 = vpop.f32.mrf.mxu0
    %v243 = vadd.f32 %v182, %v242
    %244 = vmatmul.bf16.gmra.mxu0 %v219
    %v245 = vpop.f32.mrf.mxu0
    %v246 = vadd.f32 %v185, %v245
    %v247 = vpop.f32.mrf.mxu0
    %v248 = vadd.f32 %v187, %v247
    %249 = vdwg.mxu0
    %v250 = vperm.slane %v54, 1
    %v251 = vunpack.c.l.bf16 %v250
    %253 = vrot.lane.b32.xlu0 %v251, 2
    %v254 = vpop.permute.xlu0 %253
    %v256 = vmul.f32 %v57, %v254
    %v257 = vmul.f32 %v80, %v254
    %v258 = vmul.f32 %v58, %v254
    %v259 = vmul.f32 %v81, %v254
    %v260 = vmul.f32 %v59, %v254
    %v261 = vmul.f32 %v82, %v254
    %v262 = vmul.f32 %v60, %v254
    %v263 = vmul.f32 %v83, %v254
    %v264 = vpack.c.bf16 %v258, %v256
    %v265 = vpack.c.bf16 %v259, %v257
    %v266 = vpack.c.bf16 %v262, %v260
    %v267 = vpack.c.bf16 %v263, %v261
    %s268 = scalar_lea.vmem [#allocation2], 64
    %v269 = vld [vmem:[%s268] sm:$0xf]
    %v270 = vld [vmem:[%s268 + $0x4] sm:$0xf]
    %v271 = vld [vmem:[%s268 + $0x8] sm:$0xf]
    %v272 = vld [vmem:[%s268 + $0xc] sm:$0xf]
    %v273 = vld [vmem:[%s268 + $0x10] sm:$0xf]
    %v274 = vld [vmem:[%s268 + $0x14] sm:$0xf]
    %v275 = vld [vmem:[%s268 + $0x18] sm:$0xf]
    %v276 = vld [vmem:[%s268 + $0x1c] sm:$0xf]
    %v285 = vunpack.c.l.b16 %v269
    %v286 = vunpack.c.l.b16 %v270
    %v287 = vunpack.c.l.b16 %v271
    %v288 = vunpack.c.l.b16 %v272
    %v289 = vunpack.c.l.b16 %v273
    %v290 = vunpack.c.l.b16 %v274
    %v291 = vunpack.c.l.b16 %v275
    %v292 = vunpack.c.l.b16 %v276
    %v293 = vpack.c.b16 %v286, %v285
    %v294 = vpack.c.b16 %v288, %v287
    %v295 = vpack.c.b16 %v290, %v289
    %v296 = vpack.c.b16 %v292, %v291
    %301 = vrot.lane.b32.xlu0 %v264, 126
    %v302 = vpop.permute.xlu0 %301
    %303 = vrot.lane.b32.xlu0 %v265, 126
    %v304 = vpop.permute.xlu0 %303
    %305 = vrot.lane.b32.xlu0 %v266, 126
    %v306 = vpop.permute.xlu0 %305
    %307 = vrot.lane.b32.xlu0 %v267, 126
    %v308 = vpop.permute.xlu0 %307
    %vm309 = vcmask 1031168
    %v310 = vsel %vm309, %v302, %v304
    %v311 = vsel %vm309, %v306, %v308
    %v315 = vsel %vm147, %v293, 0
    %v318 = vsel %vm147, %v294, 0
    %v321 = vsel %vm147, %v295, 0
    %v324 = vsel %vm147, %v296, 0
    %326 = vmatpush.bf16.msra.mxu0 0
    %327 = vmatpush.bf16.msra.mxu0 0
    %328 = vmatpush.bf16.msra.mxu0 0
    %329 = vmatpush.bf16.msra.mxu0 0
    %330 = vmatpush.bf16.msra.mxu0 0
    %331 = vmatpush.bf16.msra.mxu0 0
    %332 = vmatpush.bf16.msra.mxu0 %v311
    %333 = vmatpush.bf16.msra.mxu0 %v310
    %334 = vmatmul.bf16.gmra.mxu0 %v315
    %v335 = vpop.f32.mrf.mxu0
    %v336 = vadd.f32 0.0, %v335
    %v337 = vpop.f32.mrf.mxu0
    %v338 = vadd.f32 0.0, %v337
    %339 = vmatmul.bf16.gmra.mxu0 %v318
    %v340 = vpop.f32.mrf.mxu0
    %v341 = vadd.f32 0.0, %v340
    %v342 = vpop.f32.mrf.mxu0
    %v343 = vadd.f32 0.0, %v342
    %344 = vmatmul.bf16.gmra.mxu0 %v321
    %v345 = vpop.f32.mrf.mxu0
    %v346 = vadd.f32 0.0, %v345
    %v347 = vpop.f32.mrf.mxu0
    %v348 = vadd.f32 0.0, %v347
    %349 = vmatmul.bf16.gmra.mxu0 %v324
    %v350 = vpop.f32.mrf.mxu0
    %v351 = vadd.f32 0.0, %v350
    %v352 = vpop.f32.mrf.mxu0
    %v353 = vadd.f32 0.0, %v352
    %354 = vdwg.mxu0
    %v355 = vadd.f32 %v231, %v336
    %v356 = vadd.f32 %v233, %v338
    %v357 = vadd.f32 %v236, %v341
    %v358 = vadd.f32 %v238, %v343
    %v359 = vadd.f32 %v241, %v346
    %v360 = vadd.f32 %v243, %v348
    %v361 = vadd.f32 %v246, %v351
    %v362 = vadd.f32 %v248, %v353
    %v363 = vperm.slane %v77, 1
    %v364 = vunpack.c.l.bf16 %v363
    %366 = vrot.lane.b32.xlu0 %v364, 8
    %v367 = vpop.permute.xlu0 %366
    %v369 = vmul.f32 %v57, %v367
    %v370 = vmul.f32 %v80, %v367
    %v371 = vmul.f32 %v58, %v367
    %v372 = vmul.f32 %v81, %v367
    %v373 = vmul.f32 %v59, %v367
    %v374 = vmul.f32 %v82, %v367
    %v375 = vmul.f32 %v60, %v367
    %v376 = vmul.f32 %v83, %v367
    %v377 = vpack.c.bf16 %v371, %v369
    %v378 = vpack.c.bf16 %v372, %v370
    %v379 = vpack.c.bf16 %v375, %v373
    %v380 = vpack.c.bf16 %v376, %v374
    %s381 = scalar_lea.vmem [#allocation2], 96
    %v382 = vld [vmem:[%s381] sm:$0xf]
    %v383 = vld [vmem:[%s381 + $0x4] sm:$0xf]
    %v384 = vld [vmem:[%s381 + $0x8] sm:$0xf]
    %v385 = vld [vmem:[%s381 + $0xc] sm:$0xf]
    %v386 = vld [vmem:[%s381 + $0x10] sm:$0xf]
    %v387 = vld [vmem:[%s381 + $0x14] sm:$0xf]
    %v388 = vld [vmem:[%s381 + $0x18] sm:$0xf]
    %v389 = vld [vmem:[%s381 + $0x1c] sm:$0xf]
    %v398 = vunpack.c.l.b16 %v382
    %v399 = vunpack.c.l.b16 %v383
    %v400 = vunpack.c.l.b16 %v384
    %v401 = vunpack.c.l.b16 %v385
    %v402 = vunpack.c.l.b16 %v386
    %v403 = vunpack.c.l.b16 %v387
    %v404 = vunpack.c.l.b16 %v388
    %v405 = vunpack.c.l.b16 %v389
    %v406 = vpack.c.b16 %v399, %v398
    %v407 = vpack.c.b16 %v401, %v400
    %v408 = vpack.c.b16 %v403, %v402
    %v409 = vpack.c.b16 %v405, %v404
    %414 = vrot.lane.b32.xlu0 %v377, 120
    %v415 = vpop.permute.xlu0 %414
    %416 = vrot.lane.b32.xlu0 %v378, 120
    %v417 = vpop.permute.xlu0 %416
    %418 = vrot.lane.b32.xlu0 %v379, 120
    %v419 = vpop.permute.xlu0 %418
    %420 = vrot.lane.b32.xlu0 %v380, 120
    %v421 = vpop.permute.xlu0 %420
    %vm422 = vcmask 982016
    %v423 = vsel %vm422, %v415, %v417
    %v424 = vsel %vm422, %v419, %v421
    %v428 = vsel %vm147, %v406, 0
    %v431 = vsel %vm147, %v407, 0
    %v434 = vsel %vm147, %v408, 0
    %v437 = vsel %vm147, %v409, 0
    %439 = vmatpush.bf16.msra.mxu0 0
    %440 = vmatpush.bf16.msra.mxu0 0
    %441 = vmatpush.bf16.msra.mxu0 0
    %442 = vmatpush.bf16.msra.mxu0 0
    %443 = vmatpush.bf16.msra.mxu0 0
    %444 = vmatpush.bf16.msra.mxu0 0
    %445 = vmatpush.bf16.msra.mxu0 %v424
    %446 = vmatpush.bf16.msra.mxu0 %v423
    %447 = vmatmul.bf16.gmra.mxu0 %v428
    %v448 = vpop.f32.mrf.mxu0
    %v449 = vadd.f32 0.0, %v448
    %v450 = vpop.f32.mrf.mxu0
    %v451 = vadd.f32 0.0, %v450
    %452 = vmatmul.bf16.gmra.mxu0 %v431
    %v453 = vpop.f32.mrf.mxu0
    %v454 = vadd.f32 0.0, %v453
    %v455 = vpop.f32.mrf.mxu0
    %v456 = vadd.f32 0.0, %v455
    %457 = vmatmul.bf16.gmra.mxu0 %v434
    %v458 = vpop.f32.mrf.mxu0
    %v459 = vadd.f32 0.0, %v458
    %v460 = vpop.f32.mrf.mxu0
    %v461 = vadd.f32 0.0, %v460
    %462 = vmatmul.bf16.gmra.mxu0 %v437
    %v463 = vpop.f32.mrf.mxu0
    %v464 = vadd.f32 0.0, %v463
    %v465 = vpop.f32.mrf.mxu0
    %v466 = vadd.f32 0.0, %v465
    %467 = vdwg.mxu0
    %v468 = vadd.f32 %v355, %v449
    %v469 = vadd.f32 %v356, %v451
    %v470 = vadd.f32 %v357, %v454
    %v471 = vadd.f32 %v358, %v456
    %v472 = vadd.f32 %v359, %v459
    %v473 = vadd.f32 %v360, %v461
    %v474 = vadd.f32 %v361, %v464
    %v475 = vadd.f32 %v362, %v466
    %v476 = vperm.slane %v54, 2
    %v477 = vunpack.c.l.bf16 %v476
    %479 = vrot.lane.b32.xlu0 %v477, 9
    %v480 = vpop.permute.xlu0 %479
    %v482 = vmul.f32 %v57, %v480
    %v483 = vmul.f32 %v80, %v480
    %v484 = vmul.f32 %v58, %v480
    %v485 = vmul.f32 %v81, %v480
    %v486 = vmul.f32 %v59, %v480
    %v487 = vmul.f32 %v82, %v480
    %v488 = vmul.f32 %v60, %v480
    %v489 = vmul.f32 %v83, %v480
    %v490 = vpack.c.bf16 %v484, %v482
    %v491 = vpack.c.bf16 %v485, %v483
    %v492 = vpack.c.bf16 %v488, %v486
    %v493 = vpack.c.bf16 %v489, %v487
    %s494 = scalar_lea.vmem [#allocation2], 128
    %v495 = vld [vmem:[%s494] sm:$0xf]
    %v496 = vld [vmem:[%s494 + $0x4] sm:$0xf]
    %v497 = vld [vmem:[%s494 + $0x8] sm:$0xf]
    %v498 = vld [vmem:[%s494 + $0xc] sm:$0xf]
    %v499 = vld [vmem:[%s494 + $0x10] sm:$0xf]
    %v500 = vld [vmem:[%s494 + $0x14] sm:$0xf]
    %v501 = vld [vmem:[%s494 + $0x18] sm:$0xf]
    %v502 = vld [vmem:[%s494 + $0x1c] sm:$0xf]
    %v511 = vunpack.c.l.b16 %v495
    %v512 = vunpack.c.l.b16 %v496
    %v513 = vunpack.c.l.b16 %v497
    %v514 = vunpack.c.l.b16 %v498
    %v515 = vunpack.c.l.b16 %v499
    %v516 = vunpack.c.l.b16 %v500
    %v517 = vunpack.c.l.b16 %v501
    %v518 = vunpack.c.l.b16 %v502
    %v519 = vpack.c.b16 %v512, %v511
    %v520 = vpack.c.b16 %v514, %v513
    %v521 = vpack.c.b16 %v516, %v515
    %v522 = vpack.c.b16 %v518, %v517
    %527 = vrot.lane.b32.xlu0 %v490, 119
    %v528 = vpop.permute.xlu0 %527
    %529 = vrot.lane.b32.xlu0 %v491, 119
    %v530 = vpop.permute.xlu0 %529
    %531 = vrot.lane.b32.xlu0 %v492, 119
    %v532 = vpop.permute.xlu0 %531
    %533 = vrot.lane.b32.xlu0 %v493, 119
    %v534 = vpop.permute.xlu0 %533
    %vm535 = vcmask 973824
    %v536 = vsel %vm535, %v528, %v530
    %v537 = vsel %vm535, %v532, %v534
    %v541 = vsel %vm147, %v519, 0
    %v544 = vsel %vm147, %v520, 0
    %v547 = vsel %vm147, %v521, 0
    %v550 = vsel %vm147, %v522, 0
    %552 = vmatpush.bf16.msra.mxu0 0
    %553 = vmatpush.bf16.msra.mxu0 0
    %554 = vmatpush.bf16.msra.mxu0 0
    %555 = vmatpush.bf16.msra.mxu0 0
    %556 = vmatpush.bf16.msra.mxu0 0
    %557 = vmatpush.bf16.msra.mxu0 0
    %558 = vmatpush.bf16.msra.mxu0 %v537
    %559 = vmatpush.bf16.msra.mxu0 %v536
    %560 = vmatmul.bf16.gmra.mxu0 %v541
    %v561 = vpop.f32.mrf.mxu0
    %v562 = vadd.f32 0.0, %v561
    %v563 = vpop.f32.mrf.mxu0
    %v564 = vadd.f32 0.0, %v563
    %565 = vmatmul.bf16.gmra.mxu0 %v544
    %v566 = vpop.f32.mrf.mxu0
    %v567 = vadd.f32 0.0, %v566
    %v568 = vpop.f32.mrf.mxu0
    %v569 = vadd.f32 0.0, %v568
    %570 = vmatmul.bf16.gmra.mxu0 %v547
    %v571 = vpop.f32.mrf.mxu0
    %v572 = vadd.f32 0.0, %v571
    %v573 = vpop.f32.mrf.mxu0
    %v574 = vadd.f32 0.0, %v573
    %575 = vmatmul.bf16.gmra.mxu0 %v550
    %v576 = vpop.f32.mrf.mxu0
    %v577 = vadd.f32 0.0, %v576
    %v578 = vpop.f32.mrf.mxu0
    %v579 = vadd.f32 0.0, %v578
    %580 = vdwg.mxu0
    %v581 = vadd.f32 %v468, %v562
    %v582 = vadd.f32 %v469, %v564
    %v583 = vadd.f32 %v470, %v567
    %v584 = vadd.f32 %v471, %v569
    %v585 = vadd.f32 %v472, %v572
    %v586 = vadd.f32 %v473, %v574
    %v587 = vadd.f32 %v474, %v577
    %v588 = vadd.f32 %v475, %v579
    %v589 = vperm.slane %v77, 2
    %v590 = vunpack.c.l.bf16 %v589
    %592 = vrot.lane.b32.xlu0 %v590, 10
    %v593 = vpop.permute.xlu0 %592
    %v595 = vmul.f32 %v57, %v593
    %v596 = vmul.f32 %v80, %v593
    %v597 = vmul.f32 %v58, %v593
    %v598 = vmul.f32 %v81, %v593
    %v599 = vmul.f32 %v59, %v593
    %v600 = vmul.f32 %v82, %v593
    %v601 = vmul.f32 %v60, %v593
    %v602 = vmul.f32 %v83, %v593
    %v603 = vpack.c.bf16 %v597, %v595
    %v604 = vpack.c.bf16 %v598, %v596
    %v605 = vpack.c.bf16 %v601, %v599
    %v606 = vpack.c.bf16 %v602, %v600
    %s607 = scalar_lea.vmem [#allocation2], 160
    %v608 = vld [vmem:[%s607] sm:$0xf]
    %v609 = vld [vmem:[%s607 + $0x4] sm:$0xf]
    %v610 = vld [vmem:[%s607 + $0x8] sm:$0xf]
    %v611 = vld [vmem:[%s607 + $0xc] sm:$0xf]
    %v612 = vld [vmem:[%s607 + $0x10] sm:$0xf]
    %v613 = vld [vmem:[%s607 + $0x14] sm:$0xf]
    %v614 = vld [vmem:[%s607 + $0x18] sm:$0xf]
    %v615 = vld [vmem:[%s607 + $0x1c] sm:$0xf]
    %v624 = vunpack.c.l.b16 %v608
    %v625 = vunpack.c.l.b16 %v609
    %v626 = vunpack.c.l.b16 %v610
    %v627 = vunpack.c.l.b16 %v611
    %v628 = vunpack.c.l.b16 %v612
    %v629 = vunpack.c.l.b16 %v613
    %v630 = vunpack.c.l.b16 %v614
    %v631 = vunpack.c.l.b16 %v615
    %v632 = vpack.c.b16 %v625, %v624
    %v633 = vpack.c.b16 %v627, %v626
    %v634 = vpack.c.b16 %v629, %v628
    %v635 = vpack.c.b16 %v631, %v630
    %640 = vrot.lane.b32.xlu0 %v603, 118
    %v641 = vpop.permute.xlu0 %640
    %642 = vrot.lane.b32.xlu0 %v604, 118
    %v643 = vpop.permute.xlu0 %642
    %644 = vrot.lane.b32.xlu0 %v605, 118
    %v645 = vpop.permute.xlu0 %644
    %646 = vrot.lane.b32.xlu0 %v606, 118
    %v647 = vpop.permute.xlu0 %646
    %vm648 = vcmask 965632
    %v649 = vsel %vm648, %v641, %v643
    %v650 = vsel %vm648, %v645, %v647
    %v654 = vsel %vm147, %v632, 0
    %v657 = vsel %vm147, %v633, 0
    %v660 = vsel %vm147, %v634, 0
    %v663 = vsel %vm147, %v635, 0
    %665 = vmatpush.bf16.msra.mxu0 0
    %666 = vmatpush.bf16.msra.mxu0 0
    %667 = vmatpush.bf16.msra.mxu0 0
    %668 = vmatpush.bf16.msra.mxu0 0
    %669 = vmatpush.bf16.msra.mxu0 0
    %670 = vmatpush.bf16.msra.mxu0 0
    %671 = vmatpush.bf16.msra.mxu0 %v650
    %672 = vmatpush.bf16.msra.mxu0 %v649
    %673 = vmatmul.bf16.gmra.mxu0 %v654
    %v674 = vpop.f32.mrf.mxu0
    %v675 = vadd.f32 0.0, %v674
    %v676 = vpop.f32.mrf.mxu0
    %v677 = vadd.f32 0.0, %v676
    %678 = vmatmul.bf16.gmra.mxu0 %v657
    %v679 = vpop.f32.mrf.mxu0
    %v680 = vadd.f32 0.0, %v679
    %v681 = vpop.f32.mrf.mxu0
    %v682 = vadd.f32 0.0, %v681
    %683 = vmatmul.bf16.gmra.mxu0 %v660
    %v684 = vpop.f32.mrf.mxu0
    %v685 = vadd.f32 0.0, %v684
    %v686 = vpop.f32.mrf.mxu0
    %v687 = vadd.f32 0.0, %v686
    %688 = vmatmul.bf16.gmra.mxu0 %v663
    %v689 = vpop.f32.mrf.mxu0
    %v690 = vadd.f32 0.0, %v689
    %v691 = vpop.f32.mrf.mxu0
    %v692 = vadd.f32 0.0, %v691
    %693 = vdwg.mxu0
    %v694 = vadd.f32 %v581, %v675
    %v695 = vadd.f32 %v582, %v677
    %v696 = vadd.f32 %v583, %v680
    %v697 = vadd.f32 %v584, %v682
    %v698 = vadd.f32 %v585, %v685
    %v699 = vadd.f32 %v586, %v687
    %v700 = vadd.f32 %v587, %v690
    %v701 = vadd.f32 %v588, %v692
    %v702 = vperm.slane %v54, 3
    %v703 = vunpack.c.l.bf16 %v702
    %705 = vrot.lane.b32.xlu0 %v703, 16
    %v706 = vpop.permute.xlu0 %705
    %v708 = vmul.f32 %v57, %v706
    %v709 = vmul.f32 %v80, %v706
    %v710 = vmul.f32 %v58, %v706
    %v711 = vmul.f32 %v81, %v706
    %v712 = vmul.f32 %v59, %v706
    %v713 = vmul.f32 %v82, %v706
    %v714 = vmul.f32 %v60, %v706
    %v715 = vmul.f32 %v83, %v706
    %v716 = vpack.c.bf16 %v710, %v708
    %v717 = vpack.c.bf16 %v711, %v709
    %v718 = vpack.c.bf16 %v714, %v712
    %v719 = vpack.c.bf16 %v715, %v713
    %s720 = scalar_lea.vmem [#allocation2], 192
    %v721 = vld [vmem:[%s720] sm:$0xf]
    %v722 = vld [vmem:[%s720 + $0x4] sm:$0xf]
    %v723 = vld [vmem:[%s720 + $0x8] sm:$0xf]
    %v724 = vld [vmem:[%s720 + $0xc] sm:$0xf]
    %v725 = vld [vmem:[%s720 + $0x10] sm:$0xf]
    %v726 = vld [vmem:[%s720 + $0x14] sm:$0xf]
    %v727 = vld [vmem:[%s720 + $0x18] sm:$0xf]
    %v728 = vld [vmem:[%s720 + $0x1c] sm:$0xf]
    %v737 = vunpack.c.l.b16 %v721
    %v738 = vunpack.c.l.b16 %v722
    %v739 = vunpack.c.l.b16 %v723
    %v740 = vunpack.c.l.b16 %v724
    %v741 = vunpack.c.l.b16 %v725
    %v742 = vunpack.c.l.b16 %v726
    %v743 = vunpack.c.l.b16 %v727
    %v744 = vunpack.c.l.b16 %v728
    %v745 = vpack.c.b16 %v738, %v737
    %v746 = vpack.c.b16 %v740, %v739
    %v747 = vpack.c.b16 %v742, %v741
    %v748 = vpack.c.b16 %v744, %v743
    %753 = vrot.lane.b32.xlu0 %v716, 112
    %v754 = vpop.permute.xlu0 %753
    %755 = vrot.lane.b32.xlu0 %v717, 112
    %v756 = vpop.permute.xlu0 %755
    %757 = vrot.lane.b32.xlu0 %v718, 112
    %v758 = vpop.permute.xlu0 %757
    %759 = vrot.lane.b32.xlu0 %v719, 112
    %v760 = vpop.permute.xlu0 %759
    %vm761 = vcmask 916480
    %v762 = vsel %vm761, %v754, %v756
    %v763 = vsel %vm761, %v758, %v760
    %v767 = vsel %vm147, %v745, 0
    %v770 = vsel %vm147, %v746, 0
    %v773 = vsel %vm147, %v747, 0
    %v776 = vsel %vm147, %v748, 0
    %778 = vmatpush.bf16.msra.mxu0 0
    %779 = vmatpush.bf16.msra.mxu0 0
    %780 = vmatpush.bf16.msra.mxu0 0
    %781 = vmatpush.bf16.msra.mxu0 0
    %782 = vmatpush.bf16.msra.mxu0 0
    %783 = vmatpush.bf16.msra.mxu0 0
    %784 = vmatpush.bf16.msra.mxu0 %v763
    %785 = vmatpush.bf16.msra.mxu0 %v762
    %786 = vmatmul.bf16.gmra.mxu0 %v767
    %v787 = vpop.f32.mrf.mxu0
    %v788 = vadd.f32 0.0, %v787
    %v789 = vpop.f32.mrf.mxu0
    %v790 = vadd.f32 0.0, %v789
    %791 = vmatmul.bf16.gmra.mxu0 %v770
    %v792 = vpop.f32.mrf.mxu0
    %v793 = vadd.f32 0.0, %v792
    %v794 = vpop.f32.mrf.mxu0
    %v795 = vadd.f32 0.0, %v794
    %796 = vmatmul.bf16.gmra.mxu0 %v773
    %v797 = vpop.f32.mrf.mxu0
    %v798 = vadd.f32 0.0, %v797
    %v799 = vpop.f32.mrf.mxu0
    %v800 = vadd.f32 0.0, %v799
    %801 = vmatmul.bf16.gmra.mxu0 %v776
    %v802 = vpop.f32.mrf.mxu0
    %v803 = vadd.f32 0.0, %v802
    %v804 = vpop.f32.mrf.mxu0
    %v805 = vadd.f32 0.0, %v804
    %806 = vdwg.mxu0
    %v807 = vadd.f32 %v694, %v788
    %v808 = vadd.f32 %v695, %v790
    %v809 = vadd.f32 %v696, %v793
    %v810 = vadd.f32 %v697, %v795
    %v811 = vadd.f32 %v698, %v798
    %v812 = vadd.f32 %v699, %v800
    %v813 = vadd.f32 %v700, %v803
    %v814 = vadd.f32 %v701, %v805
    %v815 = vperm.slane %v77, 3
    %v816 = vunpack.c.l.bf16 %v815
    %818 = vrot.lane.b32.xlu0 %v816, 17
    %v819 = vpop.permute.xlu0 %818
    %v821 = vmul.f32 %v57, %v819
    %v822 = vmul.f32 %v80, %v819
    %v823 = vmul.f32 %v58, %v819
    %v824 = vmul.f32 %v81, %v819
    %v825 = vmul.f32 %v59, %v819
    %v826 = vmul.f32 %v82, %v819
    %v827 = vmul.f32 %v60, %v819
    %v828 = vmul.f32 %v83, %v819
    %v829 = vpack.c.bf16 %v823, %v821
    %v830 = vpack.c.bf16 %v824, %v822
    %v831 = vpack.c.bf16 %v827, %v825
    %v832 = vpack.c.bf16 %v828, %v826
    %s833 = scalar_lea.vmem [#allocation2], 224
    %v834 = vld [vmem:[%s833] sm:$0xf]
    %v835 = vld [vmem:[%s833 + $0x4] sm:$0xf]
    %v836 = vld [vmem:[%s833 + $0x8] sm:$0xf]
    %v837 = vld [vmem:[%s833 + $0xc] sm:$0xf]
    %v838 = vld [vmem:[%s833 + $0x10] sm:$0xf]
    %v839 = vld [vmem:[%s833 + $0x14] sm:$0xf]
    %v840 = vld [vmem:[%s833 + $0x18] sm:$0xf]
    %v841 = vld [vmem:[%s833 + $0x1c] sm:$0xf]
    %v850 = vunpack.c.l.b16 %v834
    %v851 = vunpack.c.l.b16 %v835
    %v852 = vunpack.c.l.b16 %v836
    %v853 = vunpack.c.l.b16 %v837
    %v854 = vunpack.c.l.b16 %v838
    %v855 = vunpack.c.l.b16 %v839
    %v856 = vunpack.c.l.b16 %v840
    %v857 = vunpack.c.l.b16 %v841
    %v858 = vpack.c.b16 %v851, %v850
    %v859 = vpack.c.b16 %v853, %v852
    %v860 = vpack.c.b16 %v855, %v854
    %v861 = vpack.c.b16 %v857, %v856
    %866 = vrot.lane.b32.xlu0 %v829, 111
    %v867 = vpop.permute.xlu0 %866
    %868 = vrot.lane.b32.xlu0 %v830, 111
    %v869 = vpop.permute.xlu0 %868
    %870 = vrot.lane.b32.xlu0 %v831, 111
    %v871 = vpop.permute.xlu0 %870
    %872 = vrot.lane.b32.xlu0 %v832, 111
    %v873 = vpop.permute.xlu0 %872
    %vm874 = vcmask 908288
    %v875 = vsel %vm874, %v867, %v869
    %v876 = vsel %vm874, %v871, %v873
    %v880 = vsel %vm147, %v858, 0
    %v883 = vsel %vm147, %v859, 0
    %v886 = vsel %vm147, %v860, 0
    %v889 = vsel %vm147, %v861, 0
    %891 = vmatpush.bf16.msra.mxu0 0
    %892 = vmatpush.bf16.msra.mxu0 0
    %893 = vmatpush.bf16.msra.mxu0 0
    %894 = vmatpush.bf16.msra.mxu0 0
    %895 = vmatpush.bf16.msra.mxu0 0
    %896 = vmatpush.bf16.msra.mxu0 0
    %897 = vmatpush.bf16.msra.mxu0 %v876
    %898 = vmatpush.bf16.msra.mxu0 %v875
    %899 = vmatmul.bf16.gmra.mxu0 %v880
    %v900 = vpop.f32.mrf.mxu0
    %v901 = vadd.f32 0.0, %v900
    %v902 = vpop.f32.mrf.mxu0
    %v903 = vadd.f32 0.0, %v902
    %904 = vmatmul.bf16.gmra.mxu0 %v883
    %v905 = vpop.f32.mrf.mxu0
    %v906 = vadd.f32 0.0, %v905
    %v907 = vpop.f32.mrf.mxu0
    %v908 = vadd.f32 0.0, %v907
    %909 = vmatmul.bf16.gmra.mxu0 %v886
    %v910 = vpop.f32.mrf.mxu0
    %v911 = vadd.f32 0.0, %v910
    %v912 = vpop.f32.mrf.mxu0
    %v913 = vadd.f32 0.0, %v912
    %914 = vmatmul.bf16.gmra.mxu0 %v889
    %v915 = vpop.f32.mrf.mxu0
    %v916 = vadd.f32 0.0, %v915
    %v917 = vpop.f32.mrf.mxu0
    %v918 = vadd.f32 0.0, %v917
    %919 = vdwg.mxu0
    %v920 = vadd.f32 %v807, %v901
    %v921 = vadd.f32 %v808, %v903
    %v922 = vadd.f32 %v809, %v906
    %v923 = vadd.f32 %v810, %v908
    %v924 = vadd.f32 %v811, %v911
    %v925 = vadd.f32 %v812, %v913
    %v926 = vadd.f32 %v813, %v916
    %v927 = vadd.f32 %v814, %v918
    %v929 = vpack.i.b16 %v52, %v52
    %v931 = vperm.slane %v929, 0
    %v932 = vunpack.c.l.bf16 %v931
    %934 = vrot.lane.b32.xlu0 %v932, 18
    %v935 = vpop.permute.xlu0 %934
    %v937 = vmul.f32 %v57, %v935
    %v938 = vmul.f32 %v80, %v935
    %v939 = vmul.f32 %v58, %v935
    %v940 = vmul.f32 %v81, %v935
    %v941 = vmul.f32 %v59, %v935
    %v942 = vmul.f32 %v82, %v935
    %v943 = vmul.f32 %v60, %v935
    %v944 = vmul.f32 %v83, %v935
    %v945 = vpack.c.bf16 %v939, %v937
    %v946 = vpack.c.bf16 %v940, %v938
    %v947 = vpack.c.bf16 %v943, %v941
    %v948 = vpack.c.bf16 %v944, %v942
    %s949 = scalar_lea.vmem [#allocation2], 256
    %v950 = vld [vmem:[%s949] sm:$0xf]
    %v951 = vld [vmem:[%s949 + $0x4] sm:$0xf]
    %v952 = vld [vmem:[%s949 + $0x8] sm:$0xf]
    %v953 = vld [vmem:[%s949 + $0xc] sm:$0xf]
    %v954 = vld [vmem:[%s949 + $0x10] sm:$0xf]
    %v955 = vld [vmem:[%s949 + $0x14] sm:$0xf]
    %v956 = vld [vmem:[%s949 + $0x18] sm:$0xf]
    %v957 = vld [vmem:[%s949 + $0x1c] sm:$0xf]
    %v966 = vunpack.c.l.b16 %v950
    %v967 = vunpack.c.l.b16 %v951
    %v968 = vunpack.c.l.b16 %v952
    %v969 = vunpack.c.l.b16 %v953
    %v970 = vunpack.c.l.b16 %v954
    %v971 = vunpack.c.l.b16 %v955
    %v972 = vunpack.c.l.b16 %v956
    %v973 = vunpack.c.l.b16 %v957
    %v974 = vpack.c.b16 %v967, %v966
    %v975 = vpack.c.b16 %v969, %v968
    %v976 = vpack.c.b16 %v971, %v970
    %v977 = vpack.c.b16 %v973, %v972
    %982 = vrot.lane.b32.xlu0 %v945, 110
    %v983 = vpop.permute.xlu0 %982
    %984 = vrot.lane.b32.xlu0 %v946, 110
    %v985 = vpop.permute.xlu0 %984
    %986 = vrot.lane.b32.xlu0 %v947, 110
    %v987 = vpop.permute.xlu0 %986
    %988 = vrot.lane.b32.xlu0 %v948, 110
    %v989 = vpop.permute.xlu0 %988
    %vm990 = vcmask 900096
    %v991 = vsel %vm990, %v983, %v985
    %v992 = vsel %vm990, %v987, %v989
    %v996 = vsel %vm147, %v974, 0
    %v999 = vsel %vm147, %v975, 0
    %v1002 = vsel %vm147, %v976, 0
    %v1005 = vsel %vm147, %v977, 0
    %1007 = vmatpush.bf16.msra.mxu0 0
    %1008 = vmatpush.bf16.msra.mxu0 0
    %1009 = vmatpush.bf16.msra.mxu0 0
    %1010 = vmatpush.bf16.msra.mxu0 0
    %1011 = vmatpush.bf16.msra.mxu0 0
    %1012 = vmatpush.bf16.msra.mxu0 0
    %1013 = vmatpush.bf16.msra.mxu0 %v992
    %1014 = vmatpush.bf16.msra.mxu0 %v991
    %1015 = vmatmul.bf16.gmra.mxu0 %v996
    %v1016 = vpop.f32.mrf.mxu0
    %v1017 = vadd.f32 0.0, %v1016
    %v1018 = vpop.f32.mrf.mxu0
    %v1019 = vadd.f32 0.0, %v1018
    %1020 = vmatmul.bf16.gmra.mxu0 %v999
    %v1021 = vpop.f32.mrf.mxu0
    %v1022 = vadd.f32 0.0, %v1021
    %v1023 = vpop.f32.mrf.mxu0
    %v1024 = vadd.f32 0.0, %v1023
    %1025 = vmatmul.bf16.gmra.mxu0 %v1002
    %v1026 = vpop.f32.mrf.mxu0
    %v1027 = vadd.f32 0.0, %v1026
    %v1028 = vpop.f32.mrf.mxu0
    %v1029 = vadd.f32 0.0, %v1028
    %1030 = vmatmul.bf16.gmra.mxu0 %v1005
    %v1031 = vpop.f32.mrf.mxu0
    %v1032 = vadd.f32 0.0, %v1031
    %v1033 = vpop.f32.mrf.mxu0
    %v1034 = vadd.f32 0.0, %v1033
    %1035 = vdwg.mxu0
    %v1036 = vadd.f32 %v920, %v1017
    %v1037 = vadd.f32 %v921, %v1019
    %v1038 = vadd.f32 %v922, %v1022
    %v1039 = vadd.f32 %v923, %v1024
    %v1040 = vadd.f32 %v924, %v1027
    %v1041 = vadd.f32 %v925, %v1029
    %v1042 = vadd.f32 %v926, %v1032
    %v1043 = vadd.f32 %v927, %v1034
    %v1044 = vmax.f32 %v1036, 0.0
    %v1045 = vmax.f32 %v1037, 0.0
    %v1046 = vmax.f32 %v1038, 0.0
    %v1047 = vmax.f32 %v1039, 0.0
    %v1048 = vmax.f32 %v1040, 0.0
    %v1049 = vmax.f32 %v1041, 0.0
    %v1050 = vmax.f32 %v1042, 0.0
    %v1051 = vmax.f32 %v1043, 0.0
    %v1052 = vpack.c.bf16 %v1044, %v1044
    %v1053 = vpack.c.bf16 %v1045, %v1045
    %v1054 = vpack.c.bf16 %v1046, %v1046
    %v1055 = vpack.c.bf16 %v1047, %v1047
    %v1056 = vpack.c.bf16 %v1048, %v1048
    %v1057 = vpack.c.bf16 %v1049, %v1049
    %v1058 = vpack.c.bf16 %v1050, %v1050
    %v1059 = vpack.c.bf16 %v1051, %v1051
    %1060 = vst [vmem:[%s3] sm:$0xf] %v1052
    %1061 = vst [vmem:[%s3 + $0x4] sm:$0xf] %v1053
    %1062 = vst [vmem:[%s3 + $0x8] sm:$0xf] %v1054
    %1063 = vst [vmem:[%s3 + $0xc] sm:$0xf] %v1055
    %1064 = vst [vmem:[%s3 + $0x10] sm:$0xf] %v1056
    %1065 = vst [vmem:[%s3 + $0x14] sm:$0xf] %v1057
    %1066 = vst [vmem:[%s3 + $0x18] sm:$0xf] %v1058
    %1067 = vst [vmem:[%s3 + $0x1c] sm:$0xf] %v1059
    // Predicated region
    $region22: #{_lambda_.3} parent=1 // pred_check
      _
    $region23: #{_lambda_.3} parent=1 // pred_check_branch
      %1069 = sbr.rel (0) target = $region25
    $region24: #{_lambda_.3} parent=1 // pred_region
      _
    $region25: #{_lambda_.3} parent=1 // pred_fallthru
      _
    // Predicated region
    $region26: #{_lambda_.3} parent=1 // pred_check
      _
    $region27: #{_lambda_.3} parent=1 // pred_check_branch
      %1071 = sbr.rel (0) target = $region29
    $region28: #{_lambda_.3} parent=1 // pred_region
      _
    $region29: #{_lambda_.3} parent=1 // pred_fallthru
      _
    %1072 = vsyncpa [#allocation3], 1
    %1073 = vsyncpa [#allocation5], 1

// kernel: _lambda_.4
$region0: #{_lambda_.4}
  #allocation0 [shape = 'u32[]', space=smem, size = 0x4, offset = 0x4, fixed_abs, tag = 'smem constant byte address 0x4 - core index']
  #allocation1 [shape = 'u32[72,128]{1,0:T(1,128)}', space=vmem, size = 0x9000, scoped, tag = 'internal scratch']
  %s0 = inlined_call_operand.hbm [shape: bf16[9,32,16], index: 0, kind: input, shape index: {}]
  %s1 = inlined_call_operand.vmem [shape: bf16[16,546], index: 1, kind: input, shape index: {}]
  %s2 = inlined_call_operand.hbm [shape: bf16[9,512], index: 2, kind: input, shape index: {}]
  %s3 = inlined_call_operand.vmem [shape: bf16[32,512], index: 3, kind: output, shape index: {}]
  %s4 = sld [smem:[#allocation0]]
  $region30: #{_lambda_.4} parent=0
    _
  %s6 = ssub.s32 1, %s4
  %s7 = scalar_select 0, %s6, %s4
  $region1: #{_lambda_.4} parent=0
    #allocation2 [shape = 'u8[73728]{0}', space=vmem, size = 0x12000, scoped, tag = 'input window, operand 0, single buffered']
    #allocation3 [shape = 's32[1]{0}', space=sflag, size = 0x4, scoped, tag = 'scoped memory for _lambda_.4']
    #allocation4 [shape = 'u8[16384]{0}', space=vmem, size = 0x4000, scoped, tag = 'input window, operand 2, single buffered']
    #allocation5 [shape = 's32[1]{0}', space=sflag, size = 0x4, scoped, tag = 'scoped memory for _lambda_.4']
    %8 = vsyncpa [#allocation3], 0
    %9 = vsyncpa [#allocation5], 0
    // Predicated region
    $region2: #{_lambda_.4} parent=1 // pred_check
      _
    $region3: #{_lambda_.4} parent=1 // pred_check_branch
      %11 = sbr.rel (0) target = $region5
    $region4: #{_lambda_.4} parent=1 // pred_region
      %13 = vsyncadd [#allocation3], 0
      %s14 = sshll.u32 %s0, 4
      %s15 = int_to_ptr.hbm [resolvable:$true] %s14
      %s16 = sshll.u32 [#allocation2], 4
      %s17 = int_to_ptr.vmem [resolvable:$true] %s16
      %22 = dma.hbm_to_vmem [thread:$0]  %s15, 2304, %s17, [#allocation3], 64, 64, 4
    $region5: #{_lambda_.4} parent=1 // pred_fallthru
      _
    // Predicated region
    $region6: #{_lambda_.4} parent=1 // pred_check
      _
    $region7: #{_lambda_.4} parent=1 // pred_check_branch
      %24 = sbr.rel (0) target = $region9
    $region8: #{_lambda_.4} parent=1 // pred_region
      _
    $region9: #{_lambda_.4} parent=1 // pred_fallthru
      _
    // Predicated region
    $region10: #{_lambda_.4} parent=1 // pred_check
      _
    $region11: #{_lambda_.4} parent=1 // pred_check_branch
      %26 = sbr.rel (0) target = $region13
    $region12: #{_lambda_.4} parent=1 // pred_region
      %28 = vsyncadd [#allocation5], 0
      %s29 = sshll.u32 %s2, 4
      %s30 = int_to_ptr.hbm [resolvable:$true] %s29
      %s31 = sshll.u32 [#allocation4], 4
      %s32 = int_to_ptr.vmem [resolvable:$true] %s31
      %37 = dma.hbm_to_vmem [thread:$0]  %s30, 512, %s32, [#allocation5], 256, 256, 16
    $region13: #{_lambda_.4} parent=1 // pred_fallthru
      _
    // Predicated region
    $region14: #{_lambda_.4} parent=1 // pred_check
      _
    $region15: #{_lambda_.4} parent=1 // pred_check_branch
      %39 = sbr.rel (0) target = $region17
    $region16: #{_lambda_.4} parent=1 // pred_region
      %41 = dma.done [#allocation3], 2304
    $region17: #{_lambda_.4} parent=1 // pred_fallthru
      _
    // Predicated region
    $region18: #{_lambda_.4} parent=1 // pred_check
      _
    $region19: #{_lambda_.4} parent=1 // pred_check_branch
      %43 = sbr.rel (0) target = $region21
    $region20: #{_lambda_.4} parent=1 // pred_region
      %45 = dma.done [#allocation5], 512
    $region21: #{_lambda_.4} parent=1 // pred_fallthru
      _
    %v47 = vld [vmem:[%s1] sm:$0xff]
    %v48 = vld [vmem:[%s1 + $0x8] sm:$0xff]
    %v49 = vld [vmem:[%s1 + $0x10] sm:$0xf]
    %v50 = vld [vmem:[%s1 + $0x14] sm:$0xff]
    %v51 = vld [vmem:[%s1 + $0x1c] sm:$0xff]
    %v52 = vld [vmem:[%s1 + $0x24] sm:$0xf]
    %v53 = vld [vmem:[#allocation4] sm:$0xff]
    %v54 = vld [vmem:[#allocation4 + $0x8] sm:$0xff]
    %v55 = vld [vmem:[#allocation4 + $0x10] sm:$0x11]
    %v56 = vld [vmem:[#allocation4 + $0x18] sm:$0x11]
    %v59 = vunpack.c.l.b16 %v53
    %v60 = vunpack.c.h.b16 %v53
    %v61 = vunpack.c.l.b16 %v54
    %v62 = vunpack.c.h.b16 %v54
    %v63 = vpack.c.b16 %v59, %v59
    %v64 = vpack.c.b16 %v60, %v60
    %v65 = vpack.c.b16 %v61, %v61
    %v66 = vpack.c.b16 %v62, %v62
    %v68 = vpack.i.b16 %v63, %v63
    %v70 = vperm.slane %v68, 0
    %v72 = vpack.i.b16 %v64, %v64
    %v74 = vperm.slane %v72, 0
    %v76 = vpack.i.b16 %v65, %v65
    %v78 = vperm.slane %v76, 0
    %v80 = vpack.i.b16 %v66, %v66
    %v82 = vperm.slane %v80, 0
    %v83 = vunpack.c.l.bf16 %v47
    %v84 = vunpack.c.h.bf16 %v47
    %v85 = vunpack.c.l.bf16 %v48
    %v86 = vunpack.c.h.bf16 %v48
    %v87 = vunpack.c.l.bf16 %v50
    %v88 = vunpack.c.h.bf16 %v50
    %v89 = vunpack.c.l.bf16 %v51
    %v90 = vunpack.c.h.bf16 %v51
    %v91 = vunpack.c.l.bf16 %v70
    %v92 = vunpack.c.l.bf16 %v74
    %v93 = vunpack.c.l.bf16 %v78
    %v94 = vunpack.c.l.bf16 %v82
    %v95 = vmul.f32 %v83, %v91
    %v96 = vmul.f32 %v84, %v92
    %v97 = vmul.f32 %v85, %v93
    %v98 = vmul.f32 %v86, %v94
    %v99 = vmul.f32 %v87, %v91
    %v100 = vmul.f32 %v88, %v92
    %v101 = vmul.f32 %v89, %v93
    %v102 = vmul.f32 %v90, %v94
    %v103 = vpack.c.bf16 %v99, %v95
    %v104 = vpack.c.bf16 %v100, %v96
    %v105 = vpack.c.bf16 %v101, %v97
    %v106 = vpack.c.bf16 %v102, %v98
    %v107 = vld [vmem:[#allocation2] sm:$0xf]
    %v108 = vld [vmem:[#allocation2 + $0x4] sm:$0xf]
    %v109 = vld [vmem:[#allocation2 + $0x8] sm:$0xf]
    %v110 = vld [vmem:[#allocation2 + $0xc] sm:$0xf]
    %v111 = vshrl.u32 %v63, 16
    %v112 = vpack.i.b16 %v111, %v111
    %v114 = vperm.slane %v112, 0
    %v115 = vshrl.u32 %v64, 16
    %v116 = vpack.i.b16 %v115, %v115
    %v118 = vperm.slane %v116, 0
    %v119 = vshrl.u32 %v65, 16
    %v120 = vpack.i.b16 %v119, %v119
    %v122 = vperm.slane %v120, 0
    %v123 = vshrl.u32 %v66, 16
    %v124 = vpack.i.b16 %v123, %v123
    %v126 = vperm.slane %v124, 0
    %v127 = vunpack.c.l.bf16 %v49
    %v128 = vunpack.c.l.bf16 %v52
    %v129 = vunpack.c.l.bf16 %v114
    %v130 = vunpack.c.l.bf16 %v118
    %v131 = vunpack.c.l.bf16 %v122
    %v132 = vunpack.c.l.bf16 %v126
    %137 = vrot.lane.b32.xlu0 %v129, 1
    %v138 = vpop.permute.xlu0 %137
    %139 = vrot.lane.b32.xlu0 %v130, 1
    %v140 = vpop.permute.xlu0 %139
    %141 = vrot.lane.b32.xlu0 %v131, 1
    %v142 = vpop.permute.xlu0 %141
    %143 = vrot.lane.b32.xlu0 %v132, 1
    %v144 = vpop.permute.xlu0 %143
    %vm145 = vcmask 7168
    %v146 = vsel %vm145, %v138, %v140
    %v147 = vsel %vm145, %v140, %v142
    %v148 = vsel %vm145, %v142, %v144
    %v154 = vmul.f32 %v83, %v138
    %v155 = vmul.f32 %v84, %v146
    %v156 = vmul.f32 %v85, %v147
    %v157 = vmul.f32 %v86, %v148
    %v158 = vmul.f32 %v127, %v144
    %v159 = vmul.f32 %v87, %v138
    %v160 = vmul.f32 %v88, %v146
    %v161 = vmul.f32 %v89, %v147
    %v162 = vmul.f32 %v90, %v148
    %v163 = vmul.f32 %v128, %v144
    %v164 = vpack.c.bf16 %v159, %v154
    %v165 = vpack.c.bf16 %v160, %v155
    %v166 = vpack.c.bf16 %v161, %v156
    %v167 = vpack.c.bf16 %v162, %v157
    %v168 = vpack.c.bf16 %v163, %v158
    %s169 = scalar_lea.vmem [#allocation2], 16
    %v170 = vld [vmem:[%s169] sm:$0xf]
    %v171 = vld [vmem:[%s169 + $0x4] sm:$0xf]
    %v172 = vld [vmem:[%s169 + $0x8] sm:$0xf]
    %v173 = vld [vmem:[%s169 + $0xc] sm:$0xf]
    %v178 = vunpack.c.l.b16 %v170
    %v179 = vunpack.c.l.b16 %v171
    %v180 = vunpack.c.l.b16 %v172
    %v181 = vunpack.c.l.b16 %v173
    %v182 = vpack.c.b16 %v179, %v178
    %v183 = vpack.c.b16 %v181, %v180
    %189 = vrot.lane.b32.xlu0 %v164, 127
    %v190 = vpop.permute.xlu0 %189
    %191 = vrot.lane.b32.xlu0 %v165, 127
    %v192 = vpop.permute.xlu0 %191
    %193 = vrot.lane.b32.xlu0 %v166, 127
    %v194 = vpop.permute.xlu0 %193
    %195 = vrot.lane.b32.xlu0 %v167, 127
    %v196 = vpop.permute.xlu0 %195
    %197 = vrot.lane.b32.xlu0 %v168, 127
    %v198 = vpop.permute.xlu0 %197
    %vm199 = vcmask 1039360
    %v200 = vsel %vm199, %v190, %v192
    %v201 = vsel %vm199, %v192, %v194
    %v202 = vsel %vm199, %v194, %v196
    %v203 = vsel %vm199, %v196, %v198
    %vm208 = vcmask 130048
    %v210 = vsel %vm208, %v182, 0
    %v213 = vsel %vm208, %v183, 0
    %215 = vmatpush.bf16.msra.mxu0 0
    %216 = vmatpush.bf16.msra.mxu0 0
    %217 = vmatpush.bf16.msra.mxu0 0
    %218 = vmatpush.bf16.msra.mxu0 0
    %219 = vmatpush.bf16.msra.mxu0 0
    %220 = vmatpush.bf16.msra.mxu0 0
    %221 = vmatpush.bf16.msra.mxu0 0
    %222 = vmatpush.bf16.msra.mxu0 %v200
    %223 = vmatmul.bf16.gmra.mxu0 %v210
    %v224 = vpop.f32.mrf.mxu0
    %v225 = vadd.f32 0.0, %v224
    %v226 = vpop.f32.mrf.mxu0
    %v227 = vadd.f32 0.0, %v226
    %228 = vmatmul.bf16.gmra.mxu0 %v213
    %v229 = vpop.f32.mrf.mxu0
    %v230 = vadd.f32 0.0, %v229
    %v231 = vpop.f32.mrf.mxu0
    %v232 = vadd.f32 0.0, %v231
    %233 = vdwg.mxu0
    %234 = vmatpush.bf16.msra.mxu0 0
    %235 = vmatpush.bf16.msra.mxu0 0
    %236 = vmatpush.bf16.msra.mxu0 0
    %237 = vmatpush.bf16.msra.mxu0 0
    %238 = vmatpush.bf16.msra.mxu0 0
    %239 = vmatpush.bf16.msra.mxu0 0
    %240 = vmatpush.bf16.msra.mxu0 0
    %241 = vmatpush.bf16.msra.mxu0 %v201
    %242 = vmatmul.bf16.gmra.mxu0 %v210
    %v243 = vpop.f32.mrf.mxu0
    %v244 = vadd.f32 0.0, %v243
    %v245 = vpop.f32.mrf.mxu0
    %v246 = vadd.f32 0.0, %v245
    %247 = vmatmul.bf16.gmra.mxu0 %v213
    %v248 = vpop.f32.mrf.mxu0
    %v249 = vadd.f32 0.0, %v248
    %v250 = vpop.f32.mrf.mxu0
    %v251 = vadd.f32 0.0, %v250
    %252 = vdwg.mxu0
    %253 = vmatpush.bf16.msra.mxu0 0
    %254 = vmatpush.bf16.msra.mxu0 0
    %255 = vmatpush.bf16.msra.mxu0 0
    %256 = vmatpush.bf16.msra.mxu0 0
    %257 = vmatpush.bf16.msra.mxu0 0
    %258 = vmatpush.bf16.msra.mxu0 0
    %259 = vmatpush.bf16.msra.mxu0 0
    %260 = vmatpush.bf16.msra.mxu0 %v202
    %261 = vmatmul.bf16.gmra.mxu0 %v210
    %v262 = vpop.f32.mrf.mxu0
    %v263 = vadd.f32 0.0, %v262
    %v264 = vpop.f32.mrf.mxu0
    %v265 = vadd.f32 0.0, %v264
    %266 = vmatmul.bf16.gmra.mxu0 %v213
    %v267 = vpop.f32.mrf.mxu0
    %v268 = vadd.f32 0.0, %v267
    %v269 = vpop.f32.mrf.mxu0
    %v270 = vadd.f32 0.0, %v269
    %271 = vdwg.mxu0
    %272 = vmatpush.bf16.msra.mxu0 0
    %273 = vmatpush.bf16.msra.mxu0 0
    %274 = vmatpush.bf16.msra.mxu0 0
    %275 = vmatpush.bf16.msra.mxu0 0
    %276 = vmatpush.bf16.msra.mxu0 0
    %277 = vmatpush.bf16.msra.mxu0 0
    %278 = vmatpush.bf16.msra.mxu0 0
    %279 = vmatpush.bf16.msra.mxu0 %v203
    %280 = vmatmul.bf16.gmra.mxu0 %v210
    %v281 = vpop.f32.mrf.mxu0
    %v282 = vadd.f32 0.0, %v281
    %v283 = vpop.f32.mrf.mxu0
    %v284 = vadd.f32 0.0, %v283
    %285 = vmatmul.bf16.gmra.mxu0 %v213
    %v286 = vpop.f32.mrf.mxu0
    %v287 = vadd.f32 0.0, %v286
    %v288 = vpop.f32.mrf.mxu0
    %v289 = vadd.f32 0.0, %v288
    %290 = vdwg.mxu0
    %v295 = vunpack.c.l.b16 %v107
    %v296 = vunpack.c.l.b16 %v108
    %v297 = vunpack.c.l.b16 %v109
    %v298 = vunpack.c.l.b16 %v110
    %v299 = vpack.c.b16 %v296, %v295
    %v300 = vpack.c.b16 %v298, %v297
    %v302 = vsel %vm208, %v299, 0
    %v305 = vsel %vm208, %v300, 0
    %307 = vmatpush.bf16.msra.mxu0 0
    %308 = vmatpush.bf16.msra.mxu0 0
    %309 = vmatpush.bf16.msra.mxu0 0
    %310 = vmatpush.bf16.msra.mxu0 0
    %311 = vmatpush.bf16.msra.mxu0 0
    %312 = vmatpush.bf16.msra.mxu0 0
    %313 = vmatpush.bf16.msra.mxu0 0
    %314 = vmatpush.bf16.msra.mxu0 %v103
    %315 = vmatmul.bf16.gmra.mxu0 %v302
    %v316 = vpop.f32.mrf.mxu0
    %v317 = vadd.f32 %v225, %v316
    %v318 = vpop.f32.mrf.mxu0
    %v319 = vadd.f32 %v227, %v318
    %320 = vmatmul.bf16.gmra.mxu0 %v305
    %v321 = vpop.f32.mrf.mxu0
    %v322 = vadd.f32 %v230, %v321
    %v323 = vpop.f32.mrf.mxu0
    %v324 = vadd.f32 %v232, %v323
    %325 = vdwg.mxu0
    %326 = vmatpush.bf16.msra.mxu0 0
    %327 = vmatpush.bf16.msra.mxu0 0
    %328 = vmatpush.bf16.msra.mxu0 0
    %329 = vmatpush.bf16.msra.mxu0 0
    %330 = vmatpush.bf16.msra.mxu0 0
    %331 = vmatpush.bf16.msra.mxu0 0
    %332 = vmatpush.bf16.msra.mxu0 0
    %333 = vmatpush.bf16.msra.mxu0 %v104
    %334 = vmatmul.bf16.gmra.mxu0 %v302
    %v335 = vpop.f32.mrf.mxu0
    %v336 = vadd.f32 %v244, %v335
    %v337 = vpop.f32.mrf.mxu0
    %v338 = vadd.f32 %v246, %v337
    %339 = vmatmul.bf16.gmra.mxu0 %v305
    %v340 = vpop.f32.mrf.mxu0
    %v341 = vadd.f32 %v249, %v340
    %v342 = vpop.f32.mrf.mxu0
    %v343 = vadd.f32 %v251, %v342
    %344 = vdwg.mxu0
    %345 = vmatpush.bf16.msra.mxu0 0
    %346 = vmatpush.bf16.msra.mxu0 0
    %347 = vmatpush.bf16.msra.mxu0 0
    %348 = vmatpush.bf16.msra.mxu0 0
    %349 = vmatpush.bf16.msra.mxu0 0
    %350 = vmatpush.bf16.msra.mxu0 0
    %351 = vmatpush.bf16.msra.mxu0 0
    %352 = vmatpush.bf16.msra.mxu0 %v105
    %353 = vmatmul.bf16.gmra.mxu0 %v302
    %v354 = vpop.f32.mrf.mxu0
    %v355 = vadd.f32 %v263, %v354
    %v356 = vpop.f32.mrf.mxu0
    %v357 = vadd.f32 %v265, %v356
    %358 = vmatmul.bf16.gmra.mxu0 %v305
    %v359 = vpop.f32.mrf.mxu0
    %v360 = vadd.f32 %v268, %v359
    %v361 = vpop.f32.mrf.mxu0
    %v362 = vadd.f32 %v270, %v361
    %363 = vdwg.mxu0
    %364 = vmatpush.bf16.msra.mxu0 0
    %365 = vmatpush.bf16.msra.mxu0 0
    %366 = vmatpush.bf16.msra.mxu0 0
    %367 = vmatpush.bf16.msra.mxu0 0
    %368 = vmatpush.bf16.msra.mxu0 0
    %369 = vmatpush.bf16.msra.mxu0 0
    %370 = vmatpush.bf16.msra.mxu0 0
    %371 = vmatpush.bf16.msra.mxu0 %v106
    %372 = vmatmul.bf16.gmra.mxu0 %v302
    %v373 = vpop.f32.mrf.mxu0
    %v374 = vadd.f32 %v282, %v373
    %v375 = vpop.f32.mrf.mxu0
    %v376 = vadd.f32 %v284, %v375
    %377 = vmatmul.bf16.gmra.mxu0 %v305
    %v378 = vpop.f32.mrf.mxu0
    %v379 = vadd.f32 %v287, %v378
    %v380 = vpop.f32.mrf.mxu0
    %v381 = vadd.f32 %v289, %v380
    %382 = vdwg.mxu0
    %v383 = vperm.slane %v68, 1
    %v384 = vperm.slane %v72, 1
    %v385 = vperm.slane %v76, 1
    %v386 = vperm.slane %v80, 1
    %v387 = vunpack.c.l.bf16 %v383
    %v388 = vunpack.c.l.bf16 %v384
    %v389 = vunpack.c.l.bf16 %v385
    %v390 = vunpack.c.l.bf16 %v386
    %395 = vrot.lane.b32.xlu0 %v387, 2
    %v396 = vpop.permute.xlu0 %395
    %397 = vrot.lane.b32.xlu0 %v388, 2
    %v398 = vpop.permute.xlu0 %397
    %399 = vrot.lane.b32.xlu0 %v389, 2
    %v400 = vpop.permute.xlu0 %399
    %401 = vrot.lane.b32.xlu0 %v390, 2
    %v402 = vpop.permute.xlu0 %401
    %vm403 = vcmask 15360
    %v404 = vsel %vm403, %v396, %v398
    %v405 = vsel %vm403, %v398, %v400
    %v406 = vsel %vm403, %v400, %v402
    %v412 = vmul.f32 %v83, %v396
    %v413 = vmul.f32 %v84, %v404
    %v414 = vmul.f32 %v85, %v405
    %v415 = vmul.f32 %v86, %v406
    %v416 = vmul.f32 %v127, %v402
    %v417 = vmul.f32 %v87, %v396
    %v418 = vmul.f32 %v88, %v404
    %v419 = vmul.f32 %v89, %v405
    %v420 = vmul.f32 %v90, %v406
    %v421 = vmul.f32 %v128, %v402
    %v422 = vpack.c.bf16 %v417, %v412
    %v423 = vpack.c.bf16 %v418, %v413
    %v424 = vpack.c.bf16 %v419, %v414
    %v425 = vpack.c.bf16 %v420, %v415
    %v426 = vpack.c.bf16 %v421, %v416
    %s427 = scalar_lea.vmem [#allocation2], 32
    %v428 = vld [vmem:[%s427] sm:$0xf]
    %v429 = vld [vmem:[%s427 + $0x4] sm:$0xf]
    %v430 = vld [vmem:[%s427 + $0x8] sm:$0xf]
    %v431 = vld [vmem:[%s427 + $0xc] sm:$0xf]
    %v436 = vunpack.c.l.b16 %v428
    %v437 = vunpack.c.l.b16 %v429
    %v438 = vunpack.c.l.b16 %v430
    %v439 = vunpack.c.l.b16 %v431
    %v440 = vpack.c.b16 %v437, %v436
    %v441 = vpack.c.b16 %v439, %v438
    %447 = vrot.lane.b32.xlu0 %v422, 126
    %v448 = vpop.permute.xlu0 %447
    %449 = vrot.lane.b32.xlu0 %v423, 126
    %v450 = vpop.permute.xlu0 %449
    %451 = vrot.lane.b32.xlu0 %v424, 126
    %v452 = vpop.permute.xlu0 %451
    %453 = vrot.lane.b32.xlu0 %v425, 126
    %v454 = vpop.permute.xlu0 %453
    %455 = vrot.lane.b32.xlu0 %v426, 126
    %v456 = vpop.permute.xlu0 %455
    %vm457 = vcmask 1031168
    %v458 = vsel %vm457, %v448, %v450
    %v459 = vsel %vm457, %v450, %v452
    %v460 = vsel %vm457, %v452, %v454
    %v461 = vsel %vm457, %v454, %v456
    %v467 = vsel %vm208, %v440, 0
    %v470 = vsel %vm208, %v441, 0
    %472 = vmatpush.bf16.msra.mxu0 0
    %473 = vmatpush.bf16.msra.mxu0 0
    %474 = vmatpush.bf16.msra.mxu0 0
    %475 = vmatpush.bf16.msra.mxu0 0
    %476 = vmatpush.bf16.msra.mxu0 0
    %477 = vmatpush.bf16.msra.mxu0 0
    %478 = vmatpush.bf16.msra.mxu0 0
    %479 = vmatpush.bf16.msra.mxu0 %v458
    %480 = vmatmul.bf16.gmra.mxu0 %v467
    %v481 = vpop.f32.mrf.mxu0
    %v482 = vadd.f32 0.0, %v481
    %v483 = vpop.f32.mrf.mxu0
    %v484 = vadd.f32 0.0, %v483
    %485 = vmatmul.bf16.gmra.mxu0 %v470
    %v486 = vpop.f32.mrf.mxu0
    %v487 = vadd.f32 0.0, %v486
    %v488 = vpop.f32.mrf.mxu0
    %v489 = vadd.f32 0.0, %v488
    %490 = vdwg.mxu0
    %491 = vmatpush.bf16.msra.mxu0 0
    %492 = vmatpush.bf16.msra.mxu0 0
    %493 = vmatpush.bf16.msra.mxu0 0
    %494 = vmatpush.bf16.msra.mxu0 0
    %495 = vmatpush.bf16.msra.mxu0 0
    %496 = vmatpush.bf16.msra.mxu0 0
    %497 = vmatpush.bf16.msra.mxu0 0
    %498 = vmatpush.bf16.msra.mxu0 %v459
    %499 = vmatmul.bf16.gmra.mxu0 %v467
    %v500 = vpop.f32.mrf.mxu0
    %v501 = vadd.f32 0.0, %v500
    %v502 = vpop.f32.mrf.mxu0
    %v503 = vadd.f32 0.0, %v502
    %504 = vmatmul.bf16.gmra.mxu0 %v470
    %v505 = vpop.f32.mrf.mxu0
    %v506 = vadd.f32 0.0, %v505
    %v507 = vpop.f32.mrf.mxu0
    %v508 = vadd.f32 0.0, %v507
    %509 = vdwg.mxu0
    %510 = vmatpush.bf16.msra.mxu0 0
    %511 = vmatpush.bf16.msra.mxu0 0
    %512 = vmatpush.bf16.msra.mxu0 0
    %513 = vmatpush.bf16.msra.mxu0 0
    %514 = vmatpush.bf16.msra.mxu0 0
    %515 = vmatpush.bf16.msra.mxu0 0
    %516 = vmatpush.bf16.msra.mxu0 0
    %517 = vmatpush.bf16.msra.mxu0 %v460
    %518 = vmatmul.bf16.gmra.mxu0 %v467
    %v519 = vpop.f32.mrf.mxu0
    %v520 = vadd.f32 0.0, %v519
    %v521 = vpop.f32.mrf.mxu0
    %v522 = vadd.f32 0.0, %v521
    %523 = vmatmul.bf16.gmra.mxu0 %v470
    %v524 = vpop.f32.mrf.mxu0
    %v525 = vadd.f32 0.0, %v524
    %v526 = vpop.f32.mrf.mxu0
    %v527 = vadd.f32 0.0, %v526
    %528 = vdwg.mxu0
    %529 = vmatpush.bf16.msra.mxu0 0
    %530 = vmatpush.bf16.msra.mxu0 0
    %531 = vmatpush.bf16.msra.mxu0 0
    %532 = vmatpush.bf16.msra.mxu0 0
    %533 = vmatpush.bf16.msra.mxu0 0
    %534 = vmatpush.bf16.msra.mxu0 0
    %535 = vmatpush.bf16.msra.mxu0 0
    %536 = vmatpush.bf16.msra.mxu0 %v461
    %537 = vmatmul.bf16.gmra.mxu0 %v467
    %v538 = vpop.f32.mrf.mxu0
    %v539 = vadd.f32 0.0, %v538
    %v540 = vpop.f32.mrf.mxu0
    %v541 = vadd.f32 0.0, %v540
    %542 = vmatmul.bf16.gmra.mxu0 %v470
    %v543 = vpop.f32.mrf.mxu0
    %v544 = vadd.f32 0.0, %v543
    %v545 = vpop.f32.mrf.mxu0
    %v546 = vadd.f32 0.0, %v545
    %547 = vdwg.mxu0
    %v548 = vadd.f32 %v317, %v482
    %v549 = vadd.f32 %v336, %v501
    %v550 = vadd.f32 %v355, %v520
    %v551 = vadd.f32 %v374, %v539
    %v552 = vadd.f32 %v319, %v484
    %v553 = vadd.f32 %v338, %v503
    %v554 = vadd.f32 %v357, %v522
    %v555 = vadd.f32 %v376, %v541
    %v556 = vadd.f32 %v322, %v487
    %v557 = vadd.f32 %v341, %v506
    %v558 = vadd.f32 %v360, %v525
    %v559 = vadd.f32 %v379, %v544
    %v560 = vadd.f32 %v324, %v489
    %v561 = vadd.f32 %v343, %v508
    %v562 = vadd.f32 %v362, %v527
    %v563 = vadd.f32 %v381, %v546
    %v564 = vperm.slane %v112, 1
    %v565 = vperm.slane %v116, 1
    %v566 = vperm.slane %v120, 1
    %v567 = vperm.slane %v124, 1
    %v568 = vunpack.c.l.bf16 %v564
    %v569 = vunpack.c.l.bf16 %v565
    %v570 = vunpack.c.l.bf16 %v566
    %v571 = vunpack.c.l.bf16 %v567
    %576 = vrot.lane.b32.xlu0 %v568, 16
    %v577 = vpop.permute.xlu0 %576
    %578 = vrot.lane.b32.xlu0 %v569, 16
    %v579 = vpop.permute.xlu0 %578
    %580 = vrot.lane.b32.xlu0 %v570, 16
    %v581 = vpop.permute.xlu0 %580
    %582 = vrot.lane.b32.xlu0 %v571, 16
    %v583 = vpop.permute.xlu0 %582
    %v584 = vsel %vm208, %v577, %v579
    %v585 = vsel %vm208, %v579, %v581
    %v586 = vsel %vm208, %v581, %v583
    %v592 = vmul.f32 %v83, %v577
    %v593 = vmul.f32 %v84, %v584
    %v594 = vmul.f32 %v85, %v585
    %v595 = vmul.f32 %v86, %v586
    %v596 = vmul.f32 %v127, %v583
    %v597 = vmul.f32 %v87, %v577
    %v598 = vmul.f32 %v88, %v584
    %v599 = vmul.f32 %v89, %v585
    %v600 = vmul.f32 %v90, %v586
    %v601 = vmul.f32 %v128, %v583
    %v602 = vpack.c.bf16 %v597, %v592
    %v603 = vpack.c.bf16 %v598, %v593
    %v604 = vpack.c.bf16 %v599, %v594
    %v605 = vpack.c.bf16 %v600, %v595
    %v606 = vpack.c.bf16 %v601, %v596
    %s607 = scalar_lea.vmem [#allocation2], 48
    %v608 = vld [vmem:[%s607] sm:$0xf]
    %v609 = vld [vmem:[%s607 + $0x4] sm:$0xf]
    %v610 = vld [vmem:[%s607 + $0x8] sm:$0xf]
    %v611 = vld [vmem:[%s607 + $0xc] sm:$0xf]
    %v616 = vunpack.c.l.b16 %v608
    %v617 = vunpack.c.l.b16 %v609
    %v618 = vunpack.c.l.b16 %v610
    %v619 = vunpack.c.l.b16 %v611
    %v620 = vpack.c.b16 %v617, %v616
    %v621 = vpack.c.b16 %v619, %v618
    %627 = vrot.lane.b32.xlu0 %v602, 112
    %v628 = vpop.permute.xlu0 %627
    %629 = vrot.lane.b32.xlu0 %v603, 112
    %v630 = vpop.permute.xlu0 %629
    %631 = vrot.lane.b32.xlu0 %v604, 112
    %v632 = vpop.permute.xlu0 %631
    %633 = vrot.lane.b32.xlu0 %v605, 112
    %v634 = vpop.permute.xlu0 %633
    %635 = vrot.lane.b32.xlu0 %v606, 112
    %v636 = vpop.permute.xlu0 %635
    %vm637 = vcmask 916480
    %v638 = vsel %vm637, %v628, %v630
    %v639 = vsel %vm637, %v630, %v632
    %v640 = vsel %vm637, %v632, %v634
    %v641 = vsel %vm637, %v634, %v636
    %v647 = vsel %vm208, %v620, 0
    %v650 = vsel %vm208, %v621, 0
    %652 = vmatpush.bf16.msra.mxu0 0
    %653 = vmatpush.bf16.msra.mxu0 0
    %654 = vmatpush.bf16.msra.mxu0 0
    %655 = vmatpush.bf16.msra.mxu0 0
    %656 = vmatpush.bf16.msra.mxu0 0
    %657 = vmatpush.bf16.msra.mxu0 0
    %658 = vmatpush.bf16.msra.mxu0 0
    %659 = vmatpush.bf16.msra.mxu0 %v638
    %660 = vmatmul.bf16.gmra.mxu0 %v647
    %v661 = vpop.f32.mrf.mxu0
    %v662 = vadd.f32 0.0, %v661
    %v663 = vpop.f32.mrf.mxu0
    %v664 = vadd.f32 0.0, %v663
    %665 = vmatmul.bf16.gmra.mxu0 %v650
    %v666 = vpop.f32.mrf.mxu0
    %v667 = vadd.f32 0.0, %v666
    %v668 = vpop.f32.mrf.mxu0
    %v669 = vadd.f32 0.0, %v668
    %670 = vdwg.mxu0
    %671 = vmatpush.bf16.msra.mxu0 0
    %672 = vmatpush.bf16.msra.mxu0 0
    %673 = vmatpush.bf16.msra.mxu0 0
    %674 = vmatpush.bf16.msra.mxu0 0
    %675 = vmatpush.bf16.msra.mxu0 0
    %676 = vmatpush.bf16.msra.mxu0 0
    %677 = vmatpush.bf16.msra.mxu0 0
    %678 = vmatpush.bf16.msra.mxu0 %v639
    %679 = vmatmul.bf16.gmra.mxu0 %v647
    %v680 = vpop.f32.mrf.mxu0
    %v681 = vadd.f32 0.0, %v680
    %v682 = vpop.f32.mrf.mxu0
    %v683 = vadd.f32 0.0, %v682
    %684 = vmatmul.bf16.gmra.mxu0 %v650
    %v685 = vpop.f32.mrf.mxu0
    %v686 = vadd.f32 0.0, %v685
    %v687 = vpop.f32.mrf.mxu0
    %v688 = vadd.f32 0.0, %v687
    %689 = vdwg.mxu0
    %690 = vmatpush.bf16.msra.mxu0 0
    %691 = vmatpush.bf16.msra.mxu0 0
    %692 = vmatpush.bf16.msra.mxu0 0
    %693 = vmatpush.bf16.msra.mxu0 0
    %694 = vmatpush.bf16.msra.mxu0 0
    %695 = vmatpush.bf16.msra.mxu0 0
    %696 = vmatpush.bf16.msra.mxu0 0
    %697 = vmatpush.bf16.msra.mxu0 %v640
    %698 = vmatmul.bf16.gmra.mxu0 %v647
    %v699 = vpop.f32.mrf.mxu0
    %v700 = vadd.f32 0.0, %v699
    %v701 = vpop.f32.mrf.mxu0
    %v702 = vadd.f32 0.0, %v701
    %703 = vmatmul.bf16.gmra.mxu0 %v650
    %v704 = vpop.f32.mrf.mxu0
    %v705 = vadd.f32 0.0, %v704
    %v706 = vpop.f32.mrf.mxu0
    %v707 = vadd.f32 0.0, %v706
    %708 = vdwg.mxu0
    %709 = vmatpush.bf16.msra.mxu0 0
    %710 = vmatpush.bf16.msra.mxu0 0
    %711 = vmatpush.bf16.msra.mxu0 0
    %712 = vmatpush.bf16.msra.mxu0 0
    %713 = vmatpush.bf16.msra.mxu0 0
    %714 = vmatpush.bf16.msra.mxu0 0
    %715 = vmatpush.bf16.msra.mxu0 0
    %716 = vmatpush.bf16.msra.mxu0 %v641
    %717 = vmatmul.bf16.gmra.mxu0 %v647
    %v718 = vpop.f32.mrf.mxu0
    %v719 = vadd.f32 0.0, %v718
    %v720 = vpop.f32.mrf.mxu0
    %v721 = vadd.f32 0.0, %v720
    %722 = vmatmul.bf16.gmra.mxu0 %v650
    %v723 = vpop.f32.mrf.mxu0
    %v724 = vadd.f32 0.0, %v723
    %v725 = vpop.f32.mrf.mxu0
    %v726 = vadd.f32 0.0, %v725
    %727 = vdwg.mxu0
    %v728 = vadd.f32 %v548, %v662
    %v729 = vadd.f32 %v549, %v681
    %v730 = vadd.f32 %v550, %v700
    %v731 = vadd.f32 %v551, %v719
    %v732 = vadd.f32 %v552, %v664
    %v733 = vadd.f32 %v553, %v683
    %v734 = vadd.f32 %v554, %v702
    %v735 = vadd.f32 %v555, %v721
    %v736 = vadd.f32 %v556, %v667
    %v737 = vadd.f32 %v557, %v686
    %v738 = vadd.f32 %v558, %v705
    %v739 = vadd.f32 %v559, %v724
    %v740 = vadd.f32 %v560, %v669
    %v741 = vadd.f32 %v561, %v688
    %v742 = vadd.f32 %v562, %v707
    %v743 = vadd.f32 %v563, %v726
    %v744 = vperm.slane %v68, 2
    %v745 = vperm.slane %v72, 2
    %v746 = vperm.slane %v76, 2
    %v747 = vperm.slane %v80, 2
    %v748 = vunpack.c.l.bf16 %v744
    %v749 = vunpack.c.l.bf16 %v745
    %v750 = vunpack.c.l.bf16 %v746
    %v751 = vunpack.c.l.bf16 %v747
    %756 = vrot.lane.b32.xlu0 %v748, 17
    %v757 = vpop.permute.xlu0 %756
    %758 = vrot.lane.b32.xlu0 %v749, 17
    %v759 = vpop.permute.xlu0 %758
    %760 = vrot.lane.b32.xlu0 %v750, 17
    %v761 = vpop.permute.xlu0 %760
    %762 = vrot.lane.b32.xlu0 %v751, 17
    %v763 = vpop.permute.xlu0 %762
    %vm764 = vcmask 138240
    %v765 = vsel %vm764, %v757, %v759
    %v766 = vsel %vm764, %v759, %v761
    %v767 = vsel %vm764, %v761, %v763
    %v773 = vmul.f32 %v83, %v757
    %v774 = vmul.f32 %v84, %v765
    %v775 = vmul.f32 %v85, %v766
    %v776 = vmul.f32 %v86, %v767
    %v777 = vmul.f32 %v127, %v763
    %v778 = vmul.f32 %v87, %v757
    %v779 = vmul.f32 %v88, %v765
    %v780 = vmul.f32 %v89, %v766
    %v781 = vmul.f32 %v90, %v767
    %v782 = vmul.f32 %v128, %v763
    %v783 = vpack.c.bf16 %v778, %v773
    %v784 = vpack.c.bf16 %v779, %v774
    %v785 = vpack.c.bf16 %v780, %v775
    %v786 = vpack.c.bf16 %v781, %v776
    %v787 = vpack.c.bf16 %v782, %v777
    %s788 = scalar_lea.vmem [#allocation2], 64
    %v789 = vld [vmem:[%s788] sm:$0xf]
    %v790 = vld [vmem:[%s788 + $0x4] sm:$0xf]
    %v791 = vld [vmem:[%s788 + $0x8] sm:$0xf]
    %v792 = vld [vmem:[%s788 + $0xc] sm:$0xf]
    %v797 = vunpack.c.l.b16 %v789
    %v798 = vunpack.c.l.b16 %v790
    %v799 = vunpack.c.l.b16 %v791
    %v800 = vunpack.c.l.b16 %v792
    %v801 = vpack.c.b16 %v798, %v797
    %v802 = vpack.c.b16 %v800, %v799
    %808 = vrot.lane.b32.xlu0 %v783, 111
    %v809 = vpop.permute.xlu0 %808
    %810 = vrot.lane.b32.xlu0 %v784, 111
    %v811 = vpop.permute.xlu0 %810
    %812 = vrot.lane.b32.xlu0 %v785, 111
    %v813 = vpop.permute.xlu0 %812
    %814 = vrot.lane.b32.xlu0 %v786, 111
    %v815 = vpop.permute.xlu0 %814
    %816 = vrot.lane.b32.xlu0 %v787, 111
    %v817 = vpop.permute.xlu0 %816
    %vm818 = vcmask 908288
    %v819 = vsel %vm818, %v809, %v811
    %v820 = vsel %vm818, %v811, %v813
    %v821 = vsel %vm818, %v813, %v815
    %v822 = vsel %vm818, %v815, %v817
    %v828 = vsel %vm208, %v801, 0
    %v831 = vsel %vm208, %v802, 0
    %833 = vmatpush.bf16.msra.mxu0 0
    %834 = vmatpush.bf16.msra.mxu0 0
    %835 = vmatpush.bf16.msra.mxu0 0
    %836 = vmatpush.bf16.msra.mxu0 0
    %837 = vmatpush.bf16.msra.mxu0 0
    %838 = vmatpush.bf16.msra.mxu0 0
    %839 = vmatpush.bf16.msra.mxu0 0
    %840 = vmatpush.bf16.msra.mxu0 %v819
    %841 = vmatmul.bf16.gmra.mxu0 %v828
    %v842 = vpop.f32.mrf.mxu0
    %v843 = vadd.f32 0.0, %v842
    %v844 = vpop.f32.mrf.mxu0
    %v845 = vadd.f32 0.0, %v844
    %846 = vmatmul.bf16.gmra.mxu0 %v831
    %v847 = vpop.f32.mrf.mxu0
    %v848 = vadd.f32 0.0, %v847
    %v849 = vpop.f32.mrf.mxu0
    %v850 = vadd.f32 0.0, %v849
    %851 = vdwg.mxu0
    %852 = vmatpush.bf16.msra.mxu0 0
    %853 = vmatpush.bf16.msra.mxu0 0
    %854 = vmatpush.bf16.msra.mxu0 0
    %855 = vmatpush.bf16.msra.mxu0 0
    %856 = vmatpush.bf16.msra.mxu0 0
    %857 = vmatpush.bf16.msra.mxu0 0
    %858 = vmatpush.bf16.msra.mxu0 0
    %859 = vmatpush.bf16.msra.mxu0 %v820
    %860 = vmatmul.bf16.gmra.mxu0 %v828
    %v861 = vpop.f32.mrf.mxu0
    %v862 = vadd.f32 0.0, %v861
    %v863 = vpop.f32.mrf.mxu0
    %v864 = vadd.f32 0.0, %v863
    %865 = vmatmul.bf16.gmra.mxu0 %v831
    %v866 = vpop.f32.mrf.mxu0
    %v867 = vadd.f32 0.0, %v866
    %v868 = vpop.f32.mrf.mxu0
    %v869 = vadd.f32 0.0, %v868
    %870 = vdwg.mxu0
    %871 = vmatpush.bf16.msra.mxu0 0
    %872 = vmatpush.bf16.msra.mxu0 0
    %873 = vmatpush.bf16.msra.mxu0 0
    %874 = vmatpush.bf16.msra.mxu0 0
    %875 = vmatpush.bf16.msra.mxu0 0
    %876 = vmatpush.bf16.msra.mxu0 0
    %877 = vmatpush.bf16.msra.mxu0 0
    %878 = vmatpush.bf16.msra.mxu0 %v821
    %879 = vmatmul.bf16.gmra.mxu0 %v828
    %v880 = vpop.f32.mrf.mxu0
    %v881 = vadd.f32 0.0, %v880
    %v882 = vpop.f32.mrf.mxu0
    %v883 = vadd.f32 0.0, %v882
    %884 = vmatmul.bf16.gmra.mxu0 %v831
    %v885 = vpop.f32.mrf.mxu0
    %v886 = vadd.f32 0.0, %v885
    %v887 = vpop.f32.mrf.mxu0
    %v888 = vadd.f32 0.0, %v887
    %889 = vdwg.mxu0
    %890 = vmatpush.bf16.msra.mxu0 0
    %891 = vmatpush.bf16.msra.mxu0 0
    %892 = vmatpush.bf16.msra.mxu0 0
    %893 = vmatpush.bf16.msra.mxu0 0
    %894 = vmatpush.bf16.msra.mxu0 0
    %895 = vmatpush.bf16.msra.mxu0 0
    %896 = vmatpush.bf16.msra.mxu0 0
    %897 = vmatpush.bf16.msra.mxu0 %v822
    %898 = vmatmul.bf16.gmra.mxu0 %v828
    %v899 = vpop.f32.mrf.mxu0
    %v900 = vadd.f32 0.0, %v899
    %v901 = vpop.f32.mrf.mxu0
    %v902 = vadd.f32 0.0, %v901
    %903 = vmatmul.bf16.gmra.mxu0 %v831
    %v904 = vpop.f32.mrf.mxu0
    %v905 = vadd.f32 0.0, %v904
    %v906 = vpop.f32.mrf.mxu0
    %v907 = vadd.f32 0.0, %v906
    %908 = vdwg.mxu0
    %v909 = vadd.f32 %v728, %v843
    %v910 = vadd.f32 %v729, %v862
    %v911 = vadd.f32 %v730, %v881
    %v912 = vadd.f32 %v731, %v900
    %v913 = vadd.f32 %v732, %v845
    %v914 = vadd.f32 %v733, %v864
    %v915 = vadd.f32 %v734, %v883
    %v916 = vadd.f32 %v735, %v902
    %v917 = vadd.f32 %v736, %v848
    %v918 = vadd.f32 %v737, %v867
    %v919 = vadd.f32 %v738, %v886
    %v920 = vadd.f32 %v739, %v905
    %v921 = vadd.f32 %v740, %v850
    %v922 = vadd.f32 %v741, %v869
    %v923 = vadd.f32 %v742, %v888
    %v924 = vadd.f32 %v743, %v907
    %v925 = vperm.slane %v112, 2
    %v926 = vperm.slane %v116, 2
    %v927 = vperm.slane %v120, 2
    %v928 = vperm.slane %v124, 2
    %v929 = vunpack.c.l.bf16 %v925
    %v930 = vunpack.c.l.bf16 %v926
    %v931 = vunpack.c.l.bf16 %v927
    %v932 = vunpack.c.l.bf16 %v928
    %937 = vrot.lane.b32.xlu0 %v929, 18
    %v938 = vpop.permute.xlu0 %937
    %939 = vrot.lane.b32.xlu0 %v930, 18
    %v940 = vpop.permute.xlu0 %939
    %941 = vrot.lane.b32.xlu0 %v931, 18
    %v942 = vpop.permute.xlu0 %941
    %943 = vrot.lane.b32.xlu0 %v932, 18
    %v944 = vpop.permute.xlu0 %943
    %vm945 = vcmask 146432
    %v946 = vsel %vm945, %v938, %v940
    %v947 = vsel %vm945, %v940, %v942
    %v948 = vsel %vm945, %v942, %v944
    %v954 = vmul.f32 %v83, %v938
    %v955 = vmul.f32 %v84, %v946
    %v956 = vmul.f32 %v85, %v947
    %v957 = vmul.f32 %v86, %v948
    %v958 = vmul.f32 %v127, %v944
    %v959 = vmul.f32 %v87, %v938
    %v960 = vmul.f32 %v88, %v946
    %v961 = vmul.f32 %v89, %v947
    %v962 = vmul.f32 %v90, %v948
    %v963 = vmul.f32 %v128, %v944
    %v964 = vpack.c.bf16 %v959, %v954
    %v965 = vpack.c.bf16 %v960, %v955
    %v966 = vpack.c.bf16 %v961, %v956
    %v967 = vpack.c.bf16 %v962, %v957
    %v968 = vpack.c.bf16 %v963, %v958
    %s969 = scalar_lea.vmem [#allocation2], 80
    %v970 = vld [vmem:[%s969] sm:$0xf]
    %v971 = vld [vmem:[%s969 + $0x4] sm:$0xf]
    %v972 = vld [vmem:[%s969 + $0x8] sm:$0xf]
    %v973 = vld [vmem:[%s969 + $0xc] sm:$0xf]
    %v978 = vunpack.c.l.b16 %v970
    %v979 = vunpack.c.l.b16 %v971
    %v980 = vunpack.c.l.b16 %v972
    %v981 = vunpack.c.l.b16 %v973
    %v982 = vpack.c.b16 %v979, %v978
    %v983 = vpack.c.b16 %v981, %v980
    %989 = vrot.lane.b32.xlu0 %v964, 110
    %v990 = vpop.permute.xlu0 %989
    %991 = vrot.lane.b32.xlu0 %v965, 110
    %v992 = vpop.permute.xlu0 %991
    %993 = vrot.lane.b32.xlu0 %v966, 110
    %v994 = vpop.permute.xlu0 %993
    %995 = vrot.lane.b32.xlu0 %v967, 110
    %v996 = vpop.permute.xlu0 %995
    %997 = vrot.lane.b32.xlu0 %v968, 110
    %v998 = vpop.permute.xlu0 %997
    %vm999 = vcmask 900096
    %v1000 = vsel %vm999, %v990, %v992
    %v1001 = vsel %vm999, %v992, %v994
    %v1002 = vsel %vm999, %v994, %v996
    %v1003 = vsel %vm999, %v996, %v998
    %v1009 = vsel %vm208, %v982, 0
    %v1012 = vsel %vm208, %v983, 0
    %1014 = vmatpush.bf16.msra.mxu0 0
    %1015 = vmatpush.bf16.msra.mxu0 0
    %1016 = vmatpush.bf16.msra.mxu0 0
    %1017 = vmatpush.bf16.msra.mxu0 0
    %1018 = vmatpush.bf16.msra.mxu0 0
    %1019 = vmatpush.bf16.msra.mxu0 0
    %1020 = vmatpush.bf16.msra.mxu0 0
    %1021 = vmatpush.bf16.msra.mxu0 %v1000
    %1022 = vmatmul.bf16.gmra.mxu0 %v1009
    %v1023 = vpop.f32.mrf.mxu0
    %v1024 = vadd.f32 0.0, %v1023
    %v1025 = vpop.f32.mrf.mxu0
    %v1026 = vadd.f32 0.0, %v1025
    %1027 = vmatmul.bf16.gmra.mxu0 %v1012
    %v1028 = vpop.f32.mrf.mxu0
    %v1029 = vadd.f32 0.0, %v1028
    %v1030 = vpop.f32.mrf.mxu0
    %v1031 = vadd.f32 0.0, %v1030
    %1032 = vdwg.mxu0
    %1033 = vmatpush.bf16.msra.mxu0 0
    %1034 = vmatpush.bf16.msra.mxu0 0
    %1035 = vmatpush.bf16.msra.mxu0 0
    %1036 = vmatpush.bf16.msra.mxu0 0
    %1037 = vmatpush.bf16.msra.mxu0 0
    %1038 = vmatpush.bf16.msra.mxu0 0
    %1039 = vmatpush.bf16.msra.mxu0 0
    %1040 = vmatpush.bf16.msra.mxu0 %v1001
    %1041 = vmatmul.bf16.gmra.mxu0 %v1009
    %v1042 = vpop.f32.mrf.mxu0
    %v1043 = vadd.f32 0.0, %v1042
    %v1044 = vpop.f32.mrf.mxu0
    %v1045 = vadd.f32 0.0, %v1044
    %1046 = vmatmul.bf16.gmra.mxu0 %v1012
    %v1047 = vpop.f32.mrf.mxu0
    %v1048 = vadd.f32 0.0, %v1047
    %v1049 = vpop.f32.mrf.mxu0
    %v1050 = vadd.f32 0.0, %v1049
    %1051 = vdwg.mxu0
    %1052 = vmatpush.bf16.msra.mxu0 0
    %1053 = vmatpush.bf16.msra.mxu0 0
    %1054 = vmatpush.bf16.msra.mxu0 0
    %1055 = vmatpush.bf16.msra.mxu0 0
    %1056 = vmatpush.bf16.msra.mxu0 0
    %1057 = vmatpush.bf16.msra.mxu0 0
    %1058 = vmatpush.bf16.msra.mxu0 0
    %1059 = vmatpush.bf16.msra.mxu0 %v1002
    %1060 = vmatmul.bf16.gmra.mxu0 %v1009
    %v1061 = vpop.f32.mrf.mxu0
    %v1062 = vadd.f32 0.0, %v1061
    %v1063 = vpop.f32.mrf.mxu0
    %v1064 = vadd.f32 0.0, %v1063
    %1065 = vmatmul.bf16.gmra.mxu0 %v1012
    %v1066 = vpop.f32.mrf.mxu0
    %v1067 = vadd.f32 0.0, %v1066
    %v1068 = vpop.f32.mrf.mxu0
    %v1069 = vadd.f32 0.0, %v1068
    %1070 = vdwg.mxu0
    %1071 = vmatpush.bf16.msra.mxu0 0
    %1072 = vmatpush.bf16.msra.mxu0 0
    %1073 = vmatpush.bf16.msra.mxu0 0
    %1074 = vmatpush.bf16.msra.mxu0 0
    %1075 = vmatpush.bf16.msra.mxu0 0
    %1076 = vmatpush.bf16.msra.mxu0 0
    %1077 = vmatpush.bf16.msra.mxu0 0
    %1078 = vmatpush.bf16.msra.mxu0 %v1003
    %1079 = vmatmul.bf16.gmra.mxu0 %v1009
    %v1080 = vpop.f32.mrf.mxu0
    %v1081 = vadd.f32 0.0, %v1080
    %v1082 = vpop.f32.mrf.mxu0
    %v1083 = vadd.f32 0.0, %v1082
    %1084 = vmatmul.bf16.gmra.mxu0 %v1012
    %v1085 = vpop.f32.mrf.mxu0
    %v1086 = vadd.f32 0.0, %v1085
    %v1087 = vpop.f32.mrf.mxu0
    %v1088 = vadd.f32 0.0, %v1087
    %1089 = vdwg.mxu0
    %v1090 = vadd.f32 %v909, %v1024
    %v1091 = vadd.f32 %v910, %v1043
    %v1092 = vadd.f32 %v911, %v1062
    %v1093 = vadd.f32 %v912, %v1081
    %v1094 = vadd.f32 %v913, %v1026
    %v1095 = vadd.f32 %v914, %v1045
    %v1096 = vadd.f32 %v915, %v1064
    %v1097 = vadd.f32 %v916, %v1083
    %v1098 = vadd.f32 %v917, %v1029
    %v1099 = vadd.f32 %v918, %v1048
    %v1100 = vadd.f32 %v919, %v1067
    %v1101 = vadd.f32 %v920, %v1086
    %v1102 = vadd.f32 %v921, %v1031
    %v1103 = vadd.f32 %v922, %v1050
    %v1104 = vadd.f32 %v923, %v1069
    %v1105 = vadd.f32 %v924, %v1088
    %v1106 = vperm.slane %v68, 3
    %v1107 = vperm.slane %v72, 3
    %v1108 = vperm.slane %v76, 3
    %v1109 = vperm.slane %v80, 3
    %v1110 = vunpack.c.l.bf16 %v1106
    %v1111 = vunpack.c.l.bf16 %v1107
    %v1112 = vunpack.c.l.bf16 %v1108
    %v1113 = vunpack.c.l.bf16 %v1109
    %1118 = vrot.lane.b32.xlu0 %v1110, 32
    %v1119 = vpop.permute.xlu0 %1118
    %1120 = vrot.lane.b32.xlu0 %v1111, 32
    %v1121 = vpop.permute.xlu0 %1120
    %1122 = vrot.lane.b32.xlu0 %v1112, 32
    %v1123 = vpop.permute.xlu0 %1122
    %1124 = vrot.lane.b32.xlu0 %v1113, 32
    %v1125 = vpop.permute.xlu0 %1124
    %vm1126 = vcmask 261120
    %v1127 = vsel %vm1126, %v1119, %v1121
    %v1128 = vsel %vm1126, %v1121, %v1123
    %v1129 = vsel %vm1126, %v1123, %v1125
    %v1135 = vmul.f32 %v83, %v1119
    %v1136 = vmul.f32 %v84, %v1127
    %v1137 = vmul.f32 %v85, %v1128
    %v1138 = vmul.f32 %v86, %v1129
    %v1139 = vmul.f32 %v127, %v1125
    %v1140 = vmul.f32 %v87, %v1119
    %v1141 = vmul.f32 %v88, %v1127
    %v1142 = vmul.f32 %v89, %v1128
    %v1143 = vmul.f32 %v90, %v1129
    %v1144 = vmul.f32 %v128, %v1125
    %v1145 = vpack.c.bf16 %v1140, %v1135
    %v1146 = vpack.c.bf16 %v1141, %v1136
    %v1147 = vpack.c.bf16 %v1142, %v1137
    %v1148 = vpack.c.bf16 %v1143, %v1138
    %v1149 = vpack.c.bf16 %v1144, %v1139
    %s1150 = scalar_lea.vmem [#allocation2], 96
    %v1151 = vld [vmem:[%s1150] sm:$0xf]
    %v1152 = vld [vmem:[%s1150 + $0x4] sm:$0xf]
    %v1153 = vld [vmem:[%s1150 + $0x8] sm:$0xf]
    %v1154 = vld [vmem:[%s1150 + $0xc] sm:$0xf]
    %v1159 = vunpack.c.l.b16 %v1151
    %v1160 = vunpack.c.l.b16 %v1152
    %v1161 = vunpack.c.l.b16 %v1153
    %v1162 = vunpack.c.l.b16 %v1154
    %v1163 = vpack.c.b16 %v1160, %v1159
    %v1164 = vpack.c.b16 %v1162, %v1161
    %1170 = vrot.lane.b32.xlu0 %v1145, 96
    %v1171 = vpop.permute.xlu0 %1170
    %1172 = vrot.lane.b32.xlu0 %v1146, 96
    %v1173 = vpop.permute.xlu0 %1172
    %1174 = vrot.lane.b32.xlu0 %v1147, 96
    %v1175 = vpop.permute.xlu0 %1174
    %1176 = vrot.lane.b32.xlu0 %v1148, 96
    %v1177 = vpop.permute.xlu0 %1176
    %1178 = vrot.lane.b32.xlu0 %v1149, 96
    %v1179 = vpop.permute.xlu0 %1178
    %vm1180 = vcmask 785408
    %v1181 = vsel %vm1180, %v1171, %v1173
    %v1182 = vsel %vm1180, %v1173, %v1175
    %v1183 = vsel %vm1180, %v1175, %v1177
    %v1184 = vsel %vm1180, %v1177, %v1179
    %v1190 = vsel %vm208, %v1163, 0
    %v1193 = vsel %vm208, %v1164, 0
    %1195 = vmatpush.bf16.msra.mxu0 0
    %1196 = vmatpush.bf16.msra.mxu0 0
    %1197 = vmatpush.bf16.msra.mxu0 0
    %1198 = vmatpush.bf16.msra.mxu0 0
    %1199 = vmatpush.bf16.msra.mxu0 0
    %1200 = vmatpush.bf16.msra.mxu0 0
    %1201 = vmatpush.bf16.msra.mxu0 0
    %1202 = vmatpush.bf16.msra.mxu0 %v1181
    %1203 = vmatmul.bf16.gmra.mxu0 %v1190
    %v1204 = vpop.f32.mrf.mxu0
    %v1205 = vadd.f32 0.0, %v1204
    %v1206 = vpop.f32.mrf.mxu0
    %v1207 = vadd.f32 0.0, %v1206
    %1208 = vmatmul.bf16.gmra.mxu0 %v1193
    %v1209 = vpop.f32.mrf.mxu0
    %v1210 = vadd.f32 0.0, %v1209
    %v1211 = vpop.f32.mrf.mxu0
    %v1212 = vadd.f32 0.0, %v1211
    %1213 = vdwg.mxu0
    %1214 = vmatpush.bf16.msra.mxu0 0
    %1215 = vmatpush.bf16.msra.mxu0 0
    %1216 = vmatpush.bf16.msra.mxu0 0
    %1217 = vmatpush.bf16.msra.mxu0 0
    %1218 = vmatpush.bf16.msra.mxu0 0
    %1219 = vmatpush.bf16.msra.mxu0 0
    %1220 = vmatpush.bf16.msra.mxu0 0
    %1221 = vmatpush.bf16.msra.mxu0 %v1182
    %1222 = vmatmul.bf16.gmra.mxu0 %v1190
    %v1223 = vpop.f32.mrf.mxu0
    %v1224 = vadd.f32 0.0, %v1223
    %v1225 = vpop.f32.mrf.mxu0
    %v1226 = vadd.f32 0.0, %v1225
    %1227 = vmatmul.bf16.gmra.mxu0 %v1193
    %v1228 = vpop.f32.mrf.mxu0
    %v1229 = vadd.f32 0.0, %v1228
    %v1230 = vpop.f32.mrf.mxu0
    %v1231 = vadd.f32 0.0, %v1230
    %1232 = vdwg.mxu0
    %1233 = vmatpush.bf16.msra.mxu0 0
    %1234 = vmatpush.bf16.msra.mxu0 0
    %1235 = vmatpush.bf16.msra.mxu0 0
    %1236 = vmatpush.bf16.msra.mxu0 0
    %1237 = vmatpush.bf16.msra.mxu0 0
    %1238 = vmatpush.bf16.msra.mxu0 0
    %1239 = vmatpush.bf16.msra.mxu0 0
    %1240 = vmatpush.bf16.msra.mxu0 %v1183
    %1241 = vmatmul.bf16.gmra.mxu0 %v1190
    %v1242 = vpop.f32.mrf.mxu0
    %v1243 = vadd.f32 0.0, %v1242
    %v1244 = vpop.f32.mrf.mxu0
    %v1245 = vadd.f32 0.0, %v1244
    %1246 = vmatmul.bf16.gmra.mxu0 %v1193
    %v1247 = vpop.f32.mrf.mxu0
    %v1248 = vadd.f32 0.0, %v1247
    %v1249 = vpop.f32.mrf.mxu0
    %v1250 = vadd.f32 0.0, %v1249
    %1251 = vdwg.mxu0
    %1252 = vmatpush.bf16.msra.mxu0 0
    %1253 = vmatpush.bf16.msra.mxu0 0
    %1254 = vmatpush.bf16.msra.mxu0 0
    %1255 = vmatpush.bf16.msra.mxu0 0
    %1256 = vmatpush.bf16.msra.mxu0 0
    %1257 = vmatpush.bf16.msra.mxu0 0
    %1258 = vmatpush.bf16.msra.mxu0 0
    %1259 = vmatpush.bf16.msra.mxu0 %v1184
    %1260 = vmatmul.bf16.gmra.mxu0 %v1190
    %v1261 = vpop.f32.mrf.mxu0
    %v1262 = vadd.f32 0.0, %v1261
    %v1263 = vpop.f32.mrf.mxu0
    %v1264 = vadd.f32 0.0, %v1263
    %1265 = vmatmul.bf16.gmra.mxu0 %v1193
    %v1266 = vpop.f32.mrf.mxu0
    %v1267 = vadd.f32 0.0, %v1266
    %v1268 = vpop.f32.mrf.mxu0
    %v1269 = vadd.f32 0.0, %v1268
    %1270 = vdwg.mxu0
    %v1271 = vadd.f32 %v1090, %v1205
    %v1272 = vadd.f32 %v1091, %v1224
    %v1273 = vadd.f32 %v1092, %v1243
    %v1274 = vadd.f32 %v1093, %v1262
    %v1275 = vadd.f32 %v1094, %v1207
    %v1276 = vadd.f32 %v1095, %v1226
    %v1277 = vadd.f32 %v1096, %v1245
    %v1278 = vadd.f32 %v1097, %v1264
    %v1279 = vadd.f32 %v1098, %v1210
    %v1280 = vadd.f32 %v1099, %v1229
    %v1281 = vadd.f32 %v1100, %v1248
    %v1282 = vadd.f32 %v1101, %v1267
    %v1283 = vadd.f32 %v1102, %v1212
    %v1284 = vadd.f32 %v1103, %v1231
    %v1285 = vadd.f32 %v1104, %v1250
    %v1286 = vadd.f32 %v1105, %v1269
    %v1287 = vperm.slane %v112, 3
    %v1288 = vperm.slane %v116, 3
    %v1289 = vperm.slane %v120, 3
    %v1290 = vperm.slane %v124, 3
    %v1291 = vunpack.c.l.bf16 %v1287
    %v1292 = vunpack.c.l.bf16 %v1288
    %v1293 = vunpack.c.l.bf16 %v1289
    %v1294 = vunpack.c.l.bf16 %v1290
    %1299 = vrot.lane.b32.xlu0 %v1291, 33
    %v1300 = vpop.permute.xlu0 %1299
    %1301 = vrot.lane.b32.xlu0 %v1292, 33
    %v1302 = vpop.permute.xlu0 %1301
    %1303 = vrot.lane.b32.xlu0 %v1293, 33
    %v1304 = vpop.permute.xlu0 %1303
    %1305 = vrot.lane.b32.xlu0 %v1294, 33
    %v1306 = vpop.permute.xlu0 %1305
    %vm1307 = vcmask 269312
    %v1308 = vsel %vm1307, %v1300, %v1302
    %v1309 = vsel %vm1307, %v1302, %v1304
    %v1310 = vsel %vm1307, %v1304, %v1306
    %v1316 = vmul.f32 %v83, %v1300
    %v1317 = vmul.f32 %v84, %v1308
    %v1318 = vmul.f32 %v85, %v1309
    %v1319 = vmul.f32 %v86, %v1310
    %v1320 = vmul.f32 %v127, %v1306
    %v1321 = vmul.f32 %v87, %v1300
    %v1322 = vmul.f32 %v88, %v1308
    %v1323 = vmul.f32 %v89, %v1309
    %v1324 = vmul.f32 %v90, %v1310
    %v1325 = vmul.f32 %v128, %v1306
    %v1326 = vpack.c.bf16 %v1321, %v1316
    %v1327 = vpack.c.bf16 %v1322, %v1317
    %v1328 = vpack.c.bf16 %v1323, %v1318
    %v1329 = vpack.c.bf16 %v1324, %v1319
    %v1330 = vpack.c.bf16 %v1325, %v1320
    %s1331 = scalar_lea.vmem [#allocation2], 112
    %v1332 = vld [vmem:[%s1331] sm:$0xf]
    %v1333 = vld [vmem:[%s1331 + $0x4] sm:$0xf]
    %v1334 = vld [vmem:[%s1331 + $0x8] sm:$0xf]
    %v1335 = vld [vmem:[%s1331 + $0xc] sm:$0xf]
    %v1340 = vunpack.c.l.b16 %v1332
    %v1341 = vunpack.c.l.b16 %v1333
    %v1342 = vunpack.c.l.b16 %v1334
    %v1343 = vunpack.c.l.b16 %v1335
    %v1344 = vpack.c.b16 %v1341, %v1340
    %v1345 = vpack.c.b16 %v1343, %v1342
    %1351 = vrot.lane.b32.xlu0 %v1326, 95
    %v1352 = vpop.permute.xlu0 %1351
    %1353 = vrot.lane.b32.xlu0 %v1327, 95
    %v1354 = vpop.permute.xlu0 %1353
    %1355 = vrot.lane.b32.xlu0 %v1328, 95
    %v1356 = vpop.permute.xlu0 %1355
    %1357 = vrot.lane.b32.xlu0 %v1329, 95
    %v1358 = vpop.permute.xlu0 %1357
    %1359 = vrot.lane.b32.xlu0 %v1330, 95
    %v1360 = vpop.permute.xlu0 %1359
    %vm1361 = vcmask 777216
    %v1362 = vsel %vm1361, %v1352, %v1354
    %v1363 = vsel %vm1361, %v1354, %v1356
    %v1364 = vsel %vm1361, %v1356, %v1358
    %v1365 = vsel %vm1361, %v1358, %v1360
    %v1371 = vsel %vm208, %v1344, 0
    %v1374 = vsel %vm208, %v1345, 0
    %1376 = vmatpush.bf16.msra.mxu0 0
    %1377 = vmatpush.bf16.msra.mxu0 0
    %1378 = vmatpush.bf16.msra.mxu0 0
    %1379 = vmatpush.bf16.msra.mxu0 0
    %1380 = vmatpush.bf16.msra.mxu0 0
    %1381 = vmatpush.bf16.msra.mxu0 0
    %1382 = vmatpush.bf16.msra.mxu0 0
    %1383 = vmatpush.bf16.msra.mxu0 %v1362
    %1384 = vmatmul.bf16.gmra.mxu0 %v1371
    %v1385 = vpop.f32.mrf.mxu0
    %v1386 = vadd.f32 0.0, %v1385
    %v1387 = vpop.f32.mrf.mxu0
    %v1388 = vadd.f32 0.0, %v1387
    %1389 = vmatmul.bf16.gmra.mxu0 %v1374
    %v1390 = vpop.f32.mrf.mxu0
    %v1391 = vadd.f32 0.0, %v1390
    %v1392 = vpop.f32.mrf.mxu0
    %v1393 = vadd.f32 0.0, %v1392
    %1394 = vdwg.mxu0
    %1395 = vmatpush.bf16.msra.mxu0 0
    %1396 = vmatpush.bf16.msra.mxu0 0
    %1397 = vmatpush.bf16.msra.mxu0 0
    %1398 = vmatpush.bf16.msra.mxu0 0
    %1399 = vmatpush.bf16.msra.mxu0 0
    %1400 = vmatpush.bf16.msra.mxu0 0
    %1401 = vmatpush.bf16.msra.mxu0 0
    %1402 = vmatpush.bf16.msra.mxu0 %v1363
    %1403 = vmatmul.bf16.gmra.mxu0 %v1371
    %v1404 = vpop.f32.mrf.mxu0
    %v1405 = vadd.f32 0.0, %v1404
    %v1406 = vpop.f32.mrf.mxu0
    %v1407 = vadd.f32 0.0, %v1406
    %1408 = vmatmul.bf16.gmra.mxu0 %v1374
    %v1409 = vpop.f32.mrf.mxu0
    %v1410 = vadd.f32 0.0, %v1409
    %v1411 = vpop.f32.mrf.mxu0
    %v1412 = vadd.f32 0.0, %v1411
    %1413 = vdwg.mxu0
    %1414 = vmatpush.bf16.msra.mxu0 0
    %1415 = vmatpush.bf16.msra.mxu0 0
    %1416 = vmatpush.bf16.msra.mxu0 0
    %1417 = vmatpush.bf16.msra.mxu0 0
    %1418 = vmatpush.bf16.msra.mxu0 0
    %1419 = vmatpush.bf16.msra.mxu0 0
    %1420 = vmatpush.bf16.msra.mxu0 0
    %1421 = vmatpush.bf16.msra.mxu0 %v1364
    %1422 = vmatmul.bf16.gmra.mxu0 %v1371
    %v1423 = vpop.f32.mrf.mxu0
    %v1424 = vadd.f32 0.0, %v1423
    %v1425 = vpop.f32.mrf.mxu0
    %v1426 = vadd.f32 0.0, %v1425
    %1427 = vmatmul.bf16.gmra.mxu0 %v1374
    %v1428 = vpop.f32.mrf.mxu0
    %v1429 = vadd.f32 0.0, %v1428
    %v1430 = vpop.f32.mrf.mxu0
    %v1431 = vadd.f32 0.0, %v1430
    %1432 = vdwg.mxu0
    %1433 = vmatpush.bf16.msra.mxu0 0
    %1434 = vmatpush.bf16.msra.mxu0 0
    %1435 = vmatpush.bf16.msra.mxu0 0
    %1436 = vmatpush.bf16.msra.mxu0 0
    %1437 = vmatpush.bf16.msra.mxu0 0
    %1438 = vmatpush.bf16.msra.mxu0 0
    %1439 = vmatpush.bf16.msra.mxu0 0
    %1440 = vmatpush.bf16.msra.mxu0 %v1365
    %1441 = vmatmul.bf16.gmra.mxu0 %v1371
    %v1442 = vpop.f32.mrf.mxu0
    %v1443 = vadd.f32 0.0, %v1442
    %v1444 = vpop.f32.mrf.mxu0
    %v1445 = vadd.f32 0.0, %v1444
    %1446 = vmatmul.bf16.gmra.mxu0 %v1374
    %v1447 = vpop.f32.mrf.mxu0
    %v1448 = vadd.f32 0.0, %v1447
    %v1449 = vpop.f32.mrf.mxu0
    %v1450 = vadd.f32 0.0, %v1449
    %1451 = vdwg.mxu0
    %v1452 = vadd.f32 %v1271, %v1386
    %v1453 = vadd.f32 %v1272, %v1405
    %v1454 = vadd.f32 %v1273, %v1424
    %v1455 = vadd.f32 %v1274, %v1443
    %v1456 = vadd.f32 %v1275, %v1388
    %v1457 = vadd.f32 %v1276, %v1407
    %v1458 = vadd.f32 %v1277, %v1426
    %v1459 = vadd.f32 %v1278, %v1445
    %v1460 = vadd.f32 %v1279, %v1391
    %v1461 = vadd.f32 %v1280, %v1410
    %v1462 = vadd.f32 %v1281, %v1429
    %v1463 = vadd.f32 %v1282, %v1448
    %v1464 = vadd.f32 %v1283, %v1393
    %v1465 = vadd.f32 %v1284, %v1412
    %v1466 = vadd.f32 %v1285, %v1431
    %v1467 = vadd.f32 %v1286, %v1450
    %v1470 = vunpack.c.l.b16 %v55
    %v1471 = vunpack.c.h.b16 %v55
    %v1472 = vunpack.c.l.b16 %v56
    %v1473 = vunpack.c.h.b16 %v56
    %v1474 = vpack.c.b16 %v1470, %v1470
    %v1475 = vpack.c.b16 %v1471, %v1471
    %v1476 = vpack.c.b16 %v1472, %v1472
    %v1477 = vpack.c.b16 %v1473, %v1473
    %v1479 = vpack.i.b16 %v1474, %v1474
    %v1481 = vperm.slane %v1479, 0
    %v1483 = vpack.i.b16 %v1475, %v1475
    %v1485 = vperm.slane %v1483, 0
    %v1487 = vpack.i.b16 %v1476, %v1476
    %v1489 = vperm.slane %v1487, 0
    %v1491 = vpack.i.b16 %v1477, %v1477
    %v1493 = vperm.slane %v1491, 0
    %v1494 = vunpack.c.l.bf16 %v1481
    %v1495 = vunpack.c.l.bf16 %v1485
    %v1496 = vunpack.c.l.bf16 %v1489
    %v1497 = vunpack.c.l.bf16 %v1493
    %1502 = vrot.lane.b32.xlu0 %v1494, 34
    %v1503 = vpop.permute.xlu0 %1502
    %1504 = vrot.lane.b32.xlu0 %v1495, 34
    %v1505 = vpop.permute.xlu0 %1504
    %1506 = vrot.lane.b32.xlu0 %v1496, 34
    %v1507 = vpop.permute.xlu0 %1506
    %1508 = vrot.lane.b32.xlu0 %v1497, 34
    %v1509 = vpop.permute.xlu0 %1508
    %vm1510 = vcmask 277504
    %v1511 = vsel %vm1510, %v1503, %v1505
    %v1512 = vsel %vm1510, %v1505, %v1507
    %v1513 = vsel %vm1510, %v1507, %v1509
    %v1519 = vmul.f32 %v83, %v1503
    %v1520 = vmul.f32 %v84, %v1511
    %v1521 = vmul.f32 %v85, %v1512
    %v1522 = vmul.f32 %v86, %v1513
    %v1523 = vmul.f32 %v127, %v1509
    %v1524 = vmul.f32 %v87, %v1503
    %v1525 = vmul.f32 %v88, %v1511
    %v1526 = vmul.f32 %v89, %v1512
    %v1527 = vmul.f32 %v90, %v1513
    %v1528 = vmul.f32 %v128, %v1509
    %v1529 = vpack.c.bf16 %v1524, %v1519
    %v1530 = vpack.c.bf16 %v1525, %v1520
    %v1531 = vpack.c.bf16 %v1526, %v1521
    %v1532 = vpack.c.bf16 %v1527, %v1522
    %v1533 = vpack.c.bf16 %v1528, %v1523
    %s1534 = scalar_lea.vmem [#allocation2], 128
    %v1535 = vld [vmem:[%s1534] sm:$0xf]
    %v1536 = vld [vmem:[%s1534 + $0x4] sm:$0xf]
    %v1537 = vld [vmem:[%s1534 + $0x8] sm:$0xf]
    %v1538 = vld [vmem:[%s1534 + $0xc] sm:$0xf]
    %v1543 = vunpack.c.l.b16 %v1535
    %v1544 = vunpack.c.l.b16 %v1536
    %v1545 = vunpack.c.l.b16 %v1537
    %v1546 = vunpack.c.l.b16 %v1538
    %v1547 = vpack.c.b16 %v1544, %v1543
    %v1548 = vpack.c.b16 %v1546, %v1545
    %1554 = vrot.lane.b32.xlu0 %v1529, 94
    %v1555 = vpop.permute.xlu0 %1554
    %1556 = vrot.lane.b32.xlu0 %v1530, 94
    %v1557 = vpop.permute.xlu0 %1556
    %1558 = vrot.lane.b32.xlu0 %v1531, 94
    %v1559 = vpop.permute.xlu0 %1558
    %1560 = vrot.lane.b32.xlu0 %v1532, 94
    %v1561 = vpop.permute.xlu0 %1560
    %1562 = vrot.lane.b32.xlu0 %v1533, 94
    %v1563 = vpop.permute.xlu0 %1562
    %vm1564 = vcmask 769024
    %v1565 = vsel %vm1564, %v1555, %v1557
    %v1566 = vsel %vm1564, %v1557, %v1559
    %v1567 = vsel %vm1564, %v1559, %v1561
    %v1568 = vsel %vm1564, %v1561, %v1563
    %v1574 = vsel %vm208, %v1547, 0
    %v1577 = vsel %vm208, %v1548, 0
    %1579 = vmatpush.bf16.msra.mxu0 0
    %1580 = vmatpush.bf16.msra.mxu0 0
    %1581 = vmatpush.bf16.msra.mxu0 0
    %1582 = vmatpush.bf16.msra.mxu0 0
    %1583 = vmatpush.bf16.msra.mxu0 0
    %1584 = vmatpush.bf16.msra.mxu0 0
    %1585 = vmatpush.bf16.msra.mxu0 0
    %1586 = vmatpush.bf16.msra.mxu0 %v1565
    %1587 = vmatmul.bf16.gmra.mxu0 %v1574
    %v1588 = vpop.f32.mrf.mxu0
    %v1589 = vadd.f32 0.0, %v1588
    %v1590 = vpop.f32.mrf.mxu0
    %v1591 = vadd.f32 0.0, %v1590
    %1592 = vmatmul.bf16.gmra.mxu0 %v1577
    %v1593 = vpop.f32.mrf.mxu0
    %v1594 = vadd.f32 0.0, %v1593
    %v1595 = vpop.f32.mrf.mxu0
    %v1596 = vadd.f32 0.0, %v1595
    %1597 = vdwg.mxu0
    %1598 = vmatpush.bf16.msra.mxu0 0
    %1599 = vmatpush.bf16.msra.mxu0 0
    %1600 = vmatpush.bf16.msra.mxu0 0
    %1601 = vmatpush.bf16.msra.mxu0 0
    %1602 = vmatpush.bf16.msra.mxu0 0
    %1603 = vmatpush.bf16.msra.mxu0 0
    %1604 = vmatpush.bf16.msra.mxu0 0
    %1605 = vmatpush.bf16.msra.mxu0 %v1566
    %1606 = vmatmul.bf16.gmra.mxu0 %v1574
    %v1607 = vpop.f32.mrf.mxu0
    %v1608 = vadd.f32 0.0, %v1607
    %v1609 = vpop.f32.mrf.mxu0
    %v1610 = vadd.f32 0.0, %v1609
    %1611 = vmatmul.bf16.gmra.mxu0 %v1577
    %v1612 = vpop.f32.mrf.mxu0
    %v1613 = vadd.f32 0.0, %v1612
    %v1614 = vpop.f32.mrf.mxu0
    %v1615 = vadd.f32 0.0, %v1614
    %1616 = vdwg.mxu0
    %1617 = vmatpush.bf16.msra.mxu0 0
    %1618 = vmatpush.bf16.msra.mxu0 0
    %1619 = vmatpush.bf16.msra.mxu0 0
    %1620 = vmatpush.bf16.msra.mxu0 0
    %1621 = vmatpush.bf16.msra.mxu0 0
    %1622 = vmatpush.bf16.msra.mxu0 0
    %1623 = vmatpush.bf16.msra.mxu0 0
    %1624 = vmatpush.bf16.msra.mxu0 %v1567
    %1625 = vmatmul.bf16.gmra.mxu0 %v1574
    %v1626 = vpop.f32.mrf.mxu0
    %v1627 = vadd.f32 0.0, %v1626
    %v1628 = vpop.f32.mrf.mxu0
    %v1629 = vadd.f32 0.0, %v1628
    %1630 = vmatmul.bf16.gmra.mxu0 %v1577
    %v1631 = vpop.f32.mrf.mxu0
    %v1632 = vadd.f32 0.0, %v1631
    %v1633 = vpop.f32.mrf.mxu0
    %v1634 = vadd.f32 0.0, %v1633
    %1635 = vdwg.mxu0
    %1636 = vmatpush.bf16.msra.mxu0 0
    %1637 = vmatpush.bf16.msra.mxu0 0
    %1638 = vmatpush.bf16.msra.mxu0 0
    %1639 = vmatpush.bf16.msra.mxu0 0
    %1640 = vmatpush.bf16.msra.mxu0 0
    %1641 = vmatpush.bf16.msra.mxu0 0
    %1642 = vmatpush.bf16.msra.mxu0 0
    %1643 = vmatpush.bf16.msra.mxu0 %v1568
    %1644 = vmatmul.bf16.gmra.mxu0 %v1574
    %v1645 = vpop.f32.mrf.mxu0
    %v1646 = vadd.f32 0.0, %v1645
    %v1647 = vpop.f32.mrf.mxu0
    %v1648 = vadd.f32 0.0, %v1647
    %1649 = vmatmul.bf16.gmra.mxu0 %v1577
    %v1650 = vpop.f32.mrf.mxu0
    %v1651 = vadd.f32 0.0, %v1650
    %v1652 = vpop.f32.mrf.mxu0
    %v1653 = vadd.f32 0.0, %v1652
    %1654 = vdwg.mxu0
    %v1655 = vadd.f32 %v1452, %v1589
    %v1656 = vadd.f32 %v1453, %v1608
    %v1657 = vadd.f32 %v1454, %v1627
    %v1658 = vadd.f32 %v1455, %v1646
    %v1659 = vadd.f32 %v1456, %v1591
    %v1660 = vadd.f32 %v1457, %v1610
    %v1661 = vadd.f32 %v1458, %v1629
    %v1662 = vadd.f32 %v1459, %v1648
    %v1663 = vadd.f32 %v1460, %v1594
    %v1664 = vadd.f32 %v1461, %v1613
    %v1665 = vadd.f32 %v1462, %v1632
    %v1666 = vadd.f32 %v1463, %v1651
    %v1667 = vadd.f32 %v1464, %v1596
    %v1668 = vadd.f32 %v1465, %v1615
    %v1669 = vadd.f32 %v1466, %v1634
    %v1670 = vadd.f32 %v1467, %v1653
    %v1671 = vmax.f32 %v1655, 0.0
    %v1672 = vmax.f32 %v1656, 0.0
    %v1673 = vmax.f32 %v1657, 0.0
    %v1674 = vmax.f32 %v1658, 0.0
    %v1675 = vmax.f32 %v1659, 0.0
    %v1676 = vmax.f32 %v1660, 0.0
    %v1677 = vmax.f32 %v1661, 0.0
    %v1678 = vmax.f32 %v1662, 0.0
    %v1679 = vmax.f32 %v1663, 0.0
    %v1680 = vmax.f32 %v1664, 0.0
    %v1681 = vmax.f32 %v1665, 0.0
    %v1682 = vmax.f32 %v1666, 0.0
    %v1683 = vmax.f32 %v1667, 0.0
    %v1684 = vmax.f32 %v1668, 0.0
    %v1685 = vmax.f32 %v1669, 0.0
    %v1686 = vmax.f32 %v1670, 0.0
    %v1687 = vpack.c.bf16 %v1672, %v1671
    %v1688 = vpack.c.bf16 %v1674, %v1673
    %v1689 = vpack.c.bf16 %v1676, %v1675
    %v1690 = vpack.c.bf16 %v1678, %v1677
    %v1691 = vpack.c.bf16 %v1680, %v1679
    %v1692 = vpack.c.bf16 %v1682, %v1681
    %v1693 = vpack.c.bf16 %v1684, %v1683
    %v1694 = vpack.c.bf16 %v1686, %v1685
    %1695 = vst [vmem:[%s3] sm:$0xff] %v1687
    %1696 = vst [vmem:[%s3 + $0x8] sm:$0xff] %v1688
    %1697 = vst [vmem:[%s3 + $0x10] sm:$0xff] %v1689
    %1698 = vst [vmem:[%s3 + $0x18] sm:$0xff] %v1690
    %1699 = vst [vmem:[%s3 + $0x20] sm:$0xff] %v1691
    %1700 = vst [vmem:[%s3 + $0x28] sm:$0xff] %v1692
    %1701 = vst [vmem:[%s3 + $0x30] sm:$0xff] %v1693
    %1702 = vst [vmem:[%s3 + $0x38] sm:$0xff] %v1694
    // Predicated region
    $region22: #{_lambda_.4} parent=1 // pred_check
      _
    $region23: #{_lambda_.4} parent=1 // pred_check_branch
      %1704 = sbr.rel (0) target = $region25
    $region24: #{_lambda_.4} parent=1 // pred_region
      _
    $region25: #{_lambda_.4} parent=1 // pred_fallthru
      _
    // Predicated region
    $region26: #{_lambda_.4} parent=1 // pred_check
      _
    $region27: #{_lambda_.4} parent=1 // pred_check_branch
      %1706 = sbr.rel (0) target = $region29
    $region28: #{_lambda_.4} parent=1 // pred_region
      _
    $region29: #{_lambda_.4} parent=1 // pred_fallthru
      _
    %1707 = vsyncpa [#allocation3], 1
    %1708 = vsyncpa [#allocation5], 1

// kernel: _lambda_.5
$region0: #{_lambda_.5}
  #allocation0 [shape = 'u32[]', space=smem, size = 0x4, offset = 0x4, fixed_abs, tag = 'smem constant byte address 0x4 - core index']
  #allocation1 [shape = 'u32[72,128]{1,0:T(1,128)}', space=vmem, size = 0x9000, scoped, tag = 'internal scratch']
  %s0 = inlined_call_operand.hbm [shape: bf16[9,12,8], index: 0, kind: input, shape index: {}]
  %s1 = inlined_call_operand.vmem [shape: bf16[8,2114], index: 1, kind: input, shape index: {}]
  %s2 = inlined_call_operand.hbm [shape: bf16[9,2048], index: 2, kind: input, shape index: {}]
  %s3 = inlined_call_operand.hbm [shape: f32[12,1], index: 3, kind: input, shape index: {}]
  %s4 = inlined_call_operand.vmem [shape: f32[12,2048], index: 4, kind: output, shape index: {}]
  %s5 = sld [smem:[#allocation0]]
  $region38: #{_lambda_.5} parent=0
    _
  %s7 = ssub.s32 1, %s5
  %s8 = scalar_select 0, %s7, %s5
  $region1: #{_lambda_.5} parent=0
    #allocation2 [shape = 'u8[36864]{0}', space=vmem, size = 0x9000, scoped, tag = 'input window, operand 0, single buffered']
    #allocation3 [shape = 's32[1]{0}', space=sflag, size = 0x4, scoped, tag = 'scoped memory for _lambda_.5']
    #allocation4 [shape = 'u8[65536]{0}', space=vmem, size = 0x10000, scoped, tag = 'input window, operand 2, single buffered']
    #allocation5 [shape = 's32[1]{0}', space=sflag, size = 0x4, scoped, tag = 'scoped memory for _lambda_.5']
    #allocation6 [shape = 'u8[8192]{0}', space=vmem, size = 0x2000, scoped, tag = 'input window, operand 3, single buffered']
    %9 = vsyncpa [#allocation3], 0
    %10 = vsyncpa [#allocation5], 0
    // Predicated region
    $region2: #{_lambda_.5} parent=1 // pred_check
      _
    $region3: #{_lambda_.5} parent=1 // pred_check_branch
      %12 = sbr.rel (0) target = $region5
    $region4: #{_lambda_.5} parent=1 // pred_region
      %14 = vsyncadd [#allocation3], 0
      %s15 = sshll.u32 %s0, 4
      %s16 = int_to_ptr.hbm [resolvable:$true] %s15
      %s17 = sshll.u32 [#allocation2], 4
      %s18 = int_to_ptr.vmem [resolvable:$true] %s17
      %23 = dma.hbm_to_vmem [thread:$0]  %s16, 1152, %s18, [#allocation3], 64, 64, 4
    $region5: #{_lambda_.5} parent=1 // pred_fallthru
      _
    // Predicated region
    $region6: #{_lambda_.5} parent=1 // pred_check
      _
    $region7: #{_lambda_.5} parent=1 // pred_check_branch
      %25 = sbr.rel (0) target = $region9
    $region8: #{_lambda_.5} parent=1 // pred_region
      _
    $region9: #{_lambda_.5} parent=1 // pred_fallthru
      _
    // Predicated region
    $region10: #{_lambda_.5} parent=1 // pred_check
      _
    $region11: #{_lambda_.5} parent=1 // pred_check_branch
      %27 = sbr.rel (0) target = $region13
    $region12: #{_lambda_.5} parent=1 // pred_region
      %29 = vsyncadd [#allocation5], 0
      %s30 = sshll.u32 %s2, 4
      %s31 = int_to_ptr.hbm [resolvable:$true] %s30
      %s32 = sshll.u32 [#allocation4], 4
      %s33 = int_to_ptr.vmem [resolvable:$true] %s32
      %38 = dma.hbm_to_vmem [thread:$0]  %s31, 2048, %s33, [#allocation5], 1024, 1024, 64
    $region13: #{_lambda_.5} parent=1 // pred_fallthru
      _
    // Predicated region
    $region14: #{_lambda_.5} parent=1 // pred_check
      _
    $region15: #{_lambda_.5} parent=1 // pred_check_branch
      %40 = sbr.rel (0) target = $region17
    $region16: #{_lambda_.5} parent=1 // pred_region
      %42 = vsyncadd [#allocation5], 0
      %s43 = sshll.u32 %s3, 4
      %s44 = int_to_ptr.hbm [resolvable:$true] %s43
      %s45 = sshll.u32 [#allocation6], 4
      %s46 = int_to_ptr.vmem [resolvable:$true] %s45
      %51 = dma.hbm_to_vmem [thread:$0]  %s44, 256, %s46, [#allocation5], 128, 128, 8
    $region17: #{_lambda_.5} parent=1 // pred_fallthru
      _
    // Predicated region
    $region18: #{_lambda_.5} parent=1 // pred_check
      _
    $region19: #{_lambda_.5} parent=1 // pred_check_branch
      %53 = sbr.rel (0) target = $region21
    $region20: #{_lambda_.5} parent=1 // pred_region
      %55 = dma.done [#allocation3], 1152
    $region21: #{_lambda_.5} parent=1 // pred_fallthru
      _
    // Predicated region
    $region22: #{_lambda_.5} parent=1 // pred_check
      _
    $region23: #{_lambda_.5} parent=1 // pred_check_branch
      %57 = sbr.rel (0) target = $region25
    $region24: #{_lambda_.5} parent=1 // pred_region
      %59 = dma.done [#allocation5], 2048
    $region25: #{_lambda_.5} parent=1 // pred_fallthru
      _
    // Predicated region
    $region26: #{_lambda_.5} parent=1 // pred_check
      _
    $region27: #{_lambda_.5} parent=1 // pred_check_branch
      %61 = sbr.rel (0) target = $region29
    $region28: #{_lambda_.5} parent=1 // pred_region
      %63 = dma.done [#allocation5], 256
    $region29: #{_lambda_.5} parent=1 // pred_fallthru
      _
    %v65 = vld [vmem:[%s1] sm:$0xff]
    %v66 = vld [vmem:[%s1 + $0x8] sm:$0xff]
    %v67 = vld [vmem:[%s1 + $0x10] sm:$0xff]
    %v68 = vld [vmem:[%s1 + $0x18] sm:$0xff]
    %v69 = vld [vmem:[%s1 + $0x20] sm:$0xff]
    %v70 = vld [vmem:[%s1 + $0x28] sm:$0xff]
    %v71 = vld [vmem:[%s1 + $0x30] sm:$0xff]
    %v72 = vld [vmem:[%s1 + $0x38] sm:$0xff]
    %v73 = vld [vmem:[%s1 + $0x40] sm:$0xf]
    %v74 = vld [vmem:[#allocation4] sm:$0xff]
    %v75 = vld [vmem:[#allocation4 + $0x8] sm:$0xff]
    %v76 = vld [vmem:[#allocation4 + $0x10] sm:$0xff]
    %v77 = vld [vmem:[#allocation4 + $0x18] sm:$0xff]
    %v78 = vld [vmem:[#allocation4 + $0x20] sm:$0xff]
    %v79 = vld [vmem:[#allocation4 + $0x28] sm:$0xff]
    %v80 = vld [vmem:[#allocation4 + $0x30] sm:$0xff]
    %v81 = vld [vmem:[#allocation4 + $0x38] sm:$0xff]
    %v82 = vld [vmem:[#allocation4 + $0x40] sm:$0x11]
    %v83 = vld [vmem:[#allocation4 + $0x48] sm:$0x11]
    %v84 = vld [vmem:[#allocation4 + $0x50] sm:$0x11]
    %v85 = vld [vmem:[#allocation4 + $0x58] sm:$0x11]
    %v86 = vld [vmem:[#allocation4 + $0x60] sm:$0x11]
    %v87 = vld [vmem:[#allocation4 + $0x68] sm:$0x11]
    %v88 = vld [vmem:[#allocation4 + $0x70] sm:$0x11]
    %v89 = vld [vmem:[#allocation4 + $0x78] sm:$0x11]
    %v98 = vunpack.c.l.b16 %v74
    %v99 = vunpack.c.h.b16 %v74
    %v100 = vunpack.c.l.b16 %v75
    %v101 = vunpack.c.h.b16 %v75
    %v102 = vunpack.c.l.b16 %v76
    %v103 = vunpack.c.h.b16 %v76
    %v104 = vunpack.c.l.b16 %v77
    %v105 = vunpack.c.h.b16 %v77
    %v106 = vunpack.c.l.b16 %v78
    %v107 = vunpack.c.h.b16 %v78
    %v108 = vunpack.c.l.b16 %v79
    %v109 = vunpack.c.h.b16 %v79
    %v110 = vunpack.c.l.b16 %v80
    %v111 = vunpack.c.h.b16 %v80
    %v112 = vunpack.c.l.b16 %v81
    %v113 = vunpack.c.h.b16 %v81
    %v114 = vpack.c.b16 %v98, %v98
    %v115 = vpack.c.b16 %v99, %v99
    %v116 = vpack.c.b16 %v100, %v100
    %v117 = vpack.c.b16 %v101, %v101
    %v118 = vpack.c.b16 %v102, %v102
    %v119 = vpack.c.b16 %v103, %v103
    %v120 = vpack.c.b16 %v104, %v104
    %v121 = vpack.c.b16 %v105, %v105
    %v122 = vpack.c.b16 %v106, %v106
    %v123 = vpack.c.b16 %v107, %v107
    %v124 = vpack.c.b16 %v108, %v108
    %v125 = vpack.c.b16 %v109, %v109
    %v126 = vpack.c.b16 %v110, %v110
    %v127 = vpack.c.b16 %v111, %v111
    %v128 = vpack.c.b16 %v112, %v112
    %v129 = vpack.c.b16 %v113, %v113
    %v131 = vpack.i.b16 %v114, %v114
    %v133 = vperm.slane %v131, 0
    %v135 = vpack.i.b16 %v115, %v115
    %v137 = vperm.slane %v135, 0
    %v139 = vpack.i.b16 %v116, %v116
    %v141 = vperm.slane %v139, 0
    %v143 = vpack.i.b16 %v117, %v117
    %v145 = vperm.slane %v143, 0
    %v147 = vpack.i.b16 %v118, %v118
    %v149 = vperm.slane %v147, 0
    %v151 = vpack.i.b16 %v119, %v119
    %v153 = vperm.slane %v151, 0
    %v155 = vpack.i.b16 %v120, %v120
    %v157 = vperm.slane %v155, 0
    %v159 = vpack.i.b16 %v121, %v121
    %v161 = vperm.slane %v159, 0
    %v163 = vpack.i.b16 %v122, %v122
    %v165 = vperm.slane %v163, 0
    %v167 = vpack.i.b16 %v123, %v123
    %v169 = vperm.slane %v167, 0
    %v171 = vpack.i.b16 %v124, %v124
    %v173 = vperm.slane %v171, 0
    %v175 = vpack.i.b16 %v125, %v125
    %v177 = vperm.slane %v175, 0
    %v179 = vpack.i.b16 %v126, %v126
    %v181 = vperm.slane %v179, 0
    %v183 = vpack.i.b16 %v127, %v127
    %v185 = vperm.slane %v183, 0
    %v187 = vpack.i.b16 %v128, %v128
    %v189 = vperm.slane %v187, 0
    %v191 = vpack.i.b16 %v129, %v129
    %v193 = vperm.slane %v191, 0
    %v194 = vunpack.c.l.bf16 %v65
    %v195 = vunpack.c.h.bf16 %v65
    %v196 = vunpack.c.l.bf16 %v66
    %v197 = vunpack.c.h.bf16 %v66
    %v198 = vunpack.c.l.bf16 %v67
    %v199 = vunpack.c.h.bf16 %v67
    %v200 = vunpack.c.l.bf16 %v68
    %v201 = vunpack.c.h.bf16 %v68
    %v202 = vunpack.c.l.bf16 %v69
    %v203 = vunpack.c.h.bf16 %v69
    %v204 = vunpack.c.l.bf16 %v70
    %v205 = vunpack.c.h.bf16 %v70
    %v206 = vunpack.c.l.bf16 %v71
    %v207 = vunpack.c.h.bf16 %v71
    %v208 = vunpack.c.l.bf16 %v72
    %v209 = vunpack.c.h.bf16 %v72
    %v210 = vunpack.c.l.bf16 %v133
    %v211 = vunpack.c.l.bf16 %v137
    %v212 = vunpack.c.l.bf16 %v141
    %v213 = vunpack.c.l.bf16 %v145
    %v214 = vunpack.c.l.bf16 %v149
    %v215 = vunpack.c.l.bf16 %v153
    %v216 = vunpack.c.l.bf16 %v157
    %v217 = vunpack.c.l.bf16 %v161
    %v218 = vunpack.c.l.bf16 %v165
    %v219 = vunpack.c.l.bf16 %v169
    %v220 = vunpack.c.l.bf16 %v173
    %v221 = vunpack.c.l.bf16 %v177
    %v222 = vunpack.c.l.bf16 %v181
    %v223 = vunpack.c.l.bf16 %v185
    %v224 = vunpack.c.l.bf16 %v189
    %v225 = vunpack.c.l.bf16 %v193
    %v226 = vmul.f32 %v194, %v210
    %v227 = vmul.f32 %v195, %v211
    %v228 = vmul.f32 %v196, %v212
    %v229 = vmul.f32 %v197, %v213
    %v230 = vmul.f32 %v198, %v214
    %v231 = vmul.f32 %v199, %v215
    %v232 = vmul.f32 %v200, %v216
    %v233 = vmul.f32 %v201, %v217
    %v234 = vmul.f32 %v202, %v218
    %v235 = vmul.f32 %v203, %v219
    %v236 = vmul.f32 %v204, %v220
    %v237 = vmul.f32 %v205, %v221
    %v238 = vmul.f32 %v206, %v222
    %v239 = vmul.f32 %v207, %v223
    %v240 = vmul.f32 %v208, %v224
    %v241 = vmul.f32 %v209, %v225
    %v242 = vpack.c.bf16 %v226, %v226
    %v243 = vpack.c.bf16 %v227, %v227
    %v244 = vpack.c.bf16 %v228, %v228
    %v245 = vpack.c.bf16 %v229, %v229
    %v246 = vpack.c.bf16 %v230, %v230
    %v247 = vpack.c.bf16 %v231, %v231
    %v248 = vpack.c.bf16 %v232, %v232
    %v249 = vpack.c.bf16 %v233, %v233
    %v250 = vpack.c.bf16 %v234, %v234
    %v251 = vpack.c.bf16 %v235, %v235
    %v252 = vpack.c.bf16 %v236, %v236
    %v253 = vpack.c.bf16 %v237, %v237
    %v254 = vpack.c.bf16 %v238, %v238
    %v255 = vpack.c.bf16 %v239, %v239
    %v256 = vpack.c.bf16 %v240, %v240
    %v257 = vpack.c.bf16 %v241, %v241
    %v258 = vld [vmem:[#allocation2] sm:$0xf]
    %v259 = vld [vmem:[#allocation2 + $0x4] sm:$0x3]
    %v260 = vshrl.u32 %v114, 16
    %v261 = vpack.i.b16 %v260, %v260
    %v263 = vperm.slane %v261, 0
    %v264 = vshrl.u32 %v115, 16
    %v265 = vpack.i.b16 %v264, %v264
    %v267 = vperm.slane %v265, 0
    %v268 = vshrl.u32 %v116, 16
    %v269 = vpack.i.b16 %v268, %v268
    %v271 = vperm.slane %v269, 0
    %v272 = vshrl.u32 %v117, 16
    %v273 = vpack.i.b16 %v272, %v272
    %v275 = vperm.slane %v273, 0
    %v276 = vshrl.u32 %v118, 16
    %v277 = vpack.i.b16 %v276, %v276
    %v279 = vperm.slane %v277, 0
    %v280 = vshrl.u32 %v119, 16
    %v281 = vpack.i.b16 %v280, %v280
    %v283 = vperm.slane %v281, 0
    %v284 = vshrl.u32 %v120, 16
    %v285 = vpack.i.b16 %v284, %v284
    %v287 = vperm.slane %v285, 0
    %v288 = vshrl.u32 %v121, 16
    %v289 = vpack.i.b16 %v288, %v288
    %v291 = vperm.slane %v289, 0
    %v292 = vshrl.u32 %v122, 16
    %v293 = vpack.i.b16 %v292, %v292
    %v295 = vperm.slane %v293, 0
    %v296 = vshrl.u32 %v123, 16
    %v297 = vpack.i.b16 %v296, %v296
    %v299 = vperm.slane %v297, 0
    %v300 = vshrl.u32 %v124, 16
    %v301 = vpack.i.b16 %v300, %v300
    %v303 = vperm.slane %v301, 0
    %v304 = vshrl.u32 %v125, 16
    %v305 = vpack.i.b16 %v304, %v304
    %v307 = vperm.slane %v305, 0
    %v308 = vshrl.u32 %v126, 16
    %v309 = vpack.i.b16 %v308, %v308
    %v311 = vperm.slane %v309, 0
    %v312 = vshrl.u32 %v127, 16
    %v313 = vpack.i.b16 %v312, %v312
    %v315 = vperm.slane %v313, 0
    %v316 = vshrl.u32 %v128, 16
    %v317 = vpack.i.b16 %v316, %v316
    %v319 = vperm.slane %v317, 0
    %v320 = vshrl.u32 %v129, 16
    %v321 = vpack.i.b16 %v320, %v320
    %v323 = vperm.slane %v321, 0
    %v324 = vunpack.c.l.bf16 %v73
    %v325 = vunpack.c.l.bf16 %v263
    %v326 = vunpack.c.l.bf16 %v267
    %v327 = vunpack.c.l.bf16 %v271
    %v328 = vunpack.c.l.bf16 %v275
    %v329 = vunpack.c.l.bf16 %v279
    %v330 = vunpack.c.l.bf16 %v283
    %v331 = vunpack.c.l.bf16 %v287
    %v332 = vunpack.c.l.bf16 %v291
    %v333 = vunpack.c.l.bf16 %v295
    %v334 = vunpack.c.l.bf16 %v299
    %v335 = vunpack.c.l.bf16 %v303
    %v336 = vunpack.c.l.bf16 %v307
    %v337 = vunpack.c.l.bf16 %v311
    %v338 = vunpack.c.l.bf16 %v315
    %v339 = vunpack.c.l.bf16 %v319
    %v340 = vunpack.c.l.bf16 %v323
    %357 = vrot.lane.b32.xlu0 %v325, 1
    %v358 = vpop.permute.xlu0 %357
    %359 = vrot.lane.b32.xlu0 %v326, 1
    %v360 = vpop.permute.xlu0 %359
    %361 = vrot.lane.b32.xlu0 %v327, 1
    %v362 = vpop.permute.xlu0 %361
    %363 = vrot.lane.b32.xlu0 %v328, 1
    %v364 = vpop.permute.xlu0 %363
    %365 = vrot.lane.b32.xlu0 %v329, 1
    %v366 = vpop.permute.xlu0 %365
    %367 = vrot.lane.b32.xlu0 %v330, 1
    %v368 = vpop.permute.xlu0 %367
    %369 = vrot.lane.b32.xlu0 %v331, 1
    %v370 = vpop.permute.xlu0 %369
    %371 = vrot.lane.b32.xlu0 %v332, 1
    %v372 = vpop.permute.xlu0 %371
    %373 = vrot.lane.b32.xlu0 %v333, 1
    %v374 = vpop.permute.xlu0 %373
    %375 = vrot.lane.b32.xlu0 %v334, 1
    %v376 = vpop.permute.xlu0 %375
    %377 = vrot.lane.b32.xlu0 %v335, 1
    %v378 = vpop.permute.xlu0 %377
    %379 = vrot.lane.b32.xlu0 %v336, 1
    %v380 = vpop.permute.xlu0 %379
    %381 = vrot.lane.b32.xlu0 %v337, 1
    %v382 = vpop.permute.xlu0 %381
    %383 = vrot.lane.b32.xlu0 %v338, 1
    %v384 = vpop.permute.xlu0 %383
    %385 = vrot.lane.b32.xlu0 %v339, 1
    %v386 = vpop.permute.xlu0 %385
    %387 = vrot.lane.b32.xlu0 %v340, 1
    %v388 = vpop.permute.xlu0 %387
    %vm389 = vcmask 7168
    %v390 = vsel %vm389, %v358, %v360
    %v391 = vsel %vm389, %v360, %v362
    %v392 = vsel %vm389, %v362, %v364
    %v393 = vsel %vm389, %v364, %v366
    %v394 = vsel %vm389, %v366, %v368
    %v395 = vsel %vm389, %v368, %v370
    %v396 = vsel %vm389, %v370, %v372
    %v397 = vsel %vm389, %v372, %v374
    %v398 = vsel %vm389, %v374, %v376
    %v399 = vsel %vm389, %v376, %v378
    %v400 = vsel %vm389, %v378, %v380
    %v401 = vsel %vm389, %v380, %v382
    %v402 = vsel %vm389, %v382, %v384
    %v403 = vsel %vm389, %v384, %v386
    %v404 = vsel %vm389, %v386, %v388
    %v422 = vmul.f32 %v194, %v358
    %v423 = vmul.f32 %v195, %v390
    %v424 = vmul.f32 %v196, %v391
    %v425 = vmul.f32 %v197, %v392
    %v426 = vmul.f32 %v198, %v393
    %v427 = vmul.f32 %v199, %v394
    %v428 = vmul.f32 %v200, %v395
    %v429 = vmul.f32 %v201, %v396
    %v430 = vmul.f32 %v202, %v397
    %v431 = vmul.f32 %v203, %v398
    %v432 = vmul.f32 %v204, %v399
    %v433 = vmul.f32 %v205, %v400
    %v434 = vmul.f32 %v206, %v401
    %v435 = vmul.f32 %v207, %v402
    %v436 = vmul.f32 %v208, %v403
    %v437 = vmul.f32 %v209, %v404
    %v438 = vmul.f32 %v324, %v388
    %v439 = vpack.c.bf16 %v422, %v422
    %v440 = vpack.c.bf16 %v423, %v423
    %v441 = vpack.c.bf16 %v424, %v424
    %v442 = vpack.c.bf16 %v425, %v425
    %v443 = vpack.c.bf16 %v426, %v426
    %v444 = vpack.c.bf16 %v427, %v427
    %v445 = vpack.c.bf16 %v428, %v428
    %v446 = vpack.c.bf16 %v429, %v429
    %v447 = vpack.c.bf16 %v430, %v430
    %v448 = vpack.c.bf16 %v431, %v431
    %v449 = vpack.c.bf16 %v432, %v432
    %v450 = vpack.c.bf16 %v433, %v433
    %v451 = vpack.c.bf16 %v434, %v434
    %v452 = vpack.c.bf16 %v435, %v435
    %v453 = vpack.c.bf16 %v436, %v436
    %v454 = vpack.c.bf16 %v437, %v437
    %v455 = vpack.c.bf16 %v438, %v438
    %s456 = scalar_lea.vmem [#allocation2], 8
    %v457 = vld [vmem:[%s456] sm:$0xf]
    %v458 = vld [vmem:[%s456 + $0x4] sm:$0x3]
    %v461 = vunpack.c.l.b16 %v457
    %v462 = vunpack.c.l.b16 %v458
    %v463 = vpack.c.b16 %v462, %v461
    %481 = vrot.lane.b32.xlu0 %v439, 127
    %v482 = vpop.permute.xlu0 %481
    %483 = vrot.lane.b32.xlu0 %v440, 127
    %v484 = vpop.permute.xlu0 %483
    %485 = vrot.lane.b32.xlu0 %v441, 127
    %v486 = vpop.permute.xlu0 %485
    %487 = vrot.lane.b32.xlu0 %v442, 127
    %v488 = vpop.permute.xlu0 %487
    %489 = vrot.lane.b32.xlu0 %v443, 127
    %v490 = vpop.permute.xlu0 %489
    %491 = vrot.lane.b32.xlu0 %v444, 127
    %v492 = vpop.permute.xlu0 %491
    %493 = vrot.lane.b32.xlu0 %v445, 127
    %v494 = vpop.permute.xlu0 %493
    %495 = vrot.lane.b32.xlu0 %v446, 127
    %v496 = vpop.permute.xlu0 %495
    %497 = vrot.lane.b32.xlu0 %v447, 127
    %v498 = vpop.permute.xlu0 %497
    %499 = vrot.lane.b32.xlu0 %v448, 127
    %v500 = vpop.permute.xlu0 %499
    %501 = vrot.lane.b32.xlu0 %v449, 127
    %v502 = vpop.permute.xlu0 %501
    %503 = vrot.lane.b32.xlu0 %v450, 127
    %v504 = vpop.permute.xlu0 %503
    %505 = vrot.lane.b32.xlu0 %v451, 127
    %v506 = vpop.permute.xlu0 %505
    %507 = vrot.lane.b32.xlu0 %v452, 127
    %v508 = vpop.permute.xlu0 %507
    %509 = vrot.lane.b32.xlu0 %v453, 127
    %v510 = vpop.permute.xlu0 %509
    %511 = vrot.lane.b32.xlu0 %v454, 127
    %v512 = vpop.permute.xlu0 %511
    %513 = vrot.lane.b32.xlu0 %v455, 127
    %v514 = vpop.permute.xlu0 %513
    %vm515 = vcmask 1039360
    %v516 = vsel %vm515, %v482, %v484
    %v517 = vsel %vm515, %v484, %v486
    %v518 = vsel %vm515, %v486, %v488
    %v519 = vsel %vm515, %v488, %v490
    %v520 = vsel %vm515, %v490, %v492
    %v521 = vsel %vm515, %v492, %v494
    %v522 = vsel %vm515, %v494, %v496
    %v523 = vsel %vm515, %v496, %v498
    %v524 = vsel %vm515, %v498, %v500
    %v525 = vsel %vm515, %v500, %v502
    %v526 = vsel %vm515, %v502, %v504
    %v527 = vsel %vm515, %v504, %v506
    %v528 = vsel %vm515, %v506, %v508
    %v529 = vsel %vm515, %v508, %v510
    %v530 = vsel %vm515, %v510, %v512
    %v531 = vsel %vm515, %v512, %v514
    %vm532 = vcmask 64512
    %v534 = vsel %vm532, %v463, 0
    %vm536 = vcmask 1043456
    %v538 = vsel %vm536, %v516, 0
    %v541 = vsel %vm536, %v517, 0
    %v544 = vsel %vm536, %v518, 0
    %v547 = vsel %vm536, %v519, 0
    %v550 = vsel %vm536, %v520, 0
    %v553 = vsel %vm536, %v521, 0
    %v556 = vsel %vm536, %v522, 0
    %v559 = vsel %vm536, %v523, 0
    %v562 = vsel %vm536, %v524, 0
    %v565 = vsel %vm536, %v525, 0
    %v568 = vsel %vm536, %v526, 0
    %v571 = vsel %vm536, %v527, 0
    %v574 = vsel %vm536, %v528, 0
    %v577 = vsel %vm536, %v529, 0
    %v580 = vsel %vm536, %v530, 0
    %v583 = vsel %vm536, %v531, 0
    %585 = vmatpush.bf16.msra.mxu0 0
    %586 = vmatpush.bf16.msra.mxu0 0
    %587 = vmatpush.bf16.msra.mxu0 0
    %588 = vmatpush.bf16.msra.mxu0 0
    %589 = vmatpush.bf16.msra.mxu0 0
    %590 = vmatpush.bf16.msra.mxu0 0
    %591 = vmatpush.bf16.msra.mxu0 0
    %592 = vmatpush.bf16.msra.mxu0 %v538
    %593 = vmatmul.bf16.gmra.mxu0 %v534
    %v594 = vpop.f32.mrf.mxu0
    %v595 = vadd.f32 0.0, %v594
    %v596 = vpop.f32.mrf.mxu0
    %v597 = vadd.f32 0.0, %v596
    %598 = vdwg.mxu0
    %599 = vmatpush.bf16.msra.mxu0 0
    %600 = vmatpush.bf16.msra.mxu0 0
    %601 = vmatpush.bf16.msra.mxu0 0
    %602 = vmatpush.bf16.msra.mxu0 0
    %603 = vmatpush.bf16.msra.mxu0 0
    %604 = vmatpush.bf16.msra.mxu0 0
    %605 = vmatpush.bf16.msra.mxu0 0
    %606 = vmatpush.bf16.msra.mxu0 %v541
    %607 = vmatmul.bf16.gmra.mxu0 %v534
    %v608 = vpop.f32.mrf.mxu0
    %v609 = vadd.f32 0.0, %v608
    %v610 = vpop.f32.mrf.mxu0
    %v611 = vadd.f32 0.0, %v610
    %612 = vdwg.mxu0
    %613 = vmatpush.bf16.msra.mxu0 0
    %614 = vmatpush.bf16.msra.mxu0 0
    %615 = vmatpush.bf16.msra.mxu0 0
    %616 = vmatpush.bf16.msra.mxu0 0
    %617 = vmatpush.bf16.msra.mxu0 0
    %618 = vmatpush.bf16.msra.mxu0 0
    %619 = vmatpush.bf16.msra.mxu0 0
    %620 = vmatpush.bf16.msra.mxu0 %v544
    %621 = vmatmul.bf16.gmra.mxu0 %v534
    %v622 = vpop.f32.mrf.mxu0
    %v623 = vadd.f32 0.0, %v622
    %v624 = vpop.f32.mrf.mxu0
    %v625 = vadd.f32 0.0, %v624
    %626 = vdwg.mxu0
    %627 = vmatpush.bf16.msra.mxu0 0
    %628 = vmatpush.bf16.msra.mxu0 0
    %629 = vmatpush.bf16.msra.mxu0 0
    %630 = vmatpush.bf16.msra.mxu0 0
    %631 = vmatpush.bf16.msra.mxu0 0
    %632 = vmatpush.bf16.msra.mxu0 0
    %633 = vmatpush.bf16.msra.mxu0 0
    %634 = vmatpush.bf16.msra.mxu0 %v547
    %635 = vmatmul.bf16.gmra.mxu0 %v534
    %v636 = vpop.f32.mrf.mxu0
    %v637 = vadd.f32 0.0, %v636
    %v638 = vpop.f32.mrf.mxu0
    %v639 = vadd.f32 0.0, %v638
    %640 = vdwg.mxu0
    %641 = vmatpush.bf16.msra.mxu0 0
    %642 = vmatpush.bf16.msra.mxu0 0
    %643 = vmatpush.bf16.msra.mxu0 0
    %644 = vmatpush.bf16.msra.mxu0 0
    %645 = vmatpush.bf16.msra.mxu0 0
    %646 = vmatpush.bf16.msra.mxu0 0
    %647 = vmatpush.bf16.msra.mxu0 0
    %648 = vmatpush.bf16.msra.mxu0 %v550
    %649 = vmatmul.bf16.gmra.mxu0 %v534
    %v650 = vpop.f32.mrf.mxu0
    %v651 = vadd.f32 0.0, %v650
    %v652 = vpop.f32.mrf.mxu0
    %v653 = vadd.f32 0.0, %v652
    %654 = vdwg.mxu0
    %655 = vmatpush.bf16.msra.mxu0 0
    %656 = vmatpush.bf16.msra.mxu0 0
    %657 = vmatpush.bf16.msra.mxu0 0
    %658 = vmatpush.bf16.msra.mxu0 0
    %659 = vmatpush.bf16.msra.mxu0 0
    %660 = vmatpush.bf16.msra.mxu0 0
    %661 = vmatpush.bf16.msra.mxu0 0
    %662 = vmatpush.bf16.msra.mxu0 %v553
    %663 = vmatmul.bf16.gmra.mxu0 %v534
    %v664 = vpop.f32.mrf.mxu0
    %v665 = vadd.f32 0.0, %v664
    %v666 = vpop.f32.mrf.mxu0
    %v667 = vadd.f32 0.0, %v666
    %668 = vdwg.mxu0
    %669 = vmatpush.bf16.msra.mxu0 0
    %670 = vmatpush.bf16.msra.mxu0 0
    %671 = vmatpush.bf16.msra.mxu0 0
    %672 = vmatpush.bf16.msra.mxu0 0
    %673 = vmatpush.bf16.msra.mxu0 0
    %674 = vmatpush.bf16.msra.mxu0 0
    %675 = vmatpush.bf16.msra.mxu0 0
    %676 = vmatpush.bf16.msra.mxu0 %v556
    %677 = vmatmul.bf16.gmra.mxu0 %v534
    %v678 = vpop.f32.mrf.mxu0
    %v679 = vadd.f32 0.0, %v678
    %v680 = vpop.f32.mrf.mxu0
    %v681 = vadd.f32 0.0, %v680
    %682 = vdwg.mxu0
    %683 = vmatpush.bf16.msra.mxu0 0
    %684 = vmatpush.bf16.msra.mxu0 0
    %685 = vmatpush.bf16.msra.mxu0 0
    %686 = vmatpush.bf16.msra.mxu0 0
    %687 = vmatpush.bf16.msra.mxu0 0
    %688 = vmatpush.bf16.msra.mxu0 0
    %689 = vmatpush.bf16.msra.mxu0 0
    %690 = vmatpush.bf16.msra.mxu0 %v559
    %691 = vmatmul.bf16.gmra.mxu0 %v534
    %v692 = vpop.f32.mrf.mxu0
    %v693 = vadd.f32 0.0, %v692
    %v694 = vpop.f32.mrf.mxu0
    %v695 = vadd.f32 0.0, %v694
    %696 = vdwg.mxu0
    %697 = vmatpush.bf16.msra.mxu0 0
    %698 = vmatpush.bf16.msra.mxu0 0
    %699 = vmatpush.bf16.msra.mxu0 0
    %700 = vmatpush.bf16.msra.mxu0 0
    %701 = vmatpush.bf16.msra.mxu0 0
    %702 = vmatpush.bf16.msra.mxu0 0
    %703 = vmatpush.bf16.msra.mxu0 0
    %704 = vmatpush.bf16.msra.mxu0 %v562
    %705 = vmatmul.bf16.gmra.mxu0 %v534
    %v706 = vpop.f32.mrf.mxu0
    %v707 = vadd.f32 0.0, %v706
    %v708 = vpop.f32.mrf.mxu0
    %v709 = vadd.f32 0.0, %v708
    %710 = vdwg.mxu0
    %711 = vmatpush.bf16.msra.mxu0 0
    %712 = vmatpush.bf16.msra.mxu0 0
    %713 = vmatpush.bf16.msra.mxu0 0
    %714 = vmatpush.bf16.msra.mxu0 0
    %715 = vmatpush.bf16.msra.mxu0 0
    %716 = vmatpush.bf16.msra.mxu0 0
    %717 = vmatpush.bf16.msra.mxu0 0
    %718 = vmatpush.bf16.msra.mxu0 %v565
    %719 = vmatmul.bf16.gmra.mxu0 %v534
    %v720 = vpop.f32.mrf.mxu0
    %v721 = vadd.f32 0.0, %v720
    %v722 = vpop.f32.mrf.mxu0
    %v723 = vadd.f32 0.0, %v722
    %724 = vdwg.mxu0
    %725 = vmatpush.bf16.msra.mxu0 0
    %726 = vmatpush.bf16.msra.mxu0 0
    %727 = vmatpush.bf16.msra.mxu0 0
    %728 = vmatpush.bf16.msra.mxu0 0
    %729 = vmatpush.bf16.msra.mxu0 0
    %730 = vmatpush.bf16.msra.mxu0 0
    %731 = vmatpush.bf16.msra.mxu0 0
    %732 = vmatpush.bf16.msra.mxu0 %v568
    %733 = vmatmul.bf16.gmra.mxu0 %v534
    %v734 = vpop.f32.mrf.mxu0
    %v735 = vadd.f32 0.0, %v734
    %v736 = vpop.f32.mrf.mxu0
    %v737 = vadd.f32 0.0, %v736
    %738 = vdwg.mxu0
    %739 = vmatpush.bf16.msra.mxu0 0
    %740 = vmatpush.bf16.msra.mxu0 0
    %741 = vmatpush.bf16.msra.mxu0 0
    %742 = vmatpush.bf16.msra.mxu0 0
    %743 = vmatpush.bf16.msra.mxu0 0
    %744 = vmatpush.bf16.msra.mxu0 0
    %745 = vmatpush.bf16.msra.mxu0 0
    %746 = vmatpush.bf16.msra.mxu0 %v571
    %747 = vmatmul.bf16.gmra.mxu0 %v534
    %v748 = vpop.f32.mrf.mxu0
    %v749 = vadd.f32 0.0, %v748
    %v750 = vpop.f32.mrf.mxu0
    %v751 = vadd.f32 0.0, %v750
    %752 = vdwg.mxu0
    %753 = vmatpush.bf16.msra.mxu0 0
    %754 = vmatpush.bf16.msra.mxu0 0
    %755 = vmatpush.bf16.msra.mxu0 0
    %756 = vmatpush.bf16.msra.mxu0 0
    %757 = vmatpush.bf16.msra.mxu0 0
    %758 = vmatpush.bf16.msra.mxu0 0
    %759 = vmatpush.bf16.msra.mxu0 0
    %760 = vmatpush.bf16.msra.mxu0 %v574
    %761 = vmatmul.bf16.gmra.mxu0 %v534
    %v762 = vpop.f32.mrf.mxu0
    %v763 = vadd.f32 0.0, %v762
    %v764 = vpop.f32.mrf.mxu0
    %v765 = vadd.f32 0.0, %v764
    %766 = vdwg.mxu0
    %767 = vmatpush.bf16.msra.mxu0 0
    %768 = vmatpush.bf16.msra.mxu0 0
    %769 = vmatpush.bf16.msra.mxu0 0
    %770 = vmatpush.bf16.msra.mxu0 0
    %771 = vmatpush.bf16.msra.mxu0 0
    %772 = vmatpush.bf16.msra.mxu0 0
    %773 = vmatpush.bf16.msra.mxu0 0
    %774 = vmatpush.bf16.msra.mxu0 %v577
    %775 = vmatmul.bf16.gmra.mxu0 %v534
    %v776 = vpop.f32.mrf.mxu0
    %v777 = vadd.f32 0.0, %v776
    %v778 = vpop.f32.mrf.mxu0
    %v779 = vadd.f32 0.0, %v778
    %780 = vdwg.mxu0
    %781 = vmatpush.bf16.msra.mxu0 0
    %782 = vmatpush.bf16.msra.mxu0 0
    %783 = vmatpush.bf16.msra.mxu0 0
    %784 = vmatpush.bf16.msra.mxu0 0
    %785 = vmatpush.bf16.msra.mxu0 0
    %786 = vmatpush.bf16.msra.mxu0 0
    %787 = vmatpush.bf16.msra.mxu0 0
    %788 = vmatpush.bf16.msra.mxu0 %v580
    %789 = vmatmul.bf16.gmra.mxu0 %v534
    %v790 = vpop.f32.mrf.mxu0
    %v791 = vadd.f32 0.0, %v790
    %v792 = vpop.f32.mrf.mxu0
    %v793 = vadd.f32 0.0, %v792
    %794 = vdwg.mxu0
    %795 = vmatpush.bf16.msra.mxu0 0
    %796 = vmatpush.bf16.msra.mxu0 0
    %797 = vmatpush.bf16.msra.mxu0 0
    %798 = vmatpush.bf16.msra.mxu0 0
    %799 = vmatpush.bf16.msra.mxu0 0
    %800 = vmatpush.bf16.msra.mxu0 0
    %801 = vmatpush.bf16.msra.mxu0 0
    %802 = vmatpush.bf16.msra.mxu0 %v583
    %803 = vmatmul.bf16.gmra.mxu0 %v534
    %v804 = vpop.f32.mrf.mxu0
    %v805 = vadd.f32 0.0, %v804
    %v806 = vpop.f32.mrf.mxu0
    %v807 = vadd.f32 0.0, %v806
    %808 = vdwg.mxu0
    %v811 = vunpack.c.l.b16 %v258
    %v812 = vunpack.c.l.b16 %v259
    %v813 = vpack.c.b16 %v812, %v811
    %v815 = vsel %vm532, %v813, 0
    %v818 = vsel %vm536, %v242, 0
    %v821 = vsel %vm536, %v243, 0
    %v824 = vsel %vm536, %v244, 0
    %v827 = vsel %vm536, %v245, 0
    %v830 = vsel %vm536, %v246, 0
    %v833 = vsel %vm536, %v247, 0
    %v836 = vsel %vm536, %v248, 0
    %v839 = vsel %vm536, %v249, 0
    %v842 = vsel %vm536, %v250, 0
    %v845 = vsel %vm536, %v251, 0
    %v848 = vsel %vm536, %v252, 0
    %v851 = vsel %vm536, %v253, 0
    %v854 = vsel %vm536, %v254, 0
    %v857 = vsel %vm536, %v255, 0
    %v860 = vsel %vm536, %v256, 0
    %v863 = vsel %vm536, %v257, 0
    %865 = vmatpush.bf16.msra.mxu0 0
    %866 = vmatpush.bf16.msra.mxu0 0
    %867 = vmatpush.bf16.msra.mxu0 0
    %868 = vmatpush.bf16.msra.mxu0 0
    %869 = vmatpush.bf16.msra.mxu0 0
    %870 = vmatpush.bf16.msra.mxu0 0
    %871 = vmatpush.bf16.msra.mxu0 0
    %872 = vmatpush.bf16.msra.mxu0 %v818
    %873 = vmatmul.bf16.gmra.mxu0 %v815
    %v874 = vpop.f32.mrf.mxu0
    %v875 = vadd.f32 %v595, %v874
    %v876 = vpop.f32.mrf.mxu0
    %v877 = vadd.f32 %v597, %v876
    %878 = vdwg.mxu0
    %879 = vmatpush.bf16.msra.mxu0 0
    %880 = vmatpush.bf16.msra.mxu0 0
    %881 = vmatpush.bf16.msra.mxu0 0
    %882 = vmatpush.bf16.msra.mxu0 0
    %883 = vmatpush.bf16.msra.mxu0 0
    %884 = vmatpush.bf16.msra.mxu0 0
    %885 = vmatpush.bf16.msra.mxu0 0
    %886 = vmatpush.bf16.msra.mxu0 %v821
    %887 = vmatmul.bf16.gmra.mxu0 %v815
    %v888 = vpop.f32.mrf.mxu0
    %v889 = vadd.f32 %v609, %v888
    %v890 = vpop.f32.mrf.mxu0
    %v891 = vadd.f32 %v611, %v890
    %892 = vdwg.mxu0
    %893 = vmatpush.bf16.msra.mxu0 0
    %894 = vmatpush.bf16.msra.mxu0 0
    %895 = vmatpush.bf16.msra.mxu0 0
    %896 = vmatpush.bf16.msra.mxu0 0
    %897 = vmatpush.bf16.msra.mxu0 0
    %898 = vmatpush.bf16.msra.mxu0 0
    %899 = vmatpush.bf16.msra.mxu0 0
    %900 = vmatpush.bf16.msra.mxu0 %v824
    %901 = vmatmul.bf16.gmra.mxu0 %v815
    %v902 = vpop.f32.mrf.mxu0
    %v903 = vadd.f32 %v623, %v902
    %v904 = vpop.f32.mrf.mxu0
    %v905 = vadd.f32 %v625, %v904
    %906 = vdwg.mxu0
    %907 = vmatpush.bf16.msra.mxu0 0
    %908 = vmatpush.bf16.msra.mxu0 0
    %909 = vmatpush.bf16.msra.mxu0 0
    %910 = vmatpush.bf16.msra.mxu0 0
    %911 = vmatpush.bf16.msra.mxu0 0
    %912 = vmatpush.bf16.msra.mxu0 0
    %913 = vmatpush.bf16.msra.mxu0 0
    %914 = vmatpush.bf16.msra.mxu0 %v827
    %915 = vmatmul.bf16.gmra.mxu0 %v815
    %v916 = vpop.f32.mrf.mxu0
    %v917 = vadd.f32 %v637, %v916
    %v918 = vpop.f32.mrf.mxu0
    %v919 = vadd.f32 %v639, %v918
    %920 = vdwg.mxu0
    %921 = vmatpush.bf16.msra.mxu0 0
    %922 = vmatpush.bf16.msra.mxu0 0
    %923 = vmatpush.bf16.msra.mxu0 0
    %924 = vmatpush.bf16.msra.mxu0 0
    %925 = vmatpush.bf16.msra.mxu0 0
    %926 = vmatpush.bf16.msra.mxu0 0
    %927 = vmatpush.bf16.msra.mxu0 0
    %928 = vmatpush.bf16.msra.mxu0 %v830
    %929 = vmatmul.bf16.gmra.mxu0 %v815
    %v930 = vpop.f32.mrf.mxu0
    %v931 = vadd.f32 %v651, %v930
    %v932 = vpop.f32.mrf.mxu0
    %v933 = vadd.f32 %v653, %v932
    %934 = vdwg.mxu0
    %935 = vmatpush.bf16.msra.mxu0 0
    %936 = vmatpush.bf16.msra.mxu0 0
    %937 = vmatpush.bf16.msra.mxu0 0
    %938 = vmatpush.bf16.msra.mxu0 0
    %939 = vmatpush.bf16.msra.mxu0 0
    %940 = vmatpush.bf16.msra.mxu0 0
    %941 = vmatpush.bf16.msra.mxu0 0
    %942 = vmatpush.bf16.msra.mxu0 %v833
    %943 = vmatmul.bf16.gmra.mxu0 %v815
    %v944 = vpop.f32.mrf.mxu0
    %v945 = vadd.f32 %v665, %v944
    %v946 = vpop.f32.mrf.mxu0
    %v947 = vadd.f32 %v667, %v946
    %948 = vdwg.mxu0
    %949 = vmatpush.bf16.msra.mxu0 0
    %950 = vmatpush.bf16.msra.mxu0 0
    %951 = vmatpush.bf16.msra.mxu0 0
    %952 = vmatpush.bf16.msra.mxu0 0
    %953 = vmatpush.bf16.msra.mxu0 0
    %954 = vmatpush.bf16.msra.mxu0 0
    %955 = vmatpush.bf16.msra.mxu0 0
    %956 = vmatpush.bf16.msra.mxu0 %v836
    %957 = vmatmul.bf16.gmra.mxu0 %v815
    %v958 = vpop.f32.mrf.mxu0
    %v959 = vadd.f32 %v679, %v958
    %v960 = vpop.f32.mrf.mxu0
    %v961 = vadd.f32 %v681, %v960
    %962 = vdwg.mxu0
    %963 = vmatpush.bf16.msra.mxu0 0
    %964 = vmatpush.bf16.msra.mxu0 0
    %965 = vmatpush.bf16.msra.mxu0 0
    %966 = vmatpush.bf16.msra.mxu0 0
    %967 = vmatpush.bf16.msra.mxu0 0
    %968 = vmatpush.bf16.msra.mxu0 0
    %969 = vmatpush.bf16.msra.mxu0 0
    %970 = vmatpush.bf16.msra.mxu0 %v839
    %971 = vmatmul.bf16.gmra.mxu0 %v815
    %v972 = vpop.f32.mrf.mxu0
    %v973 = vadd.f32 %v693, %v972
    %v974 = vpop.f32.mrf.mxu0
    %v975 = vadd.f32 %v695, %v974
    %976 = vdwg.mxu0
    %977 = vmatpush.bf16.msra.mxu0 0
    %978 = vmatpush.bf16.msra.mxu0 0
    %979 = vmatpush.bf16.msra.mxu0 0
    %980 = vmatpush.bf16.msra.mxu0 0
    %981 = vmatpush.bf16.msra.mxu0 0
    %982 = vmatpush.bf16.msra.mxu0 0
    %983 = vmatpush.bf16.msra.mxu0 0
    %984 = vmatpush.bf16.msra.mxu0 %v842
    %985 = vmatmul.bf16.gmra.mxu0 %v815
    %v986 = vpop.f32.mrf.mxu0
    %v987 = vadd.f32 %v707, %v986
    %v988 = vpop.f32.mrf.mxu0
    %v989 = vadd.f32 %v709, %v988
    %990 = vdwg.mxu0
    %991 = vmatpush.bf16.msra.mxu0 0
    %992 = vmatpush.bf16.msra.mxu0 0
    %993 = vmatpush.bf16.msra.mxu0 0
    %994 = vmatpush.bf16.msra.mxu0 0
    %995 = vmatpush.bf16.msra.mxu0 0
    %996 = vmatpush.bf16.msra.mxu0 0
    %997 = vmatpush.bf16.msra.mxu0 0
    %998 = vmatpush.bf16.msra.mxu0 %v845
    %999 = vmatmul.bf16.gmra.mxu0 %v815
    %v1000 = vpop.f32.mrf.mxu0
    %v1001 = vadd.f32 %v721, %v1000
    %v1002 = vpop.f32.mrf.mxu0
    %v1003 = vadd.f32 %v723, %v1002
    %1004 = vdwg.mxu0
    %1005 = vmatpush.bf16.msra.mxu0 0
    %1006 = vmatpush.bf16.msra.mxu0 0
    %1007 = vmatpush.bf16.msra.mxu0 0
    %1008 = vmatpush.bf16.msra.mxu0 0
    %1009 = vmatpush.bf16.msra.mxu0 0
    %1010 = vmatpush.bf16.msra.mxu0 0
    %1011 = vmatpush.bf16.msra.mxu0 0
    %1012 = vmatpush.bf16.msra.mxu0 %v848
    %1013 = vmatmul.bf16.gmra.mxu0 %v815
    %v1014 = vpop.f32.mrf.mxu0
    %v1015 = vadd.f32 %v735, %v1014
    %v1016 = vpop.f32.mrf.mxu0
    %v1017 = vadd.f32 %v737, %v1016
    %1018 = vdwg.mxu0
    %1019 = vmatpush.bf16.msra.mxu0 0
    %1020 = vmatpush.bf16.msra.mxu0 0
    %1021 = vmatpush.bf16.msra.mxu0 0
    %1022 = vmatpush.bf16.msra.mxu0 0
    %1023 = vmatpush.bf16.msra.mxu0 0
    %1024 = vmatpush.bf16.msra.mxu0 0
    %1025 = vmatpush.bf16.msra.mxu0 0
    %1026 = vmatpush.bf16.msra.mxu0 %v851
    %1027 = vmatmul.bf16.gmra.mxu0 %v815
    %v1028 = vpop.f32.mrf.mxu0
    %v1029 = vadd.f32 %v749, %v1028
    %v1030 = vpop.f32.mrf.mxu0
    %v1031 = vadd.f32 %v751, %v1030
    %1032 = vdwg.mxu0
    %1033 = vmatpush.bf16.msra.mxu0 0
    %1034 = vmatpush.bf16.msra.mxu0 0
    %1035 = vmatpush.bf16.msra.mxu0 0
    %1036 = vmatpush.bf16.msra.mxu0 0
    %1037 = vmatpush.bf16.msra.mxu0 0
    %1038 = vmatpush.bf16.msra.mxu0 0
    %1039 = vmatpush.bf16.msra.mxu0 0
    %1040 = vmatpush.bf16.msra.mxu0 %v854
    %1041 = vmatmul.bf16.gmra.mxu0 %v815
    %v1042 = vpop.f32.mrf.mxu0
    %v1043 = vadd.f32 %v763, %v1042
    %v1044 = vpop.f32.mrf.mxu0
    %v1045 = vadd.f32 %v765, %v1044
    %1046 = vdwg.mxu0
    %1047 = vmatpush.bf16.msra.mxu0 0
    %1048 = vmatpush.bf16.msra.mxu0 0
    %1049 = vmatpush.bf16.msra.mxu0 0
    %1050 = vmatpush.bf16.msra.mxu0 0
    %1051 = vmatpush.bf16.msra.mxu0 0
    %1052 = vmatpush.bf16.msra.mxu0 0
    %1053 = vmatpush.bf16.msra.mxu0 0
    %1054 = vmatpush.bf16.msra.mxu0 %v857
    %1055 = vmatmul.bf16.gmra.mxu0 %v815
    %v1056 = vpop.f32.mrf.mxu0
    %v1057 = vadd.f32 %v777, %v1056
    %v1058 = vpop.f32.mrf.mxu0
    %v1059 = vadd.f32 %v779, %v1058
    %1060 = vdwg.mxu0
    %1061 = vmatpush.bf16.msra.mxu0 0
    %1062 = vmatpush.bf16.msra.mxu0 0
    %1063 = vmatpush.bf16.msra.mxu0 0
    %1064 = vmatpush.bf16.msra.mxu0 0
    %1065 = vmatpush.bf16.msra.mxu0 0
    %1066 = vmatpush.bf16.msra.mxu0 0
    %1067 = vmatpush.bf16.msra.mxu0 0
    %1068 = vmatpush.bf16.msra.mxu0 %v860
    %1069 = vmatmul.bf16.gmra.mxu0 %v815
    %v1070 = vpop.f32.mrf.mxu0
    %v1071 = vadd.f32 %v791, %v1070
    %v1072 = vpop.f32.mrf.mxu0
    %v1073 = vadd.f32 %v793, %v1072
    %1074 = vdwg.mxu0
    %1075 = vmatpush.bf16.msra.mxu0 0
    %1076 = vmatpush.bf16.msra.mxu0 0
    %1077 = vmatpush.bf16.msra.mxu0 0
    %1078 = vmatpush.bf16.msra.mxu0 0
    %1079 = vmatpush.bf16.msra.mxu0 0
    %1080 = vmatpush.bf16.msra.mxu0 0
    %1081 = vmatpush.bf16.msra.mxu0 0
    %1082 = vmatpush.bf16.msra.mxu0 %v863
    %1083 = vmatmul.bf16.gmra.mxu0 %v815
    %v1084 = vpop.f32.mrf.mxu0
    %v1085 = vadd.f32 %v805, %v1084
    %v1086 = vpop.f32.mrf.mxu0
    %v1087 = vadd.f32 %v807, %v1086
    %1088 = vdwg.mxu0
    %v1089 = vperm.slane %v131, 1
    %v1090 = vperm.slane %v135, 1
    %v1091 = vperm.slane %v139, 1
    %v1092 = vperm.slane %v143, 1
    %v1093 = vperm.slane %v147, 1
    %v1094 = vperm.slane %v151, 1
    %v1095 = vperm.slane %v155, 1
    %v1096 = vperm.slane %v159, 1
    %v1097 = vperm.slane %v163, 1
    %v1098 = vperm.slane %v167, 1
    %v1099 = vperm.slane %v171, 1
    %v1100 = vperm.slane %v175, 1
    %v1101 = vperm.slane %v179, 1
    %v1102 = vperm.slane %v183, 1
    %v1103 = vperm.slane %v187, 1
    %v1104 = vperm.slane %v191, 1
    %v1105 = vunpack.c.l.bf16 %v1089
    %v1106 = vunpack.c.l.bf16 %v1090
    %v1107 = vunpack.c.l.bf16 %v1091
    %v1108 = vunpack.c.l.bf16 %v1092
    %v1109 = vunpack.c.l.bf16 %v1093
    %v1110 = vunpack.c.l.bf16 %v1094
    %v1111 = vunpack.c.l.bf16 %v1095
    %v1112 = vunpack.c.l.bf16 %v1096
    %v1113 = vunpack.c.l.bf16 %v1097
    %v1114 = vunpack.c.l.bf16 %v1098
    %v1115 = vunpack.c.l.bf16 %v1099
    %v1116 = vunpack.c.l.bf16 %v1100
    %v1117 = vunpack.c.l.bf16 %v1101
    %v1118 = vunpack.c.l.bf16 %v1102
    %v1119 = vunpack.c.l.bf16 %v1103
    %v1120 = vunpack.c.l.bf16 %v1104
    %1137 = vrot.lane.b32.xlu0 %v1105, 2
    %v1138 = vpop.permute.xlu0 %1137
    %1139 = vrot.lane.b32.xlu0 %v1106, 2
    %v1140 = vpop.permute.xlu0 %1139
    %1141 = vrot.lane.b32.xlu0 %v1107, 2
    %v1142 = vpop.permute.xlu0 %1141
    %1143 = vrot.lane.b32.xlu0 %v1108, 2
    %v1144 = vpop.permute.xlu0 %1143
    %1145 = vrot.lane.b32.xlu0 %v1109, 2
    %v1146 = vpop.permute.xlu0 %1145
    %1147 = vrot.lane.b32.xlu0 %v1110, 2
    %v1148 = vpop.permute.xlu0 %1147
    %1149 = vrot.lane.b32.xlu0 %v1111, 2
    %v1150 = vpop.permute.xlu0 %1149
    %1151 = vrot.lane.b32.xlu0 %v1112, 2
    %v1152 = vpop.permute.xlu0 %1151
    %1153 = vrot.lane.b32.xlu0 %v1113, 2
    %v1154 = vpop.permute.xlu0 %1153
    %1155 = vrot.lane.b32.xlu0 %v1114, 2
    %v1156 = vpop.permute.xlu0 %1155
    %1157 = vrot.lane.b32.xlu0 %v1115, 2
    %v1158 = vpop.permute.xlu0 %1157
    %1159 = vrot.lane.b32.xlu0 %v1116, 2
    %v1160 = vpop.permute.xlu0 %1159
    %1161 = vrot.lane.b32.xlu0 %v1117, 2
    %v1162 = vpop.permute.xlu0 %1161
    %1163 = vrot.lane.b32.xlu0 %v1118, 2
    %v1164 = vpop.permute.xlu0 %1163
    %1165 = vrot.lane.b32.xlu0 %v1119, 2
    %v1166 = vpop.permute.xlu0 %1165
    %1167 = vrot.lane.b32.xlu0 %v1120, 2
    %v1168 = vpop.permute.xlu0 %1167
    %vm1169 = vcmask 15360
    %v1170 = vsel %vm1169, %v1138, %v1140
    %v1171 = vsel %vm1169, %v1140, %v1142
    %v1172 = vsel %vm1169, %v1142, %v1144
    %v1173 = vsel %vm1169, %v1144, %v1146
    %v1174 = vsel %vm1169, %v1146, %v1148
    %v1175 = vsel %vm1169, %v1148, %v1150
    %v1176 = vsel %vm1169, %v1150, %v1152
    %v1177 = vsel %vm1169, %v1152, %v1154
    %v1178 = vsel %vm1169, %v1154, %v1156
    %v1179 = vsel %vm1169, %v1156, %v1158
    %v1180 = vsel %vm1169, %v1158, %v1160
    %v1181 = vsel %vm1169, %v1160, %v1162
    %v1182 = vsel %vm1169, %v1162, %v1164
    %v1183 = vsel %vm1169, %v1164, %v1166
    %v1184 = vsel %vm1169, %v1166, %v1168
    %v1202 = vmul.f32 %v194, %v1138
    %v1203 = vmul.f32 %v195, %v1170
    %v1204 = vmul.f32 %v196, %v1171
    %v1205 = vmul.f32 %v197, %v1172
    %v1206 = vmul.f32 %v198, %v1173
    %v1207 = vmul.f32 %v199, %v1174
    %v1208 = vmul.f32 %v200, %v1175
    %v1209 = vmul.f32 %v201, %v1176
    %v1210 = vmul.f32 %v202, %v1177
    %v1211 = vmul.f32 %v203, %v1178
    %v1212 = vmul.f32 %v204, %v1179
    %v1213 = vmul.f32 %v205, %v1180
    %v1214 = vmul.f32 %v206, %v1181
    %v1215 = vmul.f32 %v207, %v1182
    %v1216 = vmul.f32 %v208, %v1183
    %v1217 = vmul.f32 %v209, %v1184
    %v1218 = vmul.f32 %v324, %v1168
    %v1219 = vpack.c.bf16 %v1202, %v1202
    %v1220 = vpack.c.bf16 %v1203, %v1203
    %v1221 = vpack.c.bf16 %v1204, %v1204
    %v1222 = vpack.c.bf16 %v1205, %v1205
    %v1223 = vpack.c.bf16 %v1206, %v1206
    %v1224 = vpack.c.bf16 %v1207, %v1207
    %v1225 = vpack.c.bf16 %v1208, %v1208
    %v1226 = vpack.c.bf16 %v1209, %v1209
    %v1227 = vpack.c.bf16 %v1210, %v1210
    %v1228 = vpack.c.bf16 %v1211, %v1211
    %v1229 = vpack.c.bf16 %v1212, %v1212
    %v1230 = vpack.c.bf16 %v1213, %v1213
    %v1231 = vpack.c.bf16 %v1214, %v1214
    %v1232 = vpack.c.bf16 %v1215, %v1215
    %v1233 = vpack.c.bf16 %v1216, %v1216
    %v1234 = vpack.c.bf16 %v1217, %v1217
    %v1235 = vpack.c.bf16 %v1218, %v1218
    %s1236 = scalar_lea.vmem [#allocation2], 16
    %v1237 = vld [vmem:[%s1236] sm:$0xf]
    %v1238 = vld [vmem:[%s1236 + $0x4] sm:$0x3]
    %v1241 = vunpack.c.l.b16 %v1237
    %v1242 = vunpack.c.l.b16 %v1238
    %v1243 = vpack.c.b16 %v1242, %v1241
    %1261 = vrot.lane.b32.xlu0 %v1219, 126
    %v1262 = vpop.permute.xlu0 %1261
    %1263 = vrot.lane.b32.xlu0 %v1220, 126
    %v1264 = vpop.permute.xlu0 %1263
    %1265 = vrot.lane.b32.xlu0 %v1221, 126
    %v1266 = vpop.permute.xlu0 %1265
    %1267 = vrot.lane.b32.xlu0 %v1222, 126
    %v1268 = vpop.permute.xlu0 %1267
    %1269 = vrot.lane.b32.xlu0 %v1223, 126
    %v1270 = vpop.permute.xlu0 %1269
    %1271 = vrot.lane.b32.xlu0 %v1224, 126
    %v1272 = vpop.permute.xlu0 %1271
    %1273 = vrot.lane.b32.xlu0 %v1225, 126
    %v1274 = vpop.permute.xlu0 %1273
    %1275 = vrot.lane.b32.xlu0 %v1226, 126
    %v1276 = vpop.permute.xlu0 %1275
    %1277 = vrot.lane.b32.xlu0 %v1227, 126
    %v1278 = vpop.permute.xlu0 %1277
    %1279 = vrot.lane.b32.xlu0 %v1228, 126
    %v1280 = vpop.permute.xlu0 %1279
    %1281 = vrot.lane.b32.xlu0 %v1229, 126
    %v1282 = vpop.permute.xlu0 %1281
    %1283 = vrot.lane.b32.xlu0 %v1230, 126
    %v1284 = vpop.permute.xlu0 %1283
    %1285 = vrot.lane.b32.xlu0 %v1231, 126
    %v1286 = vpop.permute.xlu0 %1285
    %1287 = vrot.lane.b32.xlu0 %v1232, 126
    %v1288 = vpop.permute.xlu0 %1287
    %1289 = vrot.lane.b32.xlu0 %v1233, 126
    %v1290 = vpop.permute.xlu0 %1289
    %1291 = vrot.lane.b32.xlu0 %v1234, 126
    %v1292 = vpop.permute.xlu0 %1291
    %1293 = vrot.lane.b32.xlu0 %v1235, 126
    %v1294 = vpop.permute.xlu0 %1293
    %vm1295 = vcmask 1031168
    %v1296 = vsel %vm1295, %v1262, %v1264
    %v1297 = vsel %vm1295, %v1264, %v1266
    %v1298 = vsel %vm1295, %v1266, %v1268
    %v1299 = vsel %vm1295, %v1268, %v1270
    %v1300 = vsel %vm1295, %v1270, %v1272
    %v1301 = vsel %vm1295, %v1272, %v1274
    %v1302 = vsel %vm1295, %v1274, %v1276
    %v1303 = vsel %vm1295, %v1276, %v1278
    %v1304 = vsel %vm1295, %v1278, %v1280
    %v1305 = vsel %vm1295, %v1280, %v1282
    %v1306 = vsel %vm1295, %v1282, %v1284
    %v1307 = vsel %vm1295, %v1284, %v1286
    %v1308 = vsel %vm1295, %v1286, %v1288
    %v1309 = vsel %vm1295, %v1288, %v1290
    %v1310 = vsel %vm1295, %v1290, %v1292
    %v1311 = vsel %vm1295, %v1292, %v1294
    %v1313 = vsel %vm532, %v1243, 0
    %v1316 = vsel %vm536, %v1296, 0
    %v1319 = vsel %vm536, %v1297, 0
    %v1322 = vsel %vm536, %v1298, 0
    %v1325 = vsel %vm536, %v1299, 0
    %v1328 = vsel %vm536, %v1300, 0
    %v1331 = vsel %vm536, %v1301, 0
    %v1334 = vsel %vm536, %v1302, 0
    %v1337 = vsel %vm536, %v1303, 0
    %v1340 = vsel %vm536, %v1304, 0
    %v1343 = vsel %vm536, %v1305, 0
    %v1346 = vsel %vm536, %v1306, 0
    %v1349 = vsel %vm536, %v1307, 0
    %v1352 = vsel %vm536, %v1308, 0
    %v1355 = vsel %vm536, %v1309, 0
    %v1358 = vsel %vm536, %v1310, 0
    %v1361 = vsel %vm536, %v1311, 0
    %1363 = vmatpush.bf16.msra.mxu0 0
    %1364 = vmatpush.bf16.msra.mxu0 0
    %1365 = vmatpush.bf16.msra.mxu0 0
    %1366 = vmatpush.bf16.msra.mxu0 0
    %1367 = vmatpush.bf16.msra.mxu0 0
    %1368 = vmatpush.bf16.msra.mxu0 0
    %1369 = vmatpush.bf16.msra.mxu0 0
    %1370 = vmatpush.bf16.msra.mxu0 %v1316
    %1371 = vmatmul.bf16.gmra.mxu0 %v1313
    %v1372 = vpop.f32.mrf.mxu0
    %v1373 = vadd.f32 0.0, %v1372
    %v1374 = vpop.f32.mrf.mxu0
    %v1375 = vadd.f32 0.0, %v1374
    %1376 = vdwg.mxu0
    %1377 = vmatpush.bf16.msra.mxu0 0
    %1378 = vmatpush.bf16.msra.mxu0 0
    %1379 = vmatpush.bf16.msra.mxu0 0
    %1380 = vmatpush.bf16.msra.mxu0 0
    %1381 = vmatpush.bf16.msra.mxu0 0
    %1382 = vmatpush.bf16.msra.mxu0 0
    %1383 = vmatpush.bf16.msra.mxu0 0
    %1384 = vmatpush.bf16.msra.mxu0 %v1319
    %1385 = vmatmul.bf16.gmra.mxu0 %v1313
    %v1386 = vpop.f32.mrf.mxu0
    %v1387 = vadd.f32 0.0, %v1386
    %v1388 = vpop.f32.mrf.mxu0
    %v1389 = vadd.f32 0.0, %v1388
    %1390 = vdwg.mxu0
    %1391 = vmatpush.bf16.msra.mxu0 0
    %1392 = vmatpush.bf16.msra.mxu0 0
    %1393 = vmatpush.bf16.msra.mxu0 0
    %1394 = vmatpush.bf16.msra.mxu0 0
    %1395 = vmatpush.bf16.msra.mxu0 0
    %1396 = vmatpush.bf16.msra.mxu0 0
    %1397 = vmatpush.bf16.msra.mxu0 0
    %1398 = vmatpush.bf16.msra.mxu0 %v1322
    %1399 = vmatmul.bf16.gmra.mxu0 %v1313
    %v1400 = vpop.f32.mrf.mxu0
    %v1401 = vadd.f32 0.0, %v1400
    %v1402 = vpop.f32.mrf.mxu0
    %v1403 = vadd.f32 0.0, %v1402
    %1404 = vdwg.mxu0
    %1405 = vmatpush.bf16.msra.mxu0 0
    %1406 = vmatpush.bf16.msra.mxu0 0
    %1407 = vmatpush.bf16.msra.mxu0 0
    %1408 = vmatpush.bf16.msra.mxu0 0
    %1409 = vmatpush.bf16.msra.mxu0 0
    %1410 = vmatpush.bf16.msra.mxu0 0
    %1411 = vmatpush.bf16.msra.mxu0 0
    %1412 = vmatpush.bf16.msra.mxu0 %v1325
    %1413 = vmatmul.bf16.gmra.mxu0 %v1313
    %v1414 = vpop.f32.mrf.mxu0
    %v1415 = vadd.f32 0.0, %v1414
    %v1416 = vpop.f32.mrf.mxu0
    %v1417 = vadd.f32 0.0, %v1416
    %1418 = vdwg.mxu0
    %1419 = vmatpush.bf16.msra.mxu0 0
    %1420 = vmatpush.bf16.msra.mxu0 0
    %1421 = vmatpush.bf16.msra.mxu0 0
    %1422 = vmatpush.bf16.msra.mxu0 0
    %1423 = vmatpush.bf16.msra.mxu0 0
    %1424 = vmatpush.bf16.msra.mxu0 0
    %1425 = vmatpush.bf16.msra.mxu0 0
    %1426 = vmatpush.bf16.msra.mxu0 %v1328
    %1427 = vmatmul.bf16.gmra.mxu0 %v1313
    %v1428 = vpop.f32.mrf.mxu0
    %v1429 = vadd.f32 0.0, %v1428
    %v1430 = vpop.f32.mrf.mxu0
    %v1431 = vadd.f32 0.0, %v1430
    %1432 = vdwg.mxu0
    %1433 = vmatpush.bf16.msra.mxu0 0
    %1434 = vmatpush.bf16.msra.mxu0 0
    %1435 = vmatpush.bf16.msra.mxu0 0
    %1436 = vmatpush.bf16.msra.mxu0 0
    %1437 = vmatpush.bf16.msra.mxu0 0
    %1438 = vmatpush.bf16.msra.mxu0 0
    %1439 = vmatpush.bf16.msra.mxu0 0
    %1440 = vmatpush.bf16.msra.mxu0 %v1331
    %1441 = vmatmul.bf16.gmra.mxu0 %v1313
    %v1442 = vpop.f32.mrf.mxu0
    %v1443 = vadd.f32 0.0, %v1442
    %v1444 = vpop.f32.mrf.mxu0
    %v1445 = vadd.f32 0.0, %v1444
    %1446 = vdwg.mxu0
    %1447 = vmatpush.bf16.msra.mxu0 0
    %1448 = vmatpush.bf16.msra.mxu0 0
    %1449 = vmatpush.bf16.msra.mxu0 0
    %1450 = vmatpush.bf16.msra.mxu0 0
    %1451 = vmatpush.bf16.msra.mxu0 0
    %1452 = vmatpush.bf16.msra.mxu0 0
    %1453 = vmatpush.bf16.msra.mxu0 0
    %1454 = vmatpush.bf16.msra.mxu0 %v1334
    %1455 = vmatmul.bf16.gmra.mxu0 %v1313
    %v1456 = vpop.f32.mrf.mxu0
    %v1457 = vadd.f32 0.0, %v1456
    %v1458 = vpop.f32.mrf.mxu0
    %v1459 = vadd.f32 0.0, %v1458
    %1460 = vdwg.mxu0
    %1461 = vmatpush.bf16.msra.mxu0 0
    %1462 = vmatpush.bf16.msra.mxu0 0
    %1463 = vmatpush.bf16.msra.mxu0 0
    %1464 = vmatpush.bf16.msra.mxu0 0
    %1465 = vmatpush.bf16.msra.mxu0 0
    %1466 = vmatpush.bf16.msra.mxu0 0
    %1467 = vmatpush.bf16.msra.mxu0 0
    %1468 = vmatpush.bf16.msra.mxu0 %v1337
    %1469 = vmatmul.bf16.gmra.mxu0 %v1313
    %v1470 = vpop.f32.mrf.mxu0
    %v1471 = vadd.f32 0.0, %v1470
    %v1472 = vpop.f32.mrf.mxu0
    %v1473 = vadd.f32 0.0, %v1472
    %1474 = vdwg.mxu0
    %1475 = vmatpush.bf16.msra.mxu0 0
    %1476 = vmatpush.bf16.msra.mxu0 0
    %1477 = vmatpush.bf16.msra.mxu0 0
    %1478 = vmatpush.bf16.msra.mxu0 0
    %1479 = vmatpush.bf16.msra.mxu0 0
    %1480 = vmatpush.bf16.msra.mxu0 0
    %1481 = vmatpush.bf16.msra.mxu0 0
    %1482 = vmatpush.bf16.msra.mxu0 %v1340
    %1483 = vmatmul.bf16.gmra.mxu0 %v1313
    %v1484 = vpop.f32.mrf.mxu0
    %v1485 = vadd.f32 0.0, %v1484
    %v1486 = vpop.f32.mrf.mxu0
    %v1487 = vadd.f32 0.0, %v1486
    %1488 = vdwg.mxu0
    %1489 = vmatpush.bf16.msra.mxu0 0
    %1490 = vmatpush.bf16.msra.mxu0 0
    %1491 = vmatpush.bf16.msra.mxu0 0
    %1492 = vmatpush.bf16.msra.mxu0 0
    %1493 = vmatpush.bf16.msra.mxu0 0
    %1494 = vmatpush.bf16.msra.mxu0 0
    %1495 = vmatpush.bf16.msra.mxu0 0
    %1496 = vmatpush.bf16.msra.mxu0 %v1343
    %1497 = vmatmul.bf16.gmra.mxu0 %v1313
    %v1498 = vpop.f32.mrf.mxu0
    %v1499 = vadd.f32 0.0, %v1498
    %v1500 = vpop.f32.mrf.mxu0
    %v1501 = vadd.f32 0.0, %v1500
    %1502 = vdwg.mxu0
    %1503 = vmatpush.bf16.msra.mxu0 0
    %1504 = vmatpush.bf16.msra.mxu0 0
    %1505 = vmatpush.bf16.msra.mxu0 0
    %1506 = vmatpush.bf16.msra.mxu0 0
    %1507 = vmatpush.bf16.msra.mxu0 0
    %1508 = vmatpush.bf16.msra.mxu0 0
    %1509 = vmatpush.bf16.msra.mxu0 0
    %1510 = vmatpush.bf16.msra.mxu0 %v1346
    %1511 = vmatmul.bf16.gmra.mxu0 %v1313
    %v1512 = vpop.f32.mrf.mxu0
    %v1513 = vadd.f32 0.0, %v1512
    %v1514 = vpop.f32.mrf.mxu0
    %v1515 = vadd.f32 0.0, %v1514
    %1516 = vdwg.mxu0
    %1517 = vmatpush.bf16.msra.mxu0 0
    %1518 = vmatpush.bf16.msra.mxu0 0
    %1519 = vmatpush.bf16.msra.mxu0 0
    %1520 = vmatpush.bf16.msra.mxu0 0
    %1521 = vmatpush.bf16.msra.mxu0 0
    %1522 = vmatpush.bf16.msra.mxu0 0
    %1523 = vmatpush.bf16.msra.mxu0 0
    %1524 = vmatpush.bf16.msra.mxu0 %v1349
    %1525 = vmatmul.bf16.gmra.mxu0 %v1313
    %v1526 = vpop.f32.mrf.mxu0
    %v1527 = vadd.f32 0.0, %v1526
    %v1528 = vpop.f32.mrf.mxu0
    %v1529 = vadd.f32 0.0, %v1528
    %1530 = vdwg.mxu0
    %1531 = vmatpush.bf16.msra.mxu0 0
    %1532 = vmatpush.bf16.msra.mxu0 0
    %1533 = vmatpush.bf16.msra.mxu0 0
    %1534 = vmatpush.bf16.msra.mxu0 0
    %1535 = vmatpush.bf16.msra.mxu0 0
    %1536 = vmatpush.bf16.msra.mxu0 0
    %1537 = vmatpush.bf16.msra.mxu0 0
    %1538 = vmatpush.bf16.msra.mxu0 %v1352
    %1539 = vmatmul.bf16.gmra.mxu0 %v1313
    %v1540 = vpop.f32.mrf.mxu0
    %v1541 = vadd.f32 0.0, %v1540
    %v1542 = vpop.f32.mrf.mxu0
    %v1543 = vadd.f32 0.0, %v1542
    %1544 = vdwg.mxu0
    %1545 = vmatpush.bf16.msra.mxu0 0
    %1546 = vmatpush.bf16.msra.mxu0 0
    %1547 = vmatpush.bf16.msra.mxu0 0
    %1548 = vmatpush.bf16.msra.mxu0 0
    %1549 = vmatpush.bf16.msra.mxu0 0
    %1550 = vmatpush.bf16.msra.mxu0 0
    %1551 = vmatpush.bf16.msra.mxu0 0
    %1552 = vmatpush.bf16.msra.mxu0 %v1355
    %1553 = vmatmul.bf16.gmra.mxu0 %v1313
    %v1554 = vpop.f32.mrf.mxu0
    %v1555 = vadd.f32 0.0, %v1554
    %v1556 = vpop.f32.mrf.mxu0
    %v1557 = vadd.f32 0.0, %v1556
    %1558 = vdwg.mxu0
    %1559 = vmatpush.bf16.msra.mxu0 0
    %1560 = vmatpush.bf16.msra.mxu0 0
    %1561 = vmatpush.bf16.msra.mxu0 0
    %1562 = vmatpush.bf16.msra.mxu0 0
    %1563 = vmatpush.bf16.msra.mxu0 0
    %1564 = vmatpush.bf16.msra.mxu0 0
    %1565 = vmatpush.bf16.msra.mxu0 0
    %1566 = vmatpush.bf16.msra.mxu0 %v1358
    %1567 = vmatmul.bf16.gmra.mxu0 %v1313
    %v1568 = vpop.f32.mrf.mxu0
    %v1569 = vadd.f32 0.0, %v1568
    %v1570 = vpop.f32.mrf.mxu0
    %v1571 = vadd.f32 0.0, %v1570
    %1572 = vdwg.mxu0
    %1573 = vmatpush.bf16.msra.mxu0 0
    %1574 = vmatpush.bf16.msra.mxu0 0
    %1575 = vmatpush.bf16.msra.mxu0 0
    %1576 = vmatpush.bf16.msra.mxu0 0
    %1577 = vmatpush.bf16.msra.mxu0 0
    %1578 = vmatpush.bf16.msra.mxu0 0
    %1579 = vmatpush.bf16.msra.mxu0 0
    %1580 = vmatpush.bf16.msra.mxu0 %v1361
    %1581 = vmatmul.bf16.gmra.mxu0 %v1313
    %v1582 = vpop.f32.mrf.mxu0
    %v1583 = vadd.f32 0.0, %v1582
    %v1584 = vpop.f32.mrf.mxu0
    %v1585 = vadd.f32 0.0, %v1584
    %1586 = vdwg.mxu0
    %v1587 = vadd.f32 %v875, %v1373
    %v1588 = vadd.f32 %v889, %v1387
    %v1589 = vadd.f32 %v903, %v1401
    %v1590 = vadd.f32 %v917, %v1415
    %v1591 = vadd.f32 %v931, %v1429
    %v1592 = vadd.f32 %v945, %v1443
    %v1593 = vadd.f32 %v959, %v1457
    %v1594 = vadd.f32 %v973, %v1471
    %v1595 = vadd.f32 %v987, %v1485
    %v1596 = vadd.f32 %v1001, %v1499
    %v1597 = vadd.f32 %v1015, %v1513
    %v1598 = vadd.f32 %v1029, %v1527
    %v1599 = vadd.f32 %v1043, %v1541
    %v1600 = vadd.f32 %v1057, %v1555
    %v1601 = vadd.f32 %v1071, %v1569
    %v1602 = vadd.f32 %v1085, %v1583
    %v1603 = vadd.f32 %v877, %v1375
    %v1604 = vadd.f32 %v891, %v1389
    %v1605 = vadd.f32 %v905, %v1403
    %v1606 = vadd.f32 %v919, %v1417
    %v1607 = vadd.f32 %v933, %v1431
    %v1608 = vadd.f32 %v947, %v1445
    %v1609 = vadd.f32 %v961, %v1459
    %v1610 = vadd.f32 %v975, %v1473
    %v1611 = vadd.f32 %v989, %v1487
    %v1612 = vadd.f32 %v1003, %v1501
    %v1613 = vadd.f32 %v1017, %v1515
    %v1614 = vadd.f32 %v1031, %v1529
    %v1615 = vadd.f32 %v1045, %v1543
    %v1616 = vadd.f32 %v1059, %v1557
    %v1617 = vadd.f32 %v1073, %v1571
    %v1618 = vadd.f32 %v1087, %v1585
    %v1619 = vperm.slane %v261, 1
    %v1620 = vperm.slane %v265, 1
    %v1621 = vperm.slane %v269, 1
    %v1622 = vperm.slane %v273, 1
    %v1623 = vperm.slane %v277, 1
    %v1624 = vperm.slane %v281, 1
    %v1625 = vperm.slane %v285, 1
    %v1626 = vperm.slane %v289, 1
    %v1627 = vperm.slane %v293, 1
    %v1628 = vperm.slane %v297, 1
    %v1629 = vperm.slane %v301, 1
    %v1630 = vperm.slane %v305, 1
    %v1631 = vperm.slane %v309, 1
    %v1632 = vperm.slane %v313, 1
    %v1633 = vperm.slane %v317, 1
    %v1634 = vperm.slane %v321, 1
    %v1635 = vunpack.c.l.bf16 %v1619
    %v1636 = vunpack.c.l.bf16 %v1620
    %v1637 = vunpack.c.l.bf16 %v1621
    %v1638 = vunpack.c.l.bf16 %v1622
    %v1639 = vunpack.c.l.bf16 %v1623
    %v1640 = vunpack.c.l.bf16 %v1624
    %v1641 = vunpack.c.l.bf16 %v1625
    %v1642 = vunpack.c.l.bf16 %v1626
    %v1643 = vunpack.c.l.bf16 %v1627
    %v1644 = vunpack.c.l.bf16 %v1628
    %v1645 = vunpack.c.l.bf16 %v1629
    %v1646 = vunpack.c.l.bf16 %v1630
    %v1647 = vunpack.c.l.bf16 %v1631
    %v1648 = vunpack.c.l.bf16 %v1632
    %v1649 = vunpack.c.l.bf16 %v1633
    %v1650 = vunpack.c.l.bf16 %v1634
    %1667 = vrot.lane.b32.xlu0 %v1635, 32
    %v1668 = vpop.permute.xlu0 %1667
    %1669 = vrot.lane.b32.xlu0 %v1636, 32
    %v1670 = vpop.permute.xlu0 %1669
    %1671 = vrot.lane.b32.xlu0 %v1637, 32
    %v1672 = vpop.permute.xlu0 %1671
    %1673 = vrot.lane.b32.xlu0 %v1638, 32
    %v1674 = vpop.permute.xlu0 %1673
    %1675 = vrot.lane.b32.xlu0 %v1639, 32
    %v1676 = vpop.permute.xlu0 %1675
    %1677 = vrot.lane.b32.xlu0 %v1640, 32
    %v1678 = vpop.permute.xlu0 %1677
    %1679 = vrot.lane.b32.xlu0 %v1641, 32
    %v1680 = vpop.permute.xlu0 %1679
    %1681 = vrot.lane.b32.xlu0 %v1642, 32
    %v1682 = vpop.permute.xlu0 %1681
    %1683 = vrot.lane.b32.xlu0 %v1643, 32
    %v1684 = vpop.permute.xlu0 %1683
    %1685 = vrot.lane.b32.xlu0 %v1644, 32
    %v1686 = vpop.permute.xlu0 %1685
    %1687 = vrot.lane.b32.xlu0 %v1645, 32
    %v1688 = vpop.permute.xlu0 %1687
    %1689 = vrot.lane.b32.xlu0 %v1646, 32
    %v1690 = vpop.permute.xlu0 %1689
    %1691 = vrot.lane.b32.xlu0 %v1647, 32
    %v1692 = vpop.permute.xlu0 %1691
    %1693 = vrot.lane.b32.xlu0 %v1648, 32
    %v1694 = vpop.permute.xlu0 %1693
    %1695 = vrot.lane.b32.xlu0 %v1649, 32
    %v1696 = vpop.permute.xlu0 %1695
    %1697 = vrot.lane.b32.xlu0 %v1650, 32
    %v1698 = vpop.permute.xlu0 %1697
    %vm1699 = vcmask 261120
    %v1700 = vsel %vm1699, %v1668, %v1670
    %v1701 = vsel %vm1699, %v1670, %v1672
    %v1702 = vsel %vm1699, %v1672, %v1674
    %v1703 = vsel %vm1699, %v1674, %v1676
    %v1704 = vsel %vm1699, %v1676, %v1678
    %v1705 = vsel %vm1699, %v1678, %v1680
    %v1706 = vsel %vm1699, %v1680, %v1682
    %v1707 = vsel %vm1699, %v1682, %v1684
    %v1708 = vsel %vm1699, %v1684, %v1686
    %v1709 = vsel %vm1699, %v1686, %v1688
    %v1710 = vsel %vm1699, %v1688, %v1690
    %v1711 = vsel %vm1699, %v1690, %v1692
    %v1712 = vsel %vm1699, %v1692, %v1694
    %v1713 = vsel %vm1699, %v1694, %v1696
    %v1714 = vsel %vm1699, %v1696, %v1698
    %v1732 = vmul.f32 %v194, %v1668
    %v1733 = vmul.f32 %v195, %v1700
    %v1734 = vmul.f32 %v196, %v1701
    %v1735 = vmul.f32 %v197, %v1702
    %v1736 = vmul.f32 %v198, %v1703
    %v1737 = vmul.f32 %v199, %v1704
    %v1738 = vmul.f32 %v200, %v1705
    %v1739 = vmul.f32 %v201, %v1706
    %v1740 = vmul.f32 %v202, %v1707
    %v1741 = vmul.f32 %v203, %v1708
    %v1742 = vmul.f32 %v204, %v1709
    %v1743 = vmul.f32 %v205, %v1710
    %v1744 = vmul.f32 %v206, %v1711
    %v1745 = vmul.f32 %v207, %v1712
    %v1746 = vmul.f32 %v208, %v1713
    %v1747 = vmul.f32 %v209, %v1714
    %v1748 = vmul.f32 %v324, %v1698
    %v1749 = vpack.c.bf16 %v1732, %v1732
    %v1750 = vpack.c.bf16 %v1733, %v1733
    %v1751 = vpack.c.bf16 %v1734, %v1734
    %v1752 = vpack.c.bf16 %v1735, %v1735
    %v1753 = vpack.c.bf16 %v1736, %v1736
    %v1754 = vpack.c.bf16 %v1737, %v1737
    %v1755 = vpack.c.bf16 %v1738, %v1738
    %v1756 = vpack.c.bf16 %v1739, %v1739
    %v1757 = vpack.c.bf16 %v1740, %v1740
    %v1758 = vpack.c.bf16 %v1741, %v1741
    %v1759 = vpack.c.bf16 %v1742, %v1742
    %v1760 = vpack.c.bf16 %v1743, %v1743
    %v1761 = vpack.c.bf16 %v1744, %v1744
    %v1762 = vpack.c.bf16 %v1745, %v1745
    %v1763 = vpack.c.bf16 %v1746, %v1746
    %v1764 = vpack.c.bf16 %v1747, %v1747
    %v1765 = vpack.c.bf16 %v1748, %v1748
    %s1766 = scalar_lea.vmem [#allocation2], 24
    %v1767 = vld [vmem:[%s1766] sm:$0xf]
    %v1768 = vld [vmem:[%s1766 + $0x4] sm:$0x3]
    %v1771 = vunpack.c.l.b16 %v1767
    %v1772 = vunpack.c.l.b16 %v1768
    %v1773 = vpack.c.b16 %v1772, %v1771
    %1791 = vrot.lane.b32.xlu0 %v1749, 96
    %v1792 = vpop.permute.xlu0 %1791
    %1793 = vrot.lane.b32.xlu0 %v1750, 96
    %v1794 = vpop.permute.xlu0 %1793
    %1795 = vrot.lane.b32.xlu0 %v1751, 96
    %v1796 = vpop.permute.xlu0 %1795
    %1797 = vrot.lane.b32.xlu0 %v1752, 96
    %v1798 = vpop.permute.xlu0 %1797
    %1799 = vrot.lane.b32.xlu0 %v1753, 96
    %v1800 = vpop.permute.xlu0 %1799
    %1801 = vrot.lane.b32.xlu0 %v1754, 96
    %v1802 = vpop.permute.xlu0 %1801
    %1803 = vrot.lane.b32.xlu0 %v1755, 96
    %v1804 = vpop.permute.xlu0 %1803
    %1805 = vrot.lane.b32.xlu0 %v1756, 96
    %v1806 = vpop.permute.xlu0 %1805
    %1807 = vrot.lane.b32.xlu0 %v1757, 96
    %v1808 = vpop.permute.xlu0 %1807
    %1809 = vrot.lane.b32.xlu0 %v1758, 96
    %v1810 = vpop.permute.xlu0 %1809
    %1811 = vrot.lane.b32.xlu0 %v1759, 96
    %v1812 = vpop.permute.xlu0 %1811
    %1813 = vrot.lane.b32.xlu0 %v1760, 96
    %v1814 = vpop.permute.xlu0 %1813
    %1815 = vrot.lane.b32.xlu0 %v1761, 96
    %v1816 = vpop.permute.xlu0 %1815
    %1817 = vrot.lane.b32.xlu0 %v1762, 96
    %v1818 = vpop.permute.xlu0 %1817
    %1819 = vrot.lane.b32.xlu0 %v1763, 96
    %v1820 = vpop.permute.xlu0 %1819
    %1821 = vrot.lane.b32.xlu0 %v1764, 96
    %v1822 = vpop.permute.xlu0 %1821
    %1823 = vrot.lane.b32.xlu0 %v1765, 96
    %v1824 = vpop.permute.xlu0 %1823
    %vm1825 = vcmask 785408
    %v1826 = vsel %vm1825, %v1792, %v1794
    %v1827 = vsel %vm1825, %v1794, %v1796
    %v1828 = vsel %vm1825, %v1796, %v1798
    %v1829 = vsel %vm1825, %v1798, %v1800
    %v1830 = vsel %vm1825, %v1800, %v1802
    %v1831 = vsel %vm1825, %v1802, %v1804
    %v1832 = vsel %vm1825, %v1804, %v1806
    %v1833 = vsel %vm1825, %v1806, %v1808
    %v1834 = vsel %vm1825, %v1808, %v1810
    %v1835 = vsel %vm1825, %v1810, %v1812
    %v1836 = vsel %vm1825, %v1812, %v1814
    %v1837 = vsel %vm1825, %v1814, %v1816
    %v1838 = vsel %vm1825, %v1816, %v1818
    %v1839 = vsel %vm1825, %v1818, %v1820
    %v1840 = vsel %vm1825, %v1820, %v1822
    %v1841 = vsel %vm1825, %v1822, %v1824
    %v1843 = vsel %vm532, %v1773, 0
    %v1846 = vsel %vm536, %v1826, 0
    %v1849 = vsel %vm536, %v1827, 0
    %v1852 = vsel %vm536, %v1828, 0
    %v1855 = vsel %vm536, %v1829, 0
    %v1858 = vsel %vm536, %v1830, 0
    %v1861 = vsel %vm536, %v1831, 0
    %v1864 = vsel %vm536, %v1832, 0
    %v1867 = vsel %vm536, %v1833, 0
    %v1870 = vsel %vm536, %v1834, 0
    %v1873 = vsel %vm536, %v1835, 0
    %v1876 = vsel %vm536, %v1836, 0
    %v1879 = vsel %vm536, %v1837, 0
    %v1882 = vsel %vm536, %v1838, 0
    %v1885 = vsel %vm536, %v1839, 0
    %v1888 = vsel %vm536, %v1840, 0
    %v1891 = vsel %vm536, %v1841, 0
    %1893 = vmatpush.bf16.msra.mxu0 0
    %1894 = vmatpush.bf16.msra.mxu0 0
    %1895 = vmatpush.bf16.msra.mxu0 0
    %1896 = vmatpush.bf16.msra.mxu0 0
    %1897 = vmatpush.bf16.msra.mxu0 0
    %1898 = vmatpush.bf16.msra.mxu0 0
    %1899 = vmatpush.bf16.msra.mxu0 0
    %1900 = vmatpush.bf16.msra.mxu0 %v1846
    %1901 = vmatmul.bf16.gmra.mxu0 %v1843
    %v1902 = vpop.f32.mrf.mxu0
    %v1903 = vadd.f32 0.0, %v1902
    %v1904 = vpop.f32.mrf.mxu0
    %v1905 = vadd.f32 0.0, %v1904
    %1906 = vdwg.mxu0
    %1907 = vmatpush.bf16.msra.mxu0 0
    %1908 = vmatpush.bf16.msra.mxu0 0
    %1909 = vmatpush.bf16.msra.mxu0 0
    %1910 = vmatpush.bf16.msra.mxu0 0
    %1911 = vmatpush.bf16.msra.mxu0 0
    %1912 = vmatpush.bf16.msra.mxu0 0
    %1913 = vmatpush.bf16.msra.mxu0 0
    %1914 = vmatpush.bf16.msra.mxu0 %v1849
    %1915 = vmatmul.bf16.gmra.mxu0 %v1843
    %v1916 = vpop.f32.mrf.mxu0
    %v1917 = vadd.f32 0.0, %v1916
    %v1918 = vpop.f32.mrf.mxu0
    %v1919 = vadd.f32 0.0, %v1918
    %1920 = vdwg.mxu0
    %1921 = vmatpush.bf16.msra.mxu0 0
    %1922 = vmatpush.bf16.msra.mxu0 0
    %1923 = vmatpush.bf16.msra.mxu0 0
    %1924 = vmatpush.bf16.msra.mxu0 0
    %1925 = vmatpush.bf16.msra.mxu0 0
    %1926 = vmatpush.bf16.msra.mxu0 0
    %1927 = vmatpush.bf16.msra.mxu0 0
    %1928 = vmatpush.bf16.msra.mxu0 %v1852
    %1929 = vmatmul.bf16.gmra.mxu0 %v1843
    %v1930 = vpop.f32.mrf.mxu0
    %v1931 = vadd.f32 0.0, %v1930
    %v1932 = vpop.f32.mrf.mxu0
    %v1933 = vadd.f32 0.0, %v1932
    %1934 = vdwg.mxu0
    %1935 = vmatpush.bf16.msra.mxu0 0
    %1936 = vmatpush.bf16.msra.mxu0 0
    %1937 = vmatpush.bf16.msra.mxu0 0
    %1938 = vmatpush.bf16.msra.mxu0 0
    %1939 = vmatpush.bf16.msra.mxu0 0
    %1940 = vmatpush.bf16.msra.mxu0 0
    %1941 = vmatpush.bf16.msra.mxu0 0
    %1942 = vmatpush.bf16.msra.mxu0 %v1855
    %1943 = vmatmul.bf16.gmra.mxu0 %v1843
    %v1944 = vpop.f32.mrf.mxu0
    %v1945 = vadd.f32 0.0, %v1944
    %v1946 = vpop.f32.mrf.mxu0
    %v1947 = vadd.f32 0.0, %v1946
    %1948 = vdwg.mxu0
    %1949 = vmatpush.bf16.msra.mxu0 0
    %1950 = vmatpush.bf16.msra.mxu0 0
    %1951 = vmatpush.bf16.msra.mxu0 0
    %1952 = vmatpush.bf16.msra.mxu0 0
    %1953 = vmatpush.bf16.msra.mxu0 0
    %1954 = vmatpush.bf16.msra.mxu0 0
    %1955 = vmatpush.bf16.msra.mxu0 0
    %1956 = vmatpush.bf16.msra.mxu0 %v1858
    %1957 = vmatmul.bf16.gmra.mxu0 %v1843
    %v1958 = vpop.f32.mrf.mxu0
    %v1959 = vadd.f32 0.0, %v1958
    %v1960 = vpop.f32.mrf.mxu0
    %v1961 = vadd.f32 0.0, %v1960
    %1962 = vdwg.mxu0
    %1963 = vmatpush.bf16.msra.mxu0 0
    %1964 = vmatpush.bf16.msra.mxu0 0
    %1965 = vmatpush.bf16.msra.mxu0 0
    %1966 = vmatpush.bf16.msra.mxu0 0
    %1967 = vmatpush.bf16.msra.mxu0 0
    %1968 = vmatpush.bf16.msra.mxu0 0
    %1969 = vmatpush.bf16.msra.mxu0 0
    %1970 = vmatpush.bf16.msra.mxu0 %v1861
    %1971 = vmatmul.bf16.gmra.mxu0 %v1843
    %v1972 = vpop.f32.mrf.mxu0
    %v1973 = vadd.f32 0.0, %v1972
    %v1974 = vpop.f32.mrf.mxu0
    %v1975 = vadd.f32 0.0, %v1974
    %1976 = vdwg.mxu0
    %1977 = vmatpush.bf16.msra.mxu0 0
    %1978 = vmatpush.bf16.msra.mxu0 0
    %1979 = vmatpush.bf16.msra.mxu0 0
    %1980 = vmatpush.bf16.msra.mxu0 0
    %1981 = vmatpush.bf16.msra.mxu0 0
    %1982 = vmatpush.bf16.msra.mxu0 0
    %1983 = vmatpush.bf16.msra.mxu0 0
    %1984 = vmatpush.bf16.msra.mxu0 %v1864
    %1985 = vmatmul.bf16.gmra.mxu0 %v1843
    %v1986 = vpop.f32.mrf.mxu0
    %v1987 = vadd.f32 0.0, %v1986
    %v1988 = vpop.f32.mrf.mxu0
    %v1989 = vadd.f32 0.0, %v1988
    %1990 = vdwg.mxu0
    %1991 = vmatpush.bf16.msra.mxu0 0
    %1992 = vmatpush.bf16.msra.mxu0 0
    %1993 = vmatpush.bf16.msra.mxu0 0
    %1994 = vmatpush.bf16.msra.mxu0 0
    %1995 = vmatpush.bf16.msra.mxu0 0
    %1996 = vmatpush.bf16.msra.mxu0 0
    %1997 = vmatpush.bf16.msra.mxu0 0
    %1998 = vmatpush.bf16.msra.mxu0 %v1867
    %1999 = vmatmul.bf16.gmra.mxu0 %v1843
    %v2000 = vpop.f32.mrf.mxu0
    %v2001 = vadd.f32 0.0, %v2000
    %v2002 = vpop.f32.mrf.mxu0
    %v2003 = vadd.f32 0.0, %v2002
    %2004 = vdwg.mxu0
    %2005 = vmatpush.bf16.msra.mxu0 0
    %2006 = vmatpush.bf16.msra.mxu0 0
    %2007 = vmatpush.bf16.msra.mxu0 0
    %2008 = vmatpush.bf16.msra.mxu0 0
    %2009 = vmatpush.bf16.msra.mxu0 0
    %2010 = vmatpush.bf16.msra.mxu0 0
    %2011 = vmatpush.bf16.msra.mxu0 0
    %2012 = vmatpush.bf16.msra.mxu0 %v1870
    %2013 = vmatmul.bf16.gmra.mxu0 %v1843
    %v2014 = vpop.f32.mrf.mxu0
    %v2015 = vadd.f32 0.0, %v2014
    %v2016 = vpop.f32.mrf.mxu0
    %v2017 = vadd.f32 0.0, %v2016
    %2018 = vdwg.mxu0
    %2019 = vmatpush.bf16.msra.mxu0 0
    %2020 = vmatpush.bf16.msra.mxu0 0
    %2021 = vmatpush.bf16.msra.mxu0 0
    %2022 = vmatpush.bf16.msra.mxu0 0
    %2023 = vmatpush.bf16.msra.mxu0 0
    %2024 = vmatpush.bf16.msra.mxu0 0
    %2025 = vmatpush.bf16.msra.mxu0 0
    %2026 = vmatpush.bf16.msra.mxu0 %v1873
    %2027 = vmatmul.bf16.gmra.mxu0 %v1843
    %v2028 = vpop.f32.mrf.mxu0
    %v2029 = vadd.f32 0.0, %v2028
    %v2030 = vpop.f32.mrf.mxu0
    %v2031 = vadd.f32 0.0, %v2030
    %2032 = vdwg.mxu0
    %2033 = vmatpush.bf16.msra.mxu0 0
    %2034 = vmatpush.bf16.msra.mxu0 0
    %2035 = vmatpush.bf16.msra.mxu0 0
    %2036 = vmatpush.bf16.msra.mxu0 0
    %2037 = vmatpush.bf16.msra.mxu0 0
    %2038 = vmatpush.bf16.msra.mxu0 0
    %2039 = vmatpush.bf16.msra.mxu0 0
    %2040 = vmatpush.bf16.msra.mxu0 %v1876
    %2041 = vmatmul.bf16.gmra.mxu0 %v1843
    %v2042 = vpop.f32.mrf.mxu0
    %v2043 = vadd.f32 0.0, %v2042
    %v2044 = vpop.f32.mrf.mxu0
    %v2045 = vadd.f32 0.0, %v2044
    %2046 = vdwg.mxu0
    %2047 = vmatpush.bf16.msra.mxu0 0
    %2048 = vmatpush.bf16.msra.mxu0 0
    %2049 = vmatpush.bf16.msra.mxu0 0
    %2050 = vmatpush.bf16.msra.mxu0 0
    %2051 = vmatpush.bf16.msra.mxu0 0
    %2052 = vmatpush.bf16.msra.mxu0 0
    %2053 = vmatpush.bf16.msra.mxu0 0
    %2054 = vmatpush.bf16.msra.mxu0 %v1879
    %2055 = vmatmul.bf16.gmra.mxu0 %v1843
    %v2056 = vpop.f32.mrf.mxu0
    %v2057 = vadd.f32 0.0, %v2056
    %v2058 = vpop.f32.mrf.mxu0
    %v2059 = vadd.f32 0.0, %v2058
    %2060 = vdwg.mxu0
    %2061 = vmatpush.bf16.msra.mxu0 0
    %2062 = vmatpush.bf16.msra.mxu0 0
    %2063 = vmatpush.bf16.msra.mxu0 0
    %2064 = vmatpush.bf16.msra.mxu0 0
    %2065 = vmatpush.bf16.msra.mxu0 0
    %2066 = vmatpush.bf16.msra.mxu0 0
    %2067 = vmatpush.bf16.msra.mxu0 0
    %2068 = vmatpush.bf16.msra.mxu0 %v1882
    %2069 = vmatmul.bf16.gmra.mxu0 %v1843
    %v2070 = vpop.f32.mrf.mxu0
    %v2071 = vadd.f32 0.0, %v2070
    %v2072 = vpop.f32.mrf.mxu0
    %v2073 = vadd.f32 0.0, %v2072
    %2074 = vdwg.mxu0
    %2075 = vmatpush.bf16.msra.mxu0 0
    %2076 = vmatpush.bf16.msra.mxu0 0
    %2077 = vmatpush.bf16.msra.mxu0 0
    %2078 = vmatpush.bf16.msra.mxu0 0
    %2079 = vmatpush.bf16.msra.mxu0 0
    %2080 = vmatpush.bf16.msra.mxu0 0
    %2081 = vmatpush.bf16.msra.mxu0 0
    %2082 = vmatpush.bf16.msra.mxu0 %v1885
    %2083 = vmatmul.bf16.gmra.mxu0 %v1843
    %v2084 = vpop.f32.mrf.mxu0
    %v2085 = vadd.f32 0.0, %v2084
    %v2086 = vpop.f32.mrf.mxu0
    %v2087 = vadd.f32 0.0, %v2086
    %2088 = vdwg.mxu0
    %2089 = vmatpush.bf16.msra.mxu0 0
    %2090 = vmatpush.bf16.msra.mxu0 0
    %2091 = vmatpush.bf16.msra.mxu0 0
    %2092 = vmatpush.bf16.msra.mxu0 0
    %2093 = vmatpush.bf16.msra.mxu0 0
    %2094 = vmatpush.bf16.msra.mxu0 0
    %2095 = vmatpush.bf16.msra.mxu0 0
    %2096 = vmatpush.bf16.msra.mxu0 %v1888
    %2097 = vmatmul.bf16.gmra.mxu0 %v1843
    %v2098 = vpop.f32.mrf.mxu0
    %v2099 = vadd.f32 0.0, %v2098
    %v2100 = vpop.f32.mrf.mxu0
    %v2101 = vadd.f32 0.0, %v2100
    %2102 = vdwg.mxu0
    %2103 = vmatpush.bf16.msra.mxu0 0
    %2104 = vmatpush.bf16.msra.mxu0 0
    %2105 = vmatpush.bf16.msra.mxu0 0
    %2106 = vmatpush.bf16.msra.mxu0 0
    %2107 = vmatpush.bf16.msra.mxu0 0
    %2108 = vmatpush.bf16.msra.mxu0 0
    %2109 = vmatpush.bf16.msra.mxu0 0
    %2110 = vmatpush.bf16.msra.mxu0 %v1891
    %2111 = vmatmul.bf16.gmra.mxu0 %v1843
    %v2112 = vpop.f32.mrf.mxu0
    %v2113 = vadd.f32 0.0, %v2112
    %v2114 = vpop.f32.mrf.mxu0
    %v2115 = vadd.f32 0.0, %v2114
    %2116 = vdwg.mxu0
    %v2117 = vadd.f32 %v1587, %v1903
    %v2118 = vadd.f32 %v1588, %v1917
    %v2119 = vadd.f32 %v1589, %v1931
    %v2120 = vadd.f32 %v1590, %v1945
    %v2121 = vadd.f32 %v1591, %v1959
    %v2122 = vadd.f32 %v1592, %v1973
    %v2123 = vadd.f32 %v1593, %v1987
    %v2124 = vadd.f32 %v1594, %v2001
    %v2125 = vadd.f32 %v1595, %v2015
    %v2126 = vadd.f32 %v1596, %v2029
    %v2127 = vadd.f32 %v1597, %v2043
    %v2128 = vadd.f32 %v1598, %v2057
    %v2129 = vadd.f32 %v1599, %v2071
    %v2130 = vadd.f32 %v1600, %v2085
    %v2131 = vadd.f32 %v1601, %v2099
    %v2132 = vadd.f32 %v1602, %v2113
    %v2133 = vadd.f32 %v1603, %v1905
    %v2134 = vadd.f32 %v1604, %v1919
    %v2135 = vadd.f32 %v1605, %v1933
    %v2136 = vadd.f32 %v1606, %v1947
    %v2137 = vadd.f32 %v1607, %v1961
    %v2138 = vadd.f32 %v1608, %v1975
    %v2139 = vadd.f32 %v1609, %v1989
    %v2140 = vadd.f32 %v1610, %v2003
    %v2141 = vadd.f32 %v1611, %v2017
    %v2142 = vadd.f32 %v1612, %v2031
    %v2143 = vadd.f32 %v1613, %v2045
    %v2144 = vadd.f32 %v1614, %v2059
    %v2145 = vadd.f32 %v1615, %v2073
    %v2146 = vadd.f32 %v1616, %v2087
    %v2147 = vadd.f32 %v1617, %v2101
    %v2148 = vadd.f32 %v1618, %v2115
    %v2149 = vperm.slane %v131, 2
    %v2150 = vperm.slane %v135, 2
    %v2151 = vperm.slane %v139, 2
    %v2152 = vperm.slane %v143, 2
    %v2153 = vperm.slane %v147, 2
    %v2154 = vperm.slane %v151, 2
    %v2155 = vperm.slane %v155, 2
    %v2156 = vperm.slane %v159, 2
    %v2157 = vperm.slane %v163, 2
    %v2158 = vperm.slane %v167, 2
    %v2159 = vperm.slane %v171, 2
    %v2160 = vperm.slane %v175, 2
    %v2161 = vperm.slane %v179, 2
    %v2162 = vperm.slane %v183, 2
    %v2163 = vperm.slane %v187, 2
    %v2164 = vperm.slane %v191, 2
    %v2165 = vunpack.c.l.bf16 %v2149
    %v2166 = vunpack.c.l.bf16 %v2150
    %v2167 = vunpack.c.l.bf16 %v2151
    %v2168 = vunpack.c.l.bf16 %v2152
    %v2169 = vunpack.c.l.bf16 %v2153
    %v2170 = vunpack.c.l.bf16 %v2154
    %v2171 = vunpack.c.l.bf16 %v2155
    %v2172 = vunpack.c.l.bf16 %v2156
    %v2173 = vunpack.c.l.bf16 %v2157
    %v2174 = vunpack.c.l.bf16 %v2158
    %v2175 = vunpack.c.l.bf16 %v2159
    %v2176 = vunpack.c.l.bf16 %v2160
    %v2177 = vunpack.c.l.bf16 %v2161
    %v2178 = vunpack.c.l.bf16 %v2162
    %v2179 = vunpack.c.l.bf16 %v2163
    %v2180 = vunpack.c.l.bf16 %v2164
    %2197 = vrot.lane.b32.xlu0 %v2165, 33
    %v2198 = vpop.permute.xlu0 %2197
    %2199 = vrot.lane.b32.xlu0 %v2166, 33
    %v2200 = vpop.permute.xlu0 %2199
    %2201 = vrot.lane.b32.xlu0 %v2167, 33
    %v2202 = vpop.permute.xlu0 %2201
    %2203 = vrot.lane.b32.xlu0 %v2168, 33
    %v2204 = vpop.permute.xlu0 %2203
    %2205 = vrot.lane.b32.xlu0 %v2169, 33
    %v2206 = vpop.permute.xlu0 %2205
    %2207 = vrot.lane.b32.xlu0 %v2170, 33
    %v2208 = vpop.permute.xlu0 %2207
    %2209 = vrot.lane.b32.xlu0 %v2171, 33
    %v2210 = vpop.permute.xlu0 %2209
    %2211 = vrot.lane.b32.xlu0 %v2172, 33
    %v2212 = vpop.permute.xlu0 %2211
    %2213 = vrot.lane.b32.xlu0 %v2173, 33
    %v2214 = vpop.permute.xlu0 %2213
    %2215 = vrot.lane.b32.xlu0 %v2174, 33
    %v2216 = vpop.permute.xlu0 %2215
    %2217 = vrot.lane.b32.xlu0 %v2175, 33
    %v2218 = vpop.permute.xlu0 %2217
    %2219 = vrot.lane.b32.xlu0 %v2176, 33
    %v2220 = vpop.permute.xlu0 %2219
    %2221 = vrot.lane.b32.xlu0 %v2177, 33
    %v2222 = vpop.permute.xlu0 %2221
    %2223 = vrot.lane.b32.xlu0 %v2178, 33
    %v2224 = vpop.permute.xlu0 %2223
    %2225 = vrot.lane.b32.xlu0 %v2179, 33
    %v2226 = vpop.permute.xlu0 %2225
    %2227 = vrot.lane.b32.xlu0 %v2180, 33
    %v2228 = vpop.permute.xlu0 %2227
    %vm2229 = vcmask 269312
    %v2230 = vsel %vm2229, %v2198, %v2200
    %v2231 = vsel %vm2229, %v2200, %v2202
    %v2232 = vsel %vm2229, %v2202, %v2204
    %v2233 = vsel %vm2229, %v2204, %v2206
    %v2234 = vsel %vm2229, %v2206, %v2208
    %v2235 = vsel %vm2229, %v2208, %v2210
    %v2236 = vsel %vm2229, %v2210, %v2212
    %v2237 = vsel %vm2229, %v2212, %v2214
    %v2238 = vsel %vm2229, %v2214, %v2216
    %v2239 = vsel %vm2229, %v2216, %v2218
    %v2240 = vsel %vm2229, %v2218, %v2220
    %v2241 = vsel %vm2229, %v2220, %v2222
    %v2242 = vsel %vm2229, %v2222, %v2224
    %v2243 = vsel %vm2229, %v2224, %v2226
    %v2244 = vsel %vm2229, %v2226, %v2228
    %v2262 = vmul.f32 %v194, %v2198
    %v2263 = vmul.f32 %v195, %v2230
    %v2264 = vmul.f32 %v196, %v2231
    %v2265 = vmul.f32 %v197, %v2232
    %v2266 = vmul.f32 %v198, %v2233
    %v2267 = vmul.f32 %v199, %v2234
    %v2268 = vmul.f32 %v200, %v2235
    %v2269 = vmul.f32 %v201, %v2236
    %v2270 = vmul.f32 %v202, %v2237
    %v2271 = vmul.f32 %v203, %v2238
    %v2272 = vmul.f32 %v204, %v2239
    %v2273 = vmul.f32 %v205, %v2240
    %v2274 = vmul.f32 %v206, %v2241
    %v2275 = vmul.f32 %v207, %v2242
    %v2276 = vmul.f32 %v208, %v2243
    %v2277 = vmul.f32 %v209, %v2244
    %v2278 = vmul.f32 %v324, %v2228
    %v2279 = vpack.c.bf16 %v2262, %v2262
    %v2280 = vpack.c.bf16 %v2263, %v2263
    %v2281 = vpack.c.bf16 %v2264, %v2264
    %v2282 = vpack.c.bf16 %v2265, %v2265
    %v2283 = vpack.c.bf16 %v2266, %v2266
    %v2284 = vpack.c.bf16 %v2267, %v2267
    %v2285 = vpack.c.bf16 %v2268, %v2268
    %v2286 = vpack.c.bf16 %v2269, %v2269
    %v2287 = vpack.c.bf16 %v2270, %v2270
    %v2288 = vpack.c.bf16 %v2271, %v2271
    %v2289 = vpack.c.bf16 %v2272, %v2272
    %v2290 = vpack.c.bf16 %v2273, %v2273
    %v2291 = vpack.c.bf16 %v2274, %v2274
    %v2292 = vpack.c.bf16 %v2275, %v2275
    %v2293 = vpack.c.bf16 %v2276, %v2276
    %v2294 = vpack.c.bf16 %v2277, %v2277
    %v2295 = vpack.c.bf16 %v2278, %v2278
    %s2296 = scalar_lea.vmem [#allocation2], 32
    %v2297 = vld [vmem:[%s2296] sm:$0xf]
    %v2298 = vld [vmem:[%s2296 + $0x4] sm:$0x3]
    %v2301 = vunpack.c.l.b16 %v2297
    %v2302 = vunpack.c.l.b16 %v2298
    %v2303 = vpack.c.b16 %v2302, %v2301
    %2321 = vrot.lane.b32.xlu0 %v2279, 95
    %v2322 = vpop.permute.xlu0 %2321
    %2323 = vrot.lane.b32.xlu0 %v2280, 95
    %v2324 = vpop.permute.xlu0 %2323
    %2325 = vrot.lane.b32.xlu0 %v2281, 95
    %v2326 = vpop.permute.xlu0 %2325
    %2327 = vrot.lane.b32.xlu0 %v2282, 95
    %v2328 = vpop.permute.xlu0 %2327
    %2329 = vrot.lane.b32.xlu0 %v2283, 95
    %v2330 = vpop.permute.xlu0 %2329
    %2331 = vrot.lane.b32.xlu0 %v2284, 95
    %v2332 = vpop.permute.xlu0 %2331
    %2333 = vrot.lane.b32.xlu0 %v2285, 95
    %v2334 = vpop.permute.xlu0 %2333
    %2335 = vrot.lane.b32.xlu0 %v2286, 95
    %v2336 = vpop.permute.xlu0 %2335
    %2337 = vrot.lane.b32.xlu0 %v2287, 95
    %v2338 = vpop.permute.xlu0 %2337
    %2339 = vrot.lane.b32.xlu0 %v2288, 95
    %v2340 = vpop.permute.xlu0 %2339
    %2341 = vrot.lane.b32.xlu0 %v2289, 95
    %v2342 = vpop.permute.xlu0 %2341
    %2343 = vrot.lane.b32.xlu0 %v2290, 95
    %v2344 = vpop.permute.xlu0 %2343
    %2345 = vrot.lane.b32.xlu0 %v2291, 95
    %v2346 = vpop.permute.xlu0 %2345
    %2347 = vrot.lane.b32.xlu0 %v2292, 95
    %v2348 = vpop.permute.xlu0 %2347
    %2349 = vrot.lane.b32.xlu0 %v2293, 95
    %v2350 = vpop.permute.xlu0 %2349
    %2351 = vrot.lane.b32.xlu0 %v2294, 95
    %v2352 = vpop.permute.xlu0 %2351
    %2353 = vrot.lane.b32.xlu0 %v2295, 95
    %v2354 = vpop.permute.xlu0 %2353
    %vm2355 = vcmask 777216
    %v2356 = vsel %vm2355, %v2322, %v2324
    %v2357 = vsel %vm2355, %v2324, %v2326
    %v2358 = vsel %vm2355, %v2326, %v2328
    %v2359 = vsel %vm2355, %v2328, %v2330
    %v2360 = vsel %vm2355, %v2330, %v2332
    %v2361 = vsel %vm2355, %v2332, %v2334
    %v2362 = vsel %vm2355, %v2334, %v2336
    %v2363 = vsel %vm2355, %v2336, %v2338
    %v2364 = vsel %vm2355, %v2338, %v2340
    %v2365 = vsel %vm2355, %v2340, %v2342
    %v2366 = vsel %vm2355, %v2342, %v2344
    %v2367 = vsel %vm2355, %v2344, %v2346
    %v2368 = vsel %vm2355, %v2346, %v2348
    %v2369 = vsel %vm2355, %v2348, %v2350
    %v2370 = vsel %vm2355, %v2350, %v2352
    %v2371 = vsel %vm2355, %v2352, %v2354
    %v2373 = vsel %vm532, %v2303, 0
    %v2376 = vsel %vm536, %v2356, 0
    %v2379 = vsel %vm536, %v2357, 0
    %v2382 = vsel %vm536, %v2358, 0
    %v2385 = vsel %vm536, %v2359, 0
    %v2388 = vsel %vm536, %v2360, 0
    %v2391 = vsel %vm536, %v2361, 0
    %v2394 = vsel %vm536, %v2362, 0
    %v2397 = vsel %vm536, %v2363, 0
    %v2400 = vsel %vm536, %v2364, 0
    %v2403 = vsel %vm536, %v2365, 0
    %v2406 = vsel %vm536, %v2366, 0
    %v2409 = vsel %vm536, %v2367, 0
    %v2412 = vsel %vm536, %v2368, 0
    %v2415 = vsel %vm536, %v2369, 0
    %v2418 = vsel %vm536, %v2370, 0
    %v2421 = vsel %vm536, %v2371, 0
    %2423 = vmatpush.bf16.msra.mxu0 0
    %2424 = vmatpush.bf16.msra.mxu0 0
    %2425 = vmatpush.bf16.msra.mxu0 0
    %2426 = vmatpush.bf16.msra.mxu0 0
    %2427 = vmatpush.bf16.msra.mxu0 0
    %2428 = vmatpush.bf16.msra.mxu0 0
    %2429 = vmatpush.bf16.msra.mxu0 0
    %2430 = vmatpush.bf16.msra.mxu0 %v2376
    %2431 = vmatmul.bf16.gmra.mxu0 %v2373
    %v2432 = vpop.f32.mrf.mxu0
    %v2433 = vadd.f32 0.0, %v2432
    %v2434 = vpop.f32.mrf.mxu0
    %v2435 = vadd.f32 0.0, %v2434
    %2436 = vdwg.mxu0
    %2437 = vmatpush.bf16.msra.mxu0 0
    %2438 = vmatpush.bf16.msra.mxu0 0
    %2439 = vmatpush.bf16.msra.mxu0 0
    %2440 = vmatpush.bf16.msra.mxu0 0
    %2441 = vmatpush.bf16.msra.mxu0 0
    %2442 = vmatpush.bf16.msra.mxu0 0
    %2443 = vmatpush.bf16.msra.mxu0 0
    %2444 = vmatpush.bf16.msra.mxu0 %v2379
    %2445 = vmatmul.bf16.gmra.mxu0 %v2373
    %v2446 = vpop.f32.mrf.mxu0
    %v2447 = vadd.f32 0.0, %v2446
    %v2448 = vpop.f32.mrf.mxu0
    %v2449 = vadd.f32 0.0, %v2448
    %2450 = vdwg.mxu0
    %2451 = vmatpush.bf16.msra.mxu0 0
    %2452 = vmatpush.bf16.msra.mxu0 0
    %2453 = vmatpush.bf16.msra.mxu0 0
    %2454 = vmatpush.bf16.msra.mxu0 0
    %2455 = vmatpush.bf16.msra.mxu0 0
    %2456 = vmatpush.bf16.msra.mxu0 0
    %2457 = vmatpush.bf16.msra.mxu0 0
    %2458 = vmatpush.bf16.msra.mxu0 %v2382
    %2459 = vmatmul.bf16.gmra.mxu0 %v2373
    %v2460 = vpop.f32.mrf.mxu0
    %v2461 = vadd.f32 0.0, %v2460
    %v2462 = vpop.f32.mrf.mxu0
    %v2463 = vadd.f32 0.0, %v2462
    %2464 = vdwg.mxu0
    %2465 = vmatpush.bf16.msra.mxu0 0
    %2466 = vmatpush.bf16.msra.mxu0 0
    %2467 = vmatpush.bf16.msra.mxu0 0
    %2468 = vmatpush.bf16.msra.mxu0 0
    %2469 = vmatpush.bf16.msra.mxu0 0
    %2470 = vmatpush.bf16.msra.mxu0 0
    %2471 = vmatpush.bf16.msra.mxu0 0
    %2472 = vmatpush.bf16.msra.mxu0 %v2385
    %2473 = vmatmul.bf16.gmra.mxu0 %v2373
    %v2474 = vpop.f32.mrf.mxu0
    %v2475 = vadd.f32 0.0, %v2474
    %v2476 = vpop.f32.mrf.mxu0
    %v2477 = vadd.f32 0.0, %v2476
    %2478 = vdwg.mxu0
    %2479 = vmatpush.bf16.msra.mxu0 0
    %2480 = vmatpush.bf16.msra.mxu0 0
    %2481 = vmatpush.bf16.msra.mxu0 0
    %2482 = vmatpush.bf16.msra.mxu0 0
    %2483 = vmatpush.bf16.msra.mxu0 0
    %2484 = vmatpush.bf16.msra.mxu0 0
    %2485 = vmatpush.bf16.msra.mxu0 0
    %2486 = vmatpush.bf16.msra.mxu0 %v2388
    %2487 = vmatmul.bf16.gmra.mxu0 %v2373
    %v2488 = vpop.f32.mrf.mxu0
    %v2489 = vadd.f32 0.0, %v2488
    %v2490 = vpop.f32.mrf.mxu0
    %v2491 = vadd.f32 0.0, %v2490
    %2492 = vdwg.mxu0
    %2493 = vmatpush.bf16.msra.mxu0 0
    %2494 = vmatpush.bf16.msra.mxu0 0
    %2495 = vmatpush.bf16.msra.mxu0 0
    %2496 = vmatpush.bf16.msra.mxu0 0
    %2497 = vmatpush.bf16.msra.mxu0 0
    %2498 = vmatpush.bf16.msra.mxu0 0
    %2499 = vmatpush.bf16.msra.mxu0 0
    %2500 = vmatpush.bf16.msra.mxu0 %v2391
    %2501 = vmatmul.bf16.gmra.mxu0 %v2373
    %v2502 = vpop.f32.mrf.mxu0
    %v2503 = vadd.f32 0.0, %v2502
    %v2504 = vpop.f32.mrf.mxu0
    %v2505 = vadd.f32 0.0, %v2504
    %2506 = vdwg.mxu0
    %2507 = vmatpush.bf16.msra.mxu0 0
    %2508 = vmatpush.bf16.msra.mxu0 0
    %2509 = vmatpush.bf16.msra.mxu0 0
    %2510 = vmatpush.bf16.msra.mxu0 0
    %2511 = vmatpush.bf16.msra.mxu0 0
    %2512 = vmatpush.bf16.msra.mxu0 0
    %2513 = vmatpush.bf16.msra.mxu0 0
    %2514 = vmatpush.bf16.msra.mxu0 %v2394
    %2515 = vmatmul.bf16.gmra.mxu0 %v2373
    %v2516 = vpop.f32.mrf.mxu0
    %v2517 = vadd.f32 0.0, %v2516
    %v2518 = vpop.f32.mrf.mxu0
    %v2519 = vadd.f32 0.0, %v2518
    %2520 = vdwg.mxu0
    %2521 = vmatpush.bf16.msra.mxu0 0
    %2522 = vmatpush.bf16.msra.mxu0 0
    %2523 = vmatpush.bf16.msra.mxu0 0
    %2524 = vmatpush.bf16.msra.mxu0 0
    %2525 = vmatpush.bf16.msra.mxu0 0
    %2526 = vmatpush.bf16.msra.mxu0 0
    %2527 = vmatpush.bf16.msra.mxu0 0
    %2528 = vmatpush.bf16.msra.mxu0 %v2397
    %2529 = vmatmul.bf16.gmra.mxu0 %v2373
    %v2530 = vpop.f32.mrf.mxu0
    %v2531 = vadd.f32 0.0, %v2530
    %v2532 = vpop.f32.mrf.mxu0
    %v2533 = vadd.f32 0.0, %v2532
    %2534 = vdwg.mxu0
    %2535 = vmatpush.bf16.msra.mxu0 0
    %2536 = vmatpush.bf16.msra.mxu0 0
    %2537 = vmatpush.bf16.msra.mxu0 0
    %2538 = vmatpush.bf16.msra.mxu0 0
    %2539 = vmatpush.bf16.msra.mxu0 0
    %2540 = vmatpush.bf16.msra.mxu0 0
    %2541 = vmatpush.bf16.msra.mxu0 0
    %2542 = vmatpush.bf16.msra.mxu0 %v2400
    %2543 = vmatmul.bf16.gmra.mxu0 %v2373
    %v2544 = vpop.f32.mrf.mxu0
    %v2545 = vadd.f32 0.0, %v2544
    %v2546 = vpop.f32.mrf.mxu0
    %v2547 = vadd.f32 0.0, %v2546
    %2548 = vdwg.mxu0
    %2549 = vmatpush.bf16.msra.mxu0 0
    %2550 = vmatpush.bf16.msra.mxu0 0
    %2551 = vmatpush.bf16.msra.mxu0 0
    %2552 = vmatpush.bf16.msra.mxu0 0
    %2553 = vmatpush.bf16.msra.mxu0 0
    %2554 = vmatpush.bf16.msra.mxu0 0
    %2555 = vmatpush.bf16.msra.mxu0 0
    %2556 = vmatpush.bf16.msra.mxu0 %v2403
    %2557 = vmatmul.bf16.gmra.mxu0 %v2373
    %v2558 = vpop.f32.mrf.mxu0
    %v2559 = vadd.f32 0.0, %v2558
    %v2560 = vpop.f32.mrf.mxu0
    %v2561 = vadd.f32 0.0, %v2560
    %2562 = vdwg.mxu0
    %2563 = vmatpush.bf16.msra.mxu0 0
    %2564 = vmatpush.bf16.msra.mxu0 0
    %2565 = vmatpush.bf16.msra.mxu0 0
    %2566 = vmatpush.bf16.msra.mxu0 0
    %2567 = vmatpush.bf16.msra.mxu0 0
    %2568 = vmatpush.bf16.msra.mxu0 0
    %2569 = vmatpush.bf16.msra.mxu0 0
    %2570 = vmatpush.bf16.msra.mxu0 %v2406
    %2571 = vmatmul.bf16.gmra.mxu0 %v2373
    %v2572 = vpop.f32.mrf.mxu0
    %v2573 = vadd.f32 0.0, %v2572
    %v2574 = vpop.f32.mrf.mxu0
    %v2575 = vadd.f32 0.0, %v2574
    %2576 = vdwg.mxu0
    %2577 = vmatpush.bf16.msra.mxu0 0
    %2578 = vmatpush.bf16.msra.mxu0 0
    %2579 = vmatpush.bf16.msra.mxu0 0
    %2580 = vmatpush.bf16.msra.mxu0 0
    %2581 = vmatpush.bf16.msra.mxu0 0
    %2582 = vmatpush.bf16.msra.mxu0 0
    %2583 = vmatpush.bf16.msra.mxu0 0
    %2584 = vmatpush.bf16.msra.mxu0 %v2409
    %2585 = vmatmul.bf16.gmra.mxu0 %v2373
    %v2586 = vpop.f32.mrf.mxu0
    %v2587 = vadd.f32 0.0, %v2586
    %v2588 = vpop.f32.mrf.mxu0
    %v2589 = vadd.f32 0.0, %v2588
    %2590 = vdwg.mxu0
    %2591 = vmatpush.bf16.msra.mxu0 0
    %2592 = vmatpush.bf16.msra.mxu0 0
    %2593 = vmatpush.bf16.msra.mxu0 0
    %2594 = vmatpush.bf16.msra.mxu0 0
    %2595 = vmatpush.bf16.msra.mxu0 0
    %2596 = vmatpush.bf16.msra.mxu0 0
    %2597 = vmatpush.bf16.msra.mxu0 0
    %2598 = vmatpush.bf16.msra.mxu0 %v2412
    %2599 = vmatmul.bf16.gmra.mxu0 %v2373
    %v2600 = vpop.f32.mrf.mxu0
    %v2601 = vadd.f32 0.0, %v2600
    %v2602 = vpop.f32.mrf.mxu0
    %v2603 = vadd.f32 0.0, %v2602
    %2604 = vdwg.mxu0
    %2605 = vmatpush.bf16.msra.mxu0 0
    %2606 = vmatpush.bf16.msra.mxu0 0
    %2607 = vmatpush.bf16.msra.mxu0 0
    %2608 = vmatpush.bf16.msra.mxu0 0
    %2609 = vmatpush.bf16.msra.mxu0 0
    %2610 = vmatpush.bf16.msra.mxu0 0
    %2611 = vmatpush.bf16.msra.mxu0 0
    %2612 = vmatpush.bf16.msra.mxu0 %v2415
    %2613 = vmatmul.bf16.gmra.mxu0 %v2373
    %v2614 = vpop.f32.mrf.mxu0
    %v2615 = vadd.f32 0.0, %v2614
    %v2616 = vpop.f32.mrf.mxu0
    %v2617 = vadd.f32 0.0, %v2616
    %2618 = vdwg.mxu0
    %2619 = vmatpush.bf16.msra.mxu0 0
    %2620 = vmatpush.bf16.msra.mxu0 0
    %2621 = vmatpush.bf16.msra.mxu0 0
    %2622 = vmatpush.bf16.msra.mxu0 0
    %2623 = vmatpush.bf16.msra.mxu0 0
    %2624 = vmatpush.bf16.msra.mxu0 0
    %2625 = vmatpush.bf16.msra.mxu0 0
    %2626 = vmatpush.bf16.msra.mxu0 %v2418
    %2627 = vmatmul.bf16.gmra.mxu0 %v2373
    %v2628 = vpop.f32.mrf.mxu0
    %v2629 = vadd.f32 0.0, %v2628
    %v2630 = vpop.f32.mrf.mxu0
    %v2631 = vadd.f32 0.0, %v2630
    %2632 = vdwg.mxu0
    %2633 = vmatpush.bf16.msra.mxu0 0
    %2634 = vmatpush.bf16.msra.mxu0 0
    %2635 = vmatpush.bf16.msra.mxu0 0
    %2636 = vmatpush.bf16.msra.mxu0 0
    %2637 = vmatpush.bf16.msra.mxu0 0
    %2638 = vmatpush.bf16.msra.mxu0 0
    %2639 = vmatpush.bf16.msra.mxu0 0
    %2640 = vmatpush.bf16.msra.mxu0 %v2421
    %2641 = vmatmul.bf16.gmra.mxu0 %v2373
    %v2642 = vpop.f32.mrf.mxu0
    %v2643 = vadd.f32 0.0, %v2642
    %v2644 = vpop.f32.mrf.mxu0
    %v2645 = vadd.f32 0.0, %v2644
    %2646 = vdwg.mxu0
    %v2647 = vadd.f32 %v2117, %v2433
    %v2648 = vadd.f32 %v2118, %v2447
    %v2649 = vadd.f32 %v2119, %v2461
    %v2650 = vadd.f32 %v2120, %v2475
    %v2651 = vadd.f32 %v2121, %v2489
    %v2652 = vadd.f32 %v2122, %v2503
    %v2653 = vadd.f32 %v2123, %v2517
    %v2654 = vadd.f32 %v2124, %v2531
    %v2655 = vadd.f32 %v2125, %v2545
    %v2656 = vadd.f32 %v2126, %v2559
    %v2657 = vadd.f32 %v2127, %v2573
    %v2658 = vadd.f32 %v2128, %v2587
    %v2659 = vadd.f32 %v2129, %v2601
    %v2660 = vadd.f32 %v2130, %v2615
    %v2661 = vadd.f32 %v2131, %v2629
    %v2662 = vadd.f32 %v2132, %v2643
    %v2663 = vadd.f32 %v2133, %v2435
    %v2664 = vadd.f32 %v2134, %v2449
    %v2665 = vadd.f32 %v2135, %v2463
    %v2666 = vadd.f32 %v2136, %v2477
    %v2667 = vadd.f32 %v2137, %v2491
    %v2668 = vadd.f32 %v2138, %v2505
    %v2669 = vadd.f32 %v2139, %v2519
    %v2670 = vadd.f32 %v2140, %v2533
    %v2671 = vadd.f32 %v2141, %v2547
    %v2672 = vadd.f32 %v2142, %v2561
    %v2673 = vadd.f32 %v2143, %v2575
    %v2674 = vadd.f32 %v2144, %v2589
    %v2675 = vadd.f32 %v2145, %v2603
    %v2676 = vadd.f32 %v2146, %v2617
    %v2677 = vadd.f32 %v2147, %v2631
    %v2678 = vadd.f32 %v2148, %v2645
    %v2679 = vperm.slane %v261, 2
    %v2680 = vperm.slane %v265, 2
    %v2681 = vperm.slane %v269, 2
    %v2682 = vperm.slane %v273, 2
    %v2683 = vperm.slane %v277, 2
    %v2684 = vperm.slane %v281, 2
    %v2685 = vperm.slane %v285, 2
    %v2686 = vperm.slane %v289, 2
    %v2687 = vperm.slane %v293, 2
    %v2688 = vperm.slane %v297, 2
    %v2689 = vperm.slane %v301, 2
    %v2690 = vperm.slane %v305, 2
    %v2691 = vperm.slane %v309, 2
    %v2692 = vperm.slane %v313, 2
    %v2693 = vperm.slane %v317, 2
    %v2694 = vperm.slane %v321, 2
    %v2695 = vunpack.c.l.bf16 %v2679
    %v2696 = vunpack.c.l.bf16 %v2680
    %v2697 = vunpack.c.l.bf16 %v2681
    %v2698 = vunpack.c.l.bf16 %v2682
    %v2699 = vunpack.c.l.bf16 %v2683
    %v2700 = vunpack.c.l.bf16 %v2684
    %v2701 = vunpack.c.l.bf16 %v2685
    %v2702 = vunpack.c.l.bf16 %v2686
    %v2703 = vunpack.c.l.bf16 %v2687
    %v2704 = vunpack.c.l.bf16 %v2688
    %v2705 = vunpack.c.l.bf16 %v2689
    %v2706 = vunpack.c.l.bf16 %v2690
    %v2707 = vunpack.c.l.bf16 %v2691
    %v2708 = vunpack.c.l.bf16 %v2692
    %v2709 = vunpack.c.l.bf16 %v2693
    %v2710 = vunpack.c.l.bf16 %v2694
    %2727 = vrot.lane.b32.xlu0 %v2695, 34
    %v2728 = vpop.permute.xlu0 %2727
    %2729 = vrot.lane.b32.xlu0 %v2696, 34
    %v2730 = vpop.permute.xlu0 %2729
    %2731 = vrot.lane.b32.xlu0 %v2697, 34
    %v2732 = vpop.permute.xlu0 %2731
    %2733 = vrot.lane.b32.xlu0 %v2698, 34
    %v2734 = vpop.permute.xlu0 %2733
    %2735 = vrot.lane.b32.xlu0 %v2699, 34
    %v2736 = vpop.permute.xlu0 %2735
    %2737 = vrot.lane.b32.xlu0 %v2700, 34
    %v2738 = vpop.permute.xlu0 %2737
    %2739 = vrot.lane.b32.xlu0 %v2701, 34
    %v2740 = vpop.permute.xlu0 %2739
    %2741 = vrot.lane.b32.xlu0 %v2702, 34
    %v2742 = vpop.permute.xlu0 %2741
    %2743 = vrot.lane.b32.xlu0 %v2703, 34
    %v2744 = vpop.permute.xlu0 %2743
    %2745 = vrot.lane.b32.xlu0 %v2704, 34
    %v2746 = vpop.permute.xlu0 %2745
    %2747 = vrot.lane.b32.xlu0 %v2705, 34
    %v2748 = vpop.permute.xlu0 %2747
    %2749 = vrot.lane.b32.xlu0 %v2706, 34
    %v2750 = vpop.permute.xlu0 %2749
    %2751 = vrot.lane.b32.xlu0 %v2707, 34
    %v2752 = vpop.permute.xlu0 %2751
    %2753 = vrot.lane.b32.xlu0 %v2708, 34
    %v2754 = vpop.permute.xlu0 %2753
    %2755 = vrot.lane.b32.xlu0 %v2709, 34
    %v2756 = vpop.permute.xlu0 %2755
    %2757 = vrot.lane.b32.xlu0 %v2710, 34
    %v2758 = vpop.permute.xlu0 %2757
    %vm2759 = vcmask 277504
    %v2760 = vsel %vm2759, %v2728, %v2730
    %v2761 = vsel %vm2759, %v2730, %v2732
    %v2762 = vsel %vm2759, %v2732, %v2734
    %v2763 = vsel %vm2759, %v2734, %v2736
    %v2764 = vsel %vm2759, %v2736, %v2738
    %v2765 = vsel %vm2759, %v2738, %v2740
    %v2766 = vsel %vm2759, %v2740, %v2742
    %v2767 = vsel %vm2759, %v2742, %v2744
    %v2768 = vsel %vm2759, %v2744, %v2746
    %v2769 = vsel %vm2759, %v2746, %v2748
    %v2770 = vsel %vm2759, %v2748, %v2750
    %v2771 = vsel %vm2759, %v2750, %v2752
    %v2772 = vsel %vm2759, %v2752, %v2754
    %v2773 = vsel %vm2759, %v2754, %v2756
    %v2774 = vsel %vm2759, %v2756, %v2758
    %v2792 = vmul.f32 %v194, %v2728
    %v2793 = vmul.f32 %v195, %v2760
    %v2794 = vmul.f32 %v196, %v2761
    %v2795 = vmul.f32 %v197, %v2762
    %v2796 = vmul.f32 %v198, %v2763
    %v2797 = vmul.f32 %v199, %v2764
    %v2798 = vmul.f32 %v200, %v2765
    %v2799 = vmul.f32 %v201, %v2766
    %v2800 = vmul.f32 %v202, %v2767
    %v2801 = vmul.f32 %v203, %v2768
    %v2802 = vmul.f32 %v204, %v2769
    %v2803 = vmul.f32 %v205, %v2770
    %v2804 = vmul.f32 %v206, %v2771
    %v2805 = vmul.f32 %v207, %v2772
    %v2806 = vmul.f32 %v208, %v2773
    %v2807 = vmul.f32 %v209, %v2774
    %v2808 = vmul.f32 %v324, %v2758
    %v2809 = vpack.c.bf16 %v2792, %v2792
    %v2810 = vpack.c.bf16 %v2793, %v2793
    %v2811 = vpack.c.bf16 %v2794, %v2794
    %v2812 = vpack.c.bf16 %v2795, %v2795
    %v2813 = vpack.c.bf16 %v2796, %v2796
    %v2814 = vpack.c.bf16 %v2797, %v2797
    %v2815 = vpack.c.bf16 %v2798, %v2798
    %v2816 = vpack.c.bf16 %v2799, %v2799
    %v2817 = vpack.c.bf16 %v2800, %v2800
    %v2818 = vpack.c.bf16 %v2801, %v2801
    %v2819 = vpack.c.bf16 %v2802, %v2802
    %v2820 = vpack.c.bf16 %v2803, %v2803
    %v2821 = vpack.c.bf16 %v2804, %v2804
    %v2822 = vpack.c.bf16 %v2805, %v2805
    %v2823 = vpack.c.bf16 %v2806, %v2806
    %v2824 = vpack.c.bf16 %v2807, %v2807
    %v2825 = vpack.c.bf16 %v2808, %v2808
    %s2826 = scalar_lea.vmem [#allocation2], 40
    %v2827 = vld [vmem:[%s2826] sm:$0xf]
    %v2828 = vld [vmem:[%s2826 + $0x4] sm:$0x3]
    %v2831 = vunpack.c.l.b16 %v2827
    %v2832 = vunpack.c.l.b16 %v2828
    %v2833 = vpack.c.b16 %v2832, %v2831
    %2851 = vrot.lane.b32.xlu0 %v2809, 94
    %v2852 = vpop.permute.xlu0 %2851
    %2853 = vrot.lane.b32.xlu0 %v2810, 94
    %v2854 = vpop.permute.xlu0 %2853
    %2855 = vrot.lane.b32.xlu0 %v2811, 94
    %v2856 = vpop.permute.xlu0 %2855
    %2857 = vrot.lane.b32.xlu0 %v2812, 94
    %v2858 = vpop.permute.xlu0 %2857
    %2859 = vrot.lane.b32.xlu0 %v2813, 94
    %v2860 = vpop.permute.xlu0 %2859
    %2861 = vrot.lane.b32.xlu0 %v2814, 94
    %v2862 = vpop.permute.xlu0 %2861
    %2863 = vrot.lane.b32.xlu0 %v2815, 94
    %v2864 = vpop.permute.xlu0 %2863
    %2865 = vrot.lane.b32.xlu0 %v2816, 94
    %v2866 = vpop.permute.xlu0 %2865
    %2867 = vrot.lane.b32.xlu0 %v2817, 94
    %v2868 = vpop.permute.xlu0 %2867
    %2869 = vrot.lane.b32.xlu0 %v2818, 94
    %v2870 = vpop.permute.xlu0 %2869
    %2871 = vrot.lane.b32.xlu0 %v2819, 94
    %v2872 = vpop.permute.xlu0 %2871
    %2873 = vrot.lane.b32.xlu0 %v2820, 94
    %v2874 = vpop.permute.xlu0 %2873
    %2875 = vrot.lane.b32.xlu0 %v2821, 94
    %v2876 = vpop.permute.xlu0 %2875
    %2877 = vrot.lane.b32.xlu0 %v2822, 94
    %v2878 = vpop.permute.xlu0 %2877
    %2879 = vrot.lane.b32.xlu0 %v2823, 94
    %v2880 = vpop.permute.xlu0 %2879
    %2881 = vrot.lane.b32.xlu0 %v2824, 94
    %v2882 = vpop.permute.xlu0 %2881
    %2883 = vrot.lane.b32.xlu0 %v2825, 94
    %v2884 = vpop.permute.xlu0 %2883
    %vm2885 = vcmask 769024
    %v2886 = vsel %vm2885, %v2852, %v2854
    %v2887 = vsel %vm2885, %v2854, %v2856
    %v2888 = vsel %vm2885, %v2856, %v2858
    %v2889 = vsel %vm2885, %v2858, %v2860
    %v2890 = vsel %vm2885, %v2860, %v2862
    %v2891 = vsel %vm2885, %v2862, %v2864
    %v2892 = vsel %vm2885, %v2864, %v2866
    %v2893 = vsel %vm2885, %v2866, %v2868
    %v2894 = vsel %vm2885, %v2868, %v2870
    %v2895 = vsel %vm2885, %v2870, %v2872
    %v2896 = vsel %vm2885, %v2872, %v2874
    %v2897 = vsel %vm2885, %v2874, %v2876
    %v2898 = vsel %vm2885, %v2876, %v2878
    %v2899 = vsel %vm2885, %v2878, %v2880
    %v2900 = vsel %vm2885, %v2880, %v2882
    %v2901 = vsel %vm2885, %v2882, %v2884
    %v2903 = vsel %vm532, %v2833, 0
    %v2906 = vsel %vm536, %v2886, 0
    %v2909 = vsel %vm536, %v2887, 0
    %v2912 = vsel %vm536, %v2888, 0
    %v2915 = vsel %vm536, %v2889, 0
    %v2918 = vsel %vm536, %v2890, 0
    %v2921 = vsel %vm536, %v2891, 0
    %v2924 = vsel %vm536, %v2892, 0
    %v2927 = vsel %vm536, %v2893, 0
    %v2930 = vsel %vm536, %v2894, 0
    %v2933 = vsel %vm536, %v2895, 0
    %v2936 = vsel %vm536, %v2896, 0
    %v2939 = vsel %vm536, %v2897, 0
    %v2942 = vsel %vm536, %v2898, 0
    %v2945 = vsel %vm536, %v2899, 0
    %v2948 = vsel %vm536, %v2900, 0
    %v2951 = vsel %vm536, %v2901, 0
    %2953 = vmatpush.bf16.msra.mxu0 0
    %2954 = vmatpush.bf16.msra.mxu0 0
    %2955 = vmatpush.bf16.msra.mxu0 0
    %2956 = vmatpush.bf16.msra.mxu0 0
    %2957 = vmatpush.bf16.msra.mxu0 0
    %2958 = vmatpush.bf16.msra.mxu0 0
    %2959 = vmatpush.bf16.msra.mxu0 0
    %2960 = vmatpush.bf16.msra.mxu0 %v2906
    %2961 = vmatmul.bf16.gmra.mxu0 %v2903
    %v2962 = vpop.f32.mrf.mxu0
    %v2963 = vadd.f32 0.0, %v2962
    %v2964 = vpop.f32.mrf.mxu0
    %v2965 = vadd.f32 0.0, %v2964
    %2966 = vdwg.mxu0
    %2967 = vmatpush.bf16.msra.mxu0 0
    %2968 = vmatpush.bf16.msra.mxu0 0
    %2969 = vmatpush.bf16.msra.mxu0 0
    %2970 = vmatpush.bf16.msra.mxu0 0
    %2971 = vmatpush.bf16.msra.mxu0 0
    %2972 = vmatpush.bf16.msra.mxu0 0
    %2973 = vmatpush.bf16.msra.mxu0 0
    %2974 = vmatpush.bf16.msra.mxu0 %v2909
    %2975 = vmatmul.bf16.gmra.mxu0 %v2903
    %v2976 = vpop.f32.mrf.mxu0
    %v2977 = vadd.f32 0.0, %v2976
    %v2978 = vpop.f32.mrf.mxu0
    %v2979 = vadd.f32 0.0, %v2978
    %2980 = vdwg.mxu0
    %2981 = vmatpush.bf16.msra.mxu0 0
    %2982 = vmatpush.bf16.msra.mxu0 0
    %2983 = vmatpush.bf16.msra.mxu0 0
    %2984 = vmatpush.bf16.msra.mxu0 0
    %2985 = vmatpush.bf16.msra.mxu0 0
    %2986 = vmatpush.bf16.msra.mxu0 0
    %2987 = vmatpush.bf16.msra.mxu0 0
    %2988 = vmatpush.bf16.msra.mxu0 %v2912
    %2989 = vmatmul.bf16.gmra.mxu0 %v2903
    %v2990 = vpop.f32.mrf.mxu0
    %v2991 = vadd.f32 0.0, %v2990
    %v2992 = vpop.f32.mrf.mxu0
    %v2993 = vadd.f32 0.0, %v2992
    %2994 = vdwg.mxu0
    %2995 = vmatpush.bf16.msra.mxu0 0
    %2996 = vmatpush.bf16.msra.mxu0 0
    %2997 = vmatpush.bf16.msra.mxu0 0
    %2998 = vmatpush.bf16.msra.mxu0 0
    %2999 = vmatpush.bf16.msra.mxu0 0
    %3000 = vmatpush.bf16.msra.mxu0 0
    %3001 = vmatpush.bf16.msra.mxu0 0
    %3002 = vmatpush.bf16.msra.mxu0 %v2915
    %3003 = vmatmul.bf16.gmra.mxu0 %v2903
    %v3004 = vpop.f32.mrf.mxu0
    %v3005 = vadd.f32 0.0, %v3004
    %v3006 = vpop.f32.mrf.mxu0
    %v3007 = vadd.f32 0.0, %v3006
    %3008 = vdwg.mxu0
    %3009 = vmatpush.bf16.msra.mxu0 0
    %3010 = vmatpush.bf16.msra.mxu0 0
    %3011 = vmatpush.bf16.msra.mxu0 0
    %3012 = vmatpush.bf16.msra.mxu0 0
    %3013 = vmatpush.bf16.msra.mxu0 0
    %3014 = vmatpush.bf16.msra.mxu0 0
    %3015 = vmatpush.bf16.msra.mxu0 0
    %3016 = vmatpush.bf16.msra.mxu0 %v2918
    %3017 = vmatmul.bf16.gmra.mxu0 %v2903
    %v3018 = vpop.f32.mrf.mxu0
    %v3019 = vadd.f32 0.0, %v3018
    %v3020 = vpop.f32.mrf.mxu0
    %v3021 = vadd.f32 0.0, %v3020
    %3022 = vdwg.mxu0
    %3023 = vmatpush.bf16.msra.mxu0 0
    %3024 = vmatpush.bf16.msra.mxu0 0
    %3025 = vmatpush.bf16.msra.mxu0 0
    %3026 = vmatpush.bf16.msra.mxu0 0
    %3027 = vmatpush.bf16.msra.mxu0 0
    %3028 = vmatpush.bf16.msra.mxu0 0
    %3029 = vmatpush.bf16.msra.mxu0 0
    %3030 = vmatpush.bf16.msra.mxu0 %v2921
    %3031 = vmatmul.bf16.gmra.mxu0 %v2903
    %v3032 = vpop.f32.mrf.mxu0
    %v3033 = vadd.f32 0.0, %v3032
    %v3034 = vpop.f32.mrf.mxu0
    %v3035 = vadd.f32 0.0, %v3034
    %3036 = vdwg.mxu0
    %3037 = vmatpush.bf16.msra.mxu0 0
    %3038 = vmatpush.bf16.msra.mxu0 0
    %3039 = vmatpush.bf16.msra.mxu0 0
    %3040 = vmatpush.bf16.msra.mxu0 0
    %3041 = vmatpush.bf16.msra.mxu0 0
    %3042 = vmatpush.bf16.msra.mxu0 0
    %3043 = vmatpush.bf16.msra.mxu0 0
    %3044 = vmatpush.bf16.msra.mxu0 %v2924
    %3045 = vmatmul.bf16.gmra.mxu0 %v2903
    %v3046 = vpop.f32.mrf.mxu0
    %v3047 = vadd.f32 0.0, %v3046
    %v3048 = vpop.f32.mrf.mxu0
    %v3049 = vadd.f32 0.0, %v3048
    %3050 = vdwg.mxu0
    %3051 = vmatpush.bf16.msra.mxu0 0
    %3052 = vmatpush.bf16.msra.mxu0 0
    %3053 = vmatpush.bf16.msra.mxu0 0
    %3054 = vmatpush.bf16.msra.mxu0 0
    %3055 = vmatpush.bf16.msra.mxu0 0
    %3056 = vmatpush.bf16.msra.mxu0 0
    %3057 = vmatpush.bf16.msra.mxu0 0
    %3058 = vmatpush.bf16.msra.mxu0 %v2927
    %3059 = vmatmul.bf16.gmra.mxu0 %v2903
    %v3060 = vpop.f32.mrf.mxu0
    %v3061 = vadd.f32 0.0, %v3060
    %v3062 = vpop.f32.mrf.mxu0
    %v3063 = vadd.f32 0.0, %v3062
    %3064 = vdwg.mxu0
    %3065 = vmatpush.bf16.msra.mxu0 0
    %3066 = vmatpush.bf16.msra.mxu0 0
    %3067 = vmatpush.bf16.msra.mxu0 0
    %3068 = vmatpush.bf16.msra.mxu0 0
    %3069 = vmatpush.bf16.msra.mxu0 0
    %3070 = vmatpush.bf16.msra.mxu0 0
    %3071 = vmatpush.bf16.msra.mxu0 0
    %3072 = vmatpush.bf16.msra.mxu0 %v2930
    %3073 = vmatmul.bf16.gmra.mxu0 %v2903
    %v3074 = vpop.f32.mrf.mxu0
    %v3075 = vadd.f32 0.0, %v3074
    %v3076 = vpop.f32.mrf.mxu0
    %v3077 = vadd.f32 0.0, %v3076
    %3078 = vdwg.mxu0
    %3079 = vmatpush.bf16.msra.mxu0 0
    %3080 = vmatpush.bf16.msra.mxu0 0
    %3081 = vmatpush.bf16.msra.mxu0 0
    %3082 = vmatpush.bf16.msra.mxu0 0
    %3083 = vmatpush.bf16.msra.mxu0 0
    %3084 = vmatpush.bf16.msra.mxu0 0
    %3085 = vmatpush.bf16.msra.mxu0 0
    %3086 = vmatpush.bf16.msra.mxu0 %v2933
    %3087 = vmatmul.bf16.gmra.mxu0 %v2903
    %v3088 = vpop.f32.mrf.mxu0
    %v3089 = vadd.f32 0.0, %v3088
    %v3090 = vpop.f32.mrf.mxu0
    %v3091 = vadd.f32 0.0, %v3090
    %3092 = vdwg.mxu0
    %3093 = vmatpush.bf16.msra.mxu0 0
    %3094 = vmatpush.bf16.msra.mxu0 0
    %3095 = vmatpush.bf16.msra.mxu0 0
    %3096 = vmatpush.bf16.msra.mxu0 0
    %3097 = vmatpush.bf16.msra.mxu0 0
    %3098 = vmatpush.bf16.msra.mxu0 0
    %3099 = vmatpush.bf16.msra.mxu0 0
    %3100 = vmatpush.bf16.msra.mxu0 %v2936
    %3101 = vmatmul.bf16.gmra.mxu0 %v2903
    %v3102 = vpop.f32.mrf.mxu0
    %v3103 = vadd.f32 0.0, %v3102
    %v3104 = vpop.f32.mrf.mxu0
    %v3105 = vadd.f32 0.0, %v3104
    %3106 = vdwg.mxu0
    %3107 = vmatpush.bf16.msra.mxu0 0
    %3108 = vmatpush.bf16.msra.mxu0 0
    %3109 = vmatpush.bf16.msra.mxu0 0
    %3110 = vmatpush.bf16.msra.mxu0 0
    %3111 = vmatpush.bf16.msra.mxu0 0
    %3112 = vmatpush.bf16.msra.mxu0 0
    %3113 = vmatpush.bf16.msra.mxu0 0
    %3114 = vmatpush.bf16.msra.mxu0 %v2939
    %3115 = vmatmul.bf16.gmra.mxu0 %v2903
    %v3116 = vpop.f32.mrf.mxu0
    %v3117 = vadd.f32 0.0, %v3116
    %v3118 = vpop.f32.mrf.mxu0
    %v3119 = vadd.f32 0.0, %v3118
    %3120 = vdwg.mxu0
    %3121 = vmatpush.bf16.msra.mxu0 0
    %3122 = vmatpush.bf16.msra.mxu0 0
    %3123 = vmatpush.bf16.msra.mxu0 0
    %3124 = vmatpush.bf16.msra.mxu0 0
    %3125 = vmatpush.bf16.msra.mxu0 0
    %3126 = vmatpush.bf16.msra.mxu0 0
    %3127 = vmatpush.bf16.msra.mxu0 0
    %3128 = vmatpush.bf16.msra.mxu0 %v2942
    %3129 = vmatmul.bf16.gmra.mxu0 %v2903
    %v3130 = vpop.f32.mrf.mxu0
    %v3131 = vadd.f32 0.0, %v3130
    %v3132 = vpop.f32.mrf.mxu0
    %v3133 = vadd.f32 0.0, %v3132
    %3134 = vdwg.mxu0
    %3135 = vmatpush.bf16.msra.mxu0 0
    %3136 = vmatpush.bf16.msra.mxu0 0
    %3137 = vmatpush.bf16.msra.mxu0 0
    %3138 = vmatpush.bf16.msra.mxu0 0
    %3139 = vmatpush.bf16.msra.mxu0 0
    %3140 = vmatpush.bf16.msra.mxu0 0
    %3141 = vmatpush.bf16.msra.mxu0 0
    %3142 = vmatpush.bf16.msra.mxu0 %v2945
    %3143 = vmatmul.bf16.gmra.mxu0 %v2903
    %v3144 = vpop.f32.mrf.mxu0
    %v3145 = vadd.f32 0.0, %v3144
    %v3146 = vpop.f32.mrf.mxu0
    %v3147 = vadd.f32 0.0, %v3146
    %3148 = vdwg.mxu0
    %3149 = vmatpush.bf16.msra.mxu0 0
    %3150 = vmatpush.bf16.msra.mxu0 0
    %3151 = vmatpush.bf16.msra.mxu0 0
    %3152 = vmatpush.bf16.msra.mxu0 0
    %3153 = vmatpush.bf16.msra.mxu0 0
    %3154 = vmatpush.bf16.msra.mxu0 0
    %3155 = vmatpush.bf16.msra.mxu0 0
    %3156 = vmatpush.bf16.msra.mxu0 %v2948
    %3157 = vmatmul.bf16.gmra.mxu0 %v2903
    %v3158 = vpop.f32.mrf.mxu0
    %v3159 = vadd.f32 0.0, %v3158
    %v3160 = vpop.f32.mrf.mxu0
    %v3161 = vadd.f32 0.0, %v3160
    %3162 = vdwg.mxu0
    %3163 = vmatpush.bf16.msra.mxu0 0
    %3164 = vmatpush.bf16.msra.mxu0 0
    %3165 = vmatpush.bf16.msra.mxu0 0
    %3166 = vmatpush.bf16.msra.mxu0 0
    %3167 = vmatpush.bf16.msra.mxu0 0
    %3168 = vmatpush.bf16.msra.mxu0 0
    %3169 = vmatpush.bf16.msra.mxu0 0
    %3170 = vmatpush.bf16.msra.mxu0 %v2951
    %3171 = vmatmul.bf16.gmra.mxu0 %v2903
    %v3172 = vpop.f32.mrf.mxu0
    %v3173 = vadd.f32 0.0, %v3172
    %v3174 = vpop.f32.mrf.mxu0
    %v3175 = vadd.f32 0.0, %v3174
    %3176 = vdwg.mxu0
    %v3177 = vadd.f32 %v2647, %v2963
    %v3178 = vadd.f32 %v2648, %v2977
    %v3179 = vadd.f32 %v2649, %v2991
    %v3180 = vadd.f32 %v2650, %v3005
    %v3181 = vadd.f32 %v2651, %v3019
    %v3182 = vadd.f32 %v2652, %v3033
    %v3183 = vadd.f32 %v2653, %v3047
    %v3184 = vadd.f32 %v2654, %v3061
    %v3185 = vadd.f32 %v2655, %v3075
    %v3186 = vadd.f32 %v2656, %v3089
    %v3187 = vadd.f32 %v2657, %v3103
    %v3188 = vadd.f32 %v2658, %v3117
    %v3189 = vadd.f32 %v2659, %v3131
    %v3190 = vadd.f32 %v2660, %v3145
    %v3191 = vadd.f32 %v2661, %v3159
    %v3192 = vadd.f32 %v2662, %v3173
    %v3193 = vadd.f32 %v2663, %v2965
    %v3194 = vadd.f32 %v2664, %v2979
    %v3195 = vadd.f32 %v2665, %v2993
    %v3196 = vadd.f32 %v2666, %v3007
    %v3197 = vadd.f32 %v2667, %v3021
    %v3198 = vadd.f32 %v2668, %v3035
    %v3199 = vadd.f32 %v2669, %v3049
    %v3200 = vadd.f32 %v2670, %v3063
    %v3201 = vadd.f32 %v2671, %v3077
    %v3202 = vadd.f32 %v2672, %v3091
    %v3203 = vadd.f32 %v2673, %v3105
    %v3204 = vadd.f32 %v2674, %v3119
    %v3205 = vadd.f32 %v2675, %v3133
    %v3206 = vadd.f32 %v2676, %v3147
    %v3207 = vadd.f32 %v2677, %v3161
    %v3208 = vadd.f32 %v2678, %v3175
    %v3209 = vperm.slane %v131, 3
    %v3210 = vperm.slane %v135, 3
    %v3211 = vperm.slane %v139, 3
    %v3212 = vperm.slane %v143, 3
    %v3213 = vperm.slane %v147, 3
    %v3214 = vperm.slane %v151, 3
    %v3215 = vperm.slane %v155, 3
    %v3216 = vperm.slane %v159, 3
    %v3217 = vperm.slane %v163, 3
    %v3218 = vperm.slane %v167, 3
    %v3219 = vperm.slane %v171, 3
    %v3220 = vperm.slane %v175, 3
    %v3221 = vperm.slane %v179, 3
    %v3222 = vperm.slane %v183, 3
    %v3223 = vperm.slane %v187, 3
    %v3224 = vperm.slane %v191, 3
    %v3225 = vunpack.c.l.bf16 %v3209
    %v3226 = vunpack.c.l.bf16 %v3210
    %v3227 = vunpack.c.l.bf16 %v3211
    %v3228 = vunpack.c.l.bf16 %v3212
    %v3229 = vunpack.c.l.bf16 %v3213
    %v3230 = vunpack.c.l.bf16 %v3214
    %v3231 = vunpack.c.l.bf16 %v3215
    %v3232 = vunpack.c.l.bf16 %v3216
    %v3233 = vunpack.c.l.bf16 %v3217
    %v3234 = vunpack.c.l.bf16 %v3218
    %v3235 = vunpack.c.l.bf16 %v3219
    %v3236 = vunpack.c.l.bf16 %v3220
    %v3237 = vunpack.c.l.bf16 %v3221
    %v3238 = vunpack.c.l.bf16 %v3222
    %v3239 = vunpack.c.l.bf16 %v3223
    %v3240 = vunpack.c.l.bf16 %v3224
    %3257 = vrot.lane.b32.xlu0 %v3225, 64
    %v3258 = vpop.permute.xlu0 %3257
    %3259 = vrot.lane.b32.xlu0 %v3226, 64
    %v3260 = vpop.permute.xlu0 %3259
    %3261 = vrot.lane.b32.xlu0 %v3227, 64
    %v3262 = vpop.permute.xlu0 %3261
    %3263 = vrot.lane.b32.xlu0 %v3228, 64
    %v3264 = vpop.permute.xlu0 %3263
    %3265 = vrot.lane.b32.xlu0 %v3229, 64
    %v3266 = vpop.permute.xlu0 %3265
    %3267 = vrot.lane.b32.xlu0 %v3230, 64
    %v3268 = vpop.permute.xlu0 %3267
    %3269 = vrot.lane.b32.xlu0 %v3231, 64
    %v3270 = vpop.permute.xlu0 %3269
    %3271 = vrot.lane.b32.xlu0 %v3232, 64
    %v3272 = vpop.permute.xlu0 %3271
    %3273 = vrot.lane.b32.xlu0 %v3233, 64
    %v3274 = vpop.permute.xlu0 %3273
    %3275 = vrot.lane.b32.xlu0 %v3234, 64
    %v3276 = vpop.permute.xlu0 %3275
    %3277 = vrot.lane.b32.xlu0 %v3235, 64
    %v3278 = vpop.permute.xlu0 %3277
    %3279 = vrot.lane.b32.xlu0 %v3236, 64
    %v3280 = vpop.permute.xlu0 %3279
    %3281 = vrot.lane.b32.xlu0 %v3237, 64
    %v3282 = vpop.permute.xlu0 %3281
    %3283 = vrot.lane.b32.xlu0 %v3238, 64
    %v3284 = vpop.permute.xlu0 %3283
    %3285 = vrot.lane.b32.xlu0 %v3239, 64
    %v3286 = vpop.permute.xlu0 %3285
    %3287 = vrot.lane.b32.xlu0 %v3240, 64
    %v3288 = vpop.permute.xlu0 %3287
    %vm3289 = vcmask 523264
    %v3290 = vsel %vm3289, %v3258, %v3260
    %v3291 = vsel %vm3289, %v3260, %v3262
    %v3292 = vsel %vm3289, %v3262, %v3264
    %v3293 = vsel %vm3289, %v3264, %v3266
    %v3294 = vsel %vm3289, %v3266, %v3268
    %v3295 = vsel %vm3289, %v3268, %v3270
    %v3296 = vsel %vm3289, %v3270, %v3272
    %v3297 = vsel %vm3289, %v3272, %v3274
    %v3298 = vsel %vm3289, %v3274, %v3276
    %v3299 = vsel %vm3289, %v3276, %v3278
    %v3300 = vsel %vm3289, %v3278, %v3280
    %v3301 = vsel %vm3289, %v3280, %v3282
    %v3302 = vsel %vm3289, %v3282, %v3284
    %v3303 = vsel %vm3289, %v3284, %v3286
    %v3304 = vsel %vm3289, %v3286, %v3288
    %v3322 = vmul.f32 %v194, %v3258
    %v3323 = vmul.f32 %v195, %v3290
    %v3324 = vmul.f32 %v196, %v3291
    %v3325 = vmul.f32 %v197, %v3292
    %v3326 = vmul.f32 %v198, %v3293
    %v3327 = vmul.f32 %v199, %v3294
    %v3328 = vmul.f32 %v200, %v3295
    %v3329 = vmul.f32 %v201, %v3296
    %v3330 = vmul.f32 %v202, %v3297
    %v3331 = vmul.f32 %v203, %v3298
    %v3332 = vmul.f32 %v204, %v3299
    %v3333 = vmul.f32 %v205, %v3300
    %v3334 = vmul.f32 %v206, %v3301
    %v3335 = vmul.f32 %v207, %v3302
    %v3336 = vmul.f32 %v208, %v3303
    %v3337 = vmul.f32 %v209, %v3304
    %v3338 = vmul.f32 %v324, %v3288
    %v3339 = vpack.c.bf16 %v3322, %v3322
    %v3340 = vpack.c.bf16 %v3323, %v3323
    %v3341 = vpack.c.bf16 %v3324, %v3324
    %v3342 = vpack.c.bf16 %v3325, %v3325
    %v3343 = vpack.c.bf16 %v3326, %v3326
    %v3344 = vpack.c.bf16 %v3327, %v3327
    %v3345 = vpack.c.bf16 %v3328, %v3328
    %v3346 = vpack.c.bf16 %v3329, %v3329
    %v3347 = vpack.c.bf16 %v3330, %v3330
    %v3348 = vpack.c.bf16 %v3331, %v3331
    %v3349 = vpack.c.bf16 %v3332, %v3332
    %v3350 = vpack.c.bf16 %v3333, %v3333
    %v3351 = vpack.c.bf16 %v3334, %v3334
    %v3352 = vpack.c.bf16 %v3335, %v3335
    %v3353 = vpack.c.bf16 %v3336, %v3336
    %v3354 = vpack.c.bf16 %v3337, %v3337
    %v3355 = vpack.c.bf16 %v3338, %v3338
    %s3356 = scalar_lea.vmem [#allocation2], 48
    %v3357 = vld [vmem:[%s3356] sm:$0xf]
    %v3358 = vld [vmem:[%s3356 + $0x4] sm:$0x3]
    %v3361 = vunpack.c.l.b16 %v3357
    %v3362 = vunpack.c.l.b16 %v3358
    %v3363 = vpack.c.b16 %v3362, %v3361
    %3381 = vrot.lane.b32.xlu0 %v3339, 64
    %v3382 = vpop.permute.xlu0 %3381
    %3383 = vrot.lane.b32.xlu0 %v3340, 64
    %v3384 = vpop.permute.xlu0 %3383
    %3385 = vrot.lane.b32.xlu0 %v3341, 64
    %v3386 = vpop.permute.xlu0 %3385
    %3387 = vrot.lane.b32.xlu0 %v3342, 64
    %v3388 = vpop.permute.xlu0 %3387
    %3389 = vrot.lane.b32.xlu0 %v3343, 64
    %v3390 = vpop.permute.xlu0 %3389
    %3391 = vrot.lane.b32.xlu0 %v3344, 64
    %v3392 = vpop.permute.xlu0 %3391
    %3393 = vrot.lane.b32.xlu0 %v3345, 64
    %v3394 = vpop.permute.xlu0 %3393
    %3395 = vrot.lane.b32.xlu0 %v3346, 64
    %v3396 = vpop.permute.xlu0 %3395
    %3397 = vrot.lane.b32.xlu0 %v3347, 64
    %v3398 = vpop.permute.xlu0 %3397
    %3399 = vrot.lane.b32.xlu0 %v3348, 64
    %v3400 = vpop.permute.xlu0 %3399
    %3401 = vrot.lane.b32.xlu0 %v3349, 64
    %v3402 = vpop.permute.xlu0 %3401
    %3403 = vrot.lane.b32.xlu0 %v3350, 64
    %v3404 = vpop.permute.xlu0 %3403
    %3405 = vrot.lane.b32.xlu0 %v3351, 64
    %v3406 = vpop.permute.xlu0 %3405
    %3407 = vrot.lane.b32.xlu0 %v3352, 64
    %v3408 = vpop.permute.xlu0 %3407
    %3409 = vrot.lane.b32.xlu0 %v3353, 64
    %v3410 = vpop.permute.xlu0 %3409
    %3411 = vrot.lane.b32.xlu0 %v3354, 64
    %v3412 = vpop.permute.xlu0 %3411
    %3413 = vrot.lane.b32.xlu0 %v3355, 64
    %v3414 = vpop.permute.xlu0 %3413
    %vm3415 = vcmask 523264
    %v3416 = vsel %vm3415, %v3382, %v3384
    %v3417 = vsel %vm3415, %v3384, %v3386
    %v3418 = vsel %vm3415, %v3386, %v3388
    %v3419 = vsel %vm3415, %v3388, %v3390
    %v3420 = vsel %vm3415, %v3390, %v3392
    %v3421 = vsel %vm3415, %v3392, %v3394
    %v3422 = vsel %vm3415, %v3394, %v3396
    %v3423 = vsel %vm3415, %v3396, %v3398
    %v3424 = vsel %vm3415, %v3398, %v3400
    %v3425 = vsel %vm3415, %v3400, %v3402
    %v3426 = vsel %vm3415, %v3402, %v3404
    %v3427 = vsel %vm3415, %v3404, %v3406
    %v3428 = vsel %vm3415, %v3406, %v3408
    %v3429 = vsel %vm3415, %v3408, %v3410
    %v3430 = vsel %vm3415, %v3410, %v3412
    %v3431 = vsel %vm3415, %v3412, %v3414
    %v3433 = vsel %vm532, %v3363, 0
    %v3436 = vsel %vm536, %v3416, 0
    %v3439 = vsel %vm536, %v3417, 0
    %v3442 = vsel %vm536, %v3418, 0
    %v3445 = vsel %vm536, %v3419, 0
    %v3448 = vsel %vm536, %v3420, 0
    %v3451 = vsel %vm536, %v3421, 0
    %v3454 = vsel %vm536, %v3422, 0
    %v3457 = vsel %vm536, %v3423, 0
    %v3460 = vsel %vm536, %v3424, 0
    %v3463 = vsel %vm536, %v3425, 0
    %v3466 = vsel %vm536, %v3426, 0
    %v3469 = vsel %vm536, %v3427, 0
    %v3472 = vsel %vm536, %v3428, 0
    %v3475 = vsel %vm536, %v3429, 0
    %v3478 = vsel %vm536, %v3430, 0
    %v3481 = vsel %vm536, %v3431, 0
    %3483 = vmatpush.bf16.msra.mxu0 0
    %3484 = vmatpush.bf16.msra.mxu0 0
    %3485 = vmatpush.bf16.msra.mxu0 0
    %3486 = vmatpush.bf16.msra.mxu0 0
    %3487 = vmatpush.bf16.msra.mxu0 0
    %3488 = vmatpush.bf16.msra.mxu0 0
    %3489 = vmatpush.bf16.msra.mxu0 0
    %3490 = vmatpush.bf16.msra.mxu0 %v3436
    %3491 = vmatmul.bf16.gmra.mxu0 %v3433
    %v3492 = vpop.f32.mrf.mxu0
    %v3493 = vadd.f32 0.0, %v3492
    %v3494 = vpop.f32.mrf.mxu0
    %v3495 = vadd.f32 0.0, %v3494
    %3496 = vdwg.mxu0
    %3497 = vmatpush.bf16.msra.mxu0 0
    %3498 = vmatpush.bf16.msra.mxu0 0
    %3499 = vmatpush.bf16.msra.mxu0 0
    %3500 = vmatpush.bf16.msra.mxu0 0
    %3501 = vmatpush.bf16.msra.mxu0 0
    %3502 = vmatpush.bf16.msra.mxu0 0
    %3503 = vmatpush.bf16.msra.mxu0 0
    %3504 = vmatpush.bf16.msra.mxu0 %v3439
    %3505 = vmatmul.bf16.gmra.mxu0 %v3433
    %v3506 = vpop.f32.mrf.mxu0
    %v3507 = vadd.f32 0.0, %v3506
    %v3508 = vpop.f32.mrf.mxu0
    %v3509 = vadd.f32 0.0, %v3508
    %3510 = vdwg.mxu0
    %3511 = vmatpush.bf16.msra.mxu0 0
    %3512 = vmatpush.bf16.msra.mxu0 0
    %3513 = vmatpush.bf16.msra.mxu0 0
    %3514 = vmatpush.bf16.msra.mxu0 0
    %3515 = vmatpush.bf16.msra.mxu0 0
    %3516 = vmatpush.bf16.msra.mxu0 0
    %3517 = vmatpush.bf16.msra.mxu0 0
    %3518 = vmatpush.bf16.msra.mxu0 %v3442
    %3519 = vmatmul.bf16.gmra.mxu0 %v3433
    %v3520 = vpop.f32.mrf.mxu0
    %v3521 = vadd.f32 0.0, %v3520
    %v3522 = vpop.f32.mrf.mxu0
    %v3523 = vadd.f32 0.0, %v3522
    %3524 = vdwg.mxu0
    %3525 = vmatpush.bf16.msra.mxu0 0
    %3526 = vmatpush.bf16.msra.mxu0 0
    %3527 = vmatpush.bf16.msra.mxu0 0
    %3528 = vmatpush.bf16.msra.mxu0 0
    %3529 = vmatpush.bf16.msra.mxu0 0
    %3530 = vmatpush.bf16.msra.mxu0 0
    %3531 = vmatpush.bf16.msra.mxu0 0
    %3532 = vmatpush.bf16.msra.mxu0 %v3445
    %3533 = vmatmul.bf16.gmra.mxu0 %v3433
    %v3534 = vpop.f32.mrf.mxu0
    %v3535 = vadd.f32 0.0, %v3534
    %v3536 = vpop.f32.mrf.mxu0
    %v3537 = vadd.f32 0.0, %v3536
    %3538 = vdwg.mxu0
    %3539 = vmatpush.bf16.msra.mxu0 0
    %3540 = vmatpush.bf16.msra.mxu0 0
    %3541 = vmatpush.bf16.msra.mxu0 0
    %3542 = vmatpush.bf16.msra.mxu0 0
    %3543 = vmatpush.bf16.msra.mxu0 0
    %3544 = vmatpush.bf16.msra.mxu0 0
    %3545 = vmatpush.bf16.msra.mxu0 0
    %3546 = vmatpush.bf16.msra.mxu0 %v3448
    %3547 = vmatmul.bf16.gmra.mxu0 %v3433
    %v3548 = vpop.f32.mrf.mxu0
    %v3549 = vadd.f32 0.0, %v3548
    %v3550 = vpop.f32.mrf.mxu0
    %v3551 = vadd.f32 0.0, %v3550
    %3552 = vdwg.mxu0
    %3553 = vmatpush.bf16.msra.mxu0 0
    %3554 = vmatpush.bf16.msra.mxu0 0
    %3555 = vmatpush.bf16.msra.mxu0 0
    %3556 = vmatpush.bf16.msra.mxu0 0
    %3557 = vmatpush.bf16.msra.mxu0 0
    %3558 = vmatpush.bf16.msra.mxu0 0
    %3559 = vmatpush.bf16.msra.mxu0 0
    %3560 = vmatpush.bf16.msra.mxu0 %v3451
    %3561 = vmatmul.bf16.gmra.mxu0 %v3433
    %v3562 = vpop.f32.mrf.mxu0
    %v3563 = vadd.f32 0.0, %v3562
    %v3564 = vpop.f32.mrf.mxu0
    %v3565 = vadd.f32 0.0, %v3564
    %3566 = vdwg.mxu0
    %3567 = vmatpush.bf16.msra.mxu0 0
    %3568 = vmatpush.bf16.msra.mxu0 0
    %3569 = vmatpush.bf16.msra.mxu0 0
    %3570 = vmatpush.bf16.msra.mxu0 0
    %3571 = vmatpush.bf16.msra.mxu0 0
    %3572 = vmatpush.bf16.msra.mxu0 0
    %3573 = vmatpush.bf16.msra.mxu0 0
    %3574 = vmatpush.bf16.msra.mxu0 %v3454
    %3575 = vmatmul.bf16.gmra.mxu0 %v3433
    %v3576 = vpop.f32.mrf.mxu0
    %v3577 = vadd.f32 0.0, %v3576
    %v3578 = vpop.f32.mrf.mxu0
    %v3579 = vadd.f32 0.0, %v3578
    %3580 = vdwg.mxu0
    %3581 = vmatpush.bf16.msra.mxu0 0
    %3582 = vmatpush.bf16.msra.mxu0 0
    %3583 = vmatpush.bf16.msra.mxu0 0
    %3584 = vmatpush.bf16.msra.mxu0 0
    %3585 = vmatpush.bf16.msra.mxu0 0
    %3586 = vmatpush.bf16.msra.mxu0 0
    %3587 = vmatpush.bf16.msra.mxu0 0
    %3588 = vmatpush.bf16.msra.mxu0 %v3457
    %3589 = vmatmul.bf16.gmra.mxu0 %v3433
    %v3590 = vpop.f32.mrf.mxu0
    %v3591 = vadd.f32 0.0, %v3590
    %v3592 = vpop.f32.mrf.mxu0
    %v3593 = vadd.f32 0.0, %v3592
    %3594 = vdwg.mxu0
    %3595 = vmatpush.bf16.msra.mxu0 0
    %3596 = vmatpush.bf16.msra.mxu0 0
    %3597 = vmatpush.bf16.msra.mxu0 0
    %3598 = vmatpush.bf16.msra.mxu0 0
    %3599 = vmatpush.bf16.msra.mxu0 0
    %3600 = vmatpush.bf16.msra.mxu0 0
    %3601 = vmatpush.bf16.msra.mxu0 0
    %3602 = vmatpush.bf16.msra.mxu0 %v3460
    %3603 = vmatmul.bf16.gmra.mxu0 %v3433
    %v3604 = vpop.f32.mrf.mxu0
    %v3605 = vadd.f32 0.0, %v3604
    %v3606 = vpop.f32.mrf.mxu0
    %v3607 = vadd.f32 0.0, %v3606
    %3608 = vdwg.mxu0
    %3609 = vmatpush.bf16.msra.mxu0 0
    %3610 = vmatpush.bf16.msra.mxu0 0
    %3611 = vmatpush.bf16.msra.mxu0 0
    %3612 = vmatpush.bf16.msra.mxu0 0
    %3613 = vmatpush.bf16.msra.mxu0 0
    %3614 = vmatpush.bf16.msra.mxu0 0
    %3615 = vmatpush.bf16.msra.mxu0 0
    %3616 = vmatpush.bf16.msra.mxu0 %v3463
    %3617 = vmatmul.bf16.gmra.mxu0 %v3433
    %v3618 = vpop.f32.mrf.mxu0
    %v3619 = vadd.f32 0.0, %v3618
    %v3620 = vpop.f32.mrf.mxu0
    %v3621 = vadd.f32 0.0, %v3620
    %3622 = vdwg.mxu0
    %3623 = vmatpush.bf16.msra.mxu0 0
    %3624 = vmatpush.bf16.msra.mxu0 0
    %3625 = vmatpush.bf16.msra.mxu0 0
    %3626 = vmatpush.bf16.msra.mxu0 0
    %3627 = vmatpush.bf16.msra.mxu0 0
    %3628 = vmatpush.bf16.msra.mxu0 0
    %3629 = vmatpush.bf16.msra.mxu0 0
    %3630 = vmatpush.bf16.msra.mxu0 %v3466
    %3631 = vmatmul.bf16.gmra.mxu0 %v3433
    %v3632 = vpop.f32.mrf.mxu0
    %v3633 = vadd.f32 0.0, %v3632
    %v3634 = vpop.f32.mrf.mxu0
    %v3635 = vadd.f32 0.0, %v3634
    %3636 = vdwg.mxu0
    %3637 = vmatpush.bf16.msra.mxu0 0
    %3638 = vmatpush.bf16.msra.mxu0 0
    %3639 = vmatpush.bf16.msra.mxu0 0
    %3640 = vmatpush.bf16.msra.mxu0 0
    %3641 = vmatpush.bf16.msra.mxu0 0
    %3642 = vmatpush.bf16.msra.mxu0 0
    %3643 = vmatpush.bf16.msra.mxu0 0
    %3644 = vmatpush.bf16.msra.mxu0 %v3469
    %3645 = vmatmul.bf16.gmra.mxu0 %v3433
    %v3646 = vpop.f32.mrf.mxu0
    %v3647 = vadd.f32 0.0, %v3646
    %v3648 = vpop.f32.mrf.mxu0
    %v3649 = vadd.f32 0.0, %v3648
    %3650 = vdwg.mxu0
    %3651 = vmatpush.bf16.msra.mxu0 0
    %3652 = vmatpush.bf16.msra.mxu0 0
    %3653 = vmatpush.bf16.msra.mxu0 0
    %3654 = vmatpush.bf16.msra.mxu0 0
    %3655 = vmatpush.bf16.msra.mxu0 0
    %3656 = vmatpush.bf16.msra.mxu0 0
    %3657 = vmatpush.bf16.msra.mxu0 0
    %3658 = vmatpush.bf16.msra.mxu0 %v3472
    %3659 = vmatmul.bf16.gmra.mxu0 %v3433
    %v3660 = vpop.f32.mrf.mxu0
    %v3661 = vadd.f32 0.0, %v3660
    %v3662 = vpop.f32.mrf.mxu0
    %v3663 = vadd.f32 0.0, %v3662
    %3664 = vdwg.mxu0
    %3665 = vmatpush.bf16.msra.mxu0 0
    %3666 = vmatpush.bf16.msra.mxu0 0
    %3667 = vmatpush.bf16.msra.mxu0 0
    %3668 = vmatpush.bf16.msra.mxu0 0
    %3669 = vmatpush.bf16.msra.mxu0 0
    %3670 = vmatpush.bf16.msra.mxu0 0
    %3671 = vmatpush.bf16.msra.mxu0 0
    %3672 = vmatpush.bf16.msra.mxu0 %v3475
    %3673 = vmatmul.bf16.gmra.mxu0 %v3433
    %v3674 = vpop.f32.mrf.mxu0
    %v3675 = vadd.f32 0.0, %v3674
    %v3676 = vpop.f32.mrf.mxu0
    %v3677 = vadd.f32 0.0, %v3676
    %3678 = vdwg.mxu0
    %3679 = vmatpush.bf16.msra.mxu0 0
    %3680 = vmatpush.bf16.msra.mxu0 0
    %3681 = vmatpush.bf16.msra.mxu0 0
    %3682 = vmatpush.bf16.msra.mxu0 0
    %3683 = vmatpush.bf16.msra.mxu0 0
    %3684 = vmatpush.bf16.msra.mxu0 0
    %3685 = vmatpush.bf16.msra.mxu0 0
    %3686 = vmatpush.bf16.msra.mxu0 %v3478
    %3687 = vmatmul.bf16.gmra.mxu0 %v3433
    %v3688 = vpop.f32.mrf.mxu0
    %v3689 = vadd.f32 0.0, %v3688
    %v3690 = vpop.f32.mrf.mxu0
    %v3691 = vadd.f32 0.0, %v3690
    %3692 = vdwg.mxu0
    %3693 = vmatpush.bf16.msra.mxu0 0
    %3694 = vmatpush.bf16.msra.mxu0 0
    %3695 = vmatpush.bf16.msra.mxu0 0
    %3696 = vmatpush.bf16.msra.mxu0 0
    %3697 = vmatpush.bf16.msra.mxu0 0
    %3698 = vmatpush.bf16.msra.mxu0 0
    %3699 = vmatpush.bf16.msra.mxu0 0
    %3700 = vmatpush.bf16.msra.mxu0 %v3481
    %3701 = vmatmul.bf16.gmra.mxu0 %v3433
    %v3702 = vpop.f32.mrf.mxu0
    %v3703 = vadd.f32 0.0, %v3702
    %v3704 = vpop.f32.mrf.mxu0
    %v3705 = vadd.f32 0.0, %v3704
    %3706 = vdwg.mxu0
    %v3707 = vadd.f32 %v3177, %v3493
    %v3708 = vadd.f32 %v3178, %v3507
    %v3709 = vadd.f32 %v3179, %v3521
    %v3710 = vadd.f32 %v3180, %v3535
    %v3711 = vadd.f32 %v3181, %v3549
    %v3712 = vadd.f32 %v3182, %v3563
    %v3713 = vadd.f32 %v3183, %v3577
    %v3714 = vadd.f32 %v3184, %v3591
    %v3715 = vadd.f32 %v3185, %v3605
    %v3716 = vadd.f32 %v3186, %v3619
    %v3717 = vadd.f32 %v3187, %v3633
    %v3718 = vadd.f32 %v3188, %v3647
    %v3719 = vadd.f32 %v3189, %v3661
    %v3720 = vadd.f32 %v3190, %v3675
    %v3721 = vadd.f32 %v3191, %v3689
    %v3722 = vadd.f32 %v3192, %v3703
    %v3723 = vadd.f32 %v3193, %v3495
    %v3724 = vadd.f32 %v3194, %v3509
    %v3725 = vadd.f32 %v3195, %v3523
    %v3726 = vadd.f32 %v3196, %v3537
    %v3727 = vadd.f32 %v3197, %v3551
    %v3728 = vadd.f32 %v3198, %v3565
    %v3729 = vadd.f32 %v3199, %v3579
    %v3730 = vadd.f32 %v3200, %v3593
    %v3731 = vadd.f32 %v3201, %v3607
    %v3732 = vadd.f32 %v3202, %v3621
    %v3733 = vadd.f32 %v3203, %v3635
    %v3734 = vadd.f32 %v3204, %v3649
    %v3735 = vadd.f32 %v3205, %v3663
    %v3736 = vadd.f32 %v3206, %v3677
    %v3737 = vadd.f32 %v3207, %v3691
    %v3738 = vadd.f32 %v3208, %v3705
    %v3739 = vperm.slane %v261, 3
    %v3740 = vperm.slane %v265, 3
    %v3741 = vperm.slane %v269, 3
    %v3742 = vperm.slane %v273, 3
    %v3743 = vperm.slane %v277, 3
    %v3744 = vperm.slane %v281, 3
    %v3745 = vperm.slane %v285, 3
    %v3746 = vperm.slane %v289, 3
    %v3747 = vperm.slane %v293, 3
    %v3748 = vperm.slane %v297, 3
    %v3749 = vperm.slane %v301, 3
    %v3750 = vperm.slane %v305, 3
    %v3751 = vperm.slane %v309, 3
    %v3752 = vperm.slane %v313, 3
    %v3753 = vperm.slane %v317, 3
    %v3754 = vperm.slane %v321, 3
    %v3755 = vunpack.c.l.bf16 %v3739
    %v3756 = vunpack.c.l.bf16 %v3740
    %v3757 = vunpack.c.l.bf16 %v3741
    %v3758 = vunpack.c.l.bf16 %v3742
    %v3759 = vunpack.c.l.bf16 %v3743
    %v3760 = vunpack.c.l.bf16 %v3744
    %v3761 = vunpack.c.l.bf16 %v3745
    %v3762 = vunpack.c.l.bf16 %v3746
    %v3763 = vunpack.c.l.bf16 %v3747
    %v3764 = vunpack.c.l.bf16 %v3748
    %v3765 = vunpack.c.l.bf16 %v3749
    %v3766 = vunpack.c.l.bf16 %v3750
    %v3767 = vunpack.c.l.bf16 %v3751
    %v3768 = vunpack.c.l.bf16 %v3752
    %v3769 = vunpack.c.l.bf16 %v3753
    %v3770 = vunpack.c.l.bf16 %v3754
    %3787 = vrot.lane.b32.xlu0 %v3755, 65
    %v3788 = vpop.permute.xlu0 %3787
    %3789 = vrot.lane.b32.xlu0 %v3756, 65
    %v3790 = vpop.permute.xlu0 %3789
    %3791 = vrot.lane.b32.xlu0 %v3757, 65
    %v3792 = vpop.permute.xlu0 %3791
    %3793 = vrot.lane.b32.xlu0 %v3758, 65
    %v3794 = vpop.permute.xlu0 %3793
    %3795 = vrot.lane.b32.xlu0 %v3759, 65
    %v3796 = vpop.permute.xlu0 %3795
    %3797 = vrot.lane.b32.xlu0 %v3760, 65
    %v3798 = vpop.permute.xlu0 %3797
    %3799 = vrot.lane.b32.xlu0 %v3761, 65
    %v3800 = vpop.permute.xlu0 %3799
    %3801 = vrot.lane.b32.xlu0 %v3762, 65
    %v3802 = vpop.permute.xlu0 %3801
    %3803 = vrot.lane.b32.xlu0 %v3763, 65
    %v3804 = vpop.permute.xlu0 %3803
    %3805 = vrot.lane.b32.xlu0 %v3764, 65
    %v3806 = vpop.permute.xlu0 %3805
    %3807 = vrot.lane.b32.xlu0 %v3765, 65
    %v3808 = vpop.permute.xlu0 %3807
    %3809 = vrot.lane.b32.xlu0 %v3766, 65
    %v3810 = vpop.permute.xlu0 %3809
    %3811 = vrot.lane.b32.xlu0 %v3767, 65
    %v3812 = vpop.permute.xlu0 %3811
    %3813 = vrot.lane.b32.xlu0 %v3768, 65
    %v3814 = vpop.permute.xlu0 %3813
    %3815 = vrot.lane.b32.xlu0 %v3769, 65
    %v3816 = vpop.permute.xlu0 %3815
    %3817 = vrot.lane.b32.xlu0 %v3770, 65
    %v3818 = vpop.permute.xlu0 %3817
    %vm3819 = vcmask 531456
    %v3820 = vsel %vm3819, %v3788, %v3790
    %v3821 = vsel %vm3819, %v3790, %v3792
    %v3822 = vsel %vm3819, %v3792, %v3794
    %v3823 = vsel %vm3819, %v3794, %v3796
    %v3824 = vsel %vm3819, %v3796, %v3798
    %v3825 = vsel %vm3819, %v3798, %v3800
    %v3826 = vsel %vm3819, %v3800, %v3802
    %v3827 = vsel %vm3819, %v3802, %v3804
    %v3828 = vsel %vm3819, %v3804, %v3806
    %v3829 = vsel %vm3819, %v3806, %v3808
    %v3830 = vsel %vm3819, %v3808, %v3810
    %v3831 = vsel %vm3819, %v3810, %v3812
    %v3832 = vsel %vm3819, %v3812, %v3814
    %v3833 = vsel %vm3819, %v3814, %v3816
    %v3834 = vsel %vm3819, %v3816, %v3818
    %v3852 = vmul.f32 %v194, %v3788
    %v3853 = vmul.f32 %v195, %v3820
    %v3854 = vmul.f32 %v196, %v3821
    %v3855 = vmul.f32 %v197, %v3822
    %v3856 = vmul.f32 %v198, %v3823
    %v3857 = vmul.f32 %v199, %v3824
    %v3858 = vmul.f32 %v200, %v3825
    %v3859 = vmul.f32 %v201, %v3826
    %v3860 = vmul.f32 %v202, %v3827
    %v3861 = vmul.f32 %v203, %v3828
    %v3862 = vmul.f32 %v204, %v3829
    %v3863 = vmul.f32 %v205, %v3830
    %v3864 = vmul.f32 %v206, %v3831
    %v3865 = vmul.f32 %v207, %v3832
    %v3866 = vmul.f32 %v208, %v3833
    %v3867 = vmul.f32 %v209, %v3834
    %v3868 = vmul.f32 %v324, %v3818
    %v3869 = vpack.c.bf16 %v3852, %v3852
    %v3870 = vpack.c.bf16 %v3853, %v3853
    %v3871 = vpack.c.bf16 %v3854, %v3854
    %v3872 = vpack.c.bf16 %v3855, %v3855
    %v3873 = vpack.c.bf16 %v3856, %v3856
    %v3874 = vpack.c.bf16 %v3857, %v3857
    %v3875 = vpack.c.bf16 %v3858, %v3858
    %v3876 = vpack.c.bf16 %v3859, %v3859
    %v3877 = vpack.c.bf16 %v3860, %v3860
    %v3878 = vpack.c.bf16 %v3861, %v3861
    %v3879 = vpack.c.bf16 %v3862, %v3862
    %v3880 = vpack.c.bf16 %v3863, %v3863
    %v3881 = vpack.c.bf16 %v3864, %v3864
    %v3882 = vpack.c.bf16 %v3865, %v3865
    %v3883 = vpack.c.bf16 %v3866, %v3866
    %v3884 = vpack.c.bf16 %v3867, %v3867
    %v3885 = vpack.c.bf16 %v3868, %v3868
    %s3886 = scalar_lea.vmem [#allocation2], 56
    %v3887 = vld [vmem:[%s3886] sm:$0xf]
    %v3888 = vld [vmem:[%s3886 + $0x4] sm:$0x3]
    %v3891 = vunpack.c.l.b16 %v3887
    %v3892 = vunpack.c.l.b16 %v3888
    %v3893 = vpack.c.b16 %v3892, %v3891
    %3911 = vrot.lane.b32.xlu0 %v3869, 63
    %v3912 = vpop.permute.xlu0 %3911
    %3913 = vrot.lane.b32.xlu0 %v3870, 63
    %v3914 = vpop.permute.xlu0 %3913
    %3915 = vrot.lane.b32.xlu0 %v3871, 63
    %v3916 = vpop.permute.xlu0 %3915
    %3917 = vrot.lane.b32.xlu0 %v3872, 63
    %v3918 = vpop.permute.xlu0 %3917
    %3919 = vrot.lane.b32.xlu0 %v3873, 63
    %v3920 = vpop.permute.xlu0 %3919
    %3921 = vrot.lane.b32.xlu0 %v3874, 63
    %v3922 = vpop.permute.xlu0 %3921
    %3923 = vrot.lane.b32.xlu0 %v3875, 63
    %v3924 = vpop.permute.xlu0 %3923
    %3925 = vrot.lane.b32.xlu0 %v3876, 63
    %v3926 = vpop.permute.xlu0 %3925
    %3927 = vrot.lane.b32.xlu0 %v3877, 63
    %v3928 = vpop.permute.xlu0 %3927
    %3929 = vrot.lane.b32.xlu0 %v3878, 63
    %v3930 = vpop.permute.xlu0 %3929
    %3931 = vrot.lane.b32.xlu0 %v3879, 63
    %v3932 = vpop.permute.xlu0 %3931
    %3933 = vrot.lane.b32.xlu0 %v3880, 63
    %v3934 = vpop.permute.xlu0 %3933
    %3935 = vrot.lane.b32.xlu0 %v3881, 63
    %v3936 = vpop.permute.xlu0 %3935
    %3937 = vrot.lane.b32.xlu0 %v3882, 63
    %v3938 = vpop.permute.xlu0 %3937
    %3939 = vrot.lane.b32.xlu0 %v3883, 63
    %v3940 = vpop.permute.xlu0 %3939
    %3941 = vrot.lane.b32.xlu0 %v3884, 63
    %v3942 = vpop.permute.xlu0 %3941
    %3943 = vrot.lane.b32.xlu0 %v3885, 63
    %v3944 = vpop.permute.xlu0 %3943
    %vm3945 = vcmask 515072
    %v3946 = vsel %vm3945, %v3912, %v3914
    %v3947 = vsel %vm3945, %v3914, %v3916
    %v3948 = vsel %vm3945, %v3916, %v3918
    %v3949 = vsel %vm3945, %v3918, %v3920
    %v3950 = vsel %vm3945, %v3920, %v3922
    %v3951 = vsel %vm3945, %v3922, %v3924
    %v3952 = vsel %vm3945, %v3924, %v3926
    %v3953 = vsel %vm3945, %v3926, %v3928
    %v3954 = vsel %vm3945, %v3928, %v3930
    %v3955 = vsel %vm3945, %v3930, %v3932
    %v3956 = vsel %vm3945, %v3932, %v3934
    %v3957 = vsel %vm3945, %v3934, %v3936
    %v3958 = vsel %vm3945, %v3936, %v3938
    %v3959 = vsel %vm3945, %v3938, %v3940
    %v3960 = vsel %vm3945, %v3940, %v3942
    %v3961 = vsel %vm3945, %v3942, %v3944
    %v3963 = vsel %vm532, %v3893, 0
    %v3966 = vsel %vm536, %v3946, 0
    %v3969 = vsel %vm536, %v3947, 0
    %v3972 = vsel %vm536, %v3948, 0
    %v3975 = vsel %vm536, %v3949, 0
    %v3978 = vsel %vm536, %v3950, 0
    %v3981 = vsel %vm536, %v3951, 0
    %v3984 = vsel %vm536, %v3952, 0
    %v3987 = vsel %vm536, %v3953, 0
    %v3990 = vsel %vm536, %v3954, 0
    %v3993 = vsel %vm536, %v3955, 0
    %v3996 = vsel %vm536, %v3956, 0
    %v3999 = vsel %vm536, %v3957, 0
    %v4002 = vsel %vm536, %v3958, 0
    %v4005 = vsel %vm536, %v3959, 0
    %v4008 = vsel %vm536, %v3960, 0
    %v4011 = vsel %vm536, %v3961, 0
    %4013 = vmatpush.bf16.msra.mxu0 0
    %4014 = vmatpush.bf16.msra.mxu0 0
    %4015 = vmatpush.bf16.msra.mxu0 0
    %4016 = vmatpush.bf16.msra.mxu0 0
    %4017 = vmatpush.bf16.msra.mxu0 0
    %4018 = vmatpush.bf16.msra.mxu0 0
    %4019 = vmatpush.bf16.msra.mxu0 0
    %4020 = vmatpush.bf16.msra.mxu0 %v3966
    %4021 = vmatmul.bf16.gmra.mxu0 %v3963
    %v4022 = vpop.f32.mrf.mxu0
    %v4023 = vadd.f32 0.0, %v4022
    %v4024 = vpop.f32.mrf.mxu0
    %v4025 = vadd.f32 0.0, %v4024
    %4026 = vdwg.mxu0
    %4027 = vmatpush.bf16.msra.mxu0 0
    %4028 = vmatpush.bf16.msra.mxu0 0
    %4029 = vmatpush.bf16.msra.mxu0 0
    %4030 = vmatpush.bf16.msra.mxu0 0
    %4031 = vmatpush.bf16.msra.mxu0 0
    %4032 = vmatpush.bf16.msra.mxu0 0
    %4033 = vmatpush.bf16.msra.mxu0 0
    %4034 = vmatpush.bf16.msra.mxu0 %v3969
    %4035 = vmatmul.bf16.gmra.mxu0 %v3963
    %v4036 = vpop.f32.mrf.mxu0
    %v4037 = vadd.f32 0.0, %v4036
    %v4038 = vpop.f32.mrf.mxu0
    %v4039 = vadd.f32 0.0, %v4038
    %4040 = vdwg.mxu0
    %4041 = vmatpush.bf16.msra.mxu0 0
    %4042 = vmatpush.bf16.msra.mxu0 0
    %4043 = vmatpush.bf16.msra.mxu0 0
    %4044 = vmatpush.bf16.msra.mxu0 0
    %4045 = vmatpush.bf16.msra.mxu0 0
    %4046 = vmatpush.bf16.msra.mxu0 0
    %4047 = vmatpush.bf16.msra.mxu0 0
    %4048 = vmatpush.bf16.msra.mxu0 %v3972
    %4049 = vmatmul.bf16.gmra.mxu0 %v3963
    %v4050 = vpop.f32.mrf.mxu0
    %v4051 = vadd.f32 0.0, %v4050
    %v4052 = vpop.f32.mrf.mxu0
    %v4053 = vadd.f32 0.0, %v4052
    %4054 = vdwg.mxu0
    %4055 = vmatpush.bf16.msra.mxu0 0
    %4056 = vmatpush.bf16.msra.mxu0 0
    %4057 = vmatpush.bf16.msra.mxu0 0
    %4058 = vmatpush.bf16.msra.mxu0 0
    %4059 = vmatpush.bf16.msra.mxu0 0
    %4060 = vmatpush.bf16.msra.mxu0 0
    %4061 = vmatpush.bf16.msra.mxu0 0
    %4062 = vmatpush.bf16.msra.mxu0 %v3975
    %4063 = vmatmul.bf16.gmra.mxu0 %v3963
    %v4064 = vpop.f32.mrf.mxu0
    %v4065 = vadd.f32 0.0, %v4064
    %v4066 = vpop.f32.mrf.mxu0
    %v4067 = vadd.f32 0.0, %v4066
    %4068 = vdwg.mxu0
    %4069 = vmatpush.bf16.msra.mxu0 0
    %4070 = vmatpush.bf16.msra.mxu0 0
    %4071 = vmatpush.bf16.msra.mxu0 0
    %4072 = vmatpush.bf16.msra.mxu0 0
    %4073 = vmatpush.bf16.msra.mxu0 0
    %4074 = vmatpush.bf16.msra.mxu0 0
    %4075 = vmatpush.bf16.msra.mxu0 0
    %4076 = vmatpush.bf16.msra.mxu0 %v3978
    %4077 = vmatmul.bf16.gmra.mxu0 %v3963
    %v4078 = vpop.f32.mrf.mxu0
    %v4079 = vadd.f32 0.0, %v4078
    %v4080 = vpop.f32.mrf.mxu0
    %v4081 = vadd.f32 0.0, %v4080
    %4082 = vdwg.mxu0
    %4083 = vmatpush.bf16.msra.mxu0 0
    %4084 = vmatpush.bf16.msra.mxu0 0
    %4085 = vmatpush.bf16.msra.mxu0 0
    %4086 = vmatpush.bf16.msra.mxu0 0
    %4087 = vmatpush.bf16.msra.mxu0 0
    %4088 = vmatpush.bf16.msra.mxu0 0
    %4089 = vmatpush.bf16.msra.mxu0 0
    %4090 = vmatpush.bf16.msra.mxu0 %v3981
    %4091 = vmatmul.bf16.gmra.mxu0 %v3963
    %v4092 = vpop.f32.mrf.mxu0
    %v4093 = vadd.f32 0.0, %v4092
    %v4094 = vpop.f32.mrf.mxu0
    %v4095 = vadd.f32 0.0, %v4094
    %4096 = vdwg.mxu0
    %4097 = vmatpush.bf16.msra.mxu0 0
    %4098 = vmatpush.bf16.msra.mxu0 0
    %4099 = vmatpush.bf16.msra.mxu0 0
    %4100 = vmatpush.bf16.msra.mxu0 0
    %4101 = vmatpush.bf16.msra.mxu0 0
    %4102 = vmatpush.bf16.msra.mxu0 0
    %4103 = vmatpush.bf16.msra.mxu0 0
    %4104 = vmatpush.bf16.msra.mxu0 %v3984
    %4105 = vmatmul.bf16.gmra.mxu0 %v3963
    %v4106 = vpop.f32.mrf.mxu0
    %v4107 = vadd.f32 0.0, %v4106
    %v4108 = vpop.f32.mrf.mxu0
    %v4109 = vadd.f32 0.0, %v4108
    %4110 = vdwg.mxu0
    %4111 = vmatpush.bf16.msra.mxu0 0
    %4112 = vmatpush.bf16.msra.mxu0 0
    %4113 = vmatpush.bf16.msra.mxu0 0
    %4114 = vmatpush.bf16.msra.mxu0 0
    %4115 = vmatpush.bf16.msra.mxu0 0
    %4116 = vmatpush.bf16.msra.mxu0 0
    %4117 = vmatpush.bf16.msra.mxu0 0
    %4118 = vmatpush.bf16.msra.mxu0 %v3987
    %4119 = vmatmul.bf16.gmra.mxu0 %v3963
    %v4120 = vpop.f32.mrf.mxu0
    %v4121 = vadd.f32 0.0, %v4120
    %v4122 = vpop.f32.mrf.mxu0
    %v4123 = vadd.f32 0.0, %v4122
    %4124 = vdwg.mxu0
    %4125 = vmatpush.bf16.msra.mxu0 0
    %4126 = vmatpush.bf16.msra.mxu0 0
    %4127 = vmatpush.bf16.msra.mxu0 0
    %4128 = vmatpush.bf16.msra.mxu0 0
    %4129 = vmatpush.bf16.msra.mxu0 0
    %4130 = vmatpush.bf16.msra.mxu0 0
    %4131 = vmatpush.bf16.msra.mxu0 0
    %4132 = vmatpush.bf16.msra.mxu0 %v3990
    %4133 = vmatmul.bf16.gmra.mxu0 %v3963
    %v4134 = vpop.f32.mrf.mxu0
    %v4135 = vadd.f32 0.0, %v4134
    %v4136 = vpop.f32.mrf.mxu0
    %v4137 = vadd.f32 0.0, %v4136
    %4138 = vdwg.mxu0
    %4139 = vmatpush.bf16.msra.mxu0 0
    %4140 = vmatpush.bf16.msra.mxu0 0
    %4141 = vmatpush.bf16.msra.mxu0 0
    %4142 = vmatpush.bf16.msra.mxu0 0
    %4143 = vmatpush.bf16.msra.mxu0 0
    %4144 = vmatpush.bf16.msra.mxu0 0
    %4145 = vmatpush.bf16.msra.mxu0 0
    %4146 = vmatpush.bf16.msra.mxu0 %v3993
    %4147 = vmatmul.bf16.gmra.mxu0 %v3963
    %v4148 = vpop.f32.mrf.mxu0
    %v4149 = vadd.f32 0.0, %v4148
    %v4150 = vpop.f32.mrf.mxu0
    %v4151 = vadd.f32 0.0, %v4150
    %4152 = vdwg.mxu0
    %4153 = vmatpush.bf16.msra.mxu0 0
    %4154 = vmatpush.bf16.msra.mxu0 0
    %4155 = vmatpush.bf16.msra.mxu0 0
    %4156 = vmatpush.bf16.msra.mxu0 0
    %4157 = vmatpush.bf16.msra.mxu0 0
    %4158 = vmatpush.bf16.msra.mxu0 0
    %4159 = vmatpush.bf16.msra.mxu0 0
    %4160 = vmatpush.bf16.msra.mxu0 %v3996
    %4161 = vmatmul.bf16.gmra.mxu0 %v3963
    %v4162 = vpop.f32.mrf.mxu0
    %v4163 = vadd.f32 0.0, %v4162
    %v4164 = vpop.f32.mrf.mxu0
    %v4165 = vadd.f32 0.0, %v4164
    %4166 = vdwg.mxu0
    %4167 = vmatpush.bf16.msra.mxu0 0
    %4168 = vmatpush.bf16.msra.mxu0 0
    %4169 = vmatpush.bf16.msra.mxu0 0
    %4170 = vmatpush.bf16.msra.mxu0 0
    %4171 = vmatpush.bf16.msra.mxu0 0
    %4172 = vmatpush.bf16.msra.mxu0 0
    %4173 = vmatpush.bf16.msra.mxu0 0
    %4174 = vmatpush.bf16.msra.mxu0 %v3999
    %4175 = vmatmul.bf16.gmra.mxu0 %v3963
    %v4176 = vpop.f32.mrf.mxu0
    %v4177 = vadd.f32 0.0, %v4176
    %v4178 = vpop.f32.mrf.mxu0
    %v4179 = vadd.f32 0.0, %v4178
    %4180 = vdwg.mxu0
    %4181 = vmatpush.bf16.msra.mxu0 0
    %4182 = vmatpush.bf16.msra.mxu0 0
    %4183 = vmatpush.bf16.msra.mxu0 0
    %4184 = vmatpush.bf16.msra.mxu0 0
    %4185 = vmatpush.bf16.msra.mxu0 0
    %4186 = vmatpush.bf16.msra.mxu0 0
    %4187 = vmatpush.bf16.msra.mxu0 0
    %4188 = vmatpush.bf16.msra.mxu0 %v4002
    %4189 = vmatmul.bf16.gmra.mxu0 %v3963
    %v4190 = vpop.f32.mrf.mxu0
    %v4191 = vadd.f32 0.0, %v4190
    %v4192 = vpop.f32.mrf.mxu0
    %v4193 = vadd.f32 0.0, %v4192
    %4194 = vdwg.mxu0
    %4195 = vmatpush.bf16.msra.mxu0 0
    %4196 = vmatpush.bf16.msra.mxu0 0
    %4197 = vmatpush.bf16.msra.mxu0 0
    %4198 = vmatpush.bf16.msra.mxu0 0
    %4199 = vmatpush.bf16.msra.mxu0 0
    %4200 = vmatpush.bf16.msra.mxu0 0
    %4201 = vmatpush.bf16.msra.mxu0 0
    %4202 = vmatpush.bf16.msra.mxu0 %v4005
    %4203 = vmatmul.bf16.gmra.mxu0 %v3963
    %v4204 = vpop.f32.mrf.mxu0
    %v4205 = vadd.f32 0.0, %v4204
    %v4206 = vpop.f32.mrf.mxu0
    %v4207 = vadd.f32 0.0, %v4206
    %4208 = vdwg.mxu0
    %4209 = vmatpush.bf16.msra.mxu0 0
    %4210 = vmatpush.bf16.msra.mxu0 0
    %4211 = vmatpush.bf16.msra.mxu0 0
    %4212 = vmatpush.bf16.msra.mxu0 0
    %4213 = vmatpush.bf16.msra.mxu0 0
    %4214 = vmatpush.bf16.msra.mxu0 0
    %4215 = vmatpush.bf16.msra.mxu0 0
    %4216 = vmatpush.bf16.msra.mxu0 %v4008
    %4217 = vmatmul.bf16.gmra.mxu0 %v3963
    %v4218 = vpop.f32.mrf.mxu0
    %v4219 = vadd.f32 0.0, %v4218
    %v4220 = vpop.f32.mrf.mxu0
    %v4221 = vadd.f32 0.0, %v4220
    %4222 = vdwg.mxu0
    %4223 = vmatpush.bf16.msra.mxu0 0
    %4224 = vmatpush.bf16.msra.mxu0 0
    %4225 = vmatpush.bf16.msra.mxu0 0
    %4226 = vmatpush.bf16.msra.mxu0 0
    %4227 = vmatpush.bf16.msra.mxu0 0
    %4228 = vmatpush.bf16.msra.mxu0 0
    %4229 = vmatpush.bf16.msra.mxu0 0
    %4230 = vmatpush.bf16.msra.mxu0 %v4011
    %4231 = vmatmul.bf16.gmra.mxu0 %v3963
    %v4232 = vpop.f32.mrf.mxu0
    %v4233 = vadd.f32 0.0, %v4232
    %v4234 = vpop.f32.mrf.mxu0
    %v4235 = vadd.f32 0.0, %v4234
    %4236 = vdwg.mxu0
    %v4237 = vadd.f32 %v3707, %v4023
    %v4238 = vadd.f32 %v3708, %v4037
    %v4239 = vadd.f32 %v3709, %v4051
    %v4240 = vadd.f32 %v3710, %v4065
    %v4241 = vadd.f32 %v3711, %v4079
    %v4242 = vadd.f32 %v3712, %v4093
    %v4243 = vadd.f32 %v3713, %v4107
    %v4244 = vadd.f32 %v3714, %v4121
    %v4245 = vadd.f32 %v3715, %v4135
    %v4246 = vadd.f32 %v3716, %v4149
    %v4247 = vadd.f32 %v3717, %v4163
    %v4248 = vadd.f32 %v3718, %v4177
    %v4249 = vadd.f32 %v3719, %v4191
    %v4250 = vadd.f32 %v3720, %v4205
    %v4251 = vadd.f32 %v3721, %v4219
    %v4252 = vadd.f32 %v3722, %v4233
    %v4253 = vadd.f32 %v3723, %v4025
    %v4254 = vadd.f32 %v3724, %v4039
    %v4255 = vadd.f32 %v3725, %v4053
    %v4256 = vadd.f32 %v3726, %v4067
    %v4257 = vadd.f32 %v3727, %v4081
    %v4258 = vadd.f32 %v3728, %v4095
    %v4259 = vadd.f32 %v3729, %v4109
    %v4260 = vadd.f32 %v3730, %v4123
    %v4261 = vadd.f32 %v3731, %v4137
    %v4262 = vadd.f32 %v3732, %v4151
    %v4263 = vadd.f32 %v3733, %v4165
    %v4264 = vadd.f32 %v3734, %v4179
    %v4265 = vadd.f32 %v3735, %v4193
    %v4266 = vadd.f32 %v3736, %v4207
    %v4267 = vadd.f32 %v3737, %v4221
    %v4268 = vadd.f32 %v3738, %v4235
    %v4277 = vunpack.c.l.b16 %v82
    %v4278 = vunpack.c.h.b16 %v82
    %v4279 = vunpack.c.l.b16 %v83
    %v4280 = vunpack.c.h.b16 %v83
    %v4281 = vunpack.c.l.b16 %v84
    %v4282 = vunpack.c.h.b16 %v84
    %v4283 = vunpack.c.l.b16 %v85
    %v4284 = vunpack.c.h.b16 %v85
    %v4285 = vunpack.c.l.b16 %v86
    %v4286 = vunpack.c.h.b16 %v86
    %v4287 = vunpack.c.l.b16 %v87
    %v4288 = vunpack.c.h.b16 %v87
    %v4289 = vunpack.c.l.b16 %v88
    %v4290 = vunpack.c.h.b16 %v88
    %v4291 = vunpack.c.l.b16 %v89
    %v4292 = vunpack.c.h.b16 %v89
    %v4293 = vpack.c.b16 %v4277, %v4277
    %v4294 = vpack.c.b16 %v4278, %v4278
    %v4295 = vpack.c.b16 %v4279, %v4279
    %v4296 = vpack.c.b16 %v4280, %v4280
    %v4297 = vpack.c.b16 %v4281, %v4281
    %v4298 = vpack.c.b16 %v4282, %v4282
    %v4299 = vpack.c.b16 %v4283, %v4283
    %v4300 = vpack.c.b16 %v4284, %v4284
    %v4301 = vpack.c.b16 %v4285, %v4285
    %v4302 = vpack.c.b16 %v4286, %v4286
    %v4303 = vpack.c.b16 %v4287, %v4287
    %v4304 = vpack.c.b16 %v4288, %v4288
    %v4305 = vpack.c.b16 %v4289, %v4289
    %v4306 = vpack.c.b16 %v4290, %v4290
    %v4307 = vpack.c.b16 %v4291, %v4291
    %v4308 = vpack.c.b16 %v4292, %v4292
    %v4310 = vpack.i.b16 %v4293, %v4293
    %v4312 = vperm.slane %v4310, 0
    %v4314 = vpack.i.b16 %v4294, %v4294
    %v4316 = vperm.slane %v4314, 0
    %v4318 = vpack.i.b16 %v4295, %v4295
    %v4320 = vperm.slane %v4318, 0
    %v4322 = vpack.i.b16 %v4296, %v4296
    %v4324 = vperm.slane %v4322, 0
    %v4326 = vpack.i.b16 %v4297, %v4297
    %v4328 = vperm.slane %v4326, 0
    %v4330 = vpack.i.b16 %v4298, %v4298
    %v4332 = vperm.slane %v4330, 0
    %v4334 = vpack.i.b16 %v4299, %v4299
    %v4336 = vperm.slane %v4334, 0
    %v4338 = vpack.i.b16 %v4300, %v4300
    %v4340 = vperm.slane %v4338, 0
    %v4342 = vpack.i.b16 %v4301, %v4301
    %v4344 = vperm.slane %v4342, 0
    %v4346 = vpack.i.b16 %v4302, %v4302
    %v4348 = vperm.slane %v4346, 0
    %v4350 = vpack.i.b16 %v4303, %v4303
    %v4352 = vperm.slane %v4350, 0
    %v4354 = vpack.i.b16 %v4304, %v4304
    %v4356 = vperm.slane %v4354, 0
    %v4358 = vpack.i.b16 %v4305, %v4305
    %v4360 = vperm.slane %v4358, 0
    %v4362 = vpack.i.b16 %v4306, %v4306
    %v4364 = vperm.slane %v4362, 0
    %v4366 = vpack.i.b16 %v4307, %v4307
    %v4368 = vperm.slane %v4366, 0
    %v4370 = vpack.i.b16 %v4308, %v4308
    %v4372 = vperm.slane %v4370, 0
    %v4373 = vunpack.c.l.bf16 %v4312
    %v4374 = vunpack.c.l.bf16 %v4316
    %v4375 = vunpack.c.l.bf16 %v4320
    %v4376 = vunpack.c.l.bf16 %v4324
    %v4377 = vunpack.c.l.bf16 %v4328
    %v4378 = vunpack.c.l.bf16 %v4332
    %v4379 = vunpack.c.l.bf16 %v4336
    %v4380 = vunpack.c.l.bf16 %v4340
    %v4381 = vunpack.c.l.bf16 %v4344
    %v4382 = vunpack.c.l.bf16 %v4348
    %v4383 = vunpack.c.l.bf16 %v4352
    %v4384 = vunpack.c.l.bf16 %v4356
    %v4385 = vunpack.c.l.bf16 %v4360
    %v4386 = vunpack.c.l.bf16 %v4364
    %v4387 = vunpack.c.l.bf16 %v4368
    %v4388 = vunpack.c.l.bf16 %v4372
    %4405 = vrot.lane.b32.xlu0 %v4373, 66
    %v4406 = vpop.permute.xlu0 %4405
    %4407 = vrot.lane.b32.xlu0 %v4374, 66
    %v4408 = vpop.permute.xlu0 %4407
    %4409 = vrot.lane.b32.xlu0 %v4375, 66
    %v4410 = vpop.permute.xlu0 %4409
    %4411 = vrot.lane.b32.xlu0 %v4376, 66
    %v4412 = vpop.permute.xlu0 %4411
    %4413 = vrot.lane.b32.xlu0 %v4377, 66
    %v4414 = vpop.permute.xlu0 %4413
    %4415 = vrot.lane.b32.xlu0 %v4378, 66
    %v4416 = vpop.permute.xlu0 %4415
    %4417 = vrot.lane.b32.xlu0 %v4379, 66
    %v4418 = vpop.permute.xlu0 %4417
    %4419 = vrot.lane.b32.xlu0 %v4380, 66
    %v4420 = vpop.permute.xlu0 %4419
    %4421 = vrot.lane.b32.xlu0 %v4381, 66
    %v4422 = vpop.permute.xlu0 %4421
    %4423 = vrot.lane.b32.xlu0 %v4382, 66
    %v4424 = vpop.permute.xlu0 %4423
    %4425 = vrot.lane.b32.xlu0 %v4383, 66
    %v4426 = vpop.permute.xlu0 %4425
    %4427 = vrot.lane.b32.xlu0 %v4384, 66
    %v4428 = vpop.permute.xlu0 %4427
    %4429 = vrot.lane.b32.xlu0 %v4385, 66
    %v4430 = vpop.permute.xlu0 %4429
    %4431 = vrot.lane.b32.xlu0 %v4386, 66
    %v4432 = vpop.permute.xlu0 %4431
    %4433 = vrot.lane.b32.xlu0 %v4387, 66
    %v4434 = vpop.permute.xlu0 %4433
    %4435 = vrot.lane.b32.xlu0 %v4388, 66
    %v4436 = vpop.permute.xlu0 %4435
    %vm4437 = vcmask 539648
    %v4438 = vsel %vm4437, %v4406, %v4408
    %v4439 = vsel %vm4437, %v4408, %v4410
    %v4440 = vsel %vm4437, %v4410, %v4412
    %v4441 = vsel %vm4437, %v4412, %v4414
    %v4442 = vsel %vm4437, %v4414, %v4416
    %v4443 = vsel %vm4437, %v4416, %v4418
    %v4444 = vsel %vm4437, %v4418, %v4420
    %v4445 = vsel %vm4437, %v4420, %v4422
    %v4446 = vsel %vm4437, %v4422, %v4424
    %v4447 = vsel %vm4437, %v4424, %v4426
    %v4448 = vsel %vm4437, %v4426, %v4428
    %v4449 = vsel %vm4437, %v4428, %v4430
    %v4450 = vsel %vm4437, %v4430, %v4432
    %v4451 = vsel %vm4437, %v4432, %v4434
    %v4452 = vsel %vm4437, %v4434, %v4436
    %v4470 = vmul.f32 %v194, %v4406
    %v4471 = vmul.f32 %v195, %v4438
    %v4472 = vmul.f32 %v196, %v4439
    %v4473 = vmul.f32 %v197, %v4440
    %v4474 = vmul.f32 %v198, %v4441
    %v4475 = vmul.f32 %v199, %v4442
    %v4476 = vmul.f32 %v200, %v4443
    %v4477 = vmul.f32 %v201, %v4444
    %v4478 = vmul.f32 %v202, %v4445
    %v4479 = vmul.f32 %v203, %v4446
    %v4480 = vmul.f32 %v204, %v4447
    %v4481 = vmul.f32 %v205, %v4448
    %v4482 = vmul.f32 %v206, %v4449
    %v4483 = vmul.f32 %v207, %v4450
    %v4484 = vmul.f32 %v208, %v4451
    %v4485 = vmul.f32 %v209, %v4452
    %v4486 = vmul.f32 %v324, %v4436
    %v4487 = vpack.c.bf16 %v4470, %v4470
    %v4488 = vpack.c.bf16 %v4471, %v4471
    %v4489 = vpack.c.bf16 %v4472, %v4472
    %v4490 = vpack.c.bf16 %v4473, %v4473
    %v4491 = vpack.c.bf16 %v4474, %v4474
    %v4492 = vpack.c.bf16 %v4475, %v4475
    %v4493 = vpack.c.bf16 %v4476, %v4476
    %v4494 = vpack.c.bf16 %v4477, %v4477
    %v4495 = vpack.c.bf16 %v4478, %v4478
    %v4496 = vpack.c.bf16 %v4479, %v4479
    %v4497 = vpack.c.bf16 %v4480, %v4480
    %v4498 = vpack.c.bf16 %v4481, %v4481
    %v4499 = vpack.c.bf16 %v4482, %v4482
    %v4500 = vpack.c.bf16 %v4483, %v4483
    %v4501 = vpack.c.bf16 %v4484, %v4484
    %v4502 = vpack.c.bf16 %v4485, %v4485
    %v4503 = vpack.c.bf16 %v4486, %v4486
    %s4504 = scalar_lea.vmem [#allocation2], 64
    %v4505 = vld [vmem:[%s4504] sm:$0xf]
    %v4506 = vld [vmem:[%s4504 + $0x4] sm:$0x3]
    %v4509 = vunpack.c.l.b16 %v4505
    %v4510 = vunpack.c.l.b16 %v4506
    %v4511 = vpack.c.b16 %v4510, %v4509
    %4529 = vrot.lane.b32.xlu0 %v4487, 62
    %v4530 = vpop.permute.xlu0 %4529
    %4531 = vrot.lane.b32.xlu0 %v4488, 62
    %v4532 = vpop.permute.xlu0 %4531
    %4533 = vrot.lane.b32.xlu0 %v4489, 62
    %v4534 = vpop.permute.xlu0 %4533
    %4535 = vrot.lane.b32.xlu0 %v4490, 62
    %v4536 = vpop.permute.xlu0 %4535
    %4537 = vrot.lane.b32.xlu0 %v4491, 62
    %v4538 = vpop.permute.xlu0 %4537
    %4539 = vrot.lane.b32.xlu0 %v4492, 62
    %v4540 = vpop.permute.xlu0 %4539
    %4541 = vrot.lane.b32.xlu0 %v4493, 62
    %v4542 = vpop.permute.xlu0 %4541
    %4543 = vrot.lane.b32.xlu0 %v4494, 62
    %v4544 = vpop.permute.xlu0 %4543
    %4545 = vrot.lane.b32.xlu0 %v4495, 62
    %v4546 = vpop.permute.xlu0 %4545
    %4547 = vrot.lane.b32.xlu0 %v4496, 62
    %v4548 = vpop.permute.xlu0 %4547
    %4549 = vrot.lane.b32.xlu0 %v4497, 62
    %v4550 = vpop.permute.xlu0 %4549
    %4551 = vrot.lane.b32.xlu0 %v4498, 62
    %v4552 = vpop.permute.xlu0 %4551
    %4553 = vrot.lane.b32.xlu0 %v4499, 62
    %v4554 = vpop.permute.xlu0 %4553
    %4555 = vrot.lane.b32.xlu0 %v4500, 62
    %v4556 = vpop.permute.xlu0 %4555
    %4557 = vrot.lane.b32.xlu0 %v4501, 62
    %v4558 = vpop.permute.xlu0 %4557
    %4559 = vrot.lane.b32.xlu0 %v4502, 62
    %v4560 = vpop.permute.xlu0 %4559
    %4561 = vrot.lane.b32.xlu0 %v4503, 62
    %v4562 = vpop.permute.xlu0 %4561
    %vm4563 = vcmask 506880
    %v4564 = vsel %vm4563, %v4530, %v4532
    %v4565 = vsel %vm4563, %v4532, %v4534
    %v4566 = vsel %vm4563, %v4534, %v4536
    %v4567 = vsel %vm4563, %v4536, %v4538
    %v4568 = vsel %vm4563, %v4538, %v4540
    %v4569 = vsel %vm4563, %v4540, %v4542
    %v4570 = vsel %vm4563, %v4542, %v4544
    %v4571 = vsel %vm4563, %v4544, %v4546
    %v4572 = vsel %vm4563, %v4546, %v4548
    %v4573 = vsel %vm4563, %v4548, %v4550
    %v4574 = vsel %vm4563, %v4550, %v4552
    %v4575 = vsel %vm4563, %v4552, %v4554
    %v4576 = vsel %vm4563, %v4554, %v4556
    %v4577 = vsel %vm4563, %v4556, %v4558
    %v4578 = vsel %vm4563, %v4558, %v4560
    %v4579 = vsel %vm4563, %v4560, %v4562
    %v4581 = vsel %vm532, %v4511, 0
    %v4584 = vsel %vm536, %v4564, 0
    %v4587 = vsel %vm536, %v4565, 0
    %v4590 = vsel %vm536, %v4566, 0
    %v4593 = vsel %vm536, %v4567, 0
    %v4596 = vsel %vm536, %v4568, 0
    %v4599 = vsel %vm536, %v4569, 0
    %v4602 = vsel %vm536, %v4570, 0
    %v4605 = vsel %vm536, %v4571, 0
    %v4608 = vsel %vm536, %v4572, 0
    %v4611 = vsel %vm536, %v4573, 0
    %v4614 = vsel %vm536, %v4574, 0
    %v4617 = vsel %vm536, %v4575, 0
    %v4620 = vsel %vm536, %v4576, 0
    %v4623 = vsel %vm536, %v4577, 0
    %v4626 = vsel %vm536, %v4578, 0
    %v4629 = vsel %vm536, %v4579, 0
    %4631 = vmatpush.bf16.msra.mxu0 0
    %4632 = vmatpush.bf16.msra.mxu0 0
    %4633 = vmatpush.bf16.msra.mxu0 0
    %4634 = vmatpush.bf16.msra.mxu0 0
    %4635 = vmatpush.bf16.msra.mxu0 0
    %4636 = vmatpush.bf16.msra.mxu0 0
    %4637 = vmatpush.bf16.msra.mxu0 0
    %4638 = vmatpush.bf16.msra.mxu0 %v4584
    %4639 = vmatmul.bf16.gmra.mxu0 %v4581
    %v4640 = vpop.f32.mrf.mxu0
    %v4641 = vadd.f32 0.0, %v4640
    %v4642 = vpop.f32.mrf.mxu0
    %v4643 = vadd.f32 0.0, %v4642
    %4644 = vdwg.mxu0
    %4645 = vmatpush.bf16.msra.mxu0 0
    %4646 = vmatpush.bf16.msra.mxu0 0
    %4647 = vmatpush.bf16.msra.mxu0 0
    %4648 = vmatpush.bf16.msra.mxu0 0
    %4649 = vmatpush.bf16.msra.mxu0 0
    %4650 = vmatpush.bf16.msra.mxu0 0
    %4651 = vmatpush.bf16.msra.mxu0 0
    %4652 = vmatpush.bf16.msra.mxu0 %v4587
    %4653 = vmatmul.bf16.gmra.mxu0 %v4581
    %v4654 = vpop.f32.mrf.mxu0
    %v4655 = vadd.f32 0.0, %v4654
    %v4656 = vpop.f32.mrf.mxu0
    %v4657 = vadd.f32 0.0, %v4656
    %4658 = vdwg.mxu0
    %4659 = vmatpush.bf16.msra.mxu0 0
    %4660 = vmatpush.bf16.msra.mxu0 0
    %4661 = vmatpush.bf16.msra.mxu0 0
    %4662 = vmatpush.bf16.msra.mxu0 0
    %4663 = vmatpush.bf16.msra.mxu0 0
    %4664 = vmatpush.bf16.msra.mxu0 0
    %4665 = vmatpush.bf16.msra.mxu0 0
    %4666 = vmatpush.bf16.msra.mxu0 %v4590
    %4667 = vmatmul.bf16.gmra.mxu0 %v4581
    %v4668 = vpop.f32.mrf.mxu0
    %v4669 = vadd.f32 0.0, %v4668
    %v4670 = vpop.f32.mrf.mxu0
    %v4671 = vadd.f32 0.0, %v4670
    %4672 = vdwg.mxu0
    %4673 = vmatpush.bf16.msra.mxu0 0
    %4674 = vmatpush.bf16.msra.mxu0 0
    %4675 = vmatpush.bf16.msra.mxu0 0
    %4676 = vmatpush.bf16.msra.mxu0 0
    %4677 = vmatpush.bf16.msra.mxu0 0
    %4678 = vmatpush.bf16.msra.mxu0 0
    %4679 = vmatpush.bf16.msra.mxu0 0
    %4680 = vmatpush.bf16.msra.mxu0 %v4593
    %4681 = vmatmul.bf16.gmra.mxu0 %v4581
    %v4682 = vpop.f32.mrf.mxu0
    %v4683 = vadd.f32 0.0, %v4682
    %v4684 = vpop.f32.mrf.mxu0
    %v4685 = vadd.f32 0.0, %v4684
    %4686 = vdwg.mxu0
    %4687 = vmatpush.bf16.msra.mxu0 0
    %4688 = vmatpush.bf16.msra.mxu0 0
    %4689 = vmatpush.bf16.msra.mxu0 0
    %4690 = vmatpush.bf16.msra.mxu0 0
    %4691 = vmatpush.bf16.msra.mxu0 0
    %4692 = vmatpush.bf16.msra.mxu0 0
    %4693 = vmatpush.bf16.msra.mxu0 0
    %4694 = vmatpush.bf16.msra.mxu0 %v4596
    %4695 = vmatmul.bf16.gmra.mxu0 %v4581
    %v4696 = vpop.f32.mrf.mxu0
    %v4697 = vadd.f32 0.0, %v4696
    %v4698 = vpop.f32.mrf.mxu0
    %v4699 = vadd.f32 0.0, %v4698
    %4700 = vdwg.mxu0
    %4701 = vmatpush.bf16.msra.mxu0 0
    %4702 = vmatpush.bf16.msra.mxu0 0
    %4703 = vmatpush.bf16.msra.mxu0 0
    %4704 = vmatpush.bf16.msra.mxu0 0
    %4705 = vmatpush.bf16.msra.mxu0 0
    %4706 = vmatpush.bf16.msra.mxu0 0
    %4707 = vmatpush.bf16.msra.mxu0 0
    %4708 = vmatpush.bf16.msra.mxu0 %v4599
    %4709 = vmatmul.bf16.gmra.mxu0 %v4581
    %v4710 = vpop.f32.mrf.mxu0
    %v4711 = vadd.f32 0.0, %v4710
    %v4712 = vpop.f32.mrf.mxu0
    %v4713 = vadd.f32 0.0, %v4712
    %4714 = vdwg.mxu0
    %4715 = vmatpush.bf16.msra.mxu0 0
    %4716 = vmatpush.bf16.msra.mxu0 0
    %4717 = vmatpush.bf16.msra.mxu0 0
    %4718 = vmatpush.bf16.msra.mxu0 0
    %4719 = vmatpush.bf16.msra.mxu0 0
    %4720 = vmatpush.bf16.msra.mxu0 0
    %4721 = vmatpush.bf16.msra.mxu0 0
    %4722 = vmatpush.bf16.msra.mxu0 %v4602
    %4723 = vmatmul.bf16.gmra.mxu0 %v4581
    %v4724 = vpop.f32.mrf.mxu0
    %v4725 = vadd.f32 0.0, %v4724
    %v4726 = vpop.f32.mrf.mxu0
    %v4727 = vadd.f32 0.0, %v4726
    %4728 = vdwg.mxu0
    %4729 = vmatpush.bf16.msra.mxu0 0
    %4730 = vmatpush.bf16.msra.mxu0 0
    %4731 = vmatpush.bf16.msra.mxu0 0
    %4732 = vmatpush.bf16.msra.mxu0 0
    %4733 = vmatpush.bf16.msra.mxu0 0
    %4734 = vmatpush.bf16.msra.mxu0 0
    %4735 = vmatpush.bf16.msra.mxu0 0
    %4736 = vmatpush.bf16.msra.mxu0 %v4605
    %4737 = vmatmul.bf16.gmra.mxu0 %v4581
    %v4738 = vpop.f32.mrf.mxu0
    %v4739 = vadd.f32 0.0, %v4738
    %v4740 = vpop.f32.mrf.mxu0
    %v4741 = vadd.f32 0.0, %v4740
    %4742 = vdwg.mxu0
    %4743 = vmatpush.bf16.msra.mxu0 0
    %4744 = vmatpush.bf16.msra.mxu0 0
    %4745 = vmatpush.bf16.msra.mxu0 0
    %4746 = vmatpush.bf16.msra.mxu0 0
    %4747 = vmatpush.bf16.msra.mxu0 0
    %4748 = vmatpush.bf16.msra.mxu0 0
    %4749 = vmatpush.bf16.msra.mxu0 0
    %4750 = vmatpush.bf16.msra.mxu0 %v4608
    %4751 = vmatmul.bf16.gmra.mxu0 %v4581
    %v4752 = vpop.f32.mrf.mxu0
    %v4753 = vadd.f32 0.0, %v4752
    %v4754 = vpop.f32.mrf.mxu0
    %v4755 = vadd.f32 0.0, %v4754
    %4756 = vdwg.mxu0
    %4757 = vmatpush.bf16.msra.mxu0 0
    %4758 = vmatpush.bf16.msra.mxu0 0
    %4759 = vmatpush.bf16.msra.mxu0 0
    %4760 = vmatpush.bf16.msra.mxu0 0
    %4761 = vmatpush.bf16.msra.mxu0 0
    %4762 = vmatpush.bf16.msra.mxu0 0
    %4763 = vmatpush.bf16.msra.mxu0 0
    %4764 = vmatpush.bf16.msra.mxu0 %v4611
    %4765 = vmatmul.bf16.gmra.mxu0 %v4581
    %v4766 = vpop.f32.mrf.mxu0
    %v4767 = vadd.f32 0.0, %v4766
    %v4768 = vpop.f32.mrf.mxu0
    %v4769 = vadd.f32 0.0, %v4768
    %4770 = vdwg.mxu0
    %4771 = vmatpush.bf16.msra.mxu0 0
    %4772 = vmatpush.bf16.msra.mxu0 0
    %4773 = vmatpush.bf16.msra.mxu0 0
    %4774 = vmatpush.bf16.msra.mxu0 0
    %4775 = vmatpush.bf16.msra.mxu0 0
    %4776 = vmatpush.bf16.msra.mxu0 0
    %4777 = vmatpush.bf16.msra.mxu0 0
    %4778 = vmatpush.bf16.msra.mxu0 %v4614
    %4779 = vmatmul.bf16.gmra.mxu0 %v4581
    %v4780 = vpop.f32.mrf.mxu0
    %v4781 = vadd.f32 0.0, %v4780
    %v4782 = vpop.f32.mrf.mxu0
    %v4783 = vadd.f32 0.0, %v4782
    %4784 = vdwg.mxu0
    %4785 = vmatpush.bf16.msra.mxu0 0
    %4786 = vmatpush.bf16.msra.mxu0 0
    %4787 = vmatpush.bf16.msra.mxu0 0
    %4788 = vmatpush.bf16.msra.mxu0 0
    %4789 = vmatpush.bf16.msra.mxu0 0
    %4790 = vmatpush.bf16.msra.mxu0 0
    %4791 = vmatpush.bf16.msra.mxu0 0
    %4792 = vmatpush.bf16.msra.mxu0 %v4617
    %4793 = vmatmul.bf16.gmra.mxu0 %v4581
    %v4794 = vpop.f32.mrf.mxu0
    %v4795 = vadd.f32 0.0, %v4794
    %v4796 = vpop.f32.mrf.mxu0
    %v4797 = vadd.f32 0.0, %v4796
    %4798 = vdwg.mxu0
    %4799 = vmatpush.bf16.msra.mxu0 0
    %4800 = vmatpush.bf16.msra.mxu0 0
    %4801 = vmatpush.bf16.msra.mxu0 0
    %4802 = vmatpush.bf16.msra.mxu0 0
    %4803 = vmatpush.bf16.msra.mxu0 0
    %4804 = vmatpush.bf16.msra.mxu0 0
    %4805 = vmatpush.bf16.msra.mxu0 0
    %4806 = vmatpush.bf16.msra.mxu0 %v4620
    %4807 = vmatmul.bf16.gmra.mxu0 %v4581
    %v4808 = vpop.f32.mrf.mxu0
    %v4809 = vadd.f32 0.0, %v4808
    %v4810 = vpop.f32.mrf.mxu0
    %v4811 = vadd.f32 0.0, %v4810
    %4812 = vdwg.mxu0
    %4813 = vmatpush.bf16.msra.mxu0 0
    %4814 = vmatpush.bf16.msra.mxu0 0
    %4815 = vmatpush.bf16.msra.mxu0 0
    %4816 = vmatpush.bf16.msra.mxu0 0
    %4817 = vmatpush.bf16.msra.mxu0 0
    %4818 = vmatpush.bf16.msra.mxu0 0
    %4819 = vmatpush.bf16.msra.mxu0 0
    %4820 = vmatpush.bf16.msra.mxu0 %v4623
    %4821 = vmatmul.bf16.gmra.mxu0 %v4581
    %v4822 = vpop.f32.mrf.mxu0
    %v4823 = vadd.f32 0.0, %v4822
    %v4824 = vpop.f32.mrf.mxu0
    %v4825 = vadd.f32 0.0, %v4824
    %4826 = vdwg.mxu0
    %4827 = vmatpush.bf16.msra.mxu0 0
    %4828 = vmatpush.bf16.msra.mxu0 0
    %4829 = vmatpush.bf16.msra.mxu0 0
    %4830 = vmatpush.bf16.msra.mxu0 0
    %4831 = vmatpush.bf16.msra.mxu0 0
    %4832 = vmatpush.bf16.msra.mxu0 0
    %4833 = vmatpush.bf16.msra.mxu0 0
    %4834 = vmatpush.bf16.msra.mxu0 %v4626
    %4835 = vmatmul.bf16.gmra.mxu0 %v4581
    %v4836 = vpop.f32.mrf.mxu0
    %v4837 = vadd.f32 0.0, %v4836
    %v4838 = vpop.f32.mrf.mxu0
    %v4839 = vadd.f32 0.0, %v4838
    %4840 = vdwg.mxu0
    %4841 = vmatpush.bf16.msra.mxu0 0
    %4842 = vmatpush.bf16.msra.mxu0 0
    %4843 = vmatpush.bf16.msra.mxu0 0
    %4844 = vmatpush.bf16.msra.mxu0 0
    %4845 = vmatpush.bf16.msra.mxu0 0
    %4846 = vmatpush.bf16.msra.mxu0 0
    %4847 = vmatpush.bf16.msra.mxu0 0
    %4848 = vmatpush.bf16.msra.mxu0 %v4629
    %4849 = vmatmul.bf16.gmra.mxu0 %v4581
    %v4850 = vpop.f32.mrf.mxu0
    %v4851 = vadd.f32 0.0, %v4850
    %v4852 = vpop.f32.mrf.mxu0
    %v4853 = vadd.f32 0.0, %v4852
    %4854 = vdwg.mxu0
    %v4855 = vadd.f32 %v4237, %v4641
    %v4856 = vadd.f32 %v4238, %v4655
    %v4857 = vadd.f32 %v4239, %v4669
    %v4858 = vadd.f32 %v4240, %v4683
    %v4859 = vadd.f32 %v4241, %v4697
    %v4860 = vadd.f32 %v4242, %v4711
    %v4861 = vadd.f32 %v4243, %v4725
    %v4862 = vadd.f32 %v4244, %v4739
    %v4863 = vadd.f32 %v4245, %v4753
    %v4864 = vadd.f32 %v4246, %v4767
    %v4865 = vadd.f32 %v4247, %v4781
    %v4866 = vadd.f32 %v4248, %v4795
    %v4867 = vadd.f32 %v4249, %v4809
    %v4868 = vadd.f32 %v4250, %v4823
    %v4869 = vadd.f32 %v4251, %v4837
    %v4870 = vadd.f32 %v4252, %v4851
    %v4871 = vadd.f32 %v4253, %v4643
    %v4872 = vadd.f32 %v4254, %v4657
    %v4873 = vadd.f32 %v4255, %v4671
    %v4874 = vadd.f32 %v4256, %v4685
    %v4875 = vadd.f32 %v4257, %v4699
    %v4876 = vadd.f32 %v4258, %v4713
    %v4877 = vadd.f32 %v4259, %v4727
    %v4878 = vadd.f32 %v4260, %v4741
    %v4879 = vadd.f32 %v4261, %v4755
    %v4880 = vadd.f32 %v4262, %v4769
    %v4881 = vadd.f32 %v4263, %v4783
    %v4882 = vadd.f32 %v4264, %v4797
    %v4883 = vadd.f32 %v4265, %v4811
    %v4884 = vadd.f32 %v4266, %v4825
    %v4885 = vadd.f32 %v4267, %v4839
    %v4886 = vadd.f32 %v4268, %v4853
    %v4887 = vld [vmem:[#allocation6] sm:$0xff]
    %v4888 = vld [vmem:[#allocation6 + $0x8] sm:$0xf]
    %4890 = vset.pattern.permute.xlu0 0
    %4891 = vperm.xlu0 %4890, %v4887
    %v4892 = vpop.permute.xlu0 %4891
    %4895 = vset.pattern.permute.xlu0 0
    %4896 = vperm.xlu0 %4895, %v4888
    %v4897 = vpop.permute.xlu0 %4896
    %v4899 = vadd.f32 %v4855, %v4892
    %v4900 = vadd.f32 %v4856, %v4892
    %v4901 = vadd.f32 %v4857, %v4892
    %v4902 = vadd.f32 %v4858, %v4892
    %v4903 = vadd.f32 %v4859, %v4892
    %v4904 = vadd.f32 %v4860, %v4892
    %v4905 = vadd.f32 %v4861, %v4892
    %v4906 = vadd.f32 %v4862, %v4892
    %v4907 = vadd.f32 %v4863, %v4892
    %v4908 = vadd.f32 %v4864, %v4892
    %v4909 = vadd.f32 %v4865, %v4892
    %v4910 = vadd.f32 %v4866, %v4892
    %v4911 = vadd.f32 %v4867, %v4892
    %v4912 = vadd.f32 %v4868, %v4892
    %v4913 = vadd.f32 %v4869, %v4892
    %v4914 = vadd.f32 %v4870, %v4892
    %v4915 = vadd.f32 %v4871, %v4897
    %v4916 = vadd.f32 %v4872, %v4897
    %v4917 = vadd.f32 %v4873, %v4897
    %v4918 = vadd.f32 %v4874, %v4897
    %v4919 = vadd.f32 %v4875, %v4897
    %v4920 = vadd.f32 %v4876, %v4897
    %v4921 = vadd.f32 %v4877, %v4897
    %v4922 = vadd.f32 %v4878, %v4897
    %v4923 = vadd.f32 %v4879, %v4897
    %v4924 = vadd.f32 %v4880, %v4897
    %v4925 = vadd.f32 %v4881, %v4897
    %v4926 = vadd.f32 %v4882, %v4897
    %v4927 = vadd.f32 %v4883, %v4897
    %v4928 = vadd.f32 %v4884, %v4897
    %v4929 = vadd.f32 %v4885, %v4897
    %v4930 = vadd.f32 %v4886, %v4897
    %v4931 = vtanh.pop %v4899
    %v4932 = vtanh.pop %v4900
    %v4933 = vtanh.pop %v4901
    %v4934 = vtanh.pop %v4902
    %v4935 = vtanh.pop %v4903
    %v4936 = vtanh.pop %v4904
    %v4937 = vtanh.pop %v4905
    %v4938 = vtanh.pop %v4906
    %v4939 = vtanh.pop %v4907
    %v4940 = vtanh.pop %v4908
    %v4941 = vtanh.pop %v4909
    %v4942 = vtanh.pop %v4910
    %v4943 = vtanh.pop %v4911
    %v4944 = vtanh.pop %v4912
    %v4945 = vtanh.pop %v4913
    %v4946 = vtanh.pop %v4914
    %v4947 = vtanh.pop %v4915
    %v4948 = vtanh.pop %v4916
    %v4949 = vtanh.pop %v4917
    %v4950 = vtanh.pop %v4918
    %v4951 = vtanh.pop %v4919
    %v4952 = vtanh.pop %v4920
    %v4953 = vtanh.pop %v4921
    %v4954 = vtanh.pop %v4922
    %v4955 = vtanh.pop %v4923
    %v4956 = vtanh.pop %v4924
    %v4957 = vtanh.pop %v4925
    %v4958 = vtanh.pop %v4926
    %v4959 = vtanh.pop %v4927
    %v4960 = vtanh.pop %v4928
    %v4961 = vtanh.pop %v4929
    %v4962 = vtanh.pop %v4930
    %4963 = vst [vmem:[%s4] sm:$0xff] %v4931
    %4964 = vst [vmem:[%s4 + $0x8] sm:$0xff] %v4932
    %4965 = vst [vmem:[%s4 + $0x10] sm:$0xff] %v4933
    %4966 = vst [vmem:[%s4 + $0x18] sm:$0xff] %v4934
    %4967 = vst [vmem:[%s4 + $0x20] sm:$0xff] %v4935
    %4968 = vst [vmem:[%s4 + $0x28] sm:$0xff] %v4936
    %4969 = vst [vmem:[%s4 + $0x30] sm:$0xff] %v4937
    %4970 = vst [vmem:[%s4 + $0x38] sm:$0xff] %v4938
    %4971 = vst [vmem:[%s4 + $0x40] sm:$0xff] %v4939
    %4972 = vst [vmem:[%s4 + $0x48] sm:$0xff] %v4940
    %4973 = vst [vmem:[%s4 + $0x50] sm:$0xff] %v4941
    %4974 = vst [vmem:[%s4 + $0x58] sm:$0xff] %v4942
    %4975 = vst [vmem:[%s4 + $0x60] sm:$0xff] %v4943
    %4976 = vst [vmem:[%s4 + $0x68] sm:$0xff] %v4944
    %4977 = vst [vmem:[%s4 + $0x70] sm:$0xff] %v4945
    %4978 = vst [vmem:[%s4 + $0x78] sm:$0xff] %v4946
    %4979 = vst [vmem:[%s4 + $0x80] sm:$0xf] %v4947
    %4980 = vst [vmem:[%s4 + $0x88] sm:$0xf] %v4948
    %4981 = vst [vmem:[%s4 + $0x90] sm:$0xf] %v4949
    %4982 = vst [vmem:[%s4 + $0x98] sm:$0xf] %v4950
    %4983 = vst [vmem:[%s4 + $0xa0] sm:$0xf] %v4951
    %4984 = vst [vmem:[%s4 + $0xa8] sm:$0xf] %v4952
    %4985 = vst [vmem:[%s4 + $0xb0] sm:$0xf] %v4953
    %4986 = vst [vmem:[%s4 + $0xb8] sm:$0xf] %v4954
    %4987 = vst [vmem:[%s4 + $0xc0] sm:$0xf] %v4955
    %4988 = vst [vmem:[%s4 + $0xc8] sm:$0xf] %v4956
    %4989 = vst [vmem:[%s4 + $0xd0] sm:$0xf] %v4957
    %4990 = vst [vmem:[%s4 + $0xd8] sm:$0xf] %v4958
    %4991 = vst [vmem:[%s4 + $0xe0] sm:$0xf] %v4959
    %4992 = vst [vmem:[%s4 + $0xe8] sm:$0xf] %v4960
    %4993 = vst [vmem:[%s4 + $0xf0] sm:$0xf] %v4961
    %4994 = vst [vmem:[%s4 + $0xf8] sm:$0xf] %v4962
    // Predicated region
    $region30: #{_lambda_.5} parent=1 // pred_check
      _
    $region31: #{_lambda_.5} parent=1 // pred_check_branch
      %4996 = sbr.rel (0) target = $region33
    $region32: #{_lambda_.5} parent=1 // pred_region
      _
    $region33: #{_lambda_.5} parent=1 // pred_fallthru
      _
    // Predicated region
    $region34: #{_lambda_.5} parent=1 // pred_check
      _
    $region35: #{_lambda_.5} parent=1 // pred_check_branch
      %4998 = sbr.rel (0) target = $region37
    $region36: #{_lambda_.5} parent=1 // pred_region
      _
    $region37: #{_lambda_.5} parent=1 // pred_fallthru
      _
    %4999 = vsyncpa [#allocation3], 1
    %5000 = vsyncpa [#allocation5], 1

</llo_original>
